<compile_context>
chip_gen: v6e
topology: v6e:2x2x1
jax: 0.10.0
libtpu: 0.0.40
codegen_flags: <defaults>
</compile_context>

<pallas_src>
import jax
import jax.numpy as jnp
from jax.experimental import pallas as pl
from jax.experimental.pallas import tpu as pltpu

# ---- small hyperparameters consistent with the module's __init__ ----
VOCAB_SIZE = 20
INPUT_ENCODING_SIZE = 32
RNN_SIZE = 32
NUM_LAYERS = 1
SEQ_LENGTH = 8
FC_FEAT_SIZE = 32
ATT_FEAT_SIZE = 32
ATT_NUM_REGIONS = 16
ATT_HID_SIZE = 32
DROP_PROB_LM = 0.5  # identity in eval mode

EMBED_ROWS = 32     # vocab_size+1 (=21) padded to 32 rows (aligned MXU operand)
VP_LOGIT = 128      # vocab_size+1 padded to 128 lanes (lane-dense output store)
ALPHA_LANES = 128   # L=16 regions padded to 128 lanes (lane-dense output store)


# ------------------------- fused decode kernel -------------------------
def _decode_kernel(n_live_ref,                                   # SMEM scalar
                   tok_ref, fc_ref, attf_ref, att3_ref,          # data (VMEM)
                   embed_ref, w_ih_ref, b_lstm_ref,              # weights (VMEM)
                   w_init_ref, b_init_ref,
                   w_abd_ref, w_hcat_ref, b_hcat_ref,
                   w_e_ref, e_bias_ref, w_ah_ref,
                   w_logit_ref, b_logit_ref,
                   alpha_out_ref, logp_out_ref,                  # outputs (VMEM)
                   pregx_sc, patt_sc):                           # VMEM scratch
    steps, Bp, _ = alpha_out_ref.shape
    _, L, _ = att3_ref.shape
    LH = patt_sc.shape[1]                    # L * ATT_HID_SIZE
    R = w_init_ref.shape[1]                  # num_layers * rnn_size (num_layers=1)
    Vp = embed_ref.shape[0]
    SB = tok_ref.shape[0]                    # steps * Bp

    # ---------------- one-time prologue ----------------
    # init_hidden: h0 = c0 = fc @ W_init + b   (rnn_type == 'lstm')
    h0 = jnp.dot(fc_ref[...], w_init_ref[...],
                 preferred_element_type=jnp.float32) + b_init_ref[...]      # [Bp, R]

    # hoisted attention key projection, lane-dense via block-diag weight
    patt_sc[...] = jnp.dot(attf_ref[...], w_abd_ref[...],
                           preferred_element_type=jnp.float32)              # [Bp, L*H]

    # ALL token-dependent work for every step, batched into two matmuls:
    # one_hot(tokens) @ embed -> xt_all ;  xt_all @ W_ih + b -> gate preacts
    oh = (tok_ref[...] == jax.lax.broadcasted_iota(jnp.int32, (SB, Vp), 1))
    xt_all = jnp.dot(oh.astype(jnp.float32), embed_ref[...],
                     preferred_element_type=jnp.float32)                    # [S*Bp, E]
    pregx_sc[...] = jnp.dot(xt_all, w_ih_ref[...],
                            preferred_element_type=jnp.float32) + b_lstm_ref[...]

    n_live = n_live_ref[0]

    # ---------------- unrolled decode loop (state carried in vregs) ----------------
    def step(t, carry):
        h, c = carry

        row = pl.multiple_of(t * Bp, Bp)
        pregx_t = pregx_sc[pl.ds(row, Bp), :]                               # [Bp, 4R]

        # fused h matmul: [tile(W_h2att, L) | W_hh] -> tiled att query + h gates
        hp = jnp.dot(h, w_hcat_ref[...],
                     preferred_element_type=jnp.float32) + b_hcat_ref[...]  # [Bp, LH+4R]
        att_q = hp[:, :LH]
        h_gates = hp[:, LH:]

        # soft attention (lane-dense): tanh on full vregs, e-reduction on MXU
        act = jnp.tanh(patt_sc[...] + att_q)                                # [Bp, L*H]
        e = jnp.dot(act, w_e_ref[...],
                    preferred_element_type=jnp.float32) + e_bias_ref[...]   # [Bp, 128]
        m = jnp.max(e, axis=-1, keepdims=True)
        p = jnp.exp(e - m)
        alpha = p * pl.reciprocal(jnp.sum(p, axis=-1, keepdims=True), approx=True)

        att_res = jnp.sum(alpha[:, :L, None] * att3_ref[...], axis=1)       # [Bp, A]

        # LSTM gates = x-part (prologue) + h-part (fused above) + att-part
        gates = pregx_t + h_gates + jnp.dot(att_res, w_ah_ref[...],
                                            preferred_element_type=jnp.float32)
        sg = jax.nn.sigmoid(gates)           # one EUP stream over the full 128-lane vreg
        i_g = sg[:, 0:R]
        f_g = sg[:, R:2 * R]
        o_g = sg[:, 2 * R:3 * R]
        g_g = jnp.tanh(gates[:, 3 * R:4 * R])
        c_new = f_g * c + i_g * g_g
        h_new = o_g * jnp.tanh(c_new)

        # logit + log_softmax over 128-lane padded vocab (pad bias = -1e30)
        logits = jnp.dot(h_new, w_logit_ref[...],
                         preferred_element_type=jnp.float32) + b_logit_ref[...]
        m2 = jnp.max(logits, axis=-1, keepdims=True)
        z = logits - m2
        lse = jnp.log(jnp.sum(jnp.exp(z), axis=-1, keepdims=True))
        logp = z - lse

        # device-side replacement of the host `break`: dead steps keep state, write 0
        af = (t < n_live).astype(jnp.float32)
        alpha_out_ref[t] = af * alpha
        logp_out_ref[t] = af * logp
        return (af * h_new + (1.0 - af) * h, af * c_new + (1.0 - af) * c)

    jax.lax.fori_loop(0, steps, step, (h0, h0), unroll=True)


# ----------------------------- full forward -----------------------------
def caption_model_forward(packed, fc_feats, att_feats, seq):
    B = fc_feats.shape[0]
    L = att_feats.shape[1]
    A = att_feats.shape[2]
    T = seq.shape[1]
    steps = T - 1

    # pad batch to a multiple of 8 for sublane-dense kernel I/O
    Bp = ((B + 7) // 8) * 8
    pad_b = Bp - B
    fc_p = jnp.pad(fc_feats.astype(jnp.float32), ((0, pad_b), (0, 0)))
    att_p = jnp.pad(att_feats.astype(jnp.float32), ((0, pad_b), (0, 0), (0, 0)))
    att_flat = att_p.reshape(Bp, L * A)                      # lane-dense attention input
    tok = jnp.pad(seq[:, :steps].astype(jnp.int32), ((0, pad_b), (0, 0)))   # [Bp, steps]
    tok_col = tok.T.reshape(steps * Bp, 1)                   # row t*Bp+b = seq[b, t]

    # device-side replacement of the host break: number of leading live steps
    ssum = jnp.sum(seq[:, :steps], axis=0)
    zero_step = (ssum == 0) & (jnp.arange(steps) >= 1)
    alive = (jnp.cumsum(zero_step.astype(jnp.int32)) == 0)
    n_live = jnp.sum(alive.astype(jnp.int32)).reshape(1)

    vspec = pl.BlockSpec(memory_space=pltpu.MemorySpace.VMEM)
    sspec = pl.BlockSpec(memory_space=pltpu.MemorySpace.SMEM)

    alpha_all, logp_all = pl.pallas_call(
        _decode_kernel,
        out_shape=(
            jax.ShapeDtypeStruct((steps, Bp, ALPHA_LANES), jnp.float32),
            jax.ShapeDtypeStruct((steps, Bp, VP_LOGIT), jnp.float32),
        ),
        in_specs=[sspec] + [vspec] * 17,
        out_specs=(vspec, vspec),
        scratch_shapes=[
            pltpu.VMEM((steps * Bp, 4 * RNN_SIZE), jnp.float32),     # per-step x gate preacts
            pltpu.VMEM((Bp, L * ATT_HID_SIZE), jnp.float32),         # hoisted att key proj
        ],
    )(n_live, tok_col, fc_p, att_flat, att_p,
      packed["embed_p"], packed["w_ih"], packed["b_lstm"],
      packed["w_lin"], packed["b_lin"],
      packed["w_abd"], packed["w_hcat"], packed["b_hcat"],
      packed["w_e"], packed["e_bias"], packed["w_ah"],
      packed["w_logit_p"], packed["b_logit_p"])

    alphas = jnp.transpose(alpha_all[:, :B, :L], (1, 0, 2))                 # [B, T-1, L]
    logprobs = jnp.transpose(logp_all[:, :B, :VOCAB_SIZE + 1], (1, 0, 2))   # [B, T-1, V+1]
    return alphas, logprobs


# -------------------------- deterministic params --------------------------
def init_params(key):
    ks = jax.random.split(key, 9)

    def u(k, shape, r=0.1):
        return jax.random.uniform(k, shape, jnp.float32, -r, r)

    return {
        # nn.Linear(fc_feat_size, num_layers * rnn_size)
        "w_lin": u(ks[0], (FC_FEAT_SIZE, NUM_LAYERS * RNN_SIZE)),
        "b_lin": jnp.zeros((1, NUM_LAYERS * RNN_SIZE), jnp.float32),
        # nn.Embedding(vocab_size + 1, input_encoding_size), uniform(-0.1, 0.1)
        "embed": u(ks[1], (VOCAB_SIZE + 1, INPUT_ENCODING_SIZE)),
        # nn.Linear(rnn_size, vocab_size + 1): weight uniform(-0.1, 0.1), bias 0
        "w_logit": u(ks[2], (RNN_SIZE, VOCAB_SIZE + 1)),
        "b_logit": jnp.zeros((1, VOCAB_SIZE + 1), jnp.float32),
        # soft-attention LSTM core stand-in (self.core is defined in subclasses)
        "w_a2att": u(ks[3], (ATT_FEAT_SIZE, ATT_HID_SIZE)),
        "w_h2att": u(ks[4], (RNN_SIZE, ATT_HID_SIZE)),
        "b_att": jnp.zeros((1, ATT_HID_SIZE), jnp.float32),
        "w_alpha": u(ks[5], (1, ATT_HID_SIZE)),
        "w_ih": u(ks[6], (INPUT_ENCODING_SIZE, 4 * RNN_SIZE)),
        "w_hh": u(ks[7], (RNN_SIZE, 4 * RNN_SIZE)),
        "w_ah": u(ks[8], (ATT_FEAT_SIZE, 4 * RNN_SIZE)),
        "b_lstm": jnp.zeros((1, 4 * RNN_SIZE), jnp.float32),
    }


def pack_params(params):
    """One-time host-side weight packing (pure re-layout, math-identical)."""
    v_real = VOCAB_SIZE + 1
    L = ATT_NUM_REGIONS
    embed_p = jnp.pad(params["embed"], ((0, EMBED_ROWS - v_real), (0, 0)))
    # fused h weight: [R, L*H + 4R] = [tile(W_h2att, L) | W_hh], bias likewise
    w_hcat = jnp.concatenate(
        [jnp.tile(params["w_h2att"], (1, L)), params["w_hh"]], axis=1)
    b_hcat = jnp.concatenate(
        [jnp.tile(params["b_att"], (1, L)),
         jnp.zeros((1, 4 * RNN_SIZE), jnp.float32)], axis=1)
    # block-diagonal attention key projection: [L*A, L*H]
    w_abd = jnp.kron(jnp.eye(L, dtype=jnp.float32), params["w_a2att"])
    # e-reduction weight on the MXU: [L*H, 128] with w_alpha per region block
    w_e = jnp.kron(jnp.eye(L, dtype=jnp.float32), params["w_alpha"].T)      # [L*H, L]
    w_e = jnp.pad(w_e, ((0, 0), (0, ALPHA_LANES - L)))
    e_bias = jnp.concatenate(
        [jnp.zeros((1, L), jnp.float32),
         jnp.full((1, ALPHA_LANES - L), -1e30, jnp.float32)], axis=1)
    # 128-lane padded logit head (pad bias = -1e30 so pads vanish in softmax)
    w_logit_p = jnp.pad(params["w_logit"], ((0, 0), (0, VP_LOGIT - v_real)))
    b_logit_p = jnp.concatenate(
        [params["b_logit"], jnp.full((1, VP_LOGIT - v_real), -1e30, jnp.float32)],
        axis=1)
    return {
        "embed_p": embed_p, "w_ih": params["w_ih"], "b_lstm": params["b_lstm"],
        "w_lin": params["w_lin"], "b_lin": params["b_lin"],
        "w_abd": w_abd, "w_hcat": w_hcat, "b_hcat": b_hcat,
        "w_e": w_e, "e_bias": e_bias, "w_ah": params["w_ah"],
        "w_logit_p": w_logit_p, "b_logit_p": b_logit_p,
    }


if __name__ == "__main__":
    key = jax.random.PRNGKey(0)
    k_params, k_fc, k_att, k_seq = jax.random.split(key, 4)

    B = 2
    params = init_params(k_params)
    packed = pack_params(params)

    fc_feats = jax.random.normal(k_fc, (B, FC_FEAT_SIZE), jnp.float32)
    att_feats = jax.random.normal(k_att, (B, ATT_NUM_REGIONS, ATT_FEAT_SIZE), jnp.float32)
    # tokens in [1, vocab_size] so the data-dependent break never triggers
    seq = jax.random.randint(k_seq, (B, SEQ_LENGTH), 1, VOCAB_SIZE + 1, jnp.int32)

    forward = jax.jit(caption_model_forward)
    alphas, logprobs = forward(packed, fc_feats, att_feats, seq)
    jax.block_until_ready((alphas, logprobs))

    assert alphas.shape == (B, SEQ_LENGTH - 1, ATT_NUM_REGIONS)
    assert logprobs.shape == (B, SEQ_LENGTH - 1, VOCAB_SIZE + 1)
    assert bool(jnp.all(jnp.isfinite(alphas))) and bool(jnp.all(jnp.isfinite(logprobs)))
    print("KERNEL_OK")
</pallas_src>

<mosaic_0001>
module attributes {stable_mosaic.version = 11 : i64} {
  func.func @_decode_kernel(%arg0: memref<1xi32, #tpu.memory_space<smem>>, %arg1: memref<56x1xi32, #tpu.memory_space<vmem>>, %arg2: memref<8x32xf32, #tpu.memory_space<vmem>>, %arg3: memref<8x512xf32, #tpu.memory_space<vmem>>, %arg4: memref<8x16x32xf32, #tpu.memory_space<vmem>>, %arg5: memref<32x32xf32, #tpu.memory_space<vmem>>, %arg6: memref<32x128xf32, #tpu.memory_space<vmem>>, %arg7: memref<1x128xf32, #tpu.memory_space<vmem>>, %arg8: memref<32x32xf32, #tpu.memory_space<vmem>>, %arg9: memref<1x32xf32, #tpu.memory_space<vmem>>, %arg10: memref<512x512xf32, #tpu.memory_space<vmem>>, %arg11: memref<32x640xf32, #tpu.memory_space<vmem>>, %arg12: memref<1x640xf32, #tpu.memory_space<vmem>>, %arg13: memref<512x128xf32, #tpu.memory_space<vmem>>, %arg14: memref<1x128xf32, #tpu.memory_space<vmem>>, %arg15: memref<32x128xf32, #tpu.memory_space<vmem>>, %arg16: memref<32x128xf32, #tpu.memory_space<vmem>>, %arg17: memref<1x128xf32, #tpu.memory_space<vmem>>, %arg18: memref<7x8x128xf32, #tpu.memory_space<vmem>>, %arg19: memref<7x8x128xf32, #tpu.memory_space<vmem>>, %arg20: memref<56x128xf32, #tpu.memory_space<vmem>>, %arg21: memref<8x512xf32, #tpu.memory_space<vmem>>) attributes {dimension_semantics = [], scalar_prefetch = 0 : i64, scratch_operands = 2 : i64, tpu.core_type = #tpu.core_type<tc>} {
    %c0 = arith.constant 0 : index
    %c0_0 = arith.constant 0 : index
    %0 = vector.load %arg2[%c0, %c0_0] : memref<8x32xf32, #tpu.memory_space<vmem>>, vector<8x32xf32>
    %c0_1 = arith.constant 0 : index
    %c0_2 = arith.constant 0 : index
    %1 = vector.load %arg8[%c0_1, %c0_2] : memref<32x32xf32, #tpu.memory_space<vmem>>, vector<32x32xf32>
    %cst = arith.constant dense<0.000000e+00> : vector<8x32xf32>
    %2 = tpu.matmul %0, %1, %cst {dimension_numbers = #tpu.dot_dimension_numbers<[1], [0], [0], [1], [0, 0, 1, 1], [], []>} : vector<8x32xf32>, vector<32x32xf32>, vector<8x32xf32> -> vector<8x32xf32>
    %c0_3 = arith.constant 0 : index
    %c0_4 = arith.constant 0 : index
    %3 = vector.load %arg9[%c0_3, %c0_4] : memref<1x32xf32, #tpu.memory_space<vmem>>, vector<1x32xf32>
    %4 = vector.broadcast %3 : vector<1x32xf32> to vector<8x32xf32>
    %5 = arith.addf %2, %4 : vector<8x32xf32>
    %c0_5 = arith.constant 0 : index
    %c0_6 = arith.constant 0 : index
    %6 = vector.load %arg3[%c0_5, %c0_6] : memref<8x512xf32, #tpu.memory_space<vmem>>, vector<8x512xf32>
    %c0_7 = arith.constant 0 : index
    %c0_8 = arith.constant 0 : index
    %7 = vector.load %arg10[%c0_7, %c0_8] : memref<512x512xf32, #tpu.memory_space<vmem>>, vector<512x512xf32>
    %cst_9 = arith.constant dense<0.000000e+00> : vector<8x512xf32>
    %8 = tpu.matmul %6, %7, %cst_9 {dimension_numbers = #tpu.dot_dimension_numbers<[1], [0], [0], [1], [0, 0, 1, 1], [], []>} : vector<8x512xf32>, vector<512x512xf32>, vector<8x512xf32> -> vector<8x512xf32>
    %c0_10 = arith.constant 0 : index
    %c0_11 = arith.constant 0 : index
    %9 = vector.load %arg21[%c0_10, %c0_11] : memref<8x512xf32, #tpu.memory_space<vmem>>, vector<8x512xf32>
    tpu.vector_store %arg21[%c0_10, %c0_11], %8 {strides = array<i32>} : memref<8x512xf32, #tpu.memory_space<vmem>>, vector<8x512xf32>,
    %c0_12 = arith.constant 0 : index
    %c0_13 = arith.constant 0 : index
    %10 = vector.load %arg1[%c0_12, %c0_13] : memref<56x1xi32, #tpu.memory_space<vmem>>, vector<56x1xi32>
    %11 = tpu.iota {dimensions = array<i32: 1>} : vector<56x32xi32>
    %12 = vector.broadcast %10 : vector<56x1xi32> to vector<56x32xi32>
    %13 = arith.cmpi eq, %12, %11 : vector<56x32xi32>
    %14 = arith.extui %13 : vector<56x32xi1> to vector<56x32xi32>
    %15 = arith.sitofp %14 : vector<56x32xi32> to vector<56x32xf32>
    %c0_14 = arith.constant 0 : index
    %c0_15 = arith.constant 0 : index
    %16 = vector.load %arg5[%c0_14, %c0_15] : memref<32x32xf32, #tpu.memory_space<vmem>>, vector<32x32xf32>
    %cst_16 = arith.constant dense<0.000000e+00> : vector<56x32xf32>
    %17 = tpu.matmul %15, %16, %cst_16 {dimension_numbers = #tpu.dot_dimension_numbers<[1], [0], [0], [1], [0, 0, 1, 1], [], []>} : vector<56x32xf32>, vector<32x32xf32>, vector<56x32xf32> -> vector<56x32xf32>
    %c0_17 = arith.constant 0 : index
    %c0_18 = arith.constant 0 : index
    %18 = vector.load %arg6[%c0_17, %c0_18] : memref<32x128xf32, #tpu.memory_space<vmem>>, vector<32x128xf32>
    %cst_19 = arith.constant dense<0.000000e+00> : vector<56x128xf32>
    %19 = tpu.matmul %17, %18, %cst_19 {dimension_numbers = #tpu.dot_dimension_numbers<[1], [0], [0], [1], [0, 0, 1, 1], [], []>} : vector<56x32xf32>, vector<32x128xf32>, vector<56x128xf32> -> vector<56x128xf32>
    %c0_20 = arith.constant 0 : index
    %c0_21 = arith.constant 0 : index
    %20 = vector.load %arg7[%c0_20, %c0_21] : memref<1x128xf32, #tpu.memory_space<vmem>>, vector<1x128xf32>
    %21 = vector.broadcast %20 : vector<1x128xf32> to vector<56x128xf32>
    %22 = arith.addf %19, %21 : vector<56x128xf32>
    %c0_22 = arith.constant 0 : index
    %c0_23 = arith.constant 0 : index
    %23 = vector.load %arg20[%c0_22, %c0_23] : memref<56x128xf32, #tpu.memory_space<vmem>>, vector<56x128xf32>
    tpu.vector_store %arg20[%c0_22, %c0_23], %22 {strides = array<i32>} : memref<56x128xf32, #tpu.memory_space<vmem>>, vector<56x128xf32>,
    %c0_24 = arith.constant 0 : index
    %24 = memref.load %arg0[%c0_24] : memref<1xi32, #tpu.memory_space<smem>>
    %c0_i32 = arith.constant 0 : i32
    %c8_i32 = arith.constant 8 : i32
    %25 = arith.muli %c0_i32, %c8_i32 : i32
    %26 = tpu.assume_multiple %25, 8 : i32
    %27 = arith.index_cast %26 : i32 to index
    %c0_25 = arith.constant 0 : index
    %28 = vector.load %arg20[%27, %c0_25] : memref<56x128xf32, #tpu.memory_space<vmem>>, vector<8x128xf32>
    %c0_26 = arith.constant 0 : index
    %c0_27 = arith.constant 0 : index
    %29 = vector.load %arg11[%c0_26, %c0_27] : memref<32x640xf32, #tpu.memory_space<vmem>>, vector<32x640xf32>
    %cst_28 = arith.constant dense<0.000000e+00> : vector<8x640xf32>
    %30 = tpu.matmul %5, %29, %cst_28 {dimension_numbers = #tpu.dot_dimension_numbers<[1], [0], [0], [1], [0, 0, 1, 1], [], []>} : vector<8x32xf32>, vector<32x640xf32>, vector<8x640xf32> -> vector<8x640xf32>
    %c0_29 = arith.constant 0 : index
    %c0_30 = arith.constant 0 : index
    %31 = vector.load %arg12[%c0_29, %c0_30] : memref<1x640xf32, #tpu.memory_space<vmem>>, vector<1x640xf32>
    %32 = vector.broadcast %31 : vector<1x640xf32> to vector<8x640xf32>
    %33 = arith.addf %30, %32 : vector<8x640xf32>
    %34 = vector.extract_strided_slice %33 {offsets = [0, 0], sizes = [8, 512], strides = [1, 1]} : vector<8x640xf32> to vector<8x512xf32>
    %35 = vector.extract_strided_slice %33 {offsets = [0, 512], sizes = [8, 128], strides = [1, 1]} : vector<8x640xf32> to vector<8x128xf32>
    %c0_31 = arith.constant 0 : index
    %c0_32 = arith.constant 0 : index
    %36 = vector.load %arg21[%c0_31, %c0_32] : memref<8x512xf32, #tpu.memory_space<vmem>>, vector<8x512xf32>
    %37 = arith.addf %36, %34 : vector<8x512xf32>
    %38 = math.tanh %37 : vector<8x512xf32>
    %c0_33 = arith.constant 0 : index
    %c0_34 = arith.constant 0 : index
    %39 = vector.load %arg13[%c0_33, %c0_34] : memref<512x128xf32, #tpu.memory_space<vmem>>, vector<512x128xf32>
    %cst_35 = arith.constant dense<0.000000e+00> : vector<8x128xf32>
    %40 = tpu.matmul %38, %39, %cst_35 {dimension_numbers = #tpu.dot_dimension_numbers<[1], [0], [0], [1], [0, 0, 1, 1], [], []>} : vector<8x512xf32>, vector<512x128xf32>, vector<8x128xf32> -> vector<8x128xf32>
    %c0_36 = arith.constant 0 : index
    %c0_37 = arith.constant 0 : index
    %41 = vector.load %arg14[%c0_36, %c0_37] : memref<1x128xf32, #tpu.memory_space<vmem>>, vector<1x128xf32>
    %42 = vector.broadcast %41 : vector<1x128xf32> to vector<8x128xf32>
    %43 = arith.addf %40, %42 : vector<8x128xf32>
    %cst_38 = arith.constant dense<0xFF800000> : vector<8xf32>
    %44 = vector.multi_reduction <maximumf>, %43, %cst_38 [1] : vector<8x128xf32> to vector<8xf32>
    %45 = vector.shape_cast %44 : vector<8xf32> to vector<8x1xf32>
    %46 = vector.broadcast %45 : vector<8x1xf32> to vector<8x128xf32>
    %47 = arith.subf %43, %46 : vector<8x128xf32>
    %48 = math.exp %47 : vector<8x128xf32>
    %cst_39 = arith.constant dense<0.000000e+00> : vector<8xf32>
    %49 = vector.multi_reduction <add>, %48, %cst_39 [1] : vector<8x128xf32> to vector<8xf32>
    %50 = vector.shape_cast %49 : vector<8xf32> to vector<8x1xf32>
    %51 = tpu.reciprocal %50 {approx = true} : vector<8x1xf32> -> vector<8x1xf32>
    %52 = vector.broadcast %51 : vector<8x1xf32> to vector<8x128xf32>
    %53 = arith.mulf %48, %52 : vector<8x128xf32>
    %54 = vector.extract_strided_slice %53 {offsets = [0, 0], sizes = [8, 16], strides = [1, 1]} : vector<8x128xf32> to vector<8x16xf32>
    %55 = vector.shape_cast %54 : vector<8x16xf32> to vector<8x16x1xf32>
    %c0_40 = arith.constant 0 : index
    %c0_41 = arith.constant 0 : index
    %c0_42 = arith.constant 0 : index
    %56 = vector.load %arg4[%c0_40, %c0_41, %c0_42] : memref<8x16x32xf32, #tpu.memory_space<vmem>>, vector<8x16x32xf32>
    %57 = vector.broadcast %55 : vector<8x16x1xf32> to vector<8x16x32xf32>
    %58 = arith.mulf %57, %56 : vector<8x16x32xf32>
    %cst_43 = arith.constant dense<0.000000e+00> : vector<8x32xf32>
    %59 = vector.multi_reduction <add>, %58, %cst_43 [1] : vector<8x16x32xf32> to vector<8x32xf32>
    %60 = arith.addf %28, %35 : vector<8x128xf32>
    %c0_44 = arith.constant 0 : index
    %c0_45 = arith.constant 0 : index
    %61 = vector.load %arg15[%c0_44, %c0_45] : memref<32x128xf32, #tpu.memory_space<vmem>>, vector<32x128xf32>
    %cst_46 = arith.constant dense<0.000000e+00> : vector<8x128xf32>
    %62 = tpu.matmul %59, %61, %cst_46 {dimension_numbers = #tpu.dot_dimension_numbers<[1], [0], [0], [1], [0, 0, 1, 1], [], []>} : vector<8x32xf32>, vector<32x128xf32>, vector<8x128xf32> -> vector<8x128xf32>
    %63 = arith.addf %60, %62 : vector<8x128xf32>
    %64 = arith.negf %63 : vector<8x128xf32>
    %65 = math.exp %64 : vector<8x128xf32>
    %cst_47 = arith.constant 1.000000e+00 : f32
    %66 = vector.broadcast %cst_47 : f32 to vector<8x128xf32>
    %67 = arith.addf %66, %65 : vector<8x128xf32>
    %68 = arith.divf %66, %67 : vector<8x128xf32>
    %69 = vector.extract_strided_slice %68 {offsets = [0, 0], sizes = [8, 32], strides = [1, 1]} : vector<8x128xf32> to vector<8x32xf32>
    %70 = vector.extract_strided_slice %68 {offsets = [0, 32], sizes = [8, 32], strides = [1, 1]} : vector<8x128xf32> to vector<8x32xf32>
    %71 = vector.extract_strided_slice %68 {offsets = [0, 64], sizes = [8, 32], strides = [1, 1]} : vector<8x128xf32> to vector<8x32xf32>
    %72 = vector.extract_strided_slice %63 {offsets = [0, 96], sizes = [8, 32], strides = [1, 1]} : vector<8x128xf32> to vector<8x32xf32>
    %73 = math.tanh %72 : vector<8x32xf32>
    %74 = arith.mulf %70, %5 : vector<8x32xf32>
    %75 = arith.mulf %69, %73 : vector<8x32xf32>
    %76 = arith.addf %74, %75 : vector<8x32xf32>
    %77 = math.tanh %76 : vector<8x32xf32>
    %78 = arith.mulf %71, %77 : vector<8x32xf32>
    %c0_48 = arith.constant 0 : index
    %c0_49 = arith.constant 0 : index
    %79 = vector.load %arg16[%c0_48, %c0_49] : memref<32x128xf32, #tpu.memory_space<vmem>>, vector<32x128xf32>
    %cst_50 = arith.constant dense<0.000000e+00> : vector<8x128xf32>
    %80 = tpu.matmul %78, %79, %cst_50 {dimension_numbers = #tpu.dot_dimension_numbers<[1], [0], [0], [1], [0, 0, 1, 1], [], []>} : vector<8x32xf32>, vector<32x128xf32>, vector<8x128xf32> -> vector<8x128xf32>
    %c0_51 = arith.constant 0 : index
    %c0_52 = arith.constant 0 : index
    %81 = vector.load %arg17[%c0_51, %c0_52] : memref<1x128xf32, #tpu.memory_space<vmem>>, vector<1x128xf32>
    %82 = vector.broadcast %81 : vector<1x128xf32> to vector<8x128xf32>
    %83 = arith.addf %80, %82 : vector<8x128xf32>
    %cst_53 = arith.constant dense<0xFF800000> : vector<8xf32>
    %84 = vector.multi_reduction <maximumf>, %83, %cst_53 [1] : vector<8x128xf32> to vector<8xf32>
    %85 = vector.shape_cast %84 : vector<8xf32> to vector<8x1xf32>
    %86 = vector.broadcast %85 : vector<8x1xf32> to vector<8x128xf32>
    %87 = arith.subf %83, %86 : vector<8x128xf32>
    %88 = math.exp %87 : vector<8x128xf32>
    %cst_54 = arith.constant dense<0.000000e+00> : vector<8xf32>
    %89 = vector.multi_reduction <add>, %88, %cst_54 [1] : vector<8x128xf32> to vector<8xf32>
    %90 = vector.shape_cast %89 : vector<8xf32> to vector<8x1xf32>
    %91 = math.log %90 : vector<8x1xf32>
    %92 = vector.broadcast %91 : vector<8x1xf32> to vector<8x128xf32>
    %93 = arith.subf %87, %92 : vector<8x128xf32>
    %94 = arith.cmpi slt, %c0_i32, %24 : i32
    %95 = arith.extui %94 : i1 to i32
    %96 = arith.sitofp %95 : i32 to f32
    %97 = vector.broadcast %96 : f32 to vector<8x128xf32>
    %98 = arith.mulf %97, %53 : vector<8x128xf32>
    %99 = arith.index_cast %c0_i32 : i32 to index
    %c0_55 = arith.constant 0 : index
    %c0_56 = arith.constant 0 : index
    %100 = vector.load %arg18[%99, %c0_55, %c0_56] : memref<7x8x128xf32, #tpu.memory_space<vmem>>, vector<1x8x128xf32>
    %101 = vector.shape_cast %100 : vector<1x8x128xf32> to vector<8x128xf32>
    %102 = vector.shape_cast %98 : vector<8x128xf32> to vector<1x8x128xf32>
    tpu.vector_store %arg18[%99, %c0_55, %c0_56], %102 {strides = array<i32>} : memref<7x8x128xf32, #tpu.memory_space<vmem>>, vector<1x8x128xf32>,
    %103 = vector.broadcast %96 : f32 to vector<8x128xf32>
    %104 = arith.mulf %103, %93 : vector<8x128xf32>
    %105 = arith.index_cast %c0_i32 : i32 to index
    %c0_57 = arith.constant 0 : index
    %c0_58 = arith.constant 0 : index
    %106 = vector.load %arg19[%105, %c0_57, %c0_58] : memref<7x8x128xf32, #tpu.memory_space<vmem>>, vector<1x8x128xf32>
    %107 = vector.shape_cast %106 : vector<1x8x128xf32> to vector<8x128xf32>
    %108 = vector.shape_cast %104 : vector<8x128xf32> to vector<1x8x128xf32>
    tpu.vector_store %arg19[%105, %c0_57, %c0_58], %108 {strides = array<i32>} : memref<7x8x128xf32, #tpu.memory_space<vmem>>, vector<1x8x128xf32>,
    %109 = vector.broadcast %96 : f32 to vector<8x32xf32>
    %110 = arith.mulf %109, %78 : vector<8x32xf32>
    %cst_59 = arith.constant 1.000000e+00 : f32
    %111 = arith.subf %cst_59, %96 : f32
    %112 = vector.broadcast %111 : f32 to vector<8x32xf32>
    %113 = arith.mulf %112, %5 : vector<8x32xf32>
    %114 = arith.addf %110, %113 : vector<8x32xf32>
    %115 = vector.broadcast %96 : f32 to vector<8x32xf32>
    %116 = arith.mulf %115, %76 : vector<8x32xf32>
    %cst_60 = arith.constant 1.000000e+00 : f32
    %117 = arith.subf %cst_60, %96 : f32
    %118 = vector.broadcast %117 : f32 to vector<8x32xf32>
    %119 = arith.mulf %118, %5 : vector<8x32xf32>
    %120 = arith.addf %116, %119 : vector<8x32xf32>
    %c1_i32 = arith.constant 1 : i32
    %c8_i32_61 = arith.constant 8 : i32
    %121 = arith.muli %c1_i32, %c8_i32_61 : i32
    %122 = tpu.assume_multiple %121, 8 : i32
    %123 = arith.index_cast %122 : i32 to index
    %c0_62 = arith.constant 0 : index
    %124 = vector.load %arg20[%123, %c0_62] : memref<56x128xf32, #tpu.memory_space<vmem>>, vector<8x128xf32>
    %c0_63 = arith.constant 0 : index
    %c0_64 = arith.constant 0 : index
    %125 = vector.load %arg11[%c0_63, %c0_64] : memref<32x640xf32, #tpu.memory_space<vmem>>, vector<32x640xf32>
    %cst_65 = arith.constant dense<0.000000e+00> : vector<8x640xf32>
    %126 = tpu.matmul %114, %125, %cst_65 {dimension_numbers = #tpu.dot_dimension_numbers<[1], [0], [0], [1], [0, 0, 1, 1], [], []>} : vector<8x32xf32>, vector<32x640xf32>, vector<8x640xf32> -> vector<8x640xf32>
    %c0_66 = arith.constant 0 : index
    %c0_67 = arith.constant 0 : index
    %127 = vector.load %arg12[%c0_66, %c0_67] : memref<1x640xf32, #tpu.memory_space<vmem>>, vector<1x640xf32>
    %128 = vector.broadcast %127 : vector<1x640xf32> to vector<8x640xf32>
    %129 = arith.addf %126, %128 : vector<8x640xf32>
    %130 = vector.extract_strided_slice %129 {offsets = [0, 0], sizes = [8, 512], strides = [1, 1]} : vector<8x640xf32> to vector<8x512xf32>
    %131 = vector.extract_strided_slice %129 {offsets = [0, 512], sizes = [8, 128], strides = [1, 1]} : vector<8x640xf32> to vector<8x128xf32>
    %c0_68 = arith.constant 0 : index
    %c0_69 = arith.constant 0 : index
    %132 = vector.load %arg21[%c0_68, %c0_69] : memref<8x512xf32, #tpu.memory_space<vmem>>, vector<8x512xf32>
    %133 = arith.addf %132, %130 : vector<8x512xf32>
    %134 = math.tanh %133 : vector<8x512xf32>
    %c0_70 = arith.constant 0 : index
    %c0_71 = arith.constant 0 : index
    %135 = vector.load %arg13[%c0_70, %c0_71] : memref<512x128xf32, #tpu.memory_space<vmem>>, vector<512x128xf32>
    %cst_72 = arith.constant dense<0.000000e+00> : vector<8x128xf32>
    %136 = tpu.matmul %134, %135, %cst_72 {dimension_numbers = #tpu.dot_dimension_numbers<[1], [0], [0], [1], [0, 0, 1, 1], [], []>} : vector<8x512xf32>, vector<512x128xf32>, vector<8x128xf32> -> vector<8x128xf32>
    %c0_73 = arith.constant 0 : index
    %c0_74 = arith.constant 0 : index
    %137 = vector.load %arg14[%c0_73, %c0_74] : memref<1x128xf32, #tpu.memory_space<vmem>>, vector<1x128xf32>
    %138 = vector.broadcast %137 : vector<1x128xf32> to vector<8x128xf32>
    %139 = arith.addf %136, %138 : vector<8x128xf32>
    %cst_75 = arith.constant dense<0xFF800000> : vector<8xf32>
    %140 = vector.multi_reduction <maximumf>, %139, %cst_75 [1] : vector<8x128xf32> to vector<8xf32>
    %141 = vector.shape_cast %140 : vector<8xf32> to vector<8x1xf32>
    %142 = vector.broadcast %141 : vector<8x1xf32> to vector<8x128xf32>
    %143 = arith.subf %139, %142 : vector<8x128xf32>
    %144 = math.exp %143 : vector<8x128xf32>
    %cst_76 = arith.constant dense<0.000000e+00> : vector<8xf32>
    %145 = vector.multi_reduction <add>, %144, %cst_76 [1] : vector<8x128xf32> to vector<8xf32>
    %146 = vector.shape_cast %145 : vector<8xf32> to vector<8x1xf32>
    %147 = tpu.reciprocal %146 {approx = true} : vector<8x1xf32> -> vector<8x1xf32>
    %148 = vector.broadcast %147 : vector<8x1xf32> to vector<8x128xf32>
    %149 = arith.mulf %144, %148 : vector<8x128xf32>
    %150 = vector.extract_strided_slice %149 {offsets = [0, 0], sizes = [8, 16], strides = [1, 1]} : vector<8x128xf32> to vector<8x16xf32>
    %151 = vector.shape_cast %150 : vector<8x16xf32> to vector<8x16x1xf32>
    %c0_77 = arith.constant 0 : index
    %c0_78 = arith.constant 0 : index
    %c0_79 = arith.constant 0 : index
    %152 = vector.load %arg4[%c0_77, %c0_78, %c0_79] : memref<8x16x32xf32, #tpu.memory_space<vmem>>, vector<8x16x32xf32>
    %153 = vector.broadcast %151 : vector<8x16x1xf32> to vector<8x16x32xf32>
    %154 = arith.mulf %153, %152 : vector<8x16x32xf32>
    %cst_80 = arith.constant dense<0.000000e+00> : vector<8x32xf32>
    %155 = vector.multi_reduction <add>, %154, %cst_80 [1] : vector<8x16x32xf32> to vector<8x32xf32>
    %156 = arith.addf %124, %131 : vector<8x128xf32>
    %c0_81 = arith.constant 0 : index
    %c0_82 = arith.constant 0 : index
    %157 = vector.load %arg15[%c0_81, %c0_82] : memref<32x128xf32, #tpu.memory_space<vmem>>, vector<32x128xf32>
    %cst_83 = arith.constant dense<0.000000e+00> : vector<8x128xf32>
    %158 = tpu.matmul %155, %157, %cst_83 {dimension_numbers = #tpu.dot_dimension_numbers<[1], [0], [0], [1], [0, 0, 1, 1], [], []>} : vector<8x32xf32>, vector<32x128xf32>, vector<8x128xf32> -> vector<8x128xf32>
    %159 = arith.addf %156, %158 : vector<8x128xf32>
    %160 = arith.negf %159 : vector<8x128xf32>
    %161 = math.exp %160 : vector<8x128xf32>
    %cst_84 = arith.constant 1.000000e+00 : f32
    %162 = vector.broadcast %cst_84 : f32 to vector<8x128xf32>
    %163 = arith.addf %162, %161 : vector<8x128xf32>
    %164 = arith.divf %162, %163 : vector<8x128xf32>
    %165 = vector.extract_strided_slice %164 {offsets = [0, 0], sizes = [8, 32], strides = [1, 1]} : vector<8x128xf32> to vector<8x32xf32>
    %166 = vector.extract_strided_slice %164 {offsets = [0, 32], sizes = [8, 32], strides = [1, 1]} : vector<8x128xf32> to vector<8x32xf32>
    %167 = vector.extract_strided_slice %164 {offsets = [0, 64], sizes = [8, 32], strides = [1, 1]} : vector<8x128xf32> to vector<8x32xf32>
    %168 = vector.extract_strided_slice %159 {offsets = [0, 96], sizes = [8, 32], strides = [1, 1]} : vector<8x128xf32> to vector<8x32xf32>
    %169 = math.tanh %168 : vector<8x32xf32>
    %170 = arith.mulf %166, %120 : vector<8x32xf32>
    %171 = arith.mulf %165, %169 : vector<8x32xf32>
    %172 = arith.addf %170, %171 : vector<8x32xf32>
    %173 = math.tanh %172 : vector<8x32xf32>
    %174 = arith.mulf %167, %173 : vector<8x32xf32>
    %c0_85 = arith.constant 0 : index
    %c0_86 = arith.constant 0 : index
    %175 = vector.load %arg16[%c0_85, %c0_86] : memref<32x128xf32, #tpu.memory_space<vmem>>, vector<32x128xf32>
    %cst_87 = arith.constant dense<0.000000e+00> : vector<8x128xf32>
    %176 = tpu.matmul %174, %175, %cst_87 {dimension_numbers = #tpu.dot_dimension_numbers<[1], [0], [0], [1], [0, 0, 1, 1], [], []>} : vector<8x32xf32>, vector<32x128xf32>, vector<8x128xf32> -> vector<8x128xf32>
    %c0_88 = arith.constant 0 : index
    %c0_89 = arith.constant 0 : index
    %177 = vector.load %arg17[%c0_88, %c0_89] : memref<1x128xf32, #tpu.memory_space<vmem>>, vector<1x128xf32>
    %178 = vector.broadcast %177 : vector<1x128xf32> to vector<8x128xf32>
    %179 = arith.addf %176, %178 : vector<8x128xf32>
    %cst_90 = arith.constant dense<0xFF800000> : vector<8xf32>
    %180 = vector.multi_reduction <maximumf>, %179, %cst_90 [1] : vector<8x128xf32> to vector<8xf32>
    %181 = vector.shape_cast %180 : vector<8xf32> to vector<8x1xf32>
    %182 = vector.broadcast %181 : vector<8x1xf32> to vector<8x128xf32>
    %183 = arith.subf %179, %182 : vector<8x128xf32>
    %184 = math.exp %183 : vector<8x128xf32>
    %cst_91 = arith.constant dense<0.000000e+00> : vector<8xf32>
    %185 = vector.multi_reduction <add>, %184, %cst_91 [1] : vector<8x128xf32> to vector<8xf32>
    %186 = vector.shape_cast %185 : vector<8xf32> to vector<8x1xf32>
    %187 = math.log %186 : vector<8x1xf32>
    %188 = vector.broadcast %187 : vector<8x1xf32> to vector<8x128xf32>
    %189 = arith.subf %183, %188 : vector<8x128xf32>
    %190 = arith.cmpi slt, %c1_i32, %24 : i32
    %191 = arith.extui %190 : i1 to i32
    %192 = arith.sitofp %191 : i32 to f32
    %193 = vector.broadcast %192 : f32 to vector<8x128xf32>
    %194 = arith.mulf %193, %149 : vector<8x128xf32>
    %195 = arith.index_cast %c1_i32 : i32 to index
    %c0_92 = arith.constant 0 : index
    %c0_93 = arith.constant 0 : index
    %196 = vector.load %arg18[%195, %c0_92, %c0_93] : memref<7x8x128xf32, #tpu.memory_space<vmem>>, vector<1x8x128xf32>
    %197 = vector.shape_cast %196 : vector<1x8x128xf32> to vector<8x128xf32>
    %198 = vector.shape_cast %194 : vector<8x128xf32> to vector<1x8x128xf32>
    tpu.vector_store %arg18[%195, %c0_92, %c0_93], %198 {strides = array<i32>} : memref<7x8x128xf32, #tpu.memory_space<vmem>>, vector<1x8x128xf32>,
    %199 = vector.broadcast %192 : f32 to vector<8x128xf32>
    %200 = arith.mulf %199, %189 : vector<8x128xf32>
    %201 = arith.index_cast %c1_i32 : i32 to index
    %c0_94 = arith.constant 0 : index
    %c0_95 = arith.constant 0 : index
    %202 = vector.load %arg19[%201, %c0_94, %c0_95] : memref<7x8x128xf32, #tpu.memory_space<vmem>>, vector<1x8x128xf32>
    %203 = vector.shape_cast %202 : vector<1x8x128xf32> to vector<8x128xf32>
    %204 = vector.shape_cast %200 : vector<8x128xf32> to vector<1x8x128xf32>
    tpu.vector_store %arg19[%201, %c0_94, %c0_95], %204 {strides = array<i32>} : memref<7x8x128xf32, #tpu.memory_space<vmem>>, vector<1x8x128xf32>,
    %205 = vector.broadcast %192 : f32 to vector<8x32xf32>
    %206 = arith.mulf %205, %174 : vector<8x32xf32>
    %cst_96 = arith.constant 1.000000e+00 : f32
    %207 = arith.subf %cst_96, %192 : f32
    %208 = vector.broadcast %207 : f32 to vector<8x32xf32>
    %209 = arith.mulf %208, %114 : vector<8x32xf32>
    %210 = arith.addf %206, %209 : vector<8x32xf32>
    %211 = vector.broadcast %192 : f32 to vector<8x32xf32>
    %212 = arith.mulf %211, %172 : vector<8x32xf32>
    %cst_97 = arith.constant 1.000000e+00 : f32
    %213 = arith.subf %cst_97, %192 : f32
    %214 = vector.broadcast %213 : f32 to vector<8x32xf32>
    %215 = arith.mulf %214, %120 : vector<8x32xf32>
    %216 = arith.addf %212, %215 : vector<8x32xf32>
    %c2_i32 = arith.constant 2 : i32
    %c8_i32_98 = arith.constant 8 : i32
    %217 = arith.muli %c2_i32, %c8_i32_98 : i32
    %218 = tpu.assume_multiple %217, 8 : i32
    %219 = arith.index_cast %218 : i32 to index
    %c0_99 = arith.constant 0 : index
    %220 = vector.load %arg20[%219, %c0_99] : memref<56x128xf32, #tpu.memory_space<vmem>>, vector<8x128xf32>
    %c0_100 = arith.constant 0 : index
    %c0_101 = arith.constant 0 : index
    %221 = vector.load %arg11[%c0_100, %c0_101] : memref<32x640xf32, #tpu.memory_space<vmem>>, vector<32x640xf32>
    %cst_102 = arith.constant dense<0.000000e+00> : vector<8x640xf32>
    %222 = tpu.matmul %210, %221, %cst_102 {dimension_numbers = #tpu.dot_dimension_numbers<[1], [0], [0], [1], [0, 0, 1, 1], [], []>} : vector<8x32xf32>, vector<32x640xf32>, vector<8x640xf32> -> vector<8x640xf32>
    %c0_103 = arith.constant 0 : index
    %c0_104 = arith.constant 0 : index
    %223 = vector.load %arg12[%c0_103, %c0_104] : memref<1x640xf32, #tpu.memory_space<vmem>>, vector<1x640xf32>
    %224 = vector.broadcast %223 : vector<1x640xf32> to vector<8x640xf32>
    %225 = arith.addf %222, %224 : vector<8x640xf32>
    %226 = vector.extract_strided_slice %225 {offsets = [0, 0], sizes = [8, 512], strides = [1, 1]} : vector<8x640xf32> to vector<8x512xf32>
    %227 = vector.extract_strided_slice %225 {offsets = [0, 512], sizes = [8, 128], strides = [1, 1]} : vector<8x640xf32> to vector<8x128xf32>
    %c0_105 = arith.constant 0 : index
    %c0_106 = arith.constant 0 : index
    %228 = vector.load %arg21[%c0_105, %c0_106] : memref<8x512xf32, #tpu.memory_space<vmem>>, vector<8x512xf32>
    %229 = arith.addf %228, %226 : vector<8x512xf32>
    %230 = math.tanh %229 : vector<8x512xf32>
    %c0_107 = arith.constant 0 : index
    %c0_108 = arith.constant 0 : index
    %231 = vector.load %arg13[%c0_107, %c0_108] : memref<512x128xf32, #tpu.memory_space<vmem>>, vector<512x128xf32>
    %cst_109 = arith.constant dense<0.000000e+00> : vector<8x128xf32>
    %232 = tpu.matmul %230, %231, %cst_109 {dimension_numbers = #tpu.dot_dimension_numbers<[1], [0], [0], [1], [0, 0, 1, 1], [], []>} : vector<8x512xf32>, vector<512x128xf32>, vector<8x128xf32> -> vector<8x128xf32>
    %c0_110 = arith.constant 0 : index
    %c0_111 = arith.constant 0 : index
    %233 = vector.load %arg14[%c0_110, %c0_111] : memref<1x128xf32, #tpu.memory_space<vmem>>, vector<1x128xf32>
    %234 = vector.broadcast %233 : vector<1x128xf32> to vector<8x128xf32>
    %235 = arith.addf %232, %234 : vector<8x128xf32>
    %cst_112 = arith.constant dense<0xFF800000> : vector<8xf32>
    %236 = vector.multi_reduction <maximumf>, %235, %cst_112 [1] : vector<8x128xf32> to vector<8xf32>
    %237 = vector.shape_cast %236 : vector<8xf32> to vector<8x1xf32>
    %238 = vector.broadcast %237 : vector<8x1xf32> to vector<8x128xf32>
    %239 = arith.subf %235, %238 : vector<8x128xf32>
    %240 = math.exp %239 : vector<8x128xf32>
    %cst_113 = arith.constant dense<0.000000e+00> : vector<8xf32>
    %241 = vector.multi_reduction <add>, %240, %cst_113 [1] : vector<8x128xf32> to vector<8xf32>
    %242 = vector.shape_cast %241 : vector<8xf32> to vector<8x1xf32>
    %243 = tpu.reciprocal %242 {approx = true} : vector<8x1xf32> -> vector<8x1xf32>
    %244 = vector.broadcast %243 : vector<8x1xf32> to vector<8x128xf32>
    %245 = arith.mulf %240, %244 : vector<8x128xf32>
    %246 = vector.extract_strided_slice %245 {offsets = [0, 0], sizes = [8, 16], strides = [1, 1]} : vector<8x128xf32> to vector<8x16xf32>
    %247 = vector.shape_cast %246 : vector<8x16xf32> to vector<8x16x1xf32>
    %c0_114 = arith.constant 0 : index
    %c0_115 = arith.constant 0 : index
    %c0_116 = arith.constant 0 : index
    %248 = vector.load %arg4[%c0_114, %c0_115, %c0_116] : memref<8x16x32xf32, #tpu.memory_space<vmem>>, vector<8x16x32xf32>
    %249 = vector.broadcast %247 : vector<8x16x1xf32> to vector<8x16x32xf32>
    %250 = arith.mulf %249, %248 : vector<8x16x32xf32>
    %cst_117 = arith.constant dense<0.000000e+00> : vector<8x32xf32>
    %251 = vector.multi_reduction <add>, %250, %cst_117 [1] : vector<8x16x32xf32> to vector<8x32xf32>
    %252 = arith.addf %220, %227 : vector<8x128xf32>
    %c0_118 = arith.constant 0 : index
    %c0_119 = arith.constant 0 : index
    %253 = vector.load %arg15[%c0_118, %c0_119] : memref<32x128xf32, #tpu.memory_space<vmem>>, vector<32x128xf32>
    %cst_120 = arith.constant dense<0.000000e+00> : vector<8x128xf32>
    %254 = tpu.matmul %251, %253, %cst_120 {dimension_numbers = #tpu.dot_dimension_numbers<[1], [0], [0], [1], [0, 0, 1, 1], [], []>} : vector<8x32xf32>, vector<32x128xf32>, vector<8x128xf32> -> vector<8x128xf32>
    %255 = arith.addf %252, %254 : vector<8x128xf32>
    %256 = arith.negf %255 : vector<8x128xf32>
    %257 = math.exp %256 : vector<8x128xf32>
    %cst_121 = arith.constant 1.000000e+00 : f32
    %258 = vector.broadcast %cst_121 : f32 to vector<8x128xf32>
    %259 = arith.addf %258, %257 : vector<8x128xf32>
    %260 = arith.divf %258, %259 : vector<8x128xf32>
    %261 = vector.extract_strided_slice %260 {offsets = [0, 0], sizes = [8, 32], strides = [1, 1]} : vector<8x128xf32> to vector<8x32xf32>
    %262 = vector.extract_strided_slice %260 {offsets = [0, 32], sizes = [8, 32], strides = [1, 1]} : vector<8x128xf32> to vector<8x32xf32>
    %263 = vector.extract_strided_slice %260 {offsets = [0, 64], sizes = [8, 32], strides = [1, 1]} : vector<8x128xf32> to vector<8x32xf32>
    %264 = vector.extract_strided_slice %255 {offsets = [0, 96], sizes = [8, 32], strides = [1, 1]} : vector<8x128xf32> to vector<8x32xf32>
    %265 = math.tanh %264 : vector<8x32xf32>
    %266 = arith.mulf %262, %216 : vector<8x32xf32>
    %267 = arith.mulf %261, %265 : vector<8x32xf32>
    %268 = arith.addf %266, %267 : vector<8x32xf32>
    %269 = math.tanh %268 : vector<8x32xf32>
    %270 = arith.mulf %263, %269 : vector<8x32xf32>
    %c0_122 = arith.constant 0 : index
    %c0_123 = arith.constant 0 : index
    %271 = vector.load %arg16[%c0_122, %c0_123] : memref<32x128xf32, #tpu.memory_space<vmem>>, vector<32x128xf32>
    %cst_124 = arith.constant dense<0.000000e+00> : vector<8x128xf32>
    %272 = tpu.matmul %270, %271, %cst_124 {dimension_numbers = #tpu.dot_dimension_numbers<[1], [0], [0], [1], [0, 0, 1, 1], [], []>} : vector<8x32xf32>, vector<32x128xf32>, vector<8x128xf32> -> vector<8x128xf32>
    %c0_125 = arith.constant 0 : index
    %c0_126 = arith.constant 0 : index
    %273 = vector.load %arg17[%c0_125, %c0_126] : memref<1x128xf32, #tpu.memory_space<vmem>>, vector<1x128xf32>
    %274 = vector.broadcast %273 : vector<1x128xf32> to vector<8x128xf32>
    %275 = arith.addf %272, %274 : vector<8x128xf32>
    %cst_127 = arith.constant dense<0xFF800000> : vector<8xf32>
    %276 = vector.multi_reduction <maximumf>, %275, %cst_127 [1] : vector<8x128xf32> to vector<8xf32>
    %277 = vector.shape_cast %276 : vector<8xf32> to vector<8x1xf32>
    %278 = vector.broadcast %277 : vector<8x1xf32> to vector<8x128xf32>
    %279 = arith.subf %275, %278 : vector<8x128xf32>
    %280 = math.exp %279 : vector<8x128xf32>
    %cst_128 = arith.constant dense<0.000000e+00> : vector<8xf32>
    %281 = vector.multi_reduction <add>, %280, %cst_128 [1] : vector<8x128xf32> to vector<8xf32>
    %282 = vector.shape_cast %281 : vector<8xf32> to vector<8x1xf32>
    %283 = math.log %282 : vector<8x1xf32>
    %284 = vector.broadcast %283 : vector<8x1xf32> to vector<8x128xf32>
    %285 = arith.subf %279, %284 : vector<8x128xf32>
    %286 = arith.cmpi slt, %c2_i32, %24 : i32
    %287 = arith.extui %286 : i1 to i32
    %288 = arith.sitofp %287 : i32 to f32
    %289 = vector.broadcast %288 : f32 to vector<8x128xf32>
    %290 = arith.mulf %289, %245 : vector<8x128xf32>
    %291 = arith.index_cast %c2_i32 : i32 to index
    %c0_129 = arith.constant 0 : index
    %c0_130 = arith.constant 0 : index
    %292 = vector.load %arg18[%291, %c0_129, %c0_130] : memref<7x8x128xf32, #tpu.memory_space<vmem>>, vector<1x8x128xf32>
    %293 = vector.shape_cast %292 : vector<1x8x128xf32> to vector<8x128xf32>
    %294 = vector.shape_cast %290 : vector<8x128xf32> to vector<1x8x128xf32>
    tpu.vector_store %arg18[%291, %c0_129, %c0_130], %294 {strides = array<i32>} : memref<7x8x128xf32, #tpu.memory_space<vmem>>, vector<1x8x128xf32>,
    %295 = vector.broadcast %288 : f32 to vector<8x128xf32>
    %296 = arith.mulf %295, %285 : vector<8x128xf32>
    %297 = arith.index_cast %c2_i32 : i32 to index
    %c0_131 = arith.constant 0 : index
    %c0_132 = arith.constant 0 : index
    %298 = vector.load %arg19[%297, %c0_131, %c0_132] : memref<7x8x128xf32, #tpu.memory_space<vmem>>, vector<1x8x128xf32>
    %299 = vector.shape_cast %298 : vector<1x8x128xf32> to vector<8x128xf32>
    %300 = vector.shape_cast %296 : vector<8x128xf32> to vector<1x8x128xf32>
    tpu.vector_store %arg19[%297, %c0_131, %c0_132], %300 {strides = array<i32>} : memref<7x8x128xf32, #tpu.memory_space<vmem>>, vector<1x8x128xf32>,
    %301 = vector.broadcast %288 : f32 to vector<8x32xf32>
    %302 = arith.mulf %301, %270 : vector<8x32xf32>
    %cst_133 = arith.constant 1.000000e+00 : f32
    %303 = arith.subf %cst_133, %288 : f32
    %304 = vector.broadcast %303 : f32 to vector<8x32xf32>
    %305 = arith.mulf %304, %210 : vector<8x32xf32>
    %306 = arith.addf %302, %305 : vector<8x32xf32>
    %307 = vector.broadcast %288 : f32 to vector<8x32xf32>
    %308 = arith.mulf %307, %268 : vector<8x32xf32>
    %cst_134 = arith.constant 1.000000e+00 : f32
    %309 = arith.subf %cst_134, %288 : f32
    %310 = vector.broadcast %309 : f32 to vector<8x32xf32>
    %311 = arith.mulf %310, %216 : vector<8x32xf32>
    %312 = arith.addf %308, %311 : vector<8x32xf32>
    %c3_i32 = arith.constant 3 : i32
    %c8_i32_135 = arith.constant 8 : i32
    %313 = arith.muli %c3_i32, %c8_i32_135 : i32
    %314 = tpu.assume_multiple %313, 8 : i32
    %315 = arith.index_cast %314 : i32 to index
    %c0_136 = arith.constant 0 : index
    %316 = vector.load %arg20[%315, %c0_136] : memref<56x128xf32, #tpu.memory_space<vmem>>, vector<8x128xf32>
    %c0_137 = arith.constant 0 : index
    %c0_138 = arith.constant 0 : index
    %317 = vector.load %arg11[%c0_137, %c0_138] : memref<32x640xf32, #tpu.memory_space<vmem>>, vector<32x640xf32>
    %cst_139 = arith.constant dense<0.000000e+00> : vector<8x640xf32>
    %318 = tpu.matmul %306, %317, %cst_139 {dimension_numbers = #tpu.dot_dimension_numbers<[1], [0], [0], [1], [0, 0, 1, 1], [], []>} : vector<8x32xf32>, vector<32x640xf32>, vector<8x640xf32> -> vector<8x640xf32>
    %c0_140 = arith.constant 0 : index
    %c0_141 = arith.constant 0 : index
    %319 = vector.load %arg12[%c0_140, %c0_141] : memref<1x640xf32, #tpu.memory_space<vmem>>, vector<1x640xf32>
    %320 = vector.broadcast %319 : vector<1x640xf32> to vector<8x640xf32>
    %321 = arith.addf %318, %320 : vector<8x640xf32>
    %322 = vector.extract_strided_slice %321 {offsets = [0, 0], sizes = [8, 512], strides = [1, 1]} : vector<8x640xf32> to vector<8x512xf32>
    %323 = vector.extract_strided_slice %321 {offsets = [0, 512], sizes = [8, 128], strides = [1, 1]} : vector<8x640xf32> to vector<8x128xf32>
    %c0_142 = arith.constant 0 : index
    %c0_143 = arith.constant 0 : index
    %324 = vector.load %arg21[%c0_142, %c0_143] : memref<8x512xf32, #tpu.memory_space<vmem>>, vector<8x512xf32>
    %325 = arith.addf %324, %322 : vector<8x512xf32>
    %326 = math.tanh %325 : vector<8x512xf32>
    %c0_144 = arith.constant 0 : index
    %c0_145 = arith.constant 0 : index
    %327 = vector.load %arg13[%c0_144, %c0_145] : memref<512x128xf32, #tpu.memory_space<vmem>>, vector<512x128xf32>
    %cst_146 = arith.constant dense<0.000000e+00> : vector<8x128xf32>
    %328 = tpu.matmul %326, %327, %cst_146 {dimension_numbers = #tpu.dot_dimension_numbers<[1], [0], [0], [1], [0, 0, 1, 1], [], []>} : vector<8x512xf32>, vector<512x128xf32>, vector<8x128xf32> -> vector<8x128xf32>
    %c0_147 = arith.constant 0 : index
    %c0_148 = arith.constant 0 : index
    %329 = vector.load %arg14[%c0_147, %c0_148] : memref<1x128xf32, #tpu.memory_space<vmem>>, vector<1x128xf32>
    %330 = vector.broadcast %329 : vector<1x128xf32> to vector<8x128xf32>
    %331 = arith.addf %328, %330 : vector<8x128xf32>
    %cst_149 = arith.constant dense<0xFF800000> : vector<8xf32>
    %332 = vector.multi_reduction <maximumf>, %331, %cst_149 [1] : vector<8x128xf32> to vector<8xf32>
    %333 = vector.shape_cast %332 : vector<8xf32> to vector<8x1xf32>
    %334 = vector.broadcast %333 : vector<8x1xf32> to vector<8x128xf32>
    %335 = arith.subf %331, %334 : vector<8x128xf32>
    %336 = math.exp %335 : vector<8x128xf32>
    %cst_150 = arith.constant dense<0.000000e+00> : vector<8xf32>
    %337 = vector.multi_reduction <add>, %336, %cst_150 [1] : vector<8x128xf32> to vector<8xf32>
    %338 = vector.shape_cast %337 : vector<8xf32> to vector<8x1xf32>
    %339 = tpu.reciprocal %338 {approx = true} : vector<8x1xf32> -> vector<8x1xf32>
    %340 = vector.broadcast %339 : vector<8x1xf32> to vector<8x128xf32>
    %341 = arith.mulf %336, %340 : vector<8x128xf32>
    %342 = vector.extract_strided_slice %341 {offsets = [0, 0], sizes = [8, 16], strides = [1, 1]} : vector<8x128xf32> to vector<8x16xf32>
    %343 = vector.shape_cast %342 : vector<8x16xf32> to vector<8x16x1xf32>
    %c0_151 = arith.constant 0 : index
    %c0_152 = arith.constant 0 : index
    %c0_153 = arith.constant 0 : index
    %344 = vector.load %arg4[%c0_151, %c0_152, %c0_153] : memref<8x16x32xf32, #tpu.memory_space<vmem>>, vector<8x16x32xf32>
    %345 = vector.broadcast %343 : vector<8x16x1xf32> to vector<8x16x32xf32>
    %346 = arith.mulf %345, %344 : vector<8x16x32xf32>
    %cst_154 = arith.constant dense<0.000000e+00> : vector<8x32xf32>
    %347 = vector.multi_reduction <add>, %346, %cst_154 [1] : vector<8x16x32xf32> to vector<8x32xf32>
    %348 = arith.addf %316, %323 : vector<8x128xf32>
    %c0_155 = arith.constant 0 : index
    %c0_156 = arith.constant 0 : index
    %349 = vector.load %arg15[%c0_155, %c0_156] : memref<32x128xf32, #tpu.memory_space<vmem>>, vector<32x128xf32>
    %cst_157 = arith.constant dense<0.000000e+00> : vector<8x128xf32>
    %350 = tpu.matmul %347, %349, %cst_157 {dimension_numbers = #tpu.dot_dimension_numbers<[1], [0], [0], [1], [0, 0, 1, 1], [], []>} : vector<8x32xf32>, vector<32x128xf32>, vector<8x128xf32> -> vector<8x128xf32>
    %351 = arith.addf %348, %350 : vector<8x128xf32>
    %352 = arith.negf %351 : vector<8x128xf32>
    %353 = math.exp %352 : vector<8x128xf32>
    %cst_158 = arith.constant 1.000000e+00 : f32
    %354 = vector.broadcast %cst_158 : f32 to vector<8x128xf32>
    %355 = arith.addf %354, %353 : vector<8x128xf32>
    %356 = arith.divf %354, %355 : vector<8x128xf32>
    %357 = vector.extract_strided_slice %356 {offsets = [0, 0], sizes = [8, 32], strides = [1, 1]} : vector<8x128xf32> to vector<8x32xf32>
    %358 = vector.extract_strided_slice %356 {offsets = [0, 32], sizes = [8, 32], strides = [1, 1]} : vector<8x128xf32> to vector<8x32xf32>
    %359 = vector.extract_strided_slice %356 {offsets = [0, 64], sizes = [8, 32], strides = [1, 1]} : vector<8x128xf32> to vector<8x32xf32>
    %360 = vector.extract_strided_slice %351 {offsets = [0, 96], sizes = [8, 32], strides = [1, 1]} : vector<8x128xf32> to vector<8x32xf32>
    %361 = math.tanh %360 : vector<8x32xf32>
    %362 = arith.mulf %358, %312 : vector<8x32xf32>
    %363 = arith.mulf %357, %361 : vector<8x32xf32>
    %364 = arith.addf %362, %363 : vector<8x32xf32>
    %365 = math.tanh %364 : vector<8x32xf32>
    %366 = arith.mulf %359, %365 : vector<8x32xf32>
    %c0_159 = arith.constant 0 : index
    %c0_160 = arith.constant 0 : index
    %367 = vector.load %arg16[%c0_159, %c0_160] : memref<32x128xf32, #tpu.memory_space<vmem>>, vector<32x128xf32>
    %cst_161 = arith.constant dense<0.000000e+00> : vector<8x128xf32>
    %368 = tpu.matmul %366, %367, %cst_161 {dimension_numbers = #tpu.dot_dimension_numbers<[1], [0], [0], [1], [0, 0, 1, 1], [], []>} : vector<8x32xf32>, vector<32x128xf32>, vector<8x128xf32> -> vector<8x128xf32>
    %c0_162 = arith.constant 0 : index
    %c0_163 = arith.constant 0 : index
    %369 = vector.load %arg17[%c0_162, %c0_163] : memref<1x128xf32, #tpu.memory_space<vmem>>, vector<1x128xf32>
    %370 = vector.broadcast %369 : vector<1x128xf32> to vector<8x128xf32>
    %371 = arith.addf %368, %370 : vector<8x128xf32>
    %cst_164 = arith.constant dense<0xFF800000> : vector<8xf32>
    %372 = vector.multi_reduction <maximumf>, %371, %cst_164 [1] : vector<8x128xf32> to vector<8xf32>
    %373 = vector.shape_cast %372 : vector<8xf32> to vector<8x1xf32>
    %374 = vector.broadcast %373 : vector<8x1xf32> to vector<8x128xf32>
    %375 = arith.subf %371, %374 : vector<8x128xf32>
    %376 = math.exp %375 : vector<8x128xf32>
    %cst_165 = arith.constant dense<0.000000e+00> : vector<8xf32>
    %377 = vector.multi_reduction <add>, %376, %cst_165 [1] : vector<8x128xf32> to vector<8xf32>
    %378 = vector.shape_cast %377 : vector<8xf32> to vector<8x1xf32>
    %379 = math.log %378 : vector<8x1xf32>
    %380 = vector.broadcast %379 : vector<8x1xf32> to vector<8x128xf32>
    %381 = arith.subf %375, %380 : vector<8x128xf32>
    %382 = arith.cmpi slt, %c3_i32, %24 : i32
    %383 = arith.extui %382 : i1 to i32
    %384 = arith.sitofp %383 : i32 to f32
    %385 = vector.broadcast %384 : f32 to vector<8x128xf32>
    %386 = arith.mulf %385, %341 : vector<8x128xf32>
    %387 = arith.index_cast %c3_i32 : i32 to index
    %c0_166 = arith.constant 0 : index
    %c0_167 = arith.constant 0 : index
    %388 = vector.load %arg18[%387, %c0_166, %c0_167] : memref<7x8x128xf32, #tpu.memory_space<vmem>>, vector<1x8x128xf32>
    %389 = vector.shape_cast %388 : vector<1x8x128xf32> to vector<8x128xf32>
    %390 = vector.shape_cast %386 : vector<8x128xf32> to vector<1x8x128xf32>
    tpu.vector_store %arg18[%387, %c0_166, %c0_167], %390 {strides = array<i32>} : memref<7x8x128xf32, #tpu.memory_space<vmem>>, vector<1x8x128xf32>,
    %391 = vector.broadcast %384 : f32 to vector<8x128xf32>
    %392 = arith.mulf %391, %381 : vector<8x128xf32>
    %393 = arith.index_cast %c3_i32 : i32 to index
    %c0_168 = arith.constant 0 : index
    %c0_169 = arith.constant 0 : index
    %394 = vector.load %arg19[%393, %c0_168, %c0_169] : memref<7x8x128xf32, #tpu.memory_space<vmem>>, vector<1x8x128xf32>
    %395 = vector.shape_cast %394 : vector<1x8x128xf32> to vector<8x128xf32>
    %396 = vector.shape_cast %392 : vector<8x128xf32> to vector<1x8x128xf32>
    tpu.vector_store %arg19[%393, %c0_168, %c0_169], %396 {strides = array<i32>} : memref<7x8x128xf32, #tpu.memory_space<vmem>>, vector<1x8x128xf32>,
    %397 = vector.broadcast %384 : f32 to vector<8x32xf32>
    %398 = arith.mulf %397, %366 : vector<8x32xf32>
    %cst_170 = arith.constant 1.000000e+00 : f32
    %399 = arith.subf %cst_170, %384 : f32
    %400 = vector.broadcast %399 : f32 to vector<8x32xf32>
    %401 = arith.mulf %400, %306 : vector<8x32xf32>
    %402 = arith.addf %398, %401 : vector<8x32xf32>
    %403 = vector.broadcast %384 : f32 to vector<8x32xf32>
    %404 = arith.mulf %403, %364 : vector<8x32xf32>
    %cst_171 = arith.constant 1.000000e+00 : f32
    %405 = arith.subf %cst_171, %384 : f32
    %406 = vector.broadcast %405 : f32 to vector<8x32xf32>
    %407 = arith.mulf %406, %312 : vector<8x32xf32>
    %408 = arith.addf %404, %407 : vector<8x32xf32>
    %c4_i32 = arith.constant 4 : i32
    %c8_i32_172 = arith.constant 8 : i32
    %409 = arith.muli %c4_i32, %c8_i32_172 : i32
    %410 = tpu.assume_multiple %409, 8 : i32
    %411 = arith.index_cast %410 : i32 to index
    %c0_173 = arith.constant 0 : index
    %412 = vector.load %arg20[%411, %c0_173] : memref<56x128xf32, #tpu.memory_space<vmem>>, vector<8x128xf32>
    %c0_174 = arith.constant 0 : index
    %c0_175 = arith.constant 0 : index
    %413 = vector.load %arg11[%c0_174, %c0_175] : memref<32x640xf32, #tpu.memory_space<vmem>>, vector<32x640xf32>
    %cst_176 = arith.constant dense<0.000000e+00> : vector<8x640xf32>
    %414 = tpu.matmul %402, %413, %cst_176 {dimension_numbers = #tpu.dot_dimension_numbers<[1], [0], [0], [1], [0, 0, 1, 1], [], []>} : vector<8x32xf32>, vector<32x640xf32>, vector<8x640xf32> -> vector<8x640xf32>
    %c0_177 = arith.constant 0 : index
    %c0_178 = arith.constant 0 : index
    %415 = vector.load %arg12[%c0_177, %c0_178] : memref<1x640xf32, #tpu.memory_space<vmem>>, vector<1x640xf32>
    %416 = vector.broadcast %415 : vector<1x640xf32> to vector<8x640xf32>
    %417 = arith.addf %414, %416 : vector<8x640xf32>
    %418 = vector.extract_strided_slice %417 {offsets = [0, 0], sizes = [8, 512], strides = [1, 1]} : vector<8x640xf32> to vector<8x512xf32>
    %419 = vector.extract_strided_slice %417 {offsets = [0, 512], sizes = [8, 128], strides = [1, 1]} : vector<8x640xf32> to vector<8x128xf32>
    %c0_179 = arith.constant 0 : index
    %c0_180 = arith.constant 0 : index
    %420 = vector.load %arg21[%c0_179, %c0_180] : memref<8x512xf32, #tpu.memory_space<vmem>>, vector<8x512xf32>
    %421 = arith.addf %420, %418 : vector<8x512xf32>
    %422 = math.tanh %421 : vector<8x512xf32>
    %c0_181 = arith.constant 0 : index
    %c0_182 = arith.constant 0 : index
    %423 = vector.load %arg13[%c0_181, %c0_182] : memref<512x128xf32, #tpu.memory_space<vmem>>, vector<512x128xf32>
    %cst_183 = arith.constant dense<0.000000e+00> : vector<8x128xf32>
    %424 = tpu.matmul %422, %423, %cst_183 {dimension_numbers = #tpu.dot_dimension_numbers<[1], [0], [0], [1], [0, 0, 1, 1], [], []>} : vector<8x512xf32>, vector<512x128xf32>, vector<8x128xf32> -> vector<8x128xf32>
    %c0_184 = arith.constant 0 : index
    %c0_185 = arith.constant 0 : index
    %425 = vector.load %arg14[%c0_184, %c0_185] : memref<1x128xf32, #tpu.memory_space<vmem>>, vector<1x128xf32>
    %426 = vector.broadcast %425 : vector<1x128xf32> to vector<8x128xf32>
    %427 = arith.addf %424, %426 : vector<8x128xf32>
    %cst_186 = arith.constant dense<0xFF800000> : vector<8xf32>
    %428 = vector.multi_reduction <maximumf>, %427, %cst_186 [1] : vector<8x128xf32> to vector<8xf32>
    %429 = vector.shape_cast %428 : vector<8xf32> to vector<8x1xf32>
    %430 = vector.broadcast %429 : vector<8x1xf32> to vector<8x128xf32>
    %431 = arith.subf %427, %430 : vector<8x128xf32>
    %432 = math.exp %431 : vector<8x128xf32>
    %cst_187 = arith.constant dense<0.000000e+00> : vector<8xf32>
    %433 = vector.multi_reduction <add>, %432, %cst_187 [1] : vector<8x128xf32> to vector<8xf32>
    %434 = vector.shape_cast %433 : vector<8xf32> to vector<8x1xf32>
    %435 = tpu.reciprocal %434 {approx = true} : vector<8x1xf32> -> vector<8x1xf32>
    %436 = vector.broadcast %435 : vector<8x1xf32> to vector<8x128xf32>
    %437 = arith.mulf %432, %436 : vector<8x128xf32>
    %438 = vector.extract_strided_slice %437 {offsets = [0, 0], sizes = [8, 16], strides = [1, 1]} : vector<8x128xf32> to vector<8x16xf32>
    %439 = vector.shape_cast %438 : vector<8x16xf32> to vector<8x16x1xf32>
    %c0_188 = arith.constant 0 : index
    %c0_189 = arith.constant 0 : index
    %c0_190 = arith.constant 0 : index
    %440 = vector.load %arg4[%c0_188, %c0_189, %c0_190] : memref<8x16x32xf32, #tpu.memory_space<vmem>>, vector<8x16x32xf32>
    %441 = vector.broadcast %439 : vector<8x16x1xf32> to vector<8x16x32xf32>
    %442 = arith.mulf %441, %440 : vector<8x16x32xf32>
    %cst_191 = arith.constant dense<0.000000e+00> : vector<8x32xf32>
    %443 = vector.multi_reduction <add>, %442, %cst_191 [1] : vector<8x16x32xf32> to vector<8x32xf32>
    %444 = arith.addf %412, %419 : vector<8x128xf32>
    %c0_192 = arith.constant 0 : index
    %c0_193 = arith.constant 0 : index
    %445 = vector.load %arg15[%c0_192, %c0_193] : memref<32x128xf32, #tpu.memory_space<vmem>>, vector<32x128xf32>
    %cst_194 = arith.constant dense<0.000000e+00> : vector<8x128xf32>
    %446 = tpu.matmul %443, %445, %cst_194 {dimension_numbers = #tpu.dot_dimension_numbers<[1], [0], [0], [1], [0, 0, 1, 1], [], []>} : vector<8x32xf32>, vector<32x128xf32>, vector<8x128xf32> -> vector<8x128xf32>
    %447 = arith.addf %444, %446 : vector<8x128xf32>
    %448 = arith.negf %447 : vector<8x128xf32>
    %449 = math.exp %448 : vector<8x128xf32>
    %cst_195 = arith.constant 1.000000e+00 : f32
    %450 = vector.broadcast %cst_195 : f32 to vector<8x128xf32>
    %451 = arith.addf %450, %449 : vector<8x128xf32>
    %452 = arith.divf %450, %451 : vector<8x128xf32>
    %453 = vector.extract_strided_slice %452 {offsets = [0, 0], sizes = [8, 32], strides = [1, 1]} : vector<8x128xf32> to vector<8x32xf32>
    %454 = vector.extract_strided_slice %452 {offsets = [0, 32], sizes = [8, 32], strides = [1, 1]} : vector<8x128xf32> to vector<8x32xf32>
    %455 = vector.extract_strided_slice %452 {offsets = [0, 64], sizes = [8, 32], strides = [1, 1]} : vector<8x128xf32> to vector<8x32xf32>
    %456 = vector.extract_strided_slice %447 {offsets = [0, 96], sizes = [8, 32], strides = [1, 1]} : vector<8x128xf32> to vector<8x32xf32>
    %457 = math.tanh %456 : vector<8x32xf32>
    %458 = arith.mulf %454, %408 : vector<8x32xf32>
    %459 = arith.mulf %453, %457 : vector<8x32xf32>
    %460 = arith.addf %458, %459 : vector<8x32xf32>
    %461 = math.tanh %460 : vector<8x32xf32>
    %462 = arith.mulf %455, %461 : vector<8x32xf32>
    %c0_196 = arith.constant 0 : index
    %c0_197 = arith.constant 0 : index
    %463 = vector.load %arg16[%c0_196, %c0_197] : memref<32x128xf32, #tpu.memory_space<vmem>>, vector<32x128xf32>
    %cst_198 = arith.constant dense<0.000000e+00> : vector<8x128xf32>
    %464 = tpu.matmul %462, %463, %cst_198 {dimension_numbers = #tpu.dot_dimension_numbers<[1], [0], [0], [1], [0, 0, 1, 1], [], []>} : vector<8x32xf32>, vector<32x128xf32>, vector<8x128xf32> -> vector<8x128xf32>
    %c0_199 = arith.constant 0 : index
    %c0_200 = arith.constant 0 : index
    %465 = vector.load %arg17[%c0_199, %c0_200] : memref<1x128xf32, #tpu.memory_space<vmem>>, vector<1x128xf32>
    %466 = vector.broadcast %465 : vector<1x128xf32> to vector<8x128xf32>
    %467 = arith.addf %464, %466 : vector<8x128xf32>
    %cst_201 = arith.constant dense<0xFF800000> : vector<8xf32>
    %468 = vector.multi_reduction <maximumf>, %467, %cst_201 [1] : vector<8x128xf32> to vector<8xf32>
    %469 = vector.shape_cast %468 : vector<8xf32> to vector<8x1xf32>
    %470 = vector.broadcast %469 : vector<8x1xf32> to vector<8x128xf32>
    %471 = arith.subf %467, %470 : vector<8x128xf32>
    %472 = math.exp %471 : vector<8x128xf32>
    %cst_202 = arith.constant dense<0.000000e+00> : vector<8xf32>
    %473 = vector.multi_reduction <add>, %472, %cst_202 [1] : vector<8x128xf32> to vector<8xf32>
    %474 = vector.shape_cast %473 : vector<8xf32> to vector<8x1xf32>
    %475 = math.log %474 : vector<8x1xf32>
    %476 = vector.broadcast %475 : vector<8x1xf32> to vector<8x128xf32>
    %477 = arith.subf %471, %476 : vector<8x128xf32>
    %478 = arith.cmpi slt, %c4_i32, %24 : i32
    %479 = arith.extui %478 : i1 to i32
    %480 = arith.sitofp %479 : i32 to f32
    %481 = vector.broadcast %480 : f32 to vector<8x128xf32>
    %482 = arith.mulf %481, %437 : vector<8x128xf32>
    %483 = arith.index_cast %c4_i32 : i32 to index
    %c0_203 = arith.constant 0 : index
    %c0_204 = arith.constant 0 : index
    %484 = vector.load %arg18[%483, %c0_203, %c0_204] : memref<7x8x128xf32, #tpu.memory_space<vmem>>, vector<1x8x128xf32>
    %485 = vector.shape_cast %484 : vector<1x8x128xf32> to vector<8x128xf32>
    %486 = vector.shape_cast %482 : vector<8x128xf32> to vector<1x8x128xf32>
    tpu.vector_store %arg18[%483, %c0_203, %c0_204], %486 {strides = array<i32>} : memref<7x8x128xf32, #tpu.memory_space<vmem>>, vector<1x8x128xf32>,
    %487 = vector.broadcast %480 : f32 to vector<8x128xf32>
    %488 = arith.mulf %487, %477 : vector<8x128xf32>
    %489 = arith.index_cast %c4_i32 : i32 to index
    %c0_205 = arith.constant 0 : index
    %c0_206 = arith.constant 0 : index
    %490 = vector.load %arg19[%489, %c0_205, %c0_206] : memref<7x8x128xf32, #tpu.memory_space<vmem>>, vector<1x8x128xf32>
    %491 = vector.shape_cast %490 : vector<1x8x128xf32> to vector<8x128xf32>
    %492 = vector.shape_cast %488 : vector<8x128xf32> to vector<1x8x128xf32>
    tpu.vector_store %arg19[%489, %c0_205, %c0_206], %492 {strides = array<i32>} : memref<7x8x128xf32, #tpu.memory_space<vmem>>, vector<1x8x128xf32>,
    %493 = vector.broadcast %480 : f32 to vector<8x32xf32>
    %494 = arith.mulf %493, %462 : vector<8x32xf32>
    %cst_207 = arith.constant 1.000000e+00 : f32
    %495 = arith.subf %cst_207, %480 : f32
    %496 = vector.broadcast %495 : f32 to vector<8x32xf32>
    %497 = arith.mulf %496, %402 : vector<8x32xf32>
    %498 = arith.addf %494, %497 : vector<8x32xf32>
    %499 = vector.broadcast %480 : f32 to vector<8x32xf32>
    %500 = arith.mulf %499, %460 : vector<8x32xf32>
    %cst_208 = arith.constant 1.000000e+00 : f32
    %501 = arith.subf %cst_208, %480 : f32
    %502 = vector.broadcast %501 : f32 to vector<8x32xf32>
    %503 = arith.mulf %502, %408 : vector<8x32xf32>
    %504 = arith.addf %500, %503 : vector<8x32xf32>
    %c5_i32 = arith.constant 5 : i32
    %c8_i32_209 = arith.constant 8 : i32
    %505 = arith.muli %c5_i32, %c8_i32_209 : i32
    %506 = tpu.assume_multiple %505, 8 : i32
    %507 = arith.index_cast %506 : i32 to index
    %c0_210 = arith.constant 0 : index
    %508 = vector.load %arg20[%507, %c0_210] : memref<56x128xf32, #tpu.memory_space<vmem>>, vector<8x128xf32>
    %c0_211 = arith.constant 0 : index
    %c0_212 = arith.constant 0 : index
    %509 = vector.load %arg11[%c0_211, %c0_212] : memref<32x640xf32, #tpu.memory_space<vmem>>, vector<32x640xf32>
    %cst_213 = arith.constant dense<0.000000e+00> : vector<8x640xf32>
    %510 = tpu.matmul %498, %509, %cst_213 {dimension_numbers = #tpu.dot_dimension_numbers<[1], [0], [0], [1], [0, 0, 1, 1], [], []>} : vector<8x32xf32>, vector<32x640xf32>, vector<8x640xf32> -> vector<8x640xf32>
    %c0_214 = arith.constant 0 : index
    %c0_215 = arith.constant 0 : index
    %511 = vector.load %arg12[%c0_214, %c0_215] : memref<1x640xf32, #tpu.memory_space<vmem>>, vector<1x640xf32>
    %512 = vector.broadcast %511 : vector<1x640xf32> to vector<8x640xf32>
    %513 = arith.addf %510, %512 : vector<8x640xf32>
    %514 = vector.extract_strided_slice %513 {offsets = [0, 0], sizes = [8, 512], strides = [1, 1]} : vector<8x640xf32> to vector<8x512xf32>
    %515 = vector.extract_strided_slice %513 {offsets = [0, 512], sizes = [8, 128], strides = [1, 1]} : vector<8x640xf32> to vector<8x128xf32>
    %c0_216 = arith.constant 0 : index
    %c0_217 = arith.constant 0 : index
    %516 = vector.load %arg21[%c0_216, %c0_217] : memref<8x512xf32, #tpu.memory_space<vmem>>, vector<8x512xf32>
    %517 = arith.addf %516, %514 : vector<8x512xf32>
    %518 = math.tanh %517 : vector<8x512xf32>
    %c0_218 = arith.constant 0 : index
    %c0_219 = arith.constant 0 : index
    %519 = vector.load %arg13[%c0_218, %c0_219] : memref<512x128xf32, #tpu.memory_space<vmem>>, vector<512x128xf32>
    %cst_220 = arith.constant dense<0.000000e+00> : vector<8x128xf32>
    %520 = tpu.matmul %518, %519, %cst_220 {dimension_numbers = #tpu.dot_dimension_numbers<[1], [0], [0], [1], [0, 0, 1, 1], [], []>} : vector<8x512xf32>, vector<512x128xf32>, vector<8x128xf32> -> vector<8x128xf32>
    %c0_221 = arith.constant 0 : index
    %c0_222 = arith.constant 0 : index
    %521 = vector.load %arg14[%c0_221, %c0_222] : memref<1x128xf32, #tpu.memory_space<vmem>>, vector<1x128xf32>
    %522 = vector.broadcast %521 : vector<1x128xf32> to vector<8x128xf32>
    %523 = arith.addf %520, %522 : vector<8x128xf32>
    %cst_223 = arith.constant dense<0xFF800000> : vector<8xf32>
    %524 = vector.multi_reduction <maximumf>, %523, %cst_223 [1] : vector<8x128xf32> to vector<8xf32>
    %525 = vector.shape_cast %524 : vector<8xf32> to vector<8x1xf32>
    %526 = vector.broadcast %525 : vector<8x1xf32> to vector<8x128xf32>
    %527 = arith.subf %523, %526 : vector<8x128xf32>
    %528 = math.exp %527 : vector<8x128xf32>
    %cst_224 = arith.constant dense<0.000000e+00> : vector<8xf32>
    %529 = vector.multi_reduction <add>, %528, %cst_224 [1] : vector<8x128xf32> to vector<8xf32>
    %530 = vector.shape_cast %529 : vector<8xf32> to vector<8x1xf32>
    %531 = tpu.reciprocal %530 {approx = true} : vector<8x1xf32> -> vector<8x1xf32>
    %532 = vector.broadcast %531 : vector<8x1xf32> to vector<8x128xf32>
    %533 = arith.mulf %528, %532 : vector<8x128xf32>
    %534 = vector.extract_strided_slice %533 {offsets = [0, 0], sizes = [8, 16], strides = [1, 1]} : vector<8x128xf32> to vector<8x16xf32>
    %535 = vector.shape_cast %534 : vector<8x16xf32> to vector<8x16x1xf32>
    %c0_225 = arith.constant 0 : index
    %c0_226 = arith.constant 0 : index
    %c0_227 = arith.constant 0 : index
    %536 = vector.load %arg4[%c0_225, %c0_226, %c0_227] : memref<8x16x32xf32, #tpu.memory_space<vmem>>, vector<8x16x32xf32>
    %537 = vector.broadcast %535 : vector<8x16x1xf32> to vector<8x16x32xf32>
    %538 = arith.mulf %537, %536 : vector<8x16x32xf32>
    %cst_228 = arith.constant dense<0.000000e+00> : vector<8x32xf32>
    %539 = vector.multi_reduction <add>, %538, %cst_228 [1] : vector<8x16x32xf32> to vector<8x32xf32>
    %540 = arith.addf %508, %515 : vector<8x128xf32>
    %c0_229 = arith.constant 0 : index
    %c0_230 = arith.constant 0 : index
    %541 = vector.load %arg15[%c0_229, %c0_230] : memref<32x128xf32, #tpu.memory_space<vmem>>, vector<32x128xf32>
    %cst_231 = arith.constant dense<0.000000e+00> : vector<8x128xf32>
    %542 = tpu.matmul %539, %541, %cst_231 {dimension_numbers = #tpu.dot_dimension_numbers<[1], [0], [0], [1], [0, 0, 1, 1], [], []>} : vector<8x32xf32>, vector<32x128xf32>, vector<8x128xf32> -> vector<8x128xf32>
    %543 = arith.addf %540, %542 : vector<8x128xf32>
    %544 = arith.negf %543 : vector<8x128xf32>
    %545 = math.exp %544 : vector<8x128xf32>
    %cst_232 = arith.constant 1.000000e+00 : f32
    %546 = vector.broadcast %cst_232 : f32 to vector<8x128xf32>
    %547 = arith.addf %546, %545 : vector<8x128xf32>
    %548 = arith.divf %546, %547 : vector<8x128xf32>
    %549 = vector.extract_strided_slice %548 {offsets = [0, 0], sizes = [8, 32], strides = [1, 1]} : vector<8x128xf32> to vector<8x32xf32>
    %550 = vector.extract_strided_slice %548 {offsets = [0, 32], sizes = [8, 32], strides = [1, 1]} : vector<8x128xf32> to vector<8x32xf32>
    %551 = vector.extract_strided_slice %548 {offsets = [0, 64], sizes = [8, 32], strides = [1, 1]} : vector<8x128xf32> to vector<8x32xf32>
    %552 = vector.extract_strided_slice %543 {offsets = [0, 96], sizes = [8, 32], strides = [1, 1]} : vector<8x128xf32> to vector<8x32xf32>
    %553 = math.tanh %552 : vector<8x32xf32>
    %554 = arith.mulf %550, %504 : vector<8x32xf32>
    %555 = arith.mulf %549, %553 : vector<8x32xf32>
    %556 = arith.addf %554, %555 : vector<8x32xf32>
    %557 = math.tanh %556 : vector<8x32xf32>
    %558 = arith.mulf %551, %557 : vector<8x32xf32>
    %c0_233 = arith.constant 0 : index
    %c0_234 = arith.constant 0 : index
    %559 = vector.load %arg16[%c0_233, %c0_234] : memref<32x128xf32, #tpu.memory_space<vmem>>, vector<32x128xf32>
    %cst_235 = arith.constant dense<0.000000e+00> : vector<8x128xf32>
    %560 = tpu.matmul %558, %559, %cst_235 {dimension_numbers = #tpu.dot_dimension_numbers<[1], [0], [0], [1], [0, 0, 1, 1], [], []>} : vector<8x32xf32>, vector<32x128xf32>, vector<8x128xf32> -> vector<8x128xf32>
    %c0_236 = arith.constant 0 : index
    %c0_237 = arith.constant 0 : index
    %561 = vector.load %arg17[%c0_236, %c0_237] : memref<1x128xf32, #tpu.memory_space<vmem>>, vector<1x128xf32>
    %562 = vector.broadcast %561 : vector<1x128xf32> to vector<8x128xf32>
    %563 = arith.addf %560, %562 : vector<8x128xf32>
    %cst_238 = arith.constant dense<0xFF800000> : vector<8xf32>
    %564 = vector.multi_reduction <maximumf>, %563, %cst_238 [1] : vector<8x128xf32> to vector<8xf32>
    %565 = vector.shape_cast %564 : vector<8xf32> to vector<8x1xf32>
    %566 = vector.broadcast %565 : vector<8x1xf32> to vector<8x128xf32>
    %567 = arith.subf %563, %566 : vector<8x128xf32>
    %568 = math.exp %567 : vector<8x128xf32>
    %cst_239 = arith.constant dense<0.000000e+00> : vector<8xf32>
    %569 = vector.multi_reduction <add>, %568, %cst_239 [1] : vector<8x128xf32> to vector<8xf32>
    %570 = vector.shape_cast %569 : vector<8xf32> to vector<8x1xf32>
    %571 = math.log %570 : vector<8x1xf32>
    %572 = vector.broadcast %571 : vector<8x1xf32> to vector<8x128xf32>
    %573 = arith.subf %567, %572 : vector<8x128xf32>
    %574 = arith.cmpi slt, %c5_i32, %24 : i32
    %575 = arith.extui %574 : i1 to i32
    %576 = arith.sitofp %575 : i32 to f32
    %577 = vector.broadcast %576 : f32 to vector<8x128xf32>
    %578 = arith.mulf %577, %533 : vector<8x128xf32>
    %579 = arith.index_cast %c5_i32 : i32 to index
    %c0_240 = arith.constant 0 : index
    %c0_241 = arith.constant 0 : index
    %580 = vector.load %arg18[%579, %c0_240, %c0_241] : memref<7x8x128xf32, #tpu.memory_space<vmem>>, vector<1x8x128xf32>
    %581 = vector.shape_cast %580 : vector<1x8x128xf32> to vector<8x128xf32>
    %582 = vector.shape_cast %578 : vector<8x128xf32> to vector<1x8x128xf32>
    tpu.vector_store %arg18[%579, %c0_240, %c0_241], %582 {strides = array<i32>} : memref<7x8x128xf32, #tpu.memory_space<vmem>>, vector<1x8x128xf32>,
    %583 = vector.broadcast %576 : f32 to vector<8x128xf32>
    %584 = arith.mulf %583, %573 : vector<8x128xf32>
    %585 = arith.index_cast %c5_i32 : i32 to index
    %c0_242 = arith.constant 0 : index
    %c0_243 = arith.constant 0 : index
    %586 = vector.load %arg19[%585, %c0_242, %c0_243] : memref<7x8x128xf32, #tpu.memory_space<vmem>>, vector<1x8x128xf32>
    %587 = vector.shape_cast %586 : vector<1x8x128xf32> to vector<8x128xf32>
    %588 = vector.shape_cast %584 : vector<8x128xf32> to vector<1x8x128xf32>
    tpu.vector_store %arg19[%585, %c0_242, %c0_243], %588 {strides = array<i32>} : memref<7x8x128xf32, #tpu.memory_space<vmem>>, vector<1x8x128xf32>,
    %589 = vector.broadcast %576 : f32 to vector<8x32xf32>
    %590 = arith.mulf %589, %558 : vector<8x32xf32>
    %cst_244 = arith.constant 1.000000e+00 : f32
    %591 = arith.subf %cst_244, %576 : f32
    %592 = vector.broadcast %591 : f32 to vector<8x32xf32>
    %593 = arith.mulf %592, %498 : vector<8x32xf32>
    %594 = arith.addf %590, %593 : vector<8x32xf32>
    %595 = vector.broadcast %576 : f32 to vector<8x32xf32>
    %596 = arith.mulf %595, %556 : vector<8x32xf32>
    %cst_245 = arith.constant 1.000000e+00 : f32
    %597 = arith.subf %cst_245, %576 : f32
    %598 = vector.broadcast %597 : f32 to vector<8x32xf32>
    %599 = arith.mulf %598, %504 : vector<8x32xf32>
    %600 = arith.addf %596, %599 : vector<8x32xf32>
    %c6_i32 = arith.constant 6 : i32
    %c8_i32_246 = arith.constant 8 : i32
    %601 = arith.muli %c6_i32, %c8_i32_246 : i32
    %602 = tpu.assume_multiple %601, 8 : i32
    %603 = arith.index_cast %602 : i32 to index
    %c0_247 = arith.constant 0 : index
    %604 = vector.load %arg20[%603, %c0_247] : memref<56x128xf32, #tpu.memory_space<vmem>>, vector<8x128xf32>
    %c0_248 = arith.constant 0 : index
    %c0_249 = arith.constant 0 : index
    %605 = vector.load %arg11[%c0_248, %c0_249] : memref<32x640xf32, #tpu.memory_space<vmem>>, vector<32x640xf32>
    %cst_250 = arith.constant dense<0.000000e+00> : vector<8x640xf32>
    %606 = tpu.matmul %594, %605, %cst_250 {dimension_numbers = #tpu.dot_dimension_numbers<[1], [0], [0], [1], [0, 0, 1, 1], [], []>} : vector<8x32xf32>, vector<32x640xf32>, vector<8x640xf32> -> vector<8x640xf32>
    %c0_251 = arith.constant 0 : index
    %c0_252 = arith.constant 0 : index
    %607 = vector.load %arg12[%c0_251, %c0_252] : memref<1x640xf32, #tpu.memory_space<vmem>>, vector<1x640xf32>
    %608 = vector.broadcast %607 : vector<1x640xf32> to vector<8x640xf32>
    %609 = arith.addf %606, %608 : vector<8x640xf32>
    %610 = vector.extract_strided_slice %609 {offsets = [0, 0], sizes = [8, 512], strides = [1, 1]} : vector<8x640xf32> to vector<8x512xf32>
    %611 = vector.extract_strided_slice %609 {offsets = [0, 512], sizes = [8, 128], strides = [1, 1]} : vector<8x640xf32> to vector<8x128xf32>
    %c0_253 = arith.constant 0 : index
    %c0_254 = arith.constant 0 : index
    %612 = vector.load %arg21[%c0_253, %c0_254] : memref<8x512xf32, #tpu.memory_space<vmem>>, vector<8x512xf32>
    %613 = arith.addf %612, %610 : vector<8x512xf32>
    %614 = math.tanh %613 : vector<8x512xf32>
    %c0_255 = arith.constant 0 : index
    %c0_256 = arith.constant 0 : index
    %615 = vector.load %arg13[%c0_255, %c0_256] : memref<512x128xf32, #tpu.memory_space<vmem>>, vector<512x128xf32>
    %cst_257 = arith.constant dense<0.000000e+00> : vector<8x128xf32>
    %616 = tpu.matmul %614, %615, %cst_257 {dimension_numbers = #tpu.dot_dimension_numbers<[1], [0], [0], [1], [0, 0, 1, 1], [], []>} : vector<8x512xf32>, vector<512x128xf32>, vector<8x128xf32> -> vector<8x128xf32>
    %c0_258 = arith.constant 0 : index
    %c0_259 = arith.constant 0 : index
    %617 = vector.load %arg14[%c0_258, %c0_259] : memref<1x128xf32, #tpu.memory_space<vmem>>, vector<1x128xf32>
    %618 = vector.broadcast %617 : vector<1x128xf32> to vector<8x128xf32>
    %619 = arith.addf %616, %618 : vector<8x128xf32>
    %cst_260 = arith.constant dense<0xFF800000> : vector<8xf32>
    %620 = vector.multi_reduction <maximumf>, %619, %cst_260 [1] : vector<8x128xf32> to vector<8xf32>
    %621 = vector.shape_cast %620 : vector<8xf32> to vector<8x1xf32>
    %622 = vector.broadcast %621 : vector<8x1xf32> to vector<8x128xf32>
    %623 = arith.subf %619, %622 : vector<8x128xf32>
    %624 = math.exp %623 : vector<8x128xf32>
    %cst_261 = arith.constant dense<0.000000e+00> : vector<8xf32>
    %625 = vector.multi_reduction <add>, %624, %cst_261 [1] : vector<8x128xf32> to vector<8xf32>
    %626 = vector.shape_cast %625 : vector<8xf32> to vector<8x1xf32>
    %627 = tpu.reciprocal %626 {approx = true} : vector<8x1xf32> -> vector<8x1xf32>
    %628 = vector.broadcast %627 : vector<8x1xf32> to vector<8x128xf32>
    %629 = arith.mulf %624, %628 : vector<8x128xf32>
    %630 = vector.extract_strided_slice %629 {offsets = [0, 0], sizes = [8, 16], strides = [1, 1]} : vector<8x128xf32> to vector<8x16xf32>
    %631 = vector.shape_cast %630 : vector<8x16xf32> to vector<8x16x1xf32>
    %c0_262 = arith.constant 0 : index
    %c0_263 = arith.constant 0 : index
    %c0_264 = arith.constant 0 : index
    %632 = vector.load %arg4[%c0_262, %c0_263, %c0_264] : memref<8x16x32xf32, #tpu.memory_space<vmem>>, vector<8x16x32xf32>
    %633 = vector.broadcast %631 : vector<8x16x1xf32> to vector<8x16x32xf32>
    %634 = arith.mulf %633, %632 : vector<8x16x32xf32>
    %cst_265 = arith.constant dense<0.000000e+00> : vector<8x32xf32>
    %635 = vector.multi_reduction <add>, %634, %cst_265 [1] : vector<8x16x32xf32> to vector<8x32xf32>
    %636 = arith.addf %604, %611 : vector<8x128xf32>
    %c0_266 = arith.constant 0 : index
    %c0_267 = arith.constant 0 : index
    %637 = vector.load %arg15[%c0_266, %c0_267] : memref<32x128xf32, #tpu.memory_space<vmem>>, vector<32x128xf32>
    %cst_268 = arith.constant dense<0.000000e+00> : vector<8x128xf32>
    %638 = tpu.matmul %635, %637, %cst_268 {dimension_numbers = #tpu.dot_dimension_numbers<[1], [0], [0], [1], [0, 0, 1, 1], [], []>} : vector<8x32xf32>, vector<32x128xf32>, vector<8x128xf32> -> vector<8x128xf32>
    %639 = arith.addf %636, %638 : vector<8x128xf32>
    %640 = arith.negf %639 : vector<8x128xf32>
    %641 = math.exp %640 : vector<8x128xf32>
    %cst_269 = arith.constant 1.000000e+00 : f32
    %642 = vector.broadcast %cst_269 : f32 to vector<8x128xf32>
    %643 = arith.addf %642, %641 : vector<8x128xf32>
    %644 = arith.divf %642, %643 : vector<8x128xf32>
    %645 = vector.extract_strided_slice %644 {offsets = [0, 0], sizes = [8, 32], strides = [1, 1]} : vector<8x128xf32> to vector<8x32xf32>
    %646 = vector.extract_strided_slice %644 {offsets = [0, 32], sizes = [8, 32], strides = [1, 1]} : vector<8x128xf32> to vector<8x32xf32>
    %647 = vector.extract_strided_slice %644 {offsets = [0, 64], sizes = [8, 32], strides = [1, 1]} : vector<8x128xf32> to vector<8x32xf32>
    %648 = vector.extract_strided_slice %639 {offsets = [0, 96], sizes = [8, 32], strides = [1, 1]} : vector<8x128xf32> to vector<8x32xf32>
    %649 = math.tanh %648 : vector<8x32xf32>
    %650 = arith.mulf %646, %600 : vector<8x32xf32>
    %651 = arith.mulf %645, %649 : vector<8x32xf32>
    %652 = arith.addf %650, %651 : vector<8x32xf32>
    %653 = math.tanh %652 : vector<8x32xf32>
    %654 = arith.mulf %647, %653 : vector<8x32xf32>
    %c0_270 = arith.constant 0 : index
    %c0_271 = arith.constant 0 : index
    %655 = vector.load %arg16[%c0_270, %c0_271] : memref<32x128xf32, #tpu.memory_space<vmem>>, vector<32x128xf32>
    %cst_272 = arith.constant dense<0.000000e+00> : vector<8x128xf32>
    %656 = tpu.matmul %654, %655, %cst_272 {dimension_numbers = #tpu.dot_dimension_numbers<[1], [0], [0], [1], [0, 0, 1, 1], [], []>} : vector<8x32xf32>, vector<32x128xf32>, vector<8x128xf32> -> vector<8x128xf32>
    %c0_273 = arith.constant 0 : index
    %c0_274 = arith.constant 0 : index
    %657 = vector.load %arg17[%c0_273, %c0_274] : memref<1x128xf32, #tpu.memory_space<vmem>>, vector<1x128xf32>
    %658 = vector.broadcast %657 : vector<1x128xf32> to vector<8x128xf32>
    %659 = arith.addf %656, %658 : vector<8x128xf32>
    %cst_275 = arith.constant dense<0xFF800000> : vector<8xf32>
    %660 = vector.multi_reduction <maximumf>, %659, %cst_275 [1] : vector<8x128xf32> to vector<8xf32>
    %661 = vector.shape_cast %660 : vector<8xf32> to vector<8x1xf32>
    %662 = vector.broadcast %661 : vector<8x1xf32> to vector<8x128xf32>
    %663 = arith.subf %659, %662 : vector<8x128xf32>
    %664 = math.exp %663 : vector<8x128xf32>
    %cst_276 = arith.constant dense<0.000000e+00> : vector<8xf32>
    %665 = vector.multi_reduction <add>, %664, %cst_276 [1] : vector<8x128xf32> to vector<8xf32>
    %666 = vector.shape_cast %665 : vector<8xf32> to vector<8x1xf32>
    %667 = math.log %666 : vector<8x1xf32>
    %668 = vector.broadcast %667 : vector<8x1xf32> to vector<8x128xf32>
    %669 = arith.subf %663, %668 : vector<8x128xf32>
    %670 = arith.cmpi slt, %c6_i32, %24 : i32
    %671 = arith.extui %670 : i1 to i32
    %672 = arith.sitofp %671 : i32 to f32
    %673 = vector.broadcast %672 : f32 to vector<8x128xf32>
    %674 = arith.mulf %673, %629 : vector<8x128xf32>
    %675 = arith.index_cast %c6_i32 : i32 to index
    %c0_277 = arith.constant 0 : index
    %c0_278 = arith.constant 0 : index
    %676 = vector.load %arg18[%675, %c0_277, %c0_278] : memref<7x8x128xf32, #tpu.memory_space<vmem>>, vector<1x8x128xf32>
    %677 = vector.shape_cast %676 : vector<1x8x128xf32> to vector<8x128xf32>
    %678 = vector.shape_cast %674 : vector<8x128xf32> to vector<1x8x128xf32>
    tpu.vector_store %arg18[%675, %c0_277, %c0_278], %678 {strides = array<i32>} : memref<7x8x128xf32, #tpu.memory_space<vmem>>, vector<1x8x128xf32>,
    %679 = vector.broadcast %672 : f32 to vector<8x128xf32>
    %680 = arith.mulf %679, %669 : vector<8x128xf32>
    %681 = arith.index_cast %c6_i32 : i32 to index
    %c0_279 = arith.constant 0 : index
    %c0_280 = arith.constant 0 : index
    %682 = vector.load %arg19[%681, %c0_279, %c0_280] : memref<7x8x128xf32, #tpu.memory_space<vmem>>, vector<1x8x128xf32>
    %683 = vector.shape_cast %682 : vector<1x8x128xf32> to vector<8x128xf32>
    %684 = vector.shape_cast %680 : vector<8x128xf32> to vector<1x8x128xf32>
    tpu.vector_store %arg19[%681, %c0_279, %c0_280], %684 {strides = array<i32>} : memref<7x8x128xf32, #tpu.memory_space<vmem>>, vector<1x8x128xf32>,
    %685 = vector.broadcast %672 : f32 to vector<8x32xf32>
    %686 = arith.mulf %685, %654 : vector<8x32xf32>
    %cst_281 = arith.constant 1.000000e+00 : f32
    %687 = arith.subf %cst_281, %672 : f32
    %688 = vector.broadcast %687 : f32 to vector<8x32xf32>
    %689 = arith.mulf %688, %594 : vector<8x32xf32>
    %690 = arith.addf %686, %689 : vector<8x32xf32>
    %691 = vector.broadcast %672 : f32 to vector<8x32xf32>
    %692 = arith.mulf %691, %652 : vector<8x32xf32>
    %cst_282 = arith.constant 1.000000e+00 : f32
    %693 = arith.subf %cst_282, %672 : f32
    %694 = vector.broadcast %693 : f32 to vector<8x32xf32>
    %695 = arith.mulf %694, %600 : vector<8x32xf32>
    %696 = arith.addf %692, %695 : vector<8x32xf32>
    %c7_i32 = arith.constant 7 : i32
    return
  }
}

</mosaic_0001>

<llo_original>
// kernel: caption_model_forward.1
$region0: #{caption_model_forward.1}
  #allocation0 [shape = 'u32[]', space=smem, size = 0x4, offset = 0x4, fixed_abs, tag = 'smem constant byte address 0x4 - core index']
  #allocation1 [shape = 'u32[144,128]{1,0:T(1,128)}', space=vmem, size = 0x12000, scoped, tag = 'internal scratch']
  #allocation2 [shape = 'f32[56,128]{1,0:T(8,128)}', space=vmem, size = 0x7000, scoped, tag = 'scratch operand']
  #allocation3 [shape = 'f32[8,512]{1,0:T(8,128)}', space=vmem, size = 0x4000, scoped, tag = 'scratch operand']
  #allocation4 [shape = 's32[1]{0:T(128)S(6)}', space=smem, size = 0x200, scoped, tag = 'scoped memory for caption_model_forward.1']
  %s0 = inlined_call_operand.<no memory space> [shape: s32[1], index: 0, kind: input, shape index: {}]
  %s1 = inlined_call_operand.vmem [shape: s32[56,1], index: 1, kind: input, shape index: {}]
  %s2 = inlined_call_operand.vmem [shape: f32[8,32], index: 2, kind: input, shape index: {}]
  %s3 = inlined_call_operand.vmem [shape: f32[8,512], index: 3, kind: input, shape index: {}]
  %s4 = inlined_call_operand.vmem [shape: f32[8,16,32], index: 4, kind: input, shape index: {}]
  %s5 = inlined_call_operand.vmem [shape: f32[32,32], index: 5, kind: input, shape index: {}]
  %s6 = inlined_call_operand.vmem [shape: f32[32,128], index: 6, kind: input, shape index: {}]
  %s7 = inlined_call_operand.vmem [shape: f32[1,128], index: 7, kind: input, shape index: {}]
  %s8 = inlined_call_operand.vmem [shape: f32[32,32], index: 8, kind: input, shape index: {}]
  %s9 = inlined_call_operand.vmem [shape: f32[1,32], index: 9, kind: input, shape index: {}]
  %s10 = inlined_call_operand.hbm [shape: f32[512,512], index: 10, kind: input, shape index: {}]
  %s11 = inlined_call_operand.vmem [shape: f32[32,640], index: 11, kind: input, shape index: {}]
  %s12 = inlined_call_operand.vmem [shape: f32[1,640], index: 12, kind: input, shape index: {}]
  %s13 = inlined_call_operand.hbm [shape: f32[512,128], index: 13, kind: input, shape index: {}]
  %s14 = inlined_call_operand.vmem [shape: f32[1,128], index: 14, kind: input, shape index: {}]
  %s15 = inlined_call_operand.vmem [shape: f32[32,128], index: 15, kind: input, shape index: {}]
  %s16 = inlined_call_operand.vmem [shape: f32[32,128], index: 16, kind: input, shape index: {}]
  %s17 = inlined_call_operand.vmem [shape: f32[1,128], index: 17, kind: input, shape index: {}]
  %s18 = inlined_call_operand.vmem [shape: f32[7,8,128], index: 18, kind: output, shape index: {0}]
  %s19 = inlined_call_operand.vmem [shape: f32[7,8,128], index: 19, kind: output, shape index: {1}]
  %20 = xla_tuple %s18, %s19
  %s21 = sld [smem:[#allocation0]]
  $region98: #{caption_model_forward.1} parent=0
    _
  %s23 = ssub.s32 1, %s21
  %s24 = scalar_select 0, %s23, %s21
  %25 = sst [smem:[#allocation4]] %s0
  $region1: #{caption_model_forward.1} parent=0
    #allocation5 [shape = 'u8[1048576]{0}', space=vmem, size = 0x100000, scoped, tag = 'input window, operand 10, single buffered']
    #allocation6 [shape = 's32[1]{0}', space=sflag, size = 0x4, scoped, tag = 'scoped memory for caption_model_forward.1']
    #allocation7 [shape = 'u8[262144]{0}', space=vmem, size = 0x40000, scoped, tag = 'input window, operand 13, single buffered']
    #allocation8 [shape = 's32[1]{0}', space=sflag, size = 0x4, scoped, tag = 'scoped memory for caption_model_forward.1']
    %26 = vsyncpa [#allocation6], 0
    %27 = vsyncpa [#allocation8], 0
    // Predicated region
    $region2: #{caption_model_forward.1} parent=1 // pred_check
      _
    $region3: #{caption_model_forward.1} parent=1 // pred_check_branch
      %29 = sbr.rel (0) target = $region5
    $region4: #{caption_model_forward.1} parent=1 // pred_region
      _
    $region5: #{caption_model_forward.1} parent=1 // pred_fallthru
      _
    // Predicated region
    $region6: #{caption_model_forward.1} parent=1 // pred_check
      _
    $region7: #{caption_model_forward.1} parent=1 // pred_check_branch
      %31 = sbr.rel (0) target = $region9
    $region8: #{caption_model_forward.1} parent=1 // pred_region
      _
    $region9: #{caption_model_forward.1} parent=1 // pred_fallthru
      _
    // Predicated region
    $region10: #{caption_model_forward.1} parent=1 // pred_check
      _
    $region11: #{caption_model_forward.1} parent=1 // pred_check_branch
      %33 = sbr.rel (0) target = $region13
    $region12: #{caption_model_forward.1} parent=1 // pred_region
      _
    $region13: #{caption_model_forward.1} parent=1 // pred_fallthru
      _
    // Predicated region
    $region14: #{caption_model_forward.1} parent=1 // pred_check
      _
    $region15: #{caption_model_forward.1} parent=1 // pred_check_branch
      %35 = sbr.rel (0) target = $region17
    $region16: #{caption_model_forward.1} parent=1 // pred_region
      _
    $region17: #{caption_model_forward.1} parent=1 // pred_fallthru
      _
    // Predicated region
    $region18: #{caption_model_forward.1} parent=1 // pred_check
      _
    $region19: #{caption_model_forward.1} parent=1 // pred_check_branch
      %37 = sbr.rel (0) target = $region21
    $region20: #{caption_model_forward.1} parent=1 // pred_region
      _
    $region21: #{caption_model_forward.1} parent=1 // pred_fallthru
      _
    // Predicated region
    $region22: #{caption_model_forward.1} parent=1 // pred_check
      _
    $region23: #{caption_model_forward.1} parent=1 // pred_check_branch
      %39 = sbr.rel (0) target = $region25
    $region24: #{caption_model_forward.1} parent=1 // pred_region
      _
    $region25: #{caption_model_forward.1} parent=1 // pred_fallthru
      _
    // Predicated region
    $region26: #{caption_model_forward.1} parent=1 // pred_check
      _
    $region27: #{caption_model_forward.1} parent=1 // pred_check_branch
      %41 = sbr.rel (0) target = $region29
    $region28: #{caption_model_forward.1} parent=1 // pred_region
      _
    $region29: #{caption_model_forward.1} parent=1 // pred_fallthru
      _
    // Predicated region
    $region30: #{caption_model_forward.1} parent=1 // pred_check
      _
    $region31: #{caption_model_forward.1} parent=1 // pred_check_branch
      %43 = sbr.rel (0) target = $region33
    $region32: #{caption_model_forward.1} parent=1 // pred_region
      _
    $region33: #{caption_model_forward.1} parent=1 // pred_fallthru
      _
    // Predicated region
    $region34: #{caption_model_forward.1} parent=1 // pred_check
      _
    $region35: #{caption_model_forward.1} parent=1 // pred_check_branch
      %45 = sbr.rel (0) target = $region37
    $region36: #{caption_model_forward.1} parent=1 // pred_region
      _
    $region37: #{caption_model_forward.1} parent=1 // pred_fallthru
      _
    // Predicated region
    $region38: #{caption_model_forward.1} parent=1 // pred_check
      _
    $region39: #{caption_model_forward.1} parent=1 // pred_check_branch
      %47 = sbr.rel (0) target = $region41
    $region40: #{caption_model_forward.1} parent=1 // pred_region
      _
    $region41: #{caption_model_forward.1} parent=1 // pred_fallthru
      _
    // Predicated region
    $region42: #{caption_model_forward.1} parent=1 // pred_check
      _
    $region43: #{caption_model_forward.1} parent=1 // pred_check_branch
      %49 = sbr.rel (0) target = $region45
    $region44: #{caption_model_forward.1} parent=1 // pred_region
      %s51 = ssub.s32 32768, 32768
      %52 = vsyncadd [#allocation6], %s51
      %s53 = sshll.u32 [#allocation5], 4
      %s54 = int_to_ptr.vmem [resolvable:$true] %s53
      %59 = dma.hbm_to_vmem [thread:$0]  %s10, 32768, %s54, [#allocation6], 512, 512, 32
    $region45: #{caption_model_forward.1} parent=1 // pred_fallthru
      _
    // Predicated region
    $region46: #{caption_model_forward.1} parent=1 // pred_check
      _
    $region47: #{caption_model_forward.1} parent=1 // pred_check_branch
      %61 = sbr.rel (0) target = $region49
    $region48: #{caption_model_forward.1} parent=1 // pred_region
      _
    $region49: #{caption_model_forward.1} parent=1 // pred_fallthru
      _
    // Predicated region
    $region50: #{caption_model_forward.1} parent=1 // pred_check
      _
    $region51: #{caption_model_forward.1} parent=1 // pred_check_branch
      %63 = sbr.rel (0) target = $region53
    $region52: #{caption_model_forward.1} parent=1 // pred_region
      _
    $region53: #{caption_model_forward.1} parent=1 // pred_fallthru
      _
    // Predicated region
    $region54: #{caption_model_forward.1} parent=1 // pred_check
      _
    $region55: #{caption_model_forward.1} parent=1 // pred_check_branch
      %65 = sbr.rel (0) target = $region57
    $region56: #{caption_model_forward.1} parent=1 // pred_region
      %s67 = ssub.s32 8192, 8192
      %68 = vsyncadd [#allocation8], %s67
      %s69 = sshll.u32 [#allocation7], 4
      %s70 = int_to_ptr.vmem [resolvable:$true] %s69
      %75 = dma.hbm_to_vmem [thread:$0]  %s13, 8192, %s70, [#allocation8], 128, 128, 8
    $region57: #{caption_model_forward.1} parent=1 // pred_fallthru
      _
    // Predicated region
    $region58: #{caption_model_forward.1} parent=1 // pred_check
      _
    $region59: #{caption_model_forward.1} parent=1 // pred_check_branch
      %77 = sbr.rel (0) target = $region61
    $region60: #{caption_model_forward.1} parent=1 // pred_region
      _
    $region61: #{caption_model_forward.1} parent=1 // pred_fallthru
      _
    // Predicated region
    $region62: #{caption_model_forward.1} parent=1 // pred_check
      _
    $region63: #{caption_model_forward.1} parent=1 // pred_check_branch
      %79 = sbr.rel (0) target = $region65
    $region64: #{caption_model_forward.1} parent=1 // pred_region
      _
    $region65: #{caption_model_forward.1} parent=1 // pred_fallthru
      _
    // Predicated region
    $region66: #{caption_model_forward.1} parent=1 // pred_check
      _
    $region67: #{caption_model_forward.1} parent=1 // pred_check_branch
      %81 = sbr.rel (0) target = $region69
    $region68: #{caption_model_forward.1} parent=1 // pred_region
      _
    $region69: #{caption_model_forward.1} parent=1 // pred_fallthru
      _
    // Predicated region
    $region70: #{caption_model_forward.1} parent=1 // pred_check
      _
    $region71: #{caption_model_forward.1} parent=1 // pred_check_branch
      %83 = sbr.rel (0) target = $region73
    $region72: #{caption_model_forward.1} parent=1 // pred_region
      _
    $region73: #{caption_model_forward.1} parent=1 // pred_fallthru
      _
    // Predicated region
    $region74: #{caption_model_forward.1} parent=1 // pred_check
      _
    $region75: #{caption_model_forward.1} parent=1 // pred_check_branch
      %85 = sbr.rel (0) target = $region77
    $region76: #{caption_model_forward.1} parent=1 // pred_region
      %86 = dma.done [#allocation6], 32768
    $region77: #{caption_model_forward.1} parent=1 // pred_fallthru
      _
    // Predicated region
    $region78: #{caption_model_forward.1} parent=1 // pred_check
      _
    $region79: #{caption_model_forward.1} parent=1 // pred_check_branch
      %88 = sbr.rel (0) target = $region81
    $region80: #{caption_model_forward.1} parent=1 // pred_region
      %89 = dma.done [#allocation8], 8192
    $region81: #{caption_model_forward.1} parent=1 // pred_fallthru
      _
    %v90 = vld [vmem:[%s2] sm:$0xff]
    %v91 = vld [vmem:[%s8] sm:$0xff]
    %v92 = vld [vmem:[%s8 + $0x8] sm:$0xff]
    %v93 = vld [vmem:[%s8 + $0x10] sm:$0xff]
    %v94 = vld [vmem:[%s8 + $0x18] sm:$0xff]
    %v95 = vld [vmem:[%s9] sm:$0x1]
    %v97 = vlaneseq
    %v98 = vshrl.u32 %v97, 7
    %v99 = vsub.s32 0, %v98
    %v100 = vrot.slane %v95, %v99
    %vm102 = vcmask 261120
    %v104 = vsel %vm102, %v90, 0
    %106 = vmatprep.subr.mxu0 0.0
    %107 = vmatpush1.msra.mxu0 0.0
    %108 = vmatprep.subr.mxu0 0.0
    %109 = vmatpush1.msra.mxu0 0.0
    %110 = vmatprep.subr.mxu0 0.0
    %111 = vmatpush1.msra.mxu0 0.0
    %112 = vmatprep.subr.mxu0 0.0
    %113 = vmatpush1.msra.mxu0 0.0
    %114 = vmatprep.subr.mxu0 0.0
    %115 = vmatpush1.msra.mxu0 0.0
    %116 = vmatprep.subr.mxu0 0.0
    %117 = vmatpush1.msra.mxu0 0.0
    %118 = vmatprep.subr.mxu0 0.0
    %119 = vmatpush1.msra.mxu0 0.0
    %120 = vmatprep.subr.mxu0 0.0
    %121 = vmatpush1.msra.mxu0 0.0
    %122 = vmatprep.subr.mxu0 0.0
    %123 = vmatpush1.msra.mxu0 0.0
    %124 = vmatprep.subr.mxu0 0.0
    %125 = vmatpush1.msra.mxu0 0.0
    %126 = vmatprep.subr.mxu0 0.0
    %127 = vmatpush1.msra.mxu0 0.0
    %128 = vmatprep.subr.mxu0 0.0
    %129 = vmatpush1.msra.mxu0 0.0
    %130 = vmatprep.subr.mxu0 0.0
    %131 = vmatpush1.msra.mxu0 %v94
    %132 = vmatprep.subr.mxu0 0.0
    %133 = vmatpush1.msra.mxu0 %v93
    %134 = vmatprep.subr.mxu0 0.0
    %135 = vmatpush1.msra.mxu0 %v92
    %136 = vmatprep.subr.mxu0 0.0
    %137 = vmatpush1.msra.mxu0 %v91
    %138 = vmatprep.subr.mxu0 0.0
    %139 = vmatpush2.msra.mxu0 0.0
    %140 = vmatprep.subr.mxu0 0.0
    %141 = vmatpush2.msra.mxu0 0.0
    %142 = vmatprep.subr.mxu0 0.0
    %143 = vmatpush2.msra.mxu0 0.0
    %144 = vmatprep.subr.mxu0 0.0
    %145 = vmatpush2.msra.mxu0 0.0
    %146 = vmatprep.subr.mxu0 0.0
    %147 = vmatpush2.msra.mxu0 0.0
    %148 = vmatprep.subr.mxu0 0.0
    %149 = vmatpush2.msra.mxu0 0.0
    %150 = vmatprep.subr.mxu0 0.0
    %151 = vmatpush2.msra.mxu0 0.0
    %152 = vmatprep.subr.mxu0 0.0
    %153 = vmatpush2.msra.mxu0 0.0
    %154 = vmatprep.subr.mxu0 0.0
    %155 = vmatpush2.msra.mxu0 0.0
    %156 = vmatprep.subr.mxu0 0.0
    %157 = vmatpush2.msra.mxu0 0.0
    %158 = vmatprep.subr.mxu0 0.0
    %159 = vmatpush2.msra.mxu0 0.0
    %160 = vmatprep.subr.mxu0 0.0
    %161 = vmatpush2.msra.mxu0 0.0
    %162 = vmatprep.subr.mxu0 0.0
    %163 = vmatpush2.msra.mxu0 0.0
    %164 = vmatprep.subr.mxu0 0.0
    %165 = vmatpush2.msra.mxu0 0.0
    %166 = vmatprep.subr.mxu0 0.0
    %167 = vmatpush2.msra.mxu0 0.0
    %168 = vmatprep.subr.mxu0 0.0
    %169 = vmatpush2.msra.mxu0 0.0
    %170 = vmatprep.mubr.f32.mxu0 0.0
    %171 = vmatmul.mubr.f32.gmra.mxu0 %v104
    %v172 = vpop.f32.mrf.mxu0
    %v173 = vadd.f32 %v100, %v172
    %v174 = vpop.f32.mrf.mxu0
    %175 = vdwg.mxu0
    %v176 = vld [vmem:[%s3] sm:$0xff]
    %v177 = vld [vmem:[%s3 + $0x8] sm:$0xff]
    %v178 = vld [vmem:[%s3 + $0x10] sm:$0xff]
    %v179 = vld [vmem:[%s3 + $0x18] sm:$0xff]
    %v180 = vld [vmem:[#allocation5] sm:$0xff]
    %v181 = vld [vmem:[#allocation5 + $0x8] sm:$0xff]
    %v182 = vld [vmem:[#allocation5 + $0x10] sm:$0xff]
    %v183 = vld [vmem:[#allocation5 + $0x18] sm:$0xff]
    %v184 = vld [vmem:[#allocation5 + $0x20] sm:$0xff]
    %v185 = vld [vmem:[#allocation5 + $0x28] sm:$0xff]
    %v186 = vld [vmem:[#allocation5 + $0x30] sm:$0xff]
    %v187 = vld [vmem:[#allocation5 + $0x38] sm:$0xff]
    %v188 = vld [vmem:[#allocation5 + $0x40] sm:$0xff]
    %v189 = vld [vmem:[#allocation5 + $0x48] sm:$0xff]
    %v190 = vld [vmem:[#allocation5 + $0x50] sm:$0xff]
    %v191 = vld [vmem:[#allocation5 + $0x58] sm:$0xff]
    %v192 = vld [vmem:[#allocation5 + $0x60] sm:$0xff]
    %v193 = vld [vmem:[#allocation5 + $0x68] sm:$0xff]
    %v194 = vld [vmem:[#allocation5 + $0x70] sm:$0xff]
    %v195 = vld [vmem:[#allocation5 + $0x78] sm:$0xff]
    %v196 = vld [vmem:[#allocation5 + $0x80] sm:$0xff]
    %v197 = vld [vmem:[#allocation5 + $0x88] sm:$0xff]
    %v198 = vld [vmem:[#allocation5 + $0x90] sm:$0xff]
    %v199 = vld [vmem:[#allocation5 + $0x98] sm:$0xff]
    %v200 = vld [vmem:[#allocation5 + $0xa0] sm:$0xff]
    %v201 = vld [vmem:[#allocation5 + $0xa8] sm:$0xff]
    %v202 = vld [vmem:[#allocation5 + $0xb0] sm:$0xff]
    %v203 = vld [vmem:[#allocation5 + $0xb8] sm:$0xff]
    %v204 = vld [vmem:[#allocation5 + $0xc0] sm:$0xff]
    %v205 = vld [vmem:[#allocation5 + $0xc8] sm:$0xff]
    %v206 = vld [vmem:[#allocation5 + $0xd0] sm:$0xff]
    %v207 = vld [vmem:[#allocation5 + $0xd8] sm:$0xff]
    %v208 = vld [vmem:[#allocation5 + $0xe0] sm:$0xff]
    %v209 = vld [vmem:[#allocation5 + $0xe8] sm:$0xff]
    %v210 = vld [vmem:[#allocation5 + $0xf0] sm:$0xff]
    %v211 = vld [vmem:[#allocation5 + $0xf8] sm:$0xff]
    %v212 = vld [vmem:[#allocation5 + $0x100] sm:$0xff]
    %v213 = vld [vmem:[#allocation5 + $0x108] sm:$0xff]
    %v214 = vld [vmem:[#allocation5 + $0x110] sm:$0xff]
    %v215 = vld [vmem:[#allocation5 + $0x118] sm:$0xff]
    %v216 = vld [vmem:[#allocation5 + $0x120] sm:$0xff]
    %v217 = vld [vmem:[#allocation5 + $0x128] sm:$0xff]
    %v218 = vld [vmem:[#allocation5 + $0x130] sm:$0xff]
    %v219 = vld [vmem:[#allocation5 + $0x138] sm:$0xff]
    %v220 = vld [vmem:[#allocation5 + $0x140] sm:$0xff]
    %v221 = vld [vmem:[#allocation5 + $0x148] sm:$0xff]
    %v222 = vld [vmem:[#allocation5 + $0x150] sm:$0xff]
    %v223 = vld [vmem:[#allocation5 + $0x158] sm:$0xff]
    %v224 = vld [vmem:[#allocation5 + $0x160] sm:$0xff]
    %v225 = vld [vmem:[#allocation5 + $0x168] sm:$0xff]
    %v226 = vld [vmem:[#allocation5 + $0x170] sm:$0xff]
    %v227 = vld [vmem:[#allocation5 + $0x178] sm:$0xff]
    %v228 = vld [vmem:[#allocation5 + $0x180] sm:$0xff]
    %v229 = vld [vmem:[#allocation5 + $0x188] sm:$0xff]
    %v230 = vld [vmem:[#allocation5 + $0x190] sm:$0xff]
    %v231 = vld [vmem:[#allocation5 + $0x198] sm:$0xff]
    %v232 = vld [vmem:[#allocation5 + $0x1a0] sm:$0xff]
    %v233 = vld [vmem:[#allocation5 + $0x1a8] sm:$0xff]
    %v234 = vld [vmem:[#allocation5 + $0x1b0] sm:$0xff]
    %v235 = vld [vmem:[#allocation5 + $0x1b8] sm:$0xff]
    %v236 = vld [vmem:[#allocation5 + $0x1c0] sm:$0xff]
    %v237 = vld [vmem:[#allocation5 + $0x1c8] sm:$0xff]
    %v238 = vld [vmem:[#allocation5 + $0x1d0] sm:$0xff]
    %v239 = vld [vmem:[#allocation5 + $0x1d8] sm:$0xff]
    %v240 = vld [vmem:[#allocation5 + $0x1e0] sm:$0xff]
    %v241 = vld [vmem:[#allocation5 + $0x1e8] sm:$0xff]
    %v242 = vld [vmem:[#allocation5 + $0x1f0] sm:$0xff]
    %v243 = vld [vmem:[#allocation5 + $0x1f8] sm:$0xff]
    %v244 = vld [vmem:[#allocation5 + $0x200] sm:$0xff]
    %v245 = vld [vmem:[#allocation5 + $0x208] sm:$0xff]
    %v246 = vld [vmem:[#allocation5 + $0x210] sm:$0xff]
    %v247 = vld [vmem:[#allocation5 + $0x218] sm:$0xff]
    %v248 = vld [vmem:[#allocation5 + $0x220] sm:$0xff]
    %v249 = vld [vmem:[#allocation5 + $0x228] sm:$0xff]
    %v250 = vld [vmem:[#allocation5 + $0x230] sm:$0xff]
    %v251 = vld [vmem:[#allocation5 + $0x238] sm:$0xff]
    %v252 = vld [vmem:[#allocation5 + $0x240] sm:$0xff]
    %v253 = vld [vmem:[#allocation5 + $0x248] sm:$0xff]
    %v254 = vld [vmem:[#allocation5 + $0x250] sm:$0xff]
    %v255 = vld [vmem:[#allocation5 + $0x258] sm:$0xff]
    %v256 = vld [vmem:[#allocation5 + $0x260] sm:$0xff]
    %v257 = vld [vmem:[#allocation5 + $0x268] sm:$0xff]
    %v258 = vld [vmem:[#allocation5 + $0x270] sm:$0xff]
    %v259 = vld [vmem:[#allocation5 + $0x278] sm:$0xff]
    %v260 = vld [vmem:[#allocation5 + $0x280] sm:$0xff]
    %v261 = vld [vmem:[#allocation5 + $0x288] sm:$0xff]
    %v262 = vld [vmem:[#allocation5 + $0x290] sm:$0xff]
    %v263 = vld [vmem:[#allocation5 + $0x298] sm:$0xff]
    %v264 = vld [vmem:[#allocation5 + $0x2a0] sm:$0xff]
    %v265 = vld [vmem:[#allocation5 + $0x2a8] sm:$0xff]
    %v266 = vld [vmem:[#allocation5 + $0x2b0] sm:$0xff]
    %v267 = vld [vmem:[#allocation5 + $0x2b8] sm:$0xff]
    %v268 = vld [vmem:[#allocation5 + $0x2c0] sm:$0xff]
    %v269 = vld [vmem:[#allocation5 + $0x2c8] sm:$0xff]
    %v270 = vld [vmem:[#allocation5 + $0x2d0] sm:$0xff]
    %v271 = vld [vmem:[#allocation5 + $0x2d8] sm:$0xff]
    %v272 = vld [vmem:[#allocation5 + $0x2e0] sm:$0xff]
    %v273 = vld [vmem:[#allocation5 + $0x2e8] sm:$0xff]
    %v274 = vld [vmem:[#allocation5 + $0x2f0] sm:$0xff]
    %v275 = vld [vmem:[#allocation5 + $0x2f8] sm:$0xff]
    %v276 = vld [vmem:[#allocation5 + $0x300] sm:$0xff]
    %v277 = vld [vmem:[#allocation5 + $0x308] sm:$0xff]
    %v278 = vld [vmem:[#allocation5 + $0x310] sm:$0xff]
    %v279 = vld [vmem:[#allocation5 + $0x318] sm:$0xff]
    %v280 = vld [vmem:[#allocation5 + $0x320] sm:$0xff]
    %v281 = vld [vmem:[#allocation5 + $0x328] sm:$0xff]
    %v282 = vld [vmem:[#allocation5 + $0x330] sm:$0xff]
    %v283 = vld [vmem:[#allocation5 + $0x338] sm:$0xff]
    %v284 = vld [vmem:[#allocation5 + $0x340] sm:$0xff]
    %v285 = vld [vmem:[#allocation5 + $0x348] sm:$0xff]
    %v286 = vld [vmem:[#allocation5 + $0x350] sm:$0xff]
    %v287 = vld [vmem:[#allocation5 + $0x358] sm:$0xff]
    %v288 = vld [vmem:[#allocation5 + $0x360] sm:$0xff]
    %v289 = vld [vmem:[#allocation5 + $0x368] sm:$0xff]
    %v290 = vld [vmem:[#allocation5 + $0x370] sm:$0xff]
    %v291 = vld [vmem:[#allocation5 + $0x378] sm:$0xff]
    %v292 = vld [vmem:[#allocation5 + $0x380] sm:$0xff]
    %v293 = vld [vmem:[#allocation5 + $0x388] sm:$0xff]
    %v294 = vld [vmem:[#allocation5 + $0x390] sm:$0xff]
    %v295 = vld [vmem:[#allocation5 + $0x398] sm:$0xff]
    %v296 = vld [vmem:[#allocation5 + $0x3a0] sm:$0xff]
    %v297 = vld [vmem:[#allocation5 + $0x3a8] sm:$0xff]
    %v298 = vld [vmem:[#allocation5 + $0x3b0] sm:$0xff]
    %v299 = vld [vmem:[#allocation5 + $0x3b8] sm:$0xff]
    %v300 = vld [vmem:[#allocation5 + $0x3c0] sm:$0xff]
    %v301 = vld [vmem:[#allocation5 + $0x3c8] sm:$0xff]
    %v302 = vld [vmem:[#allocation5 + $0x3d0] sm:$0xff]
    %v303 = vld [vmem:[#allocation5 + $0x3d8] sm:$0xff]
    %v304 = vld [vmem:[#allocation5 + $0x3e0] sm:$0xff]
    %v305 = vld [vmem:[#allocation5 + $0x3e8] sm:$0xff]
    %v306 = vld [vmem:[#allocation5 + $0x3f0] sm:$0xff]
    %v307 = vld [vmem:[#allocation5 + $0x3f8] sm:$0xff]
    %v308 = vld [vmem:[#allocation5 + $0x400] sm:$0xff]
    %v309 = vld [vmem:[#allocation5 + $0x408] sm:$0xff]
    %v310 = vld [vmem:[#allocation5 + $0x410] sm:$0xff]
    %v311 = vld [vmem:[#allocation5 + $0x418] sm:$0xff]
    %v312 = vld [vmem:[#allocation5 + $0x420] sm:$0xff]
    %v313 = vld [vmem:[#allocation5 + $0x428] sm:$0xff]
    %v314 = vld [vmem:[#allocation5 + $0x430] sm:$0xff]
    %v315 = vld [vmem:[#allocation5 + $0x438] sm:$0xff]
    %v316 = vld [vmem:[#allocation5 + $0x440] sm:$0xff]
    %v317 = vld [vmem:[#allocation5 + $0x448] sm:$0xff]
    %v318 = vld [vmem:[#allocation5 + $0x450] sm:$0xff]
    %v319 = vld [vmem:[#allocation5 + $0x458] sm:$0xff]
    %v320 = vld [vmem:[#allocation5 + $0x460] sm:$0xff]
    %v321 = vld [vmem:[#allocation5 + $0x468] sm:$0xff]
    %v322 = vld [vmem:[#allocation5 + $0x470] sm:$0xff]
    %v323 = vld [vmem:[#allocation5 + $0x478] sm:$0xff]
    %v324 = vld [vmem:[#allocation5 + $0x480] sm:$0xff]
    %v325 = vld [vmem:[#allocation5 + $0x488] sm:$0xff]
    %v326 = vld [vmem:[#allocation5 + $0x490] sm:$0xff]
    %v327 = vld [vmem:[#allocation5 + $0x498] sm:$0xff]
    %v328 = vld [vmem:[#allocation5 + $0x4a0] sm:$0xff]
    %v329 = vld [vmem:[#allocation5 + $0x4a8] sm:$0xff]
    %v330 = vld [vmem:[#allocation5 + $0x4b0] sm:$0xff]
    %v331 = vld [vmem:[#allocation5 + $0x4b8] sm:$0xff]
    %v332 = vld [vmem:[#allocation5 + $0x4c0] sm:$0xff]
    %v333 = vld [vmem:[#allocation5 + $0x4c8] sm:$0xff]
    %v334 = vld [vmem:[#allocation5 + $0x4d0] sm:$0xff]
    %v335 = vld [vmem:[#allocation5 + $0x4d8] sm:$0xff]
    %v336 = vld [vmem:[#allocation5 + $0x4e0] sm:$0xff]
    %v337 = vld [vmem:[#allocation5 + $0x4e8] sm:$0xff]
    %v338 = vld [vmem:[#allocation5 + $0x4f0] sm:$0xff]
    %v339 = vld [vmem:[#allocation5 + $0x4f8] sm:$0xff]
    %v340 = vld [vmem:[#allocation5 + $0x500] sm:$0xff]
    %v341 = vld [vmem:[#allocation5 + $0x508] sm:$0xff]
    %v342 = vld [vmem:[#allocation5 + $0x510] sm:$0xff]
    %v343 = vld [vmem:[#allocation5 + $0x518] sm:$0xff]
    %v344 = vld [vmem:[#allocation5 + $0x520] sm:$0xff]
    %v345 = vld [vmem:[#allocation5 + $0x528] sm:$0xff]
    %v346 = vld [vmem:[#allocation5 + $0x530] sm:$0xff]
    %v347 = vld [vmem:[#allocation5 + $0x538] sm:$0xff]
    %v348 = vld [vmem:[#allocation5 + $0x540] sm:$0xff]
    %v349 = vld [vmem:[#allocation5 + $0x548] sm:$0xff]
    %v350 = vld [vmem:[#allocation5 + $0x550] sm:$0xff]
    %v351 = vld [vmem:[#allocation5 + $0x558] sm:$0xff]
    %v352 = vld [vmem:[#allocation5 + $0x560] sm:$0xff]
    %v353 = vld [vmem:[#allocation5 + $0x568] sm:$0xff]
    %v354 = vld [vmem:[#allocation5 + $0x570] sm:$0xff]
    %v355 = vld [vmem:[#allocation5 + $0x578] sm:$0xff]
    %v356 = vld [vmem:[#allocation5 + $0x580] sm:$0xff]
    %v357 = vld [vmem:[#allocation5 + $0x588] sm:$0xff]
    %v358 = vld [vmem:[#allocation5 + $0x590] sm:$0xff]
    %v359 = vld [vmem:[#allocation5 + $0x598] sm:$0xff]
    %v360 = vld [vmem:[#allocation5 + $0x5a0] sm:$0xff]
    %v361 = vld [vmem:[#allocation5 + $0x5a8] sm:$0xff]
    %v362 = vld [vmem:[#allocation5 + $0x5b0] sm:$0xff]
    %v363 = vld [vmem:[#allocation5 + $0x5b8] sm:$0xff]
    %v364 = vld [vmem:[#allocation5 + $0x5c0] sm:$0xff]
    %v365 = vld [vmem:[#allocation5 + $0x5c8] sm:$0xff]
    %v366 = vld [vmem:[#allocation5 + $0x5d0] sm:$0xff]
    %v367 = vld [vmem:[#allocation5 + $0x5d8] sm:$0xff]
    %v368 = vld [vmem:[#allocation5 + $0x5e0] sm:$0xff]
    %v369 = vld [vmem:[#allocation5 + $0x5e8] sm:$0xff]
    %v370 = vld [vmem:[#allocation5 + $0x5f0] sm:$0xff]
    %v371 = vld [vmem:[#allocation5 + $0x5f8] sm:$0xff]
    %v372 = vld [vmem:[#allocation5 + $0x600] sm:$0xff]
    %v373 = vld [vmem:[#allocation5 + $0x608] sm:$0xff]
    %v374 = vld [vmem:[#allocation5 + $0x610] sm:$0xff]
    %v375 = vld [vmem:[#allocation5 + $0x618] sm:$0xff]
    %v376 = vld [vmem:[#allocation5 + $0x620] sm:$0xff]
    %v377 = vld [vmem:[#allocation5 + $0x628] sm:$0xff]
    %v378 = vld [vmem:[#allocation5 + $0x630] sm:$0xff]
    %v379 = vld [vmem:[#allocation5 + $0x638] sm:$0xff]
    %v380 = vld [vmem:[#allocation5 + $0x640] sm:$0xff]
    %v381 = vld [vmem:[#allocation5 + $0x648] sm:$0xff]
    %v382 = vld [vmem:[#allocation5 + $0x650] sm:$0xff]
    %v383 = vld [vmem:[#allocation5 + $0x658] sm:$0xff]
    %v384 = vld [vmem:[#allocation5 + $0x660] sm:$0xff]
    %v385 = vld [vmem:[#allocation5 + $0x668] sm:$0xff]
    %v386 = vld [vmem:[#allocation5 + $0x670] sm:$0xff]
    %v387 = vld [vmem:[#allocation5 + $0x678] sm:$0xff]
    %v388 = vld [vmem:[#allocation5 + $0x680] sm:$0xff]
    %v389 = vld [vmem:[#allocation5 + $0x688] sm:$0xff]
    %v390 = vld [vmem:[#allocation5 + $0x690] sm:$0xff]
    %v391 = vld [vmem:[#allocation5 + $0x698] sm:$0xff]
    %v392 = vld [vmem:[#allocation5 + $0x6a0] sm:$0xff]
    %v393 = vld [vmem:[#allocation5 + $0x6a8] sm:$0xff]
    %v394 = vld [vmem:[#allocation5 + $0x6b0] sm:$0xff]
    %v395 = vld [vmem:[#allocation5 + $0x6b8] sm:$0xff]
    %v396 = vld [vmem:[#allocation5 + $0x6c0] sm:$0xff]
    %v397 = vld [vmem:[#allocation5 + $0x6c8] sm:$0xff]
    %v398 = vld [vmem:[#allocation5 + $0x6d0] sm:$0xff]
    %v399 = vld [vmem:[#allocation5 + $0x6d8] sm:$0xff]
    %v400 = vld [vmem:[#allocation5 + $0x6e0] sm:$0xff]
    %v401 = vld [vmem:[#allocation5 + $0x6e8] sm:$0xff]
    %v402 = vld [vmem:[#allocation5 + $0x6f0] sm:$0xff]
    %v403 = vld [vmem:[#allocation5 + $0x6f8] sm:$0xff]
    %v404 = vld [vmem:[#allocation5 + $0x700] sm:$0xff]
    %v405 = vld [vmem:[#allocation5 + $0x708] sm:$0xff]
    %v406 = vld [vmem:[#allocation5 + $0x710] sm:$0xff]
    %v407 = vld [vmem:[#allocation5 + $0x718] sm:$0xff]
    %v408 = vld [vmem:[#allocation5 + $0x720] sm:$0xff]
    %v409 = vld [vmem:[#allocation5 + $0x728] sm:$0xff]
    %v410 = vld [vmem:[#allocation5 + $0x730] sm:$0xff]
    %v411 = vld [vmem:[#allocation5 + $0x738] sm:$0xff]
    %v412 = vld [vmem:[#allocation5 + $0x740] sm:$0xff]
    %v413 = vld [vmem:[#allocation5 + $0x748] sm:$0xff]
    %v414 = vld [vmem:[#allocation5 + $0x750] sm:$0xff]
    %v415 = vld [vmem:[#allocation5 + $0x758] sm:$0xff]
    %v416 = vld [vmem:[#allocation5 + $0x760] sm:$0xff]
    %v417 = vld [vmem:[#allocation5 + $0x768] sm:$0xff]
    %v418 = vld [vmem:[#allocation5 + $0x770] sm:$0xff]
    %v419 = vld [vmem:[#allocation5 + $0x778] sm:$0xff]
    %v420 = vld [vmem:[#allocation5 + $0x780] sm:$0xff]
    %v421 = vld [vmem:[#allocation5 + $0x788] sm:$0xff]
    %v422 = vld [vmem:[#allocation5 + $0x790] sm:$0xff]
    %v423 = vld [vmem:[#allocation5 + $0x798] sm:$0xff]
    %v424 = vld [vmem:[#allocation5 + $0x7a0] sm:$0xff]
    %v425 = vld [vmem:[#allocation5 + $0x7a8] sm:$0xff]
    %v426 = vld [vmem:[#allocation5 + $0x7b0] sm:$0xff]
    %v427 = vld [vmem:[#allocation5 + $0x7b8] sm:$0xff]
    %v428 = vld [vmem:[#allocation5 + $0x7c0] sm:$0xff]
    %v429 = vld [vmem:[#allocation5 + $0x7c8] sm:$0xff]
    %v430 = vld [vmem:[#allocation5 + $0x7d0] sm:$0xff]
    %v431 = vld [vmem:[#allocation5 + $0x7d8] sm:$0xff]
    %v432 = vld [vmem:[#allocation5 + $0x7e0] sm:$0xff]
    %v433 = vld [vmem:[#allocation5 + $0x7e8] sm:$0xff]
    %v434 = vld [vmem:[#allocation5 + $0x7f0] sm:$0xff]
    %v435 = vld [vmem:[#allocation5 + $0x7f8] sm:$0xff]
    %436 = vmatprep.subr.mxu0 %v241
    %437 = vmatpush1.msra.mxu0 %v240
    %438 = vmatprep.subr.mxu0 %v237
    %439 = vmatpush1.msra.mxu0 %v236
    %440 = vmatprep.subr.mxu0 %v233
    %441 = vmatpush1.msra.mxu0 %v232
    %442 = vmatprep.subr.mxu0 %v229
    %443 = vmatpush1.msra.mxu0 %v228
    %444 = vmatprep.subr.mxu0 %v225
    %445 = vmatpush1.msra.mxu0 %v224
    %446 = vmatprep.subr.mxu0 %v221
    %447 = vmatpush1.msra.mxu0 %v220
    %448 = vmatprep.subr.mxu0 %v217
    %449 = vmatpush1.msra.mxu0 %v216
    %450 = vmatprep.subr.mxu0 %v213
    %451 = vmatpush1.msra.mxu0 %v212
    %452 = vmatprep.subr.mxu0 %v209
    %453 = vmatpush1.msra.mxu0 %v208
    %454 = vmatprep.subr.mxu0 %v205
    %455 = vmatpush1.msra.mxu0 %v204
    %456 = vmatprep.subr.mxu0 %v201
    %457 = vmatpush1.msra.mxu0 %v200
    %458 = vmatprep.subr.mxu0 %v197
    %459 = vmatpush1.msra.mxu0 %v196
    %460 = vmatprep.subr.mxu0 %v193
    %461 = vmatpush1.msra.mxu0 %v192
    %462 = vmatprep.subr.mxu0 %v189
    %463 = vmatpush1.msra.mxu0 %v188
    %464 = vmatprep.subr.mxu0 %v185
    %465 = vmatpush1.msra.mxu0 %v184
    %466 = vmatprep.subr.mxu0 %v181
    %467 = vmatpush1.msra.mxu0 %v180
    %468 = vmatprep.subr.mxu0 %v305
    %469 = vmatpush2.msra.mxu0 %v304
    %470 = vmatprep.subr.mxu0 %v301
    %471 = vmatpush2.msra.mxu0 %v300
    %472 = vmatprep.subr.mxu0 %v297
    %473 = vmatpush2.msra.mxu0 %v296
    %474 = vmatprep.subr.mxu0 %v293
    %475 = vmatpush2.msra.mxu0 %v292
    %476 = vmatprep.subr.mxu0 %v289
    %477 = vmatpush2.msra.mxu0 %v288
    %478 = vmatprep.subr.mxu0 %v285
    %479 = vmatpush2.msra.mxu0 %v284
    %480 = vmatprep.subr.mxu0 %v281
    %481 = vmatpush2.msra.mxu0 %v280
    %482 = vmatprep.subr.mxu0 %v277
    %483 = vmatpush2.msra.mxu0 %v276
    %484 = vmatprep.subr.mxu0 %v273
    %485 = vmatpush2.msra.mxu0 %v272
    %486 = vmatprep.subr.mxu0 %v269
    %487 = vmatpush2.msra.mxu0 %v268
    %488 = vmatprep.subr.mxu0 %v265
    %489 = vmatpush2.msra.mxu0 %v264
    %490 = vmatprep.subr.mxu0 %v261
    %491 = vmatpush2.msra.mxu0 %v260
    %492 = vmatprep.subr.mxu0 %v257
    %493 = vmatpush2.msra.mxu0 %v256
    %494 = vmatprep.subr.mxu0 %v253
    %495 = vmatpush2.msra.mxu0 %v252
    %496 = vmatprep.subr.mxu0 %v249
    %497 = vmatpush2.msra.mxu0 %v248
    %498 = vmatprep.subr.mxu0 %v245
    %499 = vmatpush2.msra.mxu0 %v244
    %500 = vmatprep.mubr.f32.mxu0 %v177
    %501 = vmatmul.mubr.f32.gmra.mxu0 %v176
    %v502 = vpop.f32.mrf.mxu0
    %v503 = vadd.f32 0.0, %v502
    %v504 = vpop.f32.mrf.mxu0
    %v505 = vadd.f32 0.0, %v504
    %506 = vdwg.mxu0
    %507 = vmatprep.subr.mxu0 %v369
    %508 = vmatpush1.msra.mxu0 %v368
    %509 = vmatprep.subr.mxu0 %v365
    %510 = vmatpush1.msra.mxu0 %v364
    %511 = vmatprep.subr.mxu0 %v361
    %512 = vmatpush1.msra.mxu0 %v360
    %513 = vmatprep.subr.mxu0 %v357
    %514 = vmatpush1.msra.mxu0 %v356
    %515 = vmatprep.subr.mxu0 %v353
    %516 = vmatpush1.msra.mxu0 %v352
    %517 = vmatprep.subr.mxu0 %v349
    %518 = vmatpush1.msra.mxu0 %v348
    %519 = vmatprep.subr.mxu0 %v345
    %520 = vmatpush1.msra.mxu0 %v344
    %521 = vmatprep.subr.mxu0 %v341
    %522 = vmatpush1.msra.mxu0 %v340
    %523 = vmatprep.subr.mxu0 %v337
    %524 = vmatpush1.msra.mxu0 %v336
    %525 = vmatprep.subr.mxu0 %v333
    %526 = vmatpush1.msra.mxu0 %v332
    %527 = vmatprep.subr.mxu0 %v329
    %528 = vmatpush1.msra.mxu0 %v328
    %529 = vmatprep.subr.mxu0 %v325
    %530 = vmatpush1.msra.mxu0 %v324
    %531 = vmatprep.subr.mxu0 %v321
    %532 = vmatpush1.msra.mxu0 %v320
    %533 = vmatprep.subr.mxu0 %v317
    %534 = vmatpush1.msra.mxu0 %v316
    %535 = vmatprep.subr.mxu0 %v313
    %536 = vmatpush1.msra.mxu0 %v312
    %537 = vmatprep.subr.mxu0 %v309
    %538 = vmatpush1.msra.mxu0 %v308
    %539 = vmatprep.subr.mxu0 %v433
    %540 = vmatpush2.msra.mxu0 %v432
    %541 = vmatprep.subr.mxu0 %v429
    %542 = vmatpush2.msra.mxu0 %v428
    %543 = vmatprep.subr.mxu0 %v425
    %544 = vmatpush2.msra.mxu0 %v424
    %545 = vmatprep.subr.mxu0 %v421
    %546 = vmatpush2.msra.mxu0 %v420
    %547 = vmatprep.subr.mxu0 %v417
    %548 = vmatpush2.msra.mxu0 %v416
    %549 = vmatprep.subr.mxu0 %v413
    %550 = vmatpush2.msra.mxu0 %v412
    %551 = vmatprep.subr.mxu0 %v409
    %552 = vmatpush2.msra.mxu0 %v408
    %553 = vmatprep.subr.mxu0 %v405
    %554 = vmatpush2.msra.mxu0 %v404
    %555 = vmatprep.subr.mxu0 %v401
    %556 = vmatpush2.msra.mxu0 %v400
    %557 = vmatprep.subr.mxu0 %v397
    %558 = vmatpush2.msra.mxu0 %v396
    %559 = vmatprep.subr.mxu0 %v393
    %560 = vmatpush2.msra.mxu0 %v392
    %561 = vmatprep.subr.mxu0 %v389
    %562 = vmatpush2.msra.mxu0 %v388
    %563 = vmatprep.subr.mxu0 %v385
    %564 = vmatpush2.msra.mxu0 %v384
    %565 = vmatprep.subr.mxu0 %v381
    %566 = vmatpush2.msra.mxu0 %v380
    %567 = vmatprep.subr.mxu0 %v377
    %568 = vmatpush2.msra.mxu0 %v376
    %569 = vmatprep.subr.mxu0 %v373
    %570 = vmatpush2.msra.mxu0 %v372
    %571 = vmatprep.mubr.f32.mxu0 %v179
    %572 = vmatmul.mubr.f32.gmra.mxu0 %v178
    %v573 = vpop.f32.mrf.mxu0
    %v574 = vadd.f32 %v503, %v573
    %v575 = vpop.f32.mrf.mxu0
    %v576 = vadd.f32 %v505, %v575
    %577 = vdwg.mxu0
    %578 = vmatprep.subr.mxu0 %v243
    %579 = vmatpush1.msra.mxu0 %v242
    %580 = vmatprep.subr.mxu0 %v239
    %581 = vmatpush1.msra.mxu0 %v238
    %582 = vmatprep.subr.mxu0 %v235
    %583 = vmatpush1.msra.mxu0 %v234
    %584 = vmatprep.subr.mxu0 %v231
    %585 = vmatpush1.msra.mxu0 %v230
    %586 = vmatprep.subr.mxu0 %v227
    %587 = vmatpush1.msra.mxu0 %v226
    %588 = vmatprep.subr.mxu0 %v223
    %589 = vmatpush1.msra.mxu0 %v222
    %590 = vmatprep.subr.mxu0 %v219
    %591 = vmatpush1.msra.mxu0 %v218
    %592 = vmatprep.subr.mxu0 %v215
    %593 = vmatpush1.msra.mxu0 %v214
    %594 = vmatprep.subr.mxu0 %v211
    %595 = vmatpush1.msra.mxu0 %v210
    %596 = vmatprep.subr.mxu0 %v207
    %597 = vmatpush1.msra.mxu0 %v206
    %598 = vmatprep.subr.mxu0 %v203
    %599 = vmatpush1.msra.mxu0 %v202
    %600 = vmatprep.subr.mxu0 %v199
    %601 = vmatpush1.msra.mxu0 %v198
    %602 = vmatprep.subr.mxu0 %v195
    %603 = vmatpush1.msra.mxu0 %v194
    %604 = vmatprep.subr.mxu0 %v191
    %605 = vmatpush1.msra.mxu0 %v190
    %606 = vmatprep.subr.mxu0 %v187
    %607 = vmatpush1.msra.mxu0 %v186
    %608 = vmatprep.subr.mxu0 %v183
    %609 = vmatpush1.msra.mxu0 %v182
    %610 = vmatprep.subr.mxu0 %v307
    %611 = vmatpush2.msra.mxu0 %v306
    %612 = vmatprep.subr.mxu0 %v303
    %613 = vmatpush2.msra.mxu0 %v302
    %614 = vmatprep.subr.mxu0 %v299
    %615 = vmatpush2.msra.mxu0 %v298
    %616 = vmatprep.subr.mxu0 %v295
    %617 = vmatpush2.msra.mxu0 %v294
    %618 = vmatprep.subr.mxu0 %v291
    %619 = vmatpush2.msra.mxu0 %v290
    %620 = vmatprep.subr.mxu0 %v287
    %621 = vmatpush2.msra.mxu0 %v286
    %622 = vmatprep.subr.mxu0 %v283
    %623 = vmatpush2.msra.mxu0 %v282
    %624 = vmatprep.subr.mxu0 %v279
    %625 = vmatpush2.msra.mxu0 %v278
    %626 = vmatprep.subr.mxu0 %v275
    %627 = vmatpush2.msra.mxu0 %v274
    %628 = vmatprep.subr.mxu0 %v271
    %629 = vmatpush2.msra.mxu0 %v270
    %630 = vmatprep.subr.mxu0 %v267
    %631 = vmatpush2.msra.mxu0 %v266
    %632 = vmatprep.subr.mxu0 %v263
    %633 = vmatpush2.msra.mxu0 %v262
    %634 = vmatprep.subr.mxu0 %v259
    %635 = vmatpush2.msra.mxu0 %v258
    %636 = vmatprep.subr.mxu0 %v255
    %637 = vmatpush2.msra.mxu0 %v254
    %638 = vmatprep.subr.mxu0 %v251
    %639 = vmatpush2.msra.mxu0 %v250
    %640 = vmatprep.subr.mxu0 %v247
    %641 = vmatpush2.msra.mxu0 %v246
    %642 = vmatprep.mubr.f32.mxu0 %v177
    %643 = vmatmul.mubr.f32.gmra.mxu0 %v176
    %v644 = vpop.f32.mrf.mxu0
    %v645 = vadd.f32 0.0, %v644
    %v646 = vpop.f32.mrf.mxu0
    %v647 = vadd.f32 0.0, %v646
    %648 = vdwg.mxu0
    %649 = vmatprep.subr.mxu0 %v371
    %650 = vmatpush1.msra.mxu0 %v370
    %651 = vmatprep.subr.mxu0 %v367
    %652 = vmatpush1.msra.mxu0 %v366
    %653 = vmatprep.subr.mxu0 %v363
    %654 = vmatpush1.msra.mxu0 %v362
    %655 = vmatprep.subr.mxu0 %v359
    %656 = vmatpush1.msra.mxu0 %v358
    %657 = vmatprep.subr.mxu0 %v355
    %658 = vmatpush1.msra.mxu0 %v354
    %659 = vmatprep.subr.mxu0 %v351
    %660 = vmatpush1.msra.mxu0 %v350
    %661 = vmatprep.subr.mxu0 %v347
    %662 = vmatpush1.msra.mxu0 %v346
    %663 = vmatprep.subr.mxu0 %v343
    %664 = vmatpush1.msra.mxu0 %v342
    %665 = vmatprep.subr.mxu0 %v339
    %666 = vmatpush1.msra.mxu0 %v338
    %667 = vmatprep.subr.mxu0 %v335
    %668 = vmatpush1.msra.mxu0 %v334
    %669 = vmatprep.subr.mxu0 %v331
    %670 = vmatpush1.msra.mxu0 %v330
    %671 = vmatprep.subr.mxu0 %v327
    %672 = vmatpush1.msra.mxu0 %v326
    %673 = vmatprep.subr.mxu0 %v323
    %674 = vmatpush1.msra.mxu0 %v322
    %675 = vmatprep.subr.mxu0 %v319
    %676 = vmatpush1.msra.mxu0 %v318
    %677 = vmatprep.subr.mxu0 %v315
    %678 = vmatpush1.msra.mxu0 %v314
    %679 = vmatprep.subr.mxu0 %v311
    %680 = vmatpush1.msra.mxu0 %v310
    %681 = vmatprep.subr.mxu0 %v435
    %682 = vmatpush2.msra.mxu0 %v434
    %683 = vmatprep.subr.mxu0 %v431
    %684 = vmatpush2.msra.mxu0 %v430
    %685 = vmatprep.subr.mxu0 %v427
    %686 = vmatpush2.msra.mxu0 %v426
    %687 = vmatprep.subr.mxu0 %v423
    %688 = vmatpush2.msra.mxu0 %v422
    %689 = vmatprep.subr.mxu0 %v419
    %690 = vmatpush2.msra.mxu0 %v418
    %691 = vmatprep.subr.mxu0 %v415
    %692 = vmatpush2.msra.mxu0 %v414
    %693 = vmatprep.subr.mxu0 %v411
    %694 = vmatpush2.msra.mxu0 %v410
    %695 = vmatprep.subr.mxu0 %v407
    %696 = vmatpush2.msra.mxu0 %v406
    %697 = vmatprep.subr.mxu0 %v403
    %698 = vmatpush2.msra.mxu0 %v402
    %699 = vmatprep.subr.mxu0 %v399
    %700 = vmatpush2.msra.mxu0 %v398
    %701 = vmatprep.subr.mxu0 %v395
    %702 = vmatpush2.msra.mxu0 %v394
    %703 = vmatprep.subr.mxu0 %v391
    %704 = vmatpush2.msra.mxu0 %v390
    %705 = vmatprep.subr.mxu0 %v387
    %706 = vmatpush2.msra.mxu0 %v386
    %707 = vmatprep.subr.mxu0 %v383
    %708 = vmatpush2.msra.mxu0 %v382
    %709 = vmatprep.subr.mxu0 %v379
    %710 = vmatpush2.msra.mxu0 %v378
    %711 = vmatprep.subr.mxu0 %v375
    %712 = vmatpush2.msra.mxu0 %v374
    %713 = vmatprep.mubr.f32.mxu0 %v179
    %714 = vmatmul.mubr.f32.gmra.mxu0 %v178
    %v715 = vpop.f32.mrf.mxu0
    %v716 = vadd.f32 %v645, %v715
    %v717 = vpop.f32.mrf.mxu0
    %v718 = vadd.f32 %v647, %v717
    %719 = vdwg.mxu0
    %720 = vst [vmem:[#allocation3] sm:$0xff] %v574
    %721 = vst [vmem:[#allocation3 + $0x8] sm:$0xff] %v576
    %722 = vst [vmem:[#allocation3 + $0x10] sm:$0xff] %v716
    %723 = vst [vmem:[#allocation3 + $0x18] sm:$0xff] %v718
    %v724 = vld [vmem:[%s1] sm:$0xff]
    %v725 = vld [vmem:[%s1 + $0x8] sm:$0xff]
    %v726 = vld [vmem:[%s1 + $0x10] sm:$0xff]
    %v727 = vld [vmem:[%s1 + $0x18] sm:$0xff]
    %v728 = vld [vmem:[%s1 + $0x20] sm:$0xff]
    %v729 = vld [vmem:[%s1 + $0x28] sm:$0xff]
    %v730 = vld [vmem:[%s1 + $0x30] sm:$0xff]
    %v731 = vlaneseq
    %v732 = vand.u32 %v731, 127
    %733 = vset.pattern.permute.xlu0 0
    %734 = vperm.xlu0 %733, %v724
    %v735 = vpop.permute.xlu0 %734
    %736 = vset.pattern.permute.xlu0 0
    %737 = vperm.xlu0 %736, %v725
    %v738 = vpop.permute.xlu0 %737
    %739 = vset.pattern.permute.xlu0 0
    %740 = vperm.xlu0 %739, %v726
    %v741 = vpop.permute.xlu0 %740
    %742 = vset.pattern.permute.xlu0 0
    %743 = vperm.xlu0 %742, %v727
    %v744 = vpop.permute.xlu0 %743
    %745 = vset.pattern.permute.xlu0 0
    %746 = vperm.xlu0 %745, %v728
    %v747 = vpop.permute.xlu0 %746
    %748 = vset.pattern.permute.xlu0 0
    %749 = vperm.xlu0 %748, %v729
    %v750 = vpop.permute.xlu0 %749
    %751 = vset.pattern.permute.xlu0 0
    %752 = vperm.xlu0 %751, %v730
    %v753 = vpop.permute.xlu0 %752
    %vm754 = vcmp.eq.s32.totalorder %v735, %v732
    %vm755 = vcmp.eq.s32.totalorder %v738, %v732
    %vm756 = vcmp.eq.s32.totalorder %v741, %v732
    %vm757 = vcmp.eq.s32.totalorder %v744, %v732
    %vm758 = vcmp.eq.s32.totalorder %v747, %v732
    %vm759 = vcmp.eq.s32.totalorder %v750, %v732
    %vm760 = vcmp.eq.s32.totalorder %v753, %v732
    %v761 = vsel %vm754, 1, 0
    %v762 = vsel %vm755, 1, 0
    %v763 = vsel %vm756, 1, 0
    %v764 = vsel %vm757, 1, 0
    %v765 = vsel %vm758, 1, 0
    %v766 = vsel %vm759, 1, 0
    %v767 = vsel %vm760, 1, 0
    %v768 = vcvt.s32.f32 %v761
    %v769 = vcvt.s32.f32 %v762
    %v770 = vcvt.s32.f32 %v763
    %v771 = vcvt.s32.f32 %v764
    %v772 = vcvt.s32.f32 %v765
    %v773 = vcvt.s32.f32 %v766
    %v774 = vcvt.s32.f32 %v767
    %v775 = vld [vmem:[%s5] sm:$0xff]
    %v776 = vld [vmem:[%s5 + $0x8] sm:$0xff]
    %v777 = vld [vmem:[%s5 + $0x10] sm:$0xff]
    %v778 = vld [vmem:[%s5 + $0x18] sm:$0xff]
    %v780 = vsel %vm102, %v768, 0
    %v783 = vsel %vm102, %v769, 0
    %v786 = vsel %vm102, %v770, 0
    %v789 = vsel %vm102, %v771, 0
    %v792 = vsel %vm102, %v772, 0
    %v795 = vsel %vm102, %v773, 0
    %v798 = vsel %vm102, %v774, 0
    %800 = vmatprep.subr.mxu0 0.0
    %801 = vmatpush1.msra.mxu0 0.0
    %802 = vmatprep.subr.mxu0 0.0
    %803 = vmatpush1.msra.mxu0 0.0
    %804 = vmatprep.subr.mxu0 0.0
    %805 = vmatpush1.msra.mxu0 0.0
    %806 = vmatprep.subr.mxu0 0.0
    %807 = vmatpush1.msra.mxu0 0.0
    %808 = vmatprep.subr.mxu0 0.0
    %809 = vmatpush1.msra.mxu0 0.0
    %810 = vmatprep.subr.mxu0 0.0
    %811 = vmatpush1.msra.mxu0 0.0
    %812 = vmatprep.subr.mxu0 0.0
    %813 = vmatpush1.msra.mxu0 0.0
    %814 = vmatprep.subr.mxu0 0.0
    %815 = vmatpush1.msra.mxu0 0.0
    %816 = vmatprep.subr.mxu0 0.0
    %817 = vmatpush1.msra.mxu0 0.0
    %818 = vmatprep.subr.mxu0 0.0
    %819 = vmatpush1.msra.mxu0 0.0
    %820 = vmatprep.subr.mxu0 0.0
    %821 = vmatpush1.msra.mxu0 0.0
    %822 = vmatprep.subr.mxu0 0.0
    %823 = vmatpush1.msra.mxu0 0.0
    %824 = vmatprep.subr.mxu0 0.0
    %825 = vmatpush1.msra.mxu0 %v778
    %826 = vmatprep.subr.mxu0 0.0
    %827 = vmatpush1.msra.mxu0 %v777
    %828 = vmatprep.subr.mxu0 0.0
    %829 = vmatpush1.msra.mxu0 %v776
    %830 = vmatprep.subr.mxu0 0.0
    %831 = vmatpush1.msra.mxu0 %v775
    %832 = vmatprep.subr.mxu0 0.0
    %833 = vmatpush2.msra.mxu0 0.0
    %834 = vmatprep.subr.mxu0 0.0
    %835 = vmatpush2.msra.mxu0 0.0
    %836 = vmatprep.subr.mxu0 0.0
    %837 = vmatpush2.msra.mxu0 0.0
    %838 = vmatprep.subr.mxu0 0.0
    %839 = vmatpush2.msra.mxu0 0.0
    %840 = vmatprep.subr.mxu0 0.0
    %841 = vmatpush2.msra.mxu0 0.0
    %842 = vmatprep.subr.mxu0 0.0
    %843 = vmatpush2.msra.mxu0 0.0
    %844 = vmatprep.subr.mxu0 0.0
    %845 = vmatpush2.msra.mxu0 0.0
    %846 = vmatprep.subr.mxu0 0.0
    %847 = vmatpush2.msra.mxu0 0.0
    %848 = vmatprep.subr.mxu0 0.0
    %849 = vmatpush2.msra.mxu0 0.0
    %850 = vmatprep.subr.mxu0 0.0
    %851 = vmatpush2.msra.mxu0 0.0
    %852 = vmatprep.subr.mxu0 0.0
    %853 = vmatpush2.msra.mxu0 0.0
    %854 = vmatprep.subr.mxu0 0.0
    %855 = vmatpush2.msra.mxu0 0.0
    %856 = vmatprep.subr.mxu0 0.0
    %857 = vmatpush2.msra.mxu0 0.0
    %858 = vmatprep.subr.mxu0 0.0
    %859 = vmatpush2.msra.mxu0 0.0
    %860 = vmatprep.subr.mxu0 0.0
    %861 = vmatpush2.msra.mxu0 0.0
    %862 = vmatprep.subr.mxu0 0.0
    %863 = vmatpush2.msra.mxu0 0.0
    %864 = vmatprep.mubr.f32.mxu0 0.0
    %865 = vmatmul.mubr.f32.gmra.mxu0 %v780
    %v866 = vpop.f32.mrf.mxu0
    %v867 = vadd.f32 0.0, %v866
    %v868 = vpop.f32.mrf.mxu0
    %869 = vmatprep.mubr.f32.mxu0 0.0
    %870 = vmatmul.mubr.f32.gmra.mxu0 %v783
    %v871 = vpop.f32.mrf.mxu0
    %v872 = vadd.f32 0.0, %v871
    %v873 = vpop.f32.mrf.mxu0
    %874 = vmatprep.mubr.f32.mxu0 0.0
    %875 = vmatmul.mubr.f32.gmra.mxu0 %v786
    %v876 = vpop.f32.mrf.mxu0
    %v877 = vadd.f32 0.0, %v876
    %v878 = vpop.f32.mrf.mxu0
    %879 = vmatprep.mubr.f32.mxu0 0.0
    %880 = vmatmul.mubr.f32.gmra.mxu0 %v789
    %v881 = vpop.f32.mrf.mxu0
    %v882 = vadd.f32 0.0, %v881
    %v883 = vpop.f32.mrf.mxu0
    %884 = vmatprep.mubr.f32.mxu0 0.0
    %885 = vmatmul.mubr.f32.gmra.mxu0 %v792
    %v886 = vpop.f32.mrf.mxu0
    %v887 = vadd.f32 0.0, %v886
    %v888 = vpop.f32.mrf.mxu0
    %889 = vmatprep.mubr.f32.mxu0 0.0
    %890 = vmatmul.mubr.f32.gmra.mxu0 %v795
    %v891 = vpop.f32.mrf.mxu0
    %v892 = vadd.f32 0.0, %v891
    %v893 = vpop.f32.mrf.mxu0
    %894 = vmatprep.mubr.f32.mxu0 0.0
    %895 = vmatmul.mubr.f32.gmra.mxu0 %v798
    %v896 = vpop.f32.mrf.mxu0
    %v897 = vadd.f32 0.0, %v896
    %v898 = vpop.f32.mrf.mxu0
    %899 = vdwg.mxu0
    %v900 = vld [vmem:[%s6] sm:$0xff]
    %v901 = vld [vmem:[%s6 + $0x8] sm:$0xff]
    %v902 = vld [vmem:[%s6 + $0x10] sm:$0xff]
    %v903 = vld [vmem:[%s6 + $0x18] sm:$0xff]
    %v904 = vld [vmem:[%s7] sm:$0x1]
    %v906 = vlaneseq
    %v907 = vshrl.u32 %v906, 7
    %v908 = vsub.s32 0, %v907
    %v909 = vrot.slane %v904, %v908
    %v912 = vsel %vm102, %v867, 0
    %v915 = vsel %vm102, %v872, 0
    %v918 = vsel %vm102, %v877, 0
    %v921 = vsel %vm102, %v882, 0
    %v924 = vsel %vm102, %v887, 0
    %v927 = vsel %vm102, %v892, 0
    %v930 = vsel %vm102, %v897, 0
    %932 = vmatprep.subr.mxu0 0.0
    %933 = vmatpush1.msra.mxu0 0.0
    %934 = vmatprep.subr.mxu0 0.0
    %935 = vmatpush1.msra.mxu0 0.0
    %936 = vmatprep.subr.mxu0 0.0
    %937 = vmatpush1.msra.mxu0 0.0
    %938 = vmatprep.subr.mxu0 0.0
    %939 = vmatpush1.msra.mxu0 0.0
    %940 = vmatprep.subr.mxu0 0.0
    %941 = vmatpush1.msra.mxu0 0.0
    %942 = vmatprep.subr.mxu0 0.0
    %943 = vmatpush1.msra.mxu0 0.0
    %944 = vmatprep.subr.mxu0 0.0
    %945 = vmatpush1.msra.mxu0 0.0
    %946 = vmatprep.subr.mxu0 0.0
    %947 = vmatpush1.msra.mxu0 0.0
    %948 = vmatprep.subr.mxu0 0.0
    %949 = vmatpush1.msra.mxu0 0.0
    %950 = vmatprep.subr.mxu0 0.0
    %951 = vmatpush1.msra.mxu0 0.0
    %952 = vmatprep.subr.mxu0 0.0
    %953 = vmatpush1.msra.mxu0 0.0
    %954 = vmatprep.subr.mxu0 0.0
    %955 = vmatpush1.msra.mxu0 0.0
    %956 = vmatprep.subr.mxu0 0.0
    %957 = vmatpush1.msra.mxu0 %v903
    %958 = vmatprep.subr.mxu0 0.0
    %959 = vmatpush1.msra.mxu0 %v902
    %960 = vmatprep.subr.mxu0 0.0
    %961 = vmatpush1.msra.mxu0 %v901
    %962 = vmatprep.subr.mxu0 0.0
    %963 = vmatpush1.msra.mxu0 %v900
    %964 = vmatprep.subr.mxu0 0.0
    %965 = vmatpush2.msra.mxu0 0.0
    %966 = vmatprep.subr.mxu0 0.0
    %967 = vmatpush2.msra.mxu0 0.0
    %968 = vmatprep.subr.mxu0 0.0
    %969 = vmatpush2.msra.mxu0 0.0
    %970 = vmatprep.subr.mxu0 0.0
    %971 = vmatpush2.msra.mxu0 0.0
    %972 = vmatprep.subr.mxu0 0.0
    %973 = vmatpush2.msra.mxu0 0.0
    %974 = vmatprep.subr.mxu0 0.0
    %975 = vmatpush2.msra.mxu0 0.0
    %976 = vmatprep.subr.mxu0 0.0
    %977 = vmatpush2.msra.mxu0 0.0
    %978 = vmatprep.subr.mxu0 0.0
    %979 = vmatpush2.msra.mxu0 0.0
    %980 = vmatprep.subr.mxu0 0.0
    %981 = vmatpush2.msra.mxu0 0.0
    %982 = vmatprep.subr.mxu0 0.0
    %983 = vmatpush2.msra.mxu0 0.0
    %984 = vmatprep.subr.mxu0 0.0
    %985 = vmatpush2.msra.mxu0 0.0
    %986 = vmatprep.subr.mxu0 0.0
    %987 = vmatpush2.msra.mxu0 0.0
    %988 = vmatprep.subr.mxu0 0.0
    %989 = vmatpush2.msra.mxu0 0.0
    %990 = vmatprep.subr.mxu0 0.0
    %991 = vmatpush2.msra.mxu0 0.0
    %992 = vmatprep.subr.mxu0 0.0
    %993 = vmatpush2.msra.mxu0 0.0
    %994 = vmatprep.subr.mxu0 0.0
    %995 = vmatpush2.msra.mxu0 0.0
    %996 = vmatprep.mubr.f32.mxu0 0.0
    %997 = vmatmul.mubr.f32.gmra.mxu0 %v912
    %v998 = vpop.f32.mrf.mxu0
    %v999 = vadd.f32 %v909, %v998
    %v1000 = vpop.f32.mrf.mxu0
    %1001 = vmatprep.mubr.f32.mxu0 0.0
    %1002 = vmatmul.mubr.f32.gmra.mxu0 %v915
    %v1003 = vpop.f32.mrf.mxu0
    %v1004 = vadd.f32 %v909, %v1003
    %v1005 = vpop.f32.mrf.mxu0
    %1006 = vmatprep.mubr.f32.mxu0 0.0
    %1007 = vmatmul.mubr.f32.gmra.mxu0 %v918
    %v1008 = vpop.f32.mrf.mxu0
    %v1009 = vadd.f32 %v909, %v1008
    %v1010 = vpop.f32.mrf.mxu0
    %1011 = vmatprep.mubr.f32.mxu0 0.0
    %1012 = vmatmul.mubr.f32.gmra.mxu0 %v921
    %v1013 = vpop.f32.mrf.mxu0
    %v1014 = vadd.f32 %v909, %v1013
    %v1015 = vpop.f32.mrf.mxu0
    %1016 = vmatprep.mubr.f32.mxu0 0.0
    %1017 = vmatmul.mubr.f32.gmra.mxu0 %v924
    %v1018 = vpop.f32.mrf.mxu0
    %v1019 = vadd.f32 %v909, %v1018
    %v1020 = vpop.f32.mrf.mxu0
    %1021 = vmatprep.mubr.f32.mxu0 0.0
    %1022 = vmatmul.mubr.f32.gmra.mxu0 %v927
    %v1023 = vpop.f32.mrf.mxu0
    %v1024 = vadd.f32 %v909, %v1023
    %v1025 = vpop.f32.mrf.mxu0
    %1026 = vmatprep.mubr.f32.mxu0 0.0
    %1027 = vmatmul.mubr.f32.gmra.mxu0 %v930
    %v1028 = vpop.f32.mrf.mxu0
    %v1029 = vadd.f32 %v909, %v1028
    %v1030 = vpop.f32.mrf.mxu0
    %1031 = vdwg.mxu0
    %1032 = vst [vmem:[#allocation2] sm:$0xff] %v999
    %1033 = vst [vmem:[#allocation2 + $0x8] sm:$0xff] %v1004
    %1034 = vst [vmem:[#allocation2 + $0x10] sm:$0xff] %v1009
    %1035 = vst [vmem:[#allocation2 + $0x18] sm:$0xff] %v1014
    %1036 = vst [vmem:[#allocation2 + $0x20] sm:$0xff] %v1019
    %1037 = vst [vmem:[#allocation2 + $0x28] sm:$0xff] %v1024
    %1038 = vst [vmem:[#allocation2 + $0x30] sm:$0xff] %v1029
    %s1039 = sld [smem:[#allocation4]]
    %v1040 = vld [vmem:[#allocation2] sm:$0xff]
    %v1041 = vld [vmem:[%s11] sm:$0xff]
    %v1042 = vld [vmem:[%s11 + $0x8] sm:$0xff]
    %v1043 = vld [vmem:[%s11 + $0x10] sm:$0xff]
    %v1044 = vld [vmem:[%s11 + $0x18] sm:$0xff]
    %v1045 = vld [vmem:[%s11 + $0x20] sm:$0xff]
    %v1046 = vld [vmem:[%s11 + $0x28] sm:$0xff]
    %v1047 = vld [vmem:[%s11 + $0x30] sm:$0xff]
    %v1048 = vld [vmem:[%s11 + $0x38] sm:$0xff]
    %v1049 = vld [vmem:[%s11 + $0x40] sm:$0xff]
    %v1050 = vld [vmem:[%s11 + $0x48] sm:$0xff]
    %v1051 = vld [vmem:[%s11 + $0x50] sm:$0xff]
    %v1052 = vld [vmem:[%s11 + $0x58] sm:$0xff]
    %v1053 = vld [vmem:[%s11 + $0x60] sm:$0xff]
    %v1054 = vld [vmem:[%s11 + $0x68] sm:$0xff]
    %v1055 = vld [vmem:[%s11 + $0x70] sm:$0xff]
    %v1056 = vld [vmem:[%s11 + $0x78] sm:$0xff]
    %v1057 = vld [vmem:[%s11 + $0x80] sm:$0xff]
    %v1058 = vld [vmem:[%s11 + $0x88] sm:$0xff]
    %v1059 = vld [vmem:[%s11 + $0x90] sm:$0xff]
    %v1060 = vld [vmem:[%s11 + $0x98] sm:$0xff]
    %v1061 = vld [vmem:[%s12] sm:$0x1f]
    %v1063 = vlaneseq
    %v1064 = vshrl.u32 %v1063, 7
    %v1065 = vsub.s32 0, %v1064
    %v1066 = vrot.slane %v1061, %v1065
    %v1067 = vlaneseq
    %v1068 = vshrl.u32 %v1067, 7
    %v1069 = vsub.s32 1, %v1068
    %v1070 = vrot.slane %v1061, %v1069
    %v1071 = vlaneseq
    %v1072 = vshrl.u32 %v1071, 7
    %v1073 = vsub.s32 2, %v1072
    %v1074 = vrot.slane %v1061, %v1073
    %v1075 = vlaneseq
    %v1076 = vshrl.u32 %v1075, 7
    %v1077 = vsub.s32 3, %v1076
    %v1078 = vrot.slane %v1061, %v1077
    %v1079 = vlaneseq
    %v1080 = vshrl.u32 %v1079, 7
    %v1081 = vsub.s32 4, %v1080
    %v1082 = vrot.slane %v1061, %v1081
    %v1089 = vsel %vm102, %v173, 0
    %1091 = vmatprep.subr.mxu0 0.0
    %1092 = vmatpush1.msra.mxu0 0.0
    %1093 = vmatprep.subr.mxu0 0.0
    %1094 = vmatpush1.msra.mxu0 0.0
    %1095 = vmatprep.subr.mxu0 0.0
    %1096 = vmatpush1.msra.mxu0 0.0
    %1097 = vmatprep.subr.mxu0 0.0
    %1098 = vmatpush1.msra.mxu0 0.0
    %1099 = vmatprep.subr.mxu0 0.0
    %1100 = vmatpush1.msra.mxu0 0.0
    %1101 = vmatprep.subr.mxu0 0.0
    %1102 = vmatpush1.msra.mxu0 0.0
    %1103 = vmatprep.subr.mxu0 0.0
    %1104 = vmatpush1.msra.mxu0 0.0
    %1105 = vmatprep.subr.mxu0 0.0
    %1106 = vmatpush1.msra.mxu0 0.0
    %1107 = vmatprep.subr.mxu0 0.0
    %1108 = vmatpush1.msra.mxu0 0.0
    %1109 = vmatprep.subr.mxu0 0.0
    %1110 = vmatpush1.msra.mxu0 0.0
    %1111 = vmatprep.subr.mxu0 0.0
    %1112 = vmatpush1.msra.mxu0 0.0
    %1113 = vmatprep.subr.mxu0 0.0
    %1114 = vmatpush1.msra.mxu0 0.0
    %1115 = vmatprep.subr.mxu0 %v1057
    %1116 = vmatpush1.msra.mxu0 %v1056
    %1117 = vmatprep.subr.mxu0 %v1052
    %1118 = vmatpush1.msra.mxu0 %v1051
    %1119 = vmatprep.subr.mxu0 %v1047
    %1120 = vmatpush1.msra.mxu0 %v1046
    %1121 = vmatprep.subr.mxu0 %v1042
    %1122 = vmatpush1.msra.mxu0 %v1041
    %1123 = vmatprep.subr.mxu0 0.0
    %1124 = vmatpush2.msra.mxu0 0.0
    %1125 = vmatprep.subr.mxu0 0.0
    %1126 = vmatpush2.msra.mxu0 0.0
    %1127 = vmatprep.subr.mxu0 0.0
    %1128 = vmatpush2.msra.mxu0 0.0
    %1129 = vmatprep.subr.mxu0 0.0
    %1130 = vmatpush2.msra.mxu0 0.0
    %1131 = vmatprep.subr.mxu0 0.0
    %1132 = vmatpush2.msra.mxu0 0.0
    %1133 = vmatprep.subr.mxu0 0.0
    %1134 = vmatpush2.msra.mxu0 0.0
    %1135 = vmatprep.subr.mxu0 0.0
    %1136 = vmatpush2.msra.mxu0 0.0
    %1137 = vmatprep.subr.mxu0 0.0
    %1138 = vmatpush2.msra.mxu0 0.0
    %1139 = vmatprep.subr.mxu0 0.0
    %1140 = vmatpush2.msra.mxu0 0.0
    %1141 = vmatprep.subr.mxu0 0.0
    %1142 = vmatpush2.msra.mxu0 0.0
    %1143 = vmatprep.subr.mxu0 0.0
    %1144 = vmatpush2.msra.mxu0 0.0
    %1145 = vmatprep.subr.mxu0 0.0
    %1146 = vmatpush2.msra.mxu0 0.0
    %1147 = vmatprep.subr.mxu0 0.0
    %1148 = vmatpush2.msra.mxu0 0.0
    %1149 = vmatprep.subr.mxu0 0.0
    %1150 = vmatpush2.msra.mxu0 0.0
    %1151 = vmatprep.subr.mxu0 0.0
    %1152 = vmatpush2.msra.mxu0 0.0
    %1153 = vmatprep.subr.mxu0 0.0
    %1154 = vmatpush2.msra.mxu0 0.0
    %1155 = vmatprep.mubr.f32.mxu0 0.0
    %1156 = vmatmul.mubr.f32.gmra.mxu0 %v1089
    %v1157 = vpop.f32.mrf.mxu0
    %v1158 = vadd.f32 %v1066, %v1157
    %v1159 = vpop.f32.mrf.mxu0
    %v1160 = vadd.f32 %v1070, %v1159
    %1161 = vdwg.mxu0
    %1162 = vmatprep.subr.mxu0 0.0
    %1163 = vmatpush1.msra.mxu0 0.0
    %1164 = vmatprep.subr.mxu0 0.0
    %1165 = vmatpush1.msra.mxu0 0.0
    %1166 = vmatprep.subr.mxu0 0.0
    %1167 = vmatpush1.msra.mxu0 0.0
    %1168 = vmatprep.subr.mxu0 0.0
    %1169 = vmatpush1.msra.mxu0 0.0
    %1170 = vmatprep.subr.mxu0 0.0
    %1171 = vmatpush1.msra.mxu0 0.0
    %1172 = vmatprep.subr.mxu0 0.0
    %1173 = vmatpush1.msra.mxu0 0.0
    %1174 = vmatprep.subr.mxu0 0.0
    %1175 = vmatpush1.msra.mxu0 0.0
    %1176 = vmatprep.subr.mxu0 0.0
    %1177 = vmatpush1.msra.mxu0 0.0
    %1178 = vmatprep.subr.mxu0 0.0
    %1179 = vmatpush1.msra.mxu0 0.0
    %1180 = vmatprep.subr.mxu0 0.0
    %1181 = vmatpush1.msra.mxu0 0.0
    %1182 = vmatprep.subr.mxu0 0.0
    %1183 = vmatpush1.msra.mxu0 0.0
    %1184 = vmatprep.subr.mxu0 0.0
    %1185 = vmatpush1.msra.mxu0 0.0
    %1186 = vmatprep.subr.mxu0 %v1059
    %1187 = vmatpush1.msra.mxu0 %v1058
    %1188 = vmatprep.subr.mxu0 %v1054
    %1189 = vmatpush1.msra.mxu0 %v1053
    %1190 = vmatprep.subr.mxu0 %v1049
    %1191 = vmatpush1.msra.mxu0 %v1048
    %1192 = vmatprep.subr.mxu0 %v1044
    %1193 = vmatpush1.msra.mxu0 %v1043
    %1194 = vmatprep.subr.mxu0 0.0
    %1195 = vmatpush2.msra.mxu0 0.0
    %1196 = vmatprep.subr.mxu0 0.0
    %1197 = vmatpush2.msra.mxu0 0.0
    %1198 = vmatprep.subr.mxu0 0.0
    %1199 = vmatpush2.msra.mxu0 0.0
    %1200 = vmatprep.subr.mxu0 0.0
    %1201 = vmatpush2.msra.mxu0 0.0
    %1202 = vmatprep.subr.mxu0 0.0
    %1203 = vmatpush2.msra.mxu0 0.0
    %1204 = vmatprep.subr.mxu0 0.0
    %1205 = vmatpush2.msra.mxu0 0.0
    %1206 = vmatprep.subr.mxu0 0.0
    %1207 = vmatpush2.msra.mxu0 0.0
    %1208 = vmatprep.subr.mxu0 0.0
    %1209 = vmatpush2.msra.mxu0 0.0
    %1210 = vmatprep.subr.mxu0 0.0
    %1211 = vmatpush2.msra.mxu0 0.0
    %1212 = vmatprep.subr.mxu0 0.0
    %1213 = vmatpush2.msra.mxu0 0.0
    %1214 = vmatprep.subr.mxu0 0.0
    %1215 = vmatpush2.msra.mxu0 0.0
    %1216 = vmatprep.subr.mxu0 0.0
    %1217 = vmatpush2.msra.mxu0 0.0
    %1218 = vmatprep.subr.mxu0 0.0
    %1219 = vmatpush2.msra.mxu0 0.0
    %1220 = vmatprep.subr.mxu0 0.0
    %1221 = vmatpush2.msra.mxu0 0.0
    %1222 = vmatprep.subr.mxu0 0.0
    %1223 = vmatpush2.msra.mxu0 0.0
    %1224 = vmatprep.subr.mxu0 0.0
    %1225 = vmatpush2.msra.mxu0 0.0
    %1226 = vmatprep.mubr.f32.mxu0 0.0
    %1227 = vmatmul.mubr.f32.gmra.mxu0 %v1089
    %v1228 = vpop.f32.mrf.mxu0
    %v1229 = vadd.f32 %v1074, %v1228
    %v1230 = vpop.f32.mrf.mxu0
    %v1231 = vadd.f32 %v1078, %v1230
    %1232 = vdwg.mxu0
    %1233 = vmatprep.subr.mxu0 0.0
    %1234 = vmatpush1.msra.mxu0 0.0
    %1235 = vmatprep.subr.mxu0 0.0
    %1236 = vmatpush1.msra.mxu0 0.0
    %1237 = vmatprep.subr.mxu0 0.0
    %1238 = vmatpush1.msra.mxu0 0.0
    %1239 = vmatprep.subr.mxu0 0.0
    %1240 = vmatpush1.msra.mxu0 0.0
    %1241 = vmatprep.subr.mxu0 0.0
    %1242 = vmatpush1.msra.mxu0 0.0
    %1243 = vmatprep.subr.mxu0 0.0
    %1244 = vmatpush1.msra.mxu0 0.0
    %1245 = vmatprep.subr.mxu0 0.0
    %1246 = vmatpush1.msra.mxu0 0.0
    %1247 = vmatprep.subr.mxu0 0.0
    %1248 = vmatpush1.msra.mxu0 0.0
    %1249 = vmatprep.subr.mxu0 0.0
    %1250 = vmatpush1.msra.mxu0 0.0
    %1251 = vmatprep.subr.mxu0 0.0
    %1252 = vmatpush1.msra.mxu0 0.0
    %1253 = vmatprep.subr.mxu0 0.0
    %1254 = vmatpush1.msra.mxu0 0.0
    %1255 = vmatprep.subr.mxu0 0.0
    %1256 = vmatpush1.msra.mxu0 0.0
    %1257 = vmatprep.subr.mxu0 0.0
    %1258 = vmatpush1.msra.mxu0 %v1060
    %1259 = vmatprep.subr.mxu0 0.0
    %1260 = vmatpush1.msra.mxu0 %v1055
    %1261 = vmatprep.subr.mxu0 0.0
    %1262 = vmatpush1.msra.mxu0 %v1050
    %1263 = vmatprep.subr.mxu0 0.0
    %1264 = vmatpush1.msra.mxu0 %v1045
    %1265 = vmatprep.subr.mxu0 0.0
    %1266 = vmatpush2.msra.mxu0 0.0
    %1267 = vmatprep.subr.mxu0 0.0
    %1268 = vmatpush2.msra.mxu0 0.0
    %1269 = vmatprep.subr.mxu0 0.0
    %1270 = vmatpush2.msra.mxu0 0.0
    %1271 = vmatprep.subr.mxu0 0.0
    %1272 = vmatpush2.msra.mxu0 0.0
    %1273 = vmatprep.subr.mxu0 0.0
    %1274 = vmatpush2.msra.mxu0 0.0
    %1275 = vmatprep.subr.mxu0 0.0
    %1276 = vmatpush2.msra.mxu0 0.0
    %1277 = vmatprep.subr.mxu0 0.0
    %1278 = vmatpush2.msra.mxu0 0.0
    %1279 = vmatprep.subr.mxu0 0.0
    %1280 = vmatpush2.msra.mxu0 0.0
    %1281 = vmatprep.subr.mxu0 0.0
    %1282 = vmatpush2.msra.mxu0 0.0
    %1283 = vmatprep.subr.mxu0 0.0
    %1284 = vmatpush2.msra.mxu0 0.0
    %1285 = vmatprep.subr.mxu0 0.0
    %1286 = vmatpush2.msra.mxu0 0.0
    %1287 = vmatprep.subr.mxu0 0.0
    %1288 = vmatpush2.msra.mxu0 0.0
    %1289 = vmatprep.subr.mxu0 0.0
    %1290 = vmatpush2.msra.mxu0 0.0
    %1291 = vmatprep.subr.mxu0 0.0
    %1292 = vmatpush2.msra.mxu0 0.0
    %1293 = vmatprep.subr.mxu0 0.0
    %1294 = vmatpush2.msra.mxu0 0.0
    %1295 = vmatprep.subr.mxu0 0.0
    %1296 = vmatpush2.msra.mxu0 0.0
    %1297 = vmatprep.mubr.f32.mxu0 0.0
    %1298 = vmatmul.mubr.f32.gmra.mxu0 %v1089
    %v1299 = vpop.f32.mrf.mxu0
    %v1300 = vadd.f32 %v1082, %v1299
    %v1301 = vpop.f32.mrf.mxu0
    %1302 = vdwg.mxu0
    %v1303 = vld [vmem:[#allocation3] sm:$0xff]
    %v1304 = vld [vmem:[#allocation3 + $0x8] sm:$0xff]
    %v1305 = vld [vmem:[#allocation3 + $0x10] sm:$0xff]
    %v1306 = vld [vmem:[#allocation3 + $0x18] sm:$0xff]
    %v1307 = vadd.f32 %v1303, %v1158
    %v1308 = vadd.f32 %v1304, %v1160
    %v1309 = vadd.f32 %v1305, %v1229
    %v1310 = vadd.f32 %v1306, %v1231
    %v1311 = vtanh.pop %v1307
    %v1312 = vtanh.pop %v1308
    %v1313 = vtanh.pop %v1309
    %v1314 = vtanh.pop %v1310
    %v1315 = vld [vmem:[#allocation7] sm:$0xff]
    %v1316 = vld [vmem:[#allocation7 + $0x8] sm:$0xff]
    %v1317 = vld [vmem:[#allocation7 + $0x10] sm:$0xff]
    %v1318 = vld [vmem:[#allocation7 + $0x18] sm:$0xff]
    %v1319 = vld [vmem:[#allocation7 + $0x20] sm:$0xff]
    %v1320 = vld [vmem:[#allocation7 + $0x28] sm:$0xff]
    %v1321 = vld [vmem:[#allocation7 + $0x30] sm:$0xff]
    %v1322 = vld [vmem:[#allocation7 + $0x38] sm:$0xff]
    %v1323 = vld [vmem:[#allocation7 + $0x40] sm:$0xff]
    %v1324 = vld [vmem:[#allocation7 + $0x48] sm:$0xff]
    %v1325 = vld [vmem:[#allocation7 + $0x50] sm:$0xff]
    %v1326 = vld [vmem:[#allocation7 + $0x58] sm:$0xff]
    %v1327 = vld [vmem:[#allocation7 + $0x60] sm:$0xff]
    %v1328 = vld [vmem:[#allocation7 + $0x68] sm:$0xff]
    %v1329 = vld [vmem:[#allocation7 + $0x70] sm:$0xff]
    %v1330 = vld [vmem:[#allocation7 + $0x78] sm:$0xff]
    %v1331 = vld [vmem:[#allocation7 + $0x80] sm:$0xff]
    %v1332 = vld [vmem:[#allocation7 + $0x88] sm:$0xff]
    %v1333 = vld [vmem:[#allocation7 + $0x90] sm:$0xff]
    %v1334 = vld [vmem:[#allocation7 + $0x98] sm:$0xff]
    %v1335 = vld [vmem:[#allocation7 + $0xa0] sm:$0xff]
    %v1336 = vld [vmem:[#allocation7 + $0xa8] sm:$0xff]
    %v1337 = vld [vmem:[#allocation7 + $0xb0] sm:$0xff]
    %v1338 = vld [vmem:[#allocation7 + $0xb8] sm:$0xff]
    %v1339 = vld [vmem:[#allocation7 + $0xc0] sm:$0xff]
    %v1340 = vld [vmem:[#allocation7 + $0xc8] sm:$0xff]
    %v1341 = vld [vmem:[#allocation7 + $0xd0] sm:$0xff]
    %v1342 = vld [vmem:[#allocation7 + $0xd8] sm:$0xff]
    %v1343 = vld [vmem:[#allocation7 + $0xe0] sm:$0xff]
    %v1344 = vld [vmem:[#allocation7 + $0xe8] sm:$0xff]
    %v1345 = vld [vmem:[#allocation7 + $0xf0] sm:$0xff]
    %v1346 = vld [vmem:[#allocation7 + $0xf8] sm:$0xff]
    %v1347 = vld [vmem:[#allocation7 + $0x100] sm:$0xff]
    %v1348 = vld [vmem:[#allocation7 + $0x108] sm:$0xff]
    %v1349 = vld [vmem:[#allocation7 + $0x110] sm:$0xff]
    %v1350 = vld [vmem:[#allocation7 + $0x118] sm:$0xff]
    %v1351 = vld [vmem:[#allocation7 + $0x120] sm:$0xff]
    %v1352 = vld [vmem:[#allocation7 + $0x128] sm:$0xff]
    %v1353 = vld [vmem:[#allocation7 + $0x130] sm:$0xff]
    %v1354 = vld [vmem:[#allocation7 + $0x138] sm:$0xff]
    %v1355 = vld [vmem:[#allocation7 + $0x140] sm:$0xff]
    %v1356 = vld [vmem:[#allocation7 + $0x148] sm:$0xff]
    %v1357 = vld [vmem:[#allocation7 + $0x150] sm:$0xff]
    %v1358 = vld [vmem:[#allocation7 + $0x158] sm:$0xff]
    %v1359 = vld [vmem:[#allocation7 + $0x160] sm:$0xff]
    %v1360 = vld [vmem:[#allocation7 + $0x168] sm:$0xff]
    %v1361 = vld [vmem:[#allocation7 + $0x170] sm:$0xff]
    %v1362 = vld [vmem:[#allocation7 + $0x178] sm:$0xff]
    %v1363 = vld [vmem:[#allocation7 + $0x180] sm:$0xff]
    %v1364 = vld [vmem:[#allocation7 + $0x188] sm:$0xff]
    %v1365 = vld [vmem:[#allocation7 + $0x190] sm:$0xff]
    %v1366 = vld [vmem:[#allocation7 + $0x198] sm:$0xff]
    %v1367 = vld [vmem:[#allocation7 + $0x1a0] sm:$0xff]
    %v1368 = vld [vmem:[#allocation7 + $0x1a8] sm:$0xff]
    %v1369 = vld [vmem:[#allocation7 + $0x1b0] sm:$0xff]
    %v1370 = vld [vmem:[#allocation7 + $0x1b8] sm:$0xff]
    %v1371 = vld [vmem:[#allocation7 + $0x1c0] sm:$0xff]
    %v1372 = vld [vmem:[#allocation7 + $0x1c8] sm:$0xff]
    %v1373 = vld [vmem:[#allocation7 + $0x1d0] sm:$0xff]
    %v1374 = vld [vmem:[#allocation7 + $0x1d8] sm:$0xff]
    %v1375 = vld [vmem:[#allocation7 + $0x1e0] sm:$0xff]
    %v1376 = vld [vmem:[#allocation7 + $0x1e8] sm:$0xff]
    %v1377 = vld [vmem:[#allocation7 + $0x1f0] sm:$0xff]
    %v1378 = vld [vmem:[#allocation7 + $0x1f8] sm:$0xff]
    %v1379 = vld [vmem:[%s14] sm:$0x1]
    %v1381 = vlaneseq
    %v1382 = vshrl.u32 %v1381, 7
    %v1383 = vsub.s32 0, %v1382
    %v1384 = vrot.slane %v1379, %v1383
    %1386 = vmatprep.subr.mxu0 0.0
    %1387 = vmatpush1.msra.mxu0 %v1330
    %1388 = vmatprep.subr.mxu0 0.0
    %1389 = vmatpush1.msra.mxu0 %v1329
    %1390 = vmatprep.subr.mxu0 0.0
    %1391 = vmatpush1.msra.mxu0 %v1328
    %1392 = vmatprep.subr.mxu0 0.0
    %1393 = vmatpush1.msra.mxu0 %v1327
    %1394 = vmatprep.subr.mxu0 0.0
    %1395 = vmatpush1.msra.mxu0 %v1326
    %1396 = vmatprep.subr.mxu0 0.0
    %1397 = vmatpush1.msra.mxu0 %v1325
    %1398 = vmatprep.subr.mxu0 0.0
    %1399 = vmatpush1.msra.mxu0 %v1324
    %1400 = vmatprep.subr.mxu0 0.0
    %1401 = vmatpush1.msra.mxu0 %v1323
    %1402 = vmatprep.subr.mxu0 0.0
    %1403 = vmatpush1.msra.mxu0 %v1322
    %1404 = vmatprep.subr.mxu0 0.0
    %1405 = vmatpush1.msra.mxu0 %v1321
    %1406 = vmatprep.subr.mxu0 0.0
    %1407 = vmatpush1.msra.mxu0 %v1320
    %1408 = vmatprep.subr.mxu0 0.0
    %1409 = vmatpush1.msra.mxu0 %v1319
    %1410 = vmatprep.subr.mxu0 0.0
    %1411 = vmatpush1.msra.mxu0 %v1318
    %1412 = vmatprep.subr.mxu0 0.0
    %1413 = vmatpush1.msra.mxu0 %v1317
    %1414 = vmatprep.subr.mxu0 0.0
    %1415 = vmatpush1.msra.mxu0 %v1316
    %1416 = vmatprep.subr.mxu0 0.0
    %1417 = vmatpush1.msra.mxu0 %v1315
    %1418 = vmatprep.subr.mxu0 0.0
    %1419 = vmatpush2.msra.mxu0 %v1346
    %1420 = vmatprep.subr.mxu0 0.0
    %1421 = vmatpush2.msra.mxu0 %v1345
    %1422 = vmatprep.subr.mxu0 0.0
    %1423 = vmatpush2.msra.mxu0 %v1344
    %1424 = vmatprep.subr.mxu0 0.0
    %1425 = vmatpush2.msra.mxu0 %v1343
    %1426 = vmatprep.subr.mxu0 0.0
    %1427 = vmatpush2.msra.mxu0 %v1342
    %1428 = vmatprep.subr.mxu0 0.0
    %1429 = vmatpush2.msra.mxu0 %v1341
    %1430 = vmatprep.subr.mxu0 0.0
    %1431 = vmatpush2.msra.mxu0 %v1340
    %1432 = vmatprep.subr.mxu0 0.0
    %1433 = vmatpush2.msra.mxu0 %v1339
    %1434 = vmatprep.subr.mxu0 0.0
    %1435 = vmatpush2.msra.mxu0 %v1338
    %1436 = vmatprep.subr.mxu0 0.0
    %1437 = vmatpush2.msra.mxu0 %v1337
    %1438 = vmatprep.subr.mxu0 0.0
    %1439 = vmatpush2.msra.mxu0 %v1336
    %1440 = vmatprep.subr.mxu0 0.0
    %1441 = vmatpush2.msra.mxu0 %v1335
    %1442 = vmatprep.subr.mxu0 0.0
    %1443 = vmatpush2.msra.mxu0 %v1334
    %1444 = vmatprep.subr.mxu0 0.0
    %1445 = vmatpush2.msra.mxu0 %v1333
    %1446 = vmatprep.subr.mxu0 0.0
    %1447 = vmatpush2.msra.mxu0 %v1332
    %1448 = vmatprep.subr.mxu0 0.0
    %1449 = vmatpush2.msra.mxu0 %v1331
    %1450 = vmatprep.mubr.f32.mxu0 %v1312
    %1451 = vmatmul.mubr.f32.gmra.mxu0 %v1311
    %v1452 = vpop.f32.mrf.mxu0
    %v1453 = vadd.f32 %v1384, %v1452
    %v1454 = vpop.f32.mrf.mxu0
    %1455 = vdwg.mxu0
    %1456 = vmatprep.subr.mxu0 0.0
    %1457 = vmatpush1.msra.mxu0 %v1362
    %1458 = vmatprep.subr.mxu0 0.0
    %1459 = vmatpush1.msra.mxu0 %v1361
    %1460 = vmatprep.subr.mxu0 0.0
    %1461 = vmatpush1.msra.mxu0 %v1360
    %1462 = vmatprep.subr.mxu0 0.0
    %1463 = vmatpush1.msra.mxu0 %v1359
    %1464 = vmatprep.subr.mxu0 0.0
    %1465 = vmatpush1.msra.mxu0 %v1358
    %1466 = vmatprep.subr.mxu0 0.0
    %1467 = vmatpush1.msra.mxu0 %v1357
    %1468 = vmatprep.subr.mxu0 0.0
    %1469 = vmatpush1.msra.mxu0 %v1356
    %1470 = vmatprep.subr.mxu0 0.0
    %1471 = vmatpush1.msra.mxu0 %v1355
    %1472 = vmatprep.subr.mxu0 0.0
    %1473 = vmatpush1.msra.mxu0 %v1354
    %1474 = vmatprep.subr.mxu0 0.0
    %1475 = vmatpush1.msra.mxu0 %v1353
    %1476 = vmatprep.subr.mxu0 0.0
    %1477 = vmatpush1.msra.mxu0 %v1352
    %1478 = vmatprep.subr.mxu0 0.0
    %1479 = vmatpush1.msra.mxu0 %v1351
    %1480 = vmatprep.subr.mxu0 0.0
    %1481 = vmatpush1.msra.mxu0 %v1350
    %1482 = vmatprep.subr.mxu0 0.0
    %1483 = vmatpush1.msra.mxu0 %v1349
    %1484 = vmatprep.subr.mxu0 0.0
    %1485 = vmatpush1.msra.mxu0 %v1348
    %1486 = vmatprep.subr.mxu0 0.0
    %1487 = vmatpush1.msra.mxu0 %v1347
    %1488 = vmatprep.subr.mxu0 0.0
    %1489 = vmatpush2.msra.mxu0 %v1378
    %1490 = vmatprep.subr.mxu0 0.0
    %1491 = vmatpush2.msra.mxu0 %v1377
    %1492 = vmatprep.subr.mxu0 0.0
    %1493 = vmatpush2.msra.mxu0 %v1376
    %1494 = vmatprep.subr.mxu0 0.0
    %1495 = vmatpush2.msra.mxu0 %v1375
    %1496 = vmatprep.subr.mxu0 0.0
    %1497 = vmatpush2.msra.mxu0 %v1374
    %1498 = vmatprep.subr.mxu0 0.0
    %1499 = vmatpush2.msra.mxu0 %v1373
    %1500 = vmatprep.subr.mxu0 0.0
    %1501 = vmatpush2.msra.mxu0 %v1372
    %1502 = vmatprep.subr.mxu0 0.0
    %1503 = vmatpush2.msra.mxu0 %v1371
    %1504 = vmatprep.subr.mxu0 0.0
    %1505 = vmatpush2.msra.mxu0 %v1370
    %1506 = vmatprep.subr.mxu0 0.0
    %1507 = vmatpush2.msra.mxu0 %v1369
    %1508 = vmatprep.subr.mxu0 0.0
    %1509 = vmatpush2.msra.mxu0 %v1368
    %1510 = vmatprep.subr.mxu0 0.0
    %1511 = vmatpush2.msra.mxu0 %v1367
    %1512 = vmatprep.subr.mxu0 0.0
    %1513 = vmatpush2.msra.mxu0 %v1366
    %1514 = vmatprep.subr.mxu0 0.0
    %1515 = vmatpush2.msra.mxu0 %v1365
    %1516 = vmatprep.subr.mxu0 0.0
    %1517 = vmatpush2.msra.mxu0 %v1364
    %1518 = vmatprep.subr.mxu0 0.0
    %1519 = vmatpush2.msra.mxu0 %v1363
    %1520 = vmatprep.mubr.f32.mxu0 %v1314
    %1521 = vmatmul.mubr.f32.gmra.mxu0 %v1313
    %v1522 = vpop.f32.mrf.mxu0
    %v1523 = vadd.f32 %v1453, %v1522
    %v1524 = vpop.f32.mrf.mxu0
    %1525 = vdwg.mxu0
    %1526 = vmax.xlane.f32.xlu0 %v1523
    %v1527 = vpop.xlane.xlu0 %1526
    %v1528 = vsub.f32 %v1523, %v1527
    %v1529 = vmul.f32 %v1528, 1.442695
    %v1530 = vpow.pop %v1529
    %1531 = vadd.xlane.f32.xlu0 %v1530
    %v1532 = vpop.xlane.xlu0 %1531
    %v1533 = vrcp.pop %v1532
    %v1534 = vmul.f32 %v1530, %v1533
    %v1535 = vlaneseq
    %v1536 = vshrl.u32 %v1535, 7
    %v1537 = vsub.s32 0, %v1536
    %v1538 = vrot.slane %v1534, %v1537
    %1540 = vbcast.lane.b32.xlu0 %v1538, 256
    %v1541 = vpop.permute.xlu0 %1540
    %s1543 = sor.u32 256, 8
    %1544 = vbcast.lane.b32.xlu0 %v1538, %s1543
    %v1545 = vpop.permute.xlu0 %1544
    %v1546 = vlaneseq
    %v1547 = vshrl.u32 %v1546, 7
    %v1548 = vsub.s32 1, %v1547
    %v1549 = vrot.slane %v1534, %v1548
    %1551 = vbcast.lane.b32.xlu0 %v1549, 256
    %v1552 = vpop.permute.xlu0 %1551
    %s1554 = sor.u32 256, 8
    %1555 = vbcast.lane.b32.xlu0 %v1549, %s1554
    %v1556 = vpop.permute.xlu0 %1555
    %v1557 = vlaneseq
    %v1558 = vshrl.u32 %v1557, 7
    %v1559 = vsub.s32 2, %v1558
    %v1560 = vrot.slane %v1534, %v1559
    %1562 = vbcast.lane.b32.xlu0 %v1560, 256
    %v1563 = vpop.permute.xlu0 %1562
    %s1565 = sor.u32 256, 8
    %1566 = vbcast.lane.b32.xlu0 %v1560, %s1565
    %v1567 = vpop.permute.xlu0 %1566
    %v1568 = vlaneseq
    %v1569 = vshrl.u32 %v1568, 7
    %v1570 = vsub.s32 3, %v1569
    %v1571 = vrot.slane %v1534, %v1570
    %1573 = vbcast.lane.b32.xlu0 %v1571, 256
    %v1574 = vpop.permute.xlu0 %1573
    %s1576 = sor.u32 256, 8
    %1577 = vbcast.lane.b32.xlu0 %v1571, %s1576
    %v1578 = vpop.permute.xlu0 %1577
    %v1579 = vlaneseq
    %v1580 = vshrl.u32 %v1579, 7
    %v1581 = vsub.s32 4, %v1580
    %v1582 = vrot.slane %v1534, %v1581
    %1584 = vbcast.lane.b32.xlu0 %v1582, 256
    %v1585 = vpop.permute.xlu0 %1584
    %s1587 = sor.u32 256, 8
    %1588 = vbcast.lane.b32.xlu0 %v1582, %s1587
    %v1589 = vpop.permute.xlu0 %1588
    %v1590 = vlaneseq
    %v1591 = vshrl.u32 %v1590, 7
    %v1592 = vsub.s32 5, %v1591
    %v1593 = vrot.slane %v1534, %v1592
    %1595 = vbcast.lane.b32.xlu0 %v1593, 256
    %v1596 = vpop.permute.xlu0 %1595
    %s1598 = sor.u32 256, 8
    %1599 = vbcast.lane.b32.xlu0 %v1593, %s1598
    %v1600 = vpop.permute.xlu0 %1599
    %v1601 = vlaneseq
    %v1602 = vshrl.u32 %v1601, 7
    %v1603 = vsub.s32 6, %v1602
    %v1604 = vrot.slane %v1534, %v1603
    %1606 = vbcast.lane.b32.xlu0 %v1604, 256
    %v1607 = vpop.permute.xlu0 %1606
    %s1609 = sor.u32 256, 8
    %1610 = vbcast.lane.b32.xlu0 %v1604, %s1609
    %v1611 = vpop.permute.xlu0 %1610
    %v1612 = vlaneseq
    %v1613 = vshrl.u32 %v1612, 7
    %v1614 = vsub.s32 7, %v1613
    %v1615 = vrot.slane %v1534, %v1614
    %1617 = vbcast.lane.b32.xlu0 %v1615, 256
    %v1618 = vpop.permute.xlu0 %1617
    %s1620 = sor.u32 256, 8
    %1621 = vbcast.lane.b32.xlu0 %v1615, %s1620
    %v1622 = vpop.permute.xlu0 %1621
    %v1623 = vld [vmem:[%s4] sm:$0xff]
    %v1624 = vld [vmem:[%s4 + $0x8] sm:$0xff]
    %v1625 = vld [vmem:[%s4 + $0x10] sm:$0xff]
    %v1626 = vld [vmem:[%s4 + $0x18] sm:$0xff]
    %v1627 = vld [vmem:[%s4 + $0x20] sm:$0xff]
    %v1628 = vld [vmem:[%s4 + $0x28] sm:$0xff]
    %v1629 = vld [vmem:[%s4 + $0x30] sm:$0xff]
    %v1630 = vld [vmem:[%s4 + $0x38] sm:$0xff]
    %v1631 = vld [vmem:[%s4 + $0x40] sm:$0xff]
    %v1632 = vld [vmem:[%s4 + $0x48] sm:$0xff]
    %v1633 = vld [vmem:[%s4 + $0x50] sm:$0xff]
    %v1634 = vld [vmem:[%s4 + $0x58] sm:$0xff]
    %v1635 = vld [vmem:[%s4 + $0x60] sm:$0xff]
    %v1636 = vld [vmem:[%s4 + $0x68] sm:$0xff]
    %v1637 = vld [vmem:[%s4 + $0x70] sm:$0xff]
    %v1638 = vld [vmem:[%s4 + $0x78] sm:$0xff]
    %v1639 = vmul.f32 %v1541, %v1623
    %v1640 = vmul.f32 %v1545, %v1624
    %v1641 = vmul.f32 %v1552, %v1625
    %v1642 = vmul.f32 %v1556, %v1626
    %v1643 = vmul.f32 %v1563, %v1627
    %v1644 = vmul.f32 %v1567, %v1628
    %v1645 = vmul.f32 %v1574, %v1629
    %v1646 = vmul.f32 %v1578, %v1630
    %v1647 = vmul.f32 %v1585, %v1631
    %v1648 = vmul.f32 %v1589, %v1632
    %v1649 = vmul.f32 %v1596, %v1633
    %v1650 = vmul.f32 %v1600, %v1634
    %v1651 = vmul.f32 %v1607, %v1635
    %v1652 = vmul.f32 %v1611, %v1636
    %v1653 = vmul.f32 %v1618, %v1637
    %v1654 = vmul.f32 %v1622, %v1638
    %v1655 = vsel %vm102, %v1639, 0.0
    %v1656 = vsel %vm102, %v1640, 0.0
    %v1657 = vadd.f32 %v1655, %v1656
    %v1658 = vrot.slane %v1657, 4
    %v1659 = vadd.f32 %v1657, %v1658
    %v1660 = vrot.slane %v1659, 2
    %v1661 = vadd.f32 %v1659, %v1660
    %v1662 = vrot.slane %v1661, 1
    %v1663 = vadd.f32 %v1661, %v1662
    %v1664 = vsel %vm102, %v1641, 0.0
    %v1665 = vsel %vm102, %v1642, 0.0
    %v1666 = vadd.f32 %v1664, %v1665
    %v1667 = vrot.slane %v1666, 4
    %v1668 = vadd.f32 %v1666, %v1667
    %v1669 = vrot.slane %v1668, 2
    %v1670 = vadd.f32 %v1668, %v1669
    %v1671 = vrot.slane %v1670, 1
    %v1672 = vadd.f32 %v1670, %v1671
    %v1673 = vsel %vm102, %v1643, 0.0
    %v1674 = vsel %vm102, %v1644, 0.0
    %v1675 = vadd.f32 %v1673, %v1674
    %v1676 = vrot.slane %v1675, 4
    %v1677 = vadd.f32 %v1675, %v1676
    %v1678 = vrot.slane %v1677, 2
    %v1679 = vadd.f32 %v1677, %v1678
    %v1680 = vrot.slane %v1679, 1
    %v1681 = vadd.f32 %v1679, %v1680
    %v1682 = vsel %vm102, %v1645, 0.0
    %v1683 = vsel %vm102, %v1646, 0.0
    %v1684 = vadd.f32 %v1682, %v1683
    %v1685 = vrot.slane %v1684, 4
    %v1686 = vadd.f32 %v1684, %v1685
    %v1687 = vrot.slane %v1686, 2
    %v1688 = vadd.f32 %v1686, %v1687
    %v1689 = vrot.slane %v1688, 1
    %v1690 = vadd.f32 %v1688, %v1689
    %v1691 = vsel %vm102, %v1647, 0.0
    %v1692 = vsel %vm102, %v1648, 0.0
    %v1693 = vadd.f32 %v1691, %v1692
    %v1694 = vrot.slane %v1693, 4
    %v1695 = vadd.f32 %v1693, %v1694
    %v1696 = vrot.slane %v1695, 2
    %v1697 = vadd.f32 %v1695, %v1696
    %v1698 = vrot.slane %v1697, 1
    %v1699 = vadd.f32 %v1697, %v1698
    %v1700 = vsel %vm102, %v1649, 0.0
    %v1701 = vsel %vm102, %v1650, 0.0
    %v1702 = vadd.f32 %v1700, %v1701
    %v1703 = vrot.slane %v1702, 4
    %v1704 = vadd.f32 %v1702, %v1703
    %v1705 = vrot.slane %v1704, 2
    %v1706 = vadd.f32 %v1704, %v1705
    %v1707 = vrot.slane %v1706, 1
    %v1708 = vadd.f32 %v1706, %v1707
    %v1709 = vsel %vm102, %v1651, 0.0
    %v1710 = vsel %vm102, %v1652, 0.0
    %v1711 = vadd.f32 %v1709, %v1710
    %v1712 = vrot.slane %v1711, 4
    %v1713 = vadd.f32 %v1711, %v1712
    %v1714 = vrot.slane %v1713, 2
    %v1715 = vadd.f32 %v1713, %v1714
    %v1716 = vrot.slane %v1715, 1
    %v1717 = vadd.f32 %v1715, %v1716
    %v1718 = vsel %vm102, %v1653, 0.0
    %v1719 = vsel %vm102, %v1654, 0.0
    %v1720 = vadd.f32 %v1718, %v1719
    %v1721 = vrot.slane %v1720, 4
    %v1722 = vadd.f32 %v1720, %v1721
    %v1723 = vrot.slane %v1722, 2
    %v1724 = vadd.f32 %v1722, %v1723
    %v1725 = vrot.slane %v1724, 1
    %v1726 = vadd.f32 %v1724, %v1725
    %v1727 = vadd.f32 %v1040, %v1300
    %v1728 = vld [vmem:[%s15] sm:$0xff]
    %v1729 = vld [vmem:[%s15 + $0x8] sm:$0xff]
    %v1730 = vld [vmem:[%s15 + $0x10] sm:$0xff]
    %v1731 = vld [vmem:[%s15 + $0x18] sm:$0xff]
    %vm1740 = vcmask 1041409
    %v1741 = vsel %vm1740, %v1672, %v1663
    %vm1742 = vcmask 1042434
    %v1743 = vsel %vm1742, %v1681, %v1741
    %vm1744 = vcmask 1043459
    %v1745 = vsel %vm1744, %v1690, %v1743
    %vm1746 = vcmask 1044484
    %v1747 = vsel %vm1746, %v1699, %v1745
    %vm1748 = vcmask 1045509
    %v1749 = vsel %vm1748, %v1708, %v1747
    %vm1750 = vcmask 1046534
    %v1751 = vsel %vm1750, %v1717, %v1749
    %vm1752 = vcmask 1047559
    %v1753 = vsel %vm1752, %v1726, %v1751
    %v1754 = vsel %vm102, %v1753, 0
    %1756 = vmatprep.subr.mxu0 0.0
    %1757 = vmatpush1.msra.mxu0 0.0
    %1758 = vmatprep.subr.mxu0 0.0
    %1759 = vmatpush1.msra.mxu0 0.0
    %1760 = vmatprep.subr.mxu0 0.0
    %1761 = vmatpush1.msra.mxu0 0.0
    %1762 = vmatprep.subr.mxu0 0.0
    %1763 = vmatpush1.msra.mxu0 0.0
    %1764 = vmatprep.subr.mxu0 0.0
    %1765 = vmatpush1.msra.mxu0 0.0
    %1766 = vmatprep.subr.mxu0 0.0
    %1767 = vmatpush1.msra.mxu0 0.0
    %1768 = vmatprep.subr.mxu0 0.0
    %1769 = vmatpush1.msra.mxu0 0.0
    %1770 = vmatprep.subr.mxu0 0.0
    %1771 = vmatpush1.msra.mxu0 0.0
    %1772 = vmatprep.subr.mxu0 0.0
    %1773 = vmatpush1.msra.mxu0 0.0
    %1774 = vmatprep.subr.mxu0 0.0
    %1775 = vmatpush1.msra.mxu0 0.0
    %1776 = vmatprep.subr.mxu0 0.0
    %1777 = vmatpush1.msra.mxu0 0.0
    %1778 = vmatprep.subr.mxu0 0.0
    %1779 = vmatpush1.msra.mxu0 0.0
    %1780 = vmatprep.subr.mxu0 0.0
    %1781 = vmatpush1.msra.mxu0 %v1731
    %1782 = vmatprep.subr.mxu0 0.0
    %1783 = vmatpush1.msra.mxu0 %v1730
    %1784 = vmatprep.subr.mxu0 0.0
    %1785 = vmatpush1.msra.mxu0 %v1729
    %1786 = vmatprep.subr.mxu0 0.0
    %1787 = vmatpush1.msra.mxu0 %v1728
    %1788 = vmatprep.subr.mxu0 0.0
    %1789 = vmatpush2.msra.mxu0 0.0
    %1790 = vmatprep.subr.mxu0 0.0
    %1791 = vmatpush2.msra.mxu0 0.0
    %1792 = vmatprep.subr.mxu0 0.0
    %1793 = vmatpush2.msra.mxu0 0.0
    %1794 = vmatprep.subr.mxu0 0.0
    %1795 = vmatpush2.msra.mxu0 0.0
    %1796 = vmatprep.subr.mxu0 0.0
    %1797 = vmatpush2.msra.mxu0 0.0
    %1798 = vmatprep.subr.mxu0 0.0
    %1799 = vmatpush2.msra.mxu0 0.0
    %1800 = vmatprep.subr.mxu0 0.0
    %1801 = vmatpush2.msra.mxu0 0.0
    %1802 = vmatprep.subr.mxu0 0.0
    %1803 = vmatpush2.msra.mxu0 0.0
    %1804 = vmatprep.subr.mxu0 0.0
    %1805 = vmatpush2.msra.mxu0 0.0
    %1806 = vmatprep.subr.mxu0 0.0
    %1807 = vmatpush2.msra.mxu0 0.0
    %1808 = vmatprep.subr.mxu0 0.0
    %1809 = vmatpush2.msra.mxu0 0.0
    %1810 = vmatprep.subr.mxu0 0.0
    %1811 = vmatpush2.msra.mxu0 0.0
    %1812 = vmatprep.subr.mxu0 0.0
    %1813 = vmatpush2.msra.mxu0 0.0
    %1814 = vmatprep.subr.mxu0 0.0
    %1815 = vmatpush2.msra.mxu0 0.0
    %1816 = vmatprep.subr.mxu0 0.0
    %1817 = vmatpush2.msra.mxu0 0.0
    %1818 = vmatprep.subr.mxu0 0.0
    %1819 = vmatpush2.msra.mxu0 0.0
    %1820 = vmatprep.mubr.f32.mxu0 0.0
    %1821 = vmatmul.mubr.f32.gmra.mxu0 %v1754
    %v1822 = vpop.f32.mrf.mxu0
    %v1823 = vadd.f32 0.0, %v1822
    %v1824 = vpop.f32.mrf.mxu0
    %1825 = vdwg.mxu0
    %v1826 = vadd.f32 %v1727, %v1823
    %v1827 = vxor.u32 %v1826, 2147483648
    %v1828 = vmul.f32 %v1827, 1.442695
    %v1829 = vpow.pop %v1828
    %v1830 = vadd.f32 %v1829, 1.0
    %v1831 = vrcp.pop %v1830
    %v1832 = vmul.f32 1.0, %v1831
    %v1833 = vtanh.pop %v1826
    %1834 = vrot.lane.b32.xlu0 %v173, 32
    %v1835 = vpop.permute.xlu0 %1834
    %v1837 = vmul.f32 %v1832, %v1835
    %1839 = vrot.lane.b32.xlu0 %v1833, 32
    %v1840 = vpop.permute.xlu0 %1839
    %v1842 = vmul.f32 %v1832, %v1840
    %1844 = vrot.lane.b32.xlu0 %v1842, 32
    %v1845 = vpop.permute.xlu0 %1844
    %v1847 = vadd.f32 %v1837, %v1845
    %v1848 = vtanh.pop %v1847
    %1850 = vrot.lane.b32.xlu0 %v1848, 32
    %v1851 = vpop.permute.xlu0 %1850
    %v1853 = vmul.f32 %v1832, %v1851
    %v1854 = vld [vmem:[%s16] sm:$0xff]
    %v1855 = vld [vmem:[%s16 + $0x8] sm:$0xff]
    %v1856 = vld [vmem:[%s16 + $0x10] sm:$0xff]
    %v1857 = vld [vmem:[%s16 + $0x18] sm:$0xff]
    %v1858 = vld [vmem:[%s17] sm:$0x1]
    %v1860 = vlaneseq
    %v1861 = vshrl.u32 %v1860, 7
    %v1862 = vsub.s32 0, %v1861
    %v1863 = vrot.slane %v1858, %v1862
    %1866 = vrot.lane.b32.xlu0 %v1853, 64
    %v1867 = vpop.permute.xlu0 %1866
    %v1868 = vsel %vm102, %v1867, 0
    %1870 = vmatprep.subr.mxu0 0.0
    %1871 = vmatpush1.msra.mxu0 0.0
    %1872 = vmatprep.subr.mxu0 0.0
    %1873 = vmatpush1.msra.mxu0 0.0
    %1874 = vmatprep.subr.mxu0 0.0
    %1875 = vmatpush1.msra.mxu0 0.0
    %1876 = vmatprep.subr.mxu0 0.0
    %1877 = vmatpush1.msra.mxu0 0.0
    %1878 = vmatprep.subr.mxu0 0.0
    %1879 = vmatpush1.msra.mxu0 0.0
    %1880 = vmatprep.subr.mxu0 0.0
    %1881 = vmatpush1.msra.mxu0 0.0
    %1882 = vmatprep.subr.mxu0 0.0
    %1883 = vmatpush1.msra.mxu0 0.0
    %1884 = vmatprep.subr.mxu0 0.0
    %1885 = vmatpush1.msra.mxu0 0.0
    %1886 = vmatprep.subr.mxu0 0.0
    %1887 = vmatpush1.msra.mxu0 0.0
    %1888 = vmatprep.subr.mxu0 0.0
    %1889 = vmatpush1.msra.mxu0 0.0
    %1890 = vmatprep.subr.mxu0 0.0
    %1891 = vmatpush1.msra.mxu0 0.0
    %1892 = vmatprep.subr.mxu0 0.0
    %1893 = vmatpush1.msra.mxu0 0.0
    %1894 = vmatprep.subr.mxu0 0.0
    %1895 = vmatpush1.msra.mxu0 %v1857
    %1896 = vmatprep.subr.mxu0 0.0
    %1897 = vmatpush1.msra.mxu0 %v1856
    %1898 = vmatprep.subr.mxu0 0.0
    %1899 = vmatpush1.msra.mxu0 %v1855
    %1900 = vmatprep.subr.mxu0 0.0
    %1901 = vmatpush1.msra.mxu0 %v1854
    %1902 = vmatprep.subr.mxu0 0.0
    %1903 = vmatpush2.msra.mxu0 0.0
    %1904 = vmatprep.subr.mxu0 0.0
    %1905 = vmatpush2.msra.mxu0 0.0
    %1906 = vmatprep.subr.mxu0 0.0
    %1907 = vmatpush2.msra.mxu0 0.0
    %1908 = vmatprep.subr.mxu0 0.0
    %1909 = vmatpush2.msra.mxu0 0.0
    %1910 = vmatprep.subr.mxu0 0.0
    %1911 = vmatpush2.msra.mxu0 0.0
    %1912 = vmatprep.subr.mxu0 0.0
    %1913 = vmatpush2.msra.mxu0 0.0
    %1914 = vmatprep.subr.mxu0 0.0
    %1915 = vmatpush2.msra.mxu0 0.0
    %1916 = vmatprep.subr.mxu0 0.0
    %1917 = vmatpush2.msra.mxu0 0.0
    %1918 = vmatprep.subr.mxu0 0.0
    %1919 = vmatpush2.msra.mxu0 0.0
    %1920 = vmatprep.subr.mxu0 0.0
    %1921 = vmatpush2.msra.mxu0 0.0
    %1922 = vmatprep.subr.mxu0 0.0
    %1923 = vmatpush2.msra.mxu0 0.0
    %1924 = vmatprep.subr.mxu0 0.0
    %1925 = vmatpush2.msra.mxu0 0.0
    %1926 = vmatprep.subr.mxu0 0.0
    %1927 = vmatpush2.msra.mxu0 0.0
    %1928 = vmatprep.subr.mxu0 0.0
    %1929 = vmatpush2.msra.mxu0 0.0
    %1930 = vmatprep.subr.mxu0 0.0
    %1931 = vmatpush2.msra.mxu0 0.0
    %1932 = vmatprep.subr.mxu0 0.0
    %1933 = vmatpush2.msra.mxu0 0.0
    %1934 = vmatprep.mubr.f32.mxu0 0.0
    %1935 = vmatmul.mubr.f32.gmra.mxu0 %v1868
    %v1936 = vpop.f32.mrf.mxu0
    %v1937 = vadd.f32 %v1863, %v1936
    %v1938 = vpop.f32.mrf.mxu0
    %1939 = vdwg.mxu0
    %1940 = vmax.xlane.f32.xlu0 %v1937
    %v1941 = vpop.xlane.xlu0 %1940
    %v1942 = vsub.f32 %v1937, %v1941
    %v1943 = vmul.f32 %v1942, 1.442695
    %v1944 = vpow.pop %v1943
    %1945 = vadd.xlane.f32.xlu0 %v1944
    %v1946 = vpop.xlane.xlu0 %1945
    %v1947 = vlog2.pop %v1946
    %v1948 = vmul.f32 %v1947, 0.6931472
    %v1949 = vsub.f32 %v1942, %v1948
    %p1950 = scmp.gt.s32.totalorder %s1039, 0
    %s1951 = scalar_select %p1950, 1, 0
    %s1952 = scvt.s32.f32 %s1951
    %v1953 = vstv %s1952
    %v1954 = vmul.f32 %v1953, %v1534
    %1955 = vst [vmem:[%s18] sm:$0xff] %v1954
    %v1956 = vmul.f32 %v1953, %v1949
    %1957 = vst [vmem:[%s19] sm:$0xff] %v1956
    %v1958 = vmul.f32 %v1953, %v1853
    %s1959 = ssub.f32 1.0, %s1952
    %v1960 = vstv %s1959
    %v1961 = vmul.f32 %v1960, %v173
    %1963 = vrot.lane.b32.xlu0 %v1961, 64
    %v1964 = vpop.permute.xlu0 %1963
    %v1966 = vadd.f32 %v1958, %v1964
    %v1967 = vmul.f32 %v1953, %v1847
    %1968 = vrot.lane.b32.xlu0 %v1961, 32
    %v1969 = vpop.permute.xlu0 %1968
    %v1971 = vadd.f32 %v1967, %v1969
    %s1972 = scalar_lea.vmem [#allocation2], 8
    %v1973 = vld [vmem:[%s1972] sm:$0xff]
    %v1974 = vld [vmem:[%s11] sm:$0xff]
    %v1975 = vld [vmem:[%s11 + $0x8] sm:$0xff]
    %v1976 = vld [vmem:[%s11 + $0x10] sm:$0xff]
    %v1977 = vld [vmem:[%s11 + $0x18] sm:$0xff]
    %v1978 = vld [vmem:[%s11 + $0x20] sm:$0xff]
    %v1979 = vld [vmem:[%s11 + $0x28] sm:$0xff]
    %v1980 = vld [vmem:[%s11 + $0x30] sm:$0xff]
    %v1981 = vld [vmem:[%s11 + $0x38] sm:$0xff]
    %v1982 = vld [vmem:[%s11 + $0x40] sm:$0xff]
    %v1983 = vld [vmem:[%s11 + $0x48] sm:$0xff]
    %v1984 = vld [vmem:[%s11 + $0x50] sm:$0xff]
    %v1985 = vld [vmem:[%s11 + $0x58] sm:$0xff]
    %v1986 = vld [vmem:[%s11 + $0x60] sm:$0xff]
    %v1987 = vld [vmem:[%s11 + $0x68] sm:$0xff]
    %v1988 = vld [vmem:[%s11 + $0x70] sm:$0xff]
    %v1989 = vld [vmem:[%s11 + $0x78] sm:$0xff]
    %v1990 = vld [vmem:[%s11 + $0x80] sm:$0xff]
    %v1991 = vld [vmem:[%s11 + $0x88] sm:$0xff]
    %v1992 = vld [vmem:[%s11 + $0x90] sm:$0xff]
    %v1993 = vld [vmem:[%s11 + $0x98] sm:$0xff]
    %v1994 = vld [vmem:[%s12] sm:$0x1f]
    %v1996 = vlaneseq
    %v1997 = vshrl.u32 %v1996, 7
    %v1998 = vsub.s32 0, %v1997
    %v1999 = vrot.slane %v1994, %v1998
    %v2000 = vlaneseq
    %v2001 = vshrl.u32 %v2000, 7
    %v2002 = vsub.s32 1, %v2001
    %v2003 = vrot.slane %v1994, %v2002
    %v2004 = vlaneseq
    %v2005 = vshrl.u32 %v2004, 7
    %v2006 = vsub.s32 2, %v2005
    %v2007 = vrot.slane %v1994, %v2006
    %v2008 = vlaneseq
    %v2009 = vshrl.u32 %v2008, 7
    %v2010 = vsub.s32 3, %v2009
    %v2011 = vrot.slane %v1994, %v2010
    %v2012 = vlaneseq
    %v2013 = vshrl.u32 %v2012, 7
    %v2014 = vsub.s32 4, %v2013
    %v2015 = vrot.slane %v1994, %v2014
    %2022 = vrot.lane.b32.xlu0 %v1966, 64
    %v2023 = vpop.permute.xlu0 %2022
    %v2024 = vsel %vm102, %v2023, 0
    %2026 = vmatprep.subr.mxu0 0.0
    %2027 = vmatpush1.msra.mxu0 0.0
    %2028 = vmatprep.subr.mxu0 0.0
    %2029 = vmatpush1.msra.mxu0 0.0
    %2030 = vmatprep.subr.mxu0 0.0
    %2031 = vmatpush1.msra.mxu0 0.0
    %2032 = vmatprep.subr.mxu0 0.0
    %2033 = vmatpush1.msra.mxu0 0.0
    %2034 = vmatprep.subr.mxu0 0.0
    %2035 = vmatpush1.msra.mxu0 0.0
    %2036 = vmatprep.subr.mxu0 0.0
    %2037 = vmatpush1.msra.mxu0 0.0
    %2038 = vmatprep.subr.mxu0 0.0
    %2039 = vmatpush1.msra.mxu0 0.0
    %2040 = vmatprep.subr.mxu0 0.0
    %2041 = vmatpush1.msra.mxu0 0.0
    %2042 = vmatprep.subr.mxu0 0.0
    %2043 = vmatpush1.msra.mxu0 0.0
    %2044 = vmatprep.subr.mxu0 0.0
    %2045 = vmatpush1.msra.mxu0 0.0
    %2046 = vmatprep.subr.mxu0 0.0
    %2047 = vmatpush1.msra.mxu0 0.0
    %2048 = vmatprep.subr.mxu0 0.0
    %2049 = vmatpush1.msra.mxu0 0.0
    %2050 = vmatprep.subr.mxu0 %v1990
    %2051 = vmatpush1.msra.mxu0 %v1989
    %2052 = vmatprep.subr.mxu0 %v1985
    %2053 = vmatpush1.msra.mxu0 %v1984
    %2054 = vmatprep.subr.mxu0 %v1980
    %2055 = vmatpush1.msra.mxu0 %v1979
    %2056 = vmatprep.subr.mxu0 %v1975
    %2057 = vmatpush1.msra.mxu0 %v1974
    %2058 = vmatprep.subr.mxu0 0.0
    %2059 = vmatpush2.msra.mxu0 0.0
    %2060 = vmatprep.subr.mxu0 0.0
    %2061 = vmatpush2.msra.mxu0 0.0
    %2062 = vmatprep.subr.mxu0 0.0
    %2063 = vmatpush2.msra.mxu0 0.0
    %2064 = vmatprep.subr.mxu0 0.0
    %2065 = vmatpush2.msra.mxu0 0.0
    %2066 = vmatprep.subr.mxu0 0.0
    %2067 = vmatpush2.msra.mxu0 0.0
    %2068 = vmatprep.subr.mxu0 0.0
    %2069 = vmatpush2.msra.mxu0 0.0
    %2070 = vmatprep.subr.mxu0 0.0
    %2071 = vmatpush2.msra.mxu0 0.0
    %2072 = vmatprep.subr.mxu0 0.0
    %2073 = vmatpush2.msra.mxu0 0.0
    %2074 = vmatprep.subr.mxu0 0.0
    %2075 = vmatpush2.msra.mxu0 0.0
    %2076 = vmatprep.subr.mxu0 0.0
    %2077 = vmatpush2.msra.mxu0 0.0
    %2078 = vmatprep.subr.mxu0 0.0
    %2079 = vmatpush2.msra.mxu0 0.0
    %2080 = vmatprep.subr.mxu0 0.0
    %2081 = vmatpush2.msra.mxu0 0.0
    %2082 = vmatprep.subr.mxu0 0.0
    %2083 = vmatpush2.msra.mxu0 0.0
    %2084 = vmatprep.subr.mxu0 0.0
    %2085 = vmatpush2.msra.mxu0 0.0
    %2086 = vmatprep.subr.mxu0 0.0
    %2087 = vmatpush2.msra.mxu0 0.0
    %2088 = vmatprep.subr.mxu0 0.0
    %2089 = vmatpush2.msra.mxu0 0.0
    %2090 = vmatprep.mubr.f32.mxu0 0.0
    %2091 = vmatmul.mubr.f32.gmra.mxu0 %v2024
    %v2092 = vpop.f32.mrf.mxu0
    %v2093 = vadd.f32 %v1999, %v2092
    %v2094 = vpop.f32.mrf.mxu0
    %v2095 = vadd.f32 %v2003, %v2094
    %2096 = vdwg.mxu0
    %2097 = vmatprep.subr.mxu0 0.0
    %2098 = vmatpush1.msra.mxu0 0.0
    %2099 = vmatprep.subr.mxu0 0.0
    %2100 = vmatpush1.msra.mxu0 0.0
    %2101 = vmatprep.subr.mxu0 0.0
    %2102 = vmatpush1.msra.mxu0 0.0
    %2103 = vmatprep.subr.mxu0 0.0
    %2104 = vmatpush1.msra.mxu0 0.0
    %2105 = vmatprep.subr.mxu0 0.0
    %2106 = vmatpush1.msra.mxu0 0.0
    %2107 = vmatprep.subr.mxu0 0.0
    %2108 = vmatpush1.msra.mxu0 0.0
    %2109 = vmatprep.subr.mxu0 0.0
    %2110 = vmatpush1.msra.mxu0 0.0
    %2111 = vmatprep.subr.mxu0 0.0
    %2112 = vmatpush1.msra.mxu0 0.0
    %2113 = vmatprep.subr.mxu0 0.0
    %2114 = vmatpush1.msra.mxu0 0.0
    %2115 = vmatprep.subr.mxu0 0.0
    %2116 = vmatpush1.msra.mxu0 0.0
    %2117 = vmatprep.subr.mxu0 0.0
    %2118 = vmatpush1.msra.mxu0 0.0
    %2119 = vmatprep.subr.mxu0 0.0
    %2120 = vmatpush1.msra.mxu0 0.0
    %2121 = vmatprep.subr.mxu0 %v1992
    %2122 = vmatpush1.msra.mxu0 %v1991
    %2123 = vmatprep.subr.mxu0 %v1987
    %2124 = vmatpush1.msra.mxu0 %v1986
    %2125 = vmatprep.subr.mxu0 %v1982
    %2126 = vmatpush1.msra.mxu0 %v1981
    %2127 = vmatprep.subr.mxu0 %v1977
    %2128 = vmatpush1.msra.mxu0 %v1976
    %2129 = vmatprep.subr.mxu0 0.0
    %2130 = vmatpush2.msra.mxu0 0.0
    %2131 = vmatprep.subr.mxu0 0.0
    %2132 = vmatpush2.msra.mxu0 0.0
    %2133 = vmatprep.subr.mxu0 0.0
    %2134 = vmatpush2.msra.mxu0 0.0
    %2135 = vmatprep.subr.mxu0 0.0
    %2136 = vmatpush2.msra.mxu0 0.0
    %2137 = vmatprep.subr.mxu0 0.0
    %2138 = vmatpush2.msra.mxu0 0.0
    %2139 = vmatprep.subr.mxu0 0.0
    %2140 = vmatpush2.msra.mxu0 0.0
    %2141 = vmatprep.subr.mxu0 0.0
    %2142 = vmatpush2.msra.mxu0 0.0
    %2143 = vmatprep.subr.mxu0 0.0
    %2144 = vmatpush2.msra.mxu0 0.0
    %2145 = vmatprep.subr.mxu0 0.0
    %2146 = vmatpush2.msra.mxu0 0.0
    %2147 = vmatprep.subr.mxu0 0.0
    %2148 = vmatpush2.msra.mxu0 0.0
    %2149 = vmatprep.subr.mxu0 0.0
    %2150 = vmatpush2.msra.mxu0 0.0
    %2151 = vmatprep.subr.mxu0 0.0
    %2152 = vmatpush2.msra.mxu0 0.0
    %2153 = vmatprep.subr.mxu0 0.0
    %2154 = vmatpush2.msra.mxu0 0.0
    %2155 = vmatprep.subr.mxu0 0.0
    %2156 = vmatpush2.msra.mxu0 0.0
    %2157 = vmatprep.subr.mxu0 0.0
    %2158 = vmatpush2.msra.mxu0 0.0
    %2159 = vmatprep.subr.mxu0 0.0
    %2160 = vmatpush2.msra.mxu0 0.0
    %2161 = vmatprep.mubr.f32.mxu0 0.0
    %2162 = vmatmul.mubr.f32.gmra.mxu0 %v2024
    %v2163 = vpop.f32.mrf.mxu0
    %v2164 = vadd.f32 %v2007, %v2163
    %v2165 = vpop.f32.mrf.mxu0
    %v2166 = vadd.f32 %v2011, %v2165
    %2167 = vdwg.mxu0
    %2168 = vmatprep.subr.mxu0 0.0
    %2169 = vmatpush1.msra.mxu0 0.0
    %2170 = vmatprep.subr.mxu0 0.0
    %2171 = vmatpush1.msra.mxu0 0.0
    %2172 = vmatprep.subr.mxu0 0.0
    %2173 = vmatpush1.msra.mxu0 0.0
    %2174 = vmatprep.subr.mxu0 0.0
    %2175 = vmatpush1.msra.mxu0 0.0
    %2176 = vmatprep.subr.mxu0 0.0
    %2177 = vmatpush1.msra.mxu0 0.0
    %2178 = vmatprep.subr.mxu0 0.0
    %2179 = vmatpush1.msra.mxu0 0.0
    %2180 = vmatprep.subr.mxu0 0.0
    %2181 = vmatpush1.msra.mxu0 0.0
    %2182 = vmatprep.subr.mxu0 0.0
    %2183 = vmatpush1.msra.mxu0 0.0
    %2184 = vmatprep.subr.mxu0 0.0
    %2185 = vmatpush1.msra.mxu0 0.0
    %2186 = vmatprep.subr.mxu0 0.0
    %2187 = vmatpush1.msra.mxu0 0.0
    %2188 = vmatprep.subr.mxu0 0.0
    %2189 = vmatpush1.msra.mxu0 0.0
    %2190 = vmatprep.subr.mxu0 0.0
    %2191 = vmatpush1.msra.mxu0 0.0
    %2192 = vmatprep.subr.mxu0 0.0
    %2193 = vmatpush1.msra.mxu0 %v1993
    %2194 = vmatprep.subr.mxu0 0.0
    %2195 = vmatpush1.msra.mxu0 %v1988
    %2196 = vmatprep.subr.mxu0 0.0
    %2197 = vmatpush1.msra.mxu0 %v1983
    %2198 = vmatprep.subr.mxu0 0.0
    %2199 = vmatpush1.msra.mxu0 %v1978
    %2200 = vmatprep.subr.mxu0 0.0
    %2201 = vmatpush2.msra.mxu0 0.0
    %2202 = vmatprep.subr.mxu0 0.0
    %2203 = vmatpush2.msra.mxu0 0.0
    %2204 = vmatprep.subr.mxu0 0.0
    %2205 = vmatpush2.msra.mxu0 0.0
    %2206 = vmatprep.subr.mxu0 0.0
    %2207 = vmatpush2.msra.mxu0 0.0
    %2208 = vmatprep.subr.mxu0 0.0
    %2209 = vmatpush2.msra.mxu0 0.0
    %2210 = vmatprep.subr.mxu0 0.0
    %2211 = vmatpush2.msra.mxu0 0.0
    %2212 = vmatprep.subr.mxu0 0.0
    %2213 = vmatpush2.msra.mxu0 0.0
    %2214 = vmatprep.subr.mxu0 0.0
    %2215 = vmatpush2.msra.mxu0 0.0
    %2216 = vmatprep.subr.mxu0 0.0
    %2217 = vmatpush2.msra.mxu0 0.0
    %2218 = vmatprep.subr.mxu0 0.0
    %2219 = vmatpush2.msra.mxu0 0.0
    %2220 = vmatprep.subr.mxu0 0.0
    %2221 = vmatpush2.msra.mxu0 0.0
    %2222 = vmatprep.subr.mxu0 0.0
    %2223 = vmatpush2.msra.mxu0 0.0
    %2224 = vmatprep.subr.mxu0 0.0
    %2225 = vmatpush2.msra.mxu0 0.0
    %2226 = vmatprep.subr.mxu0 0.0
    %2227 = vmatpush2.msra.mxu0 0.0
    %2228 = vmatprep.subr.mxu0 0.0
    %2229 = vmatpush2.msra.mxu0 0.0
    %2230 = vmatprep.subr.mxu0 0.0
    %2231 = vmatpush2.msra.mxu0 0.0
    %2232 = vmatprep.mubr.f32.mxu0 0.0
    %2233 = vmatmul.mubr.f32.gmra.mxu0 %v2024
    %v2234 = vpop.f32.mrf.mxu0
    %v2235 = vadd.f32 %v2015, %v2234
    %v2236 = vpop.f32.mrf.mxu0
    %2237 = vdwg.mxu0
    %v2238 = vld [vmem:[#allocation3] sm:$0xff]
    %v2239 = vld [vmem:[#allocation3 + $0x8] sm:$0xff]
    %v2240 = vld [vmem:[#allocation3 + $0x10] sm:$0xff]
    %v2241 = vld [vmem:[#allocation3 + $0x18] sm:$0xff]
    %v2242 = vadd.f32 %v2238, %v2093
    %v2243 = vadd.f32 %v2239, %v2095
    %v2244 = vadd.f32 %v2240, %v2164
    %v2245 = vadd.f32 %v2241, %v2166
    %v2246 = vtanh.pop %v2242
    %v2247 = vtanh.pop %v2243
    %v2248 = vtanh.pop %v2244
    %v2249 = vtanh.pop %v2245
    %v2250 = vld [vmem:[#allocation7] sm:$0xff]
    %v2251 = vld [vmem:[#allocation7 + $0x8] sm:$0xff]
    %v2252 = vld [vmem:[#allocation7 + $0x10] sm:$0xff]
    %v2253 = vld [vmem:[#allocation7 + $0x18] sm:$0xff]
    %v2254 = vld [vmem:[#allocation7 + $0x20] sm:$0xff]
    %v2255 = vld [vmem:[#allocation7 + $0x28] sm:$0xff]
    %v2256 = vld [vmem:[#allocation7 + $0x30] sm:$0xff]
    %v2257 = vld [vmem:[#allocation7 + $0x38] sm:$0xff]
    %v2258 = vld [vmem:[#allocation7 + $0x40] sm:$0xff]
    %v2259 = vld [vmem:[#allocation7 + $0x48] sm:$0xff]
    %v2260 = vld [vmem:[#allocation7 + $0x50] sm:$0xff]
    %v2261 = vld [vmem:[#allocation7 + $0x58] sm:$0xff]
    %v2262 = vld [vmem:[#allocation7 + $0x60] sm:$0xff]
    %v2263 = vld [vmem:[#allocation7 + $0x68] sm:$0xff]
    %v2264 = vld [vmem:[#allocation7 + $0x70] sm:$0xff]
    %v2265 = vld [vmem:[#allocation7 + $0x78] sm:$0xff]
    %v2266 = vld [vmem:[#allocation7 + $0x80] sm:$0xff]
    %v2267 = vld [vmem:[#allocation7 + $0x88] sm:$0xff]
    %v2268 = vld [vmem:[#allocation7 + $0x90] sm:$0xff]
    %v2269 = vld [vmem:[#allocation7 + $0x98] sm:$0xff]
    %v2270 = vld [vmem:[#allocation7 + $0xa0] sm:$0xff]
    %v2271 = vld [vmem:[#allocation7 + $0xa8] sm:$0xff]
    %v2272 = vld [vmem:[#allocation7 + $0xb0] sm:$0xff]
    %v2273 = vld [vmem:[#allocation7 + $0xb8] sm:$0xff]
    %v2274 = vld [vmem:[#allocation7 + $0xc0] sm:$0xff]
    %v2275 = vld [vmem:[#allocation7 + $0xc8] sm:$0xff]
    %v2276 = vld [vmem:[#allocation7 + $0xd0] sm:$0xff]
    %v2277 = vld [vmem:[#allocation7 + $0xd8] sm:$0xff]
    %v2278 = vld [vmem:[#allocation7 + $0xe0] sm:$0xff]
    %v2279 = vld [vmem:[#allocation7 + $0xe8] sm:$0xff]
    %v2280 = vld [vmem:[#allocation7 + $0xf0] sm:$0xff]
    %v2281 = vld [vmem:[#allocation7 + $0xf8] sm:$0xff]
    %v2282 = vld [vmem:[#allocation7 + $0x100] sm:$0xff]
    %v2283 = vld [vmem:[#allocation7 + $0x108] sm:$0xff]
    %v2284 = vld [vmem:[#allocation7 + $0x110] sm:$0xff]
    %v2285 = vld [vmem:[#allocation7 + $0x118] sm:$0xff]
    %v2286 = vld [vmem:[#allocation7 + $0x120] sm:$0xff]
    %v2287 = vld [vmem:[#allocation7 + $0x128] sm:$0xff]
    %v2288 = vld [vmem:[#allocation7 + $0x130] sm:$0xff]
    %v2289 = vld [vmem:[#allocation7 + $0x138] sm:$0xff]
    %v2290 = vld [vmem:[#allocation7 + $0x140] sm:$0xff]
    %v2291 = vld [vmem:[#allocation7 + $0x148] sm:$0xff]
    %v2292 = vld [vmem:[#allocation7 + $0x150] sm:$0xff]
    %v2293 = vld [vmem:[#allocation7 + $0x158] sm:$0xff]
    %v2294 = vld [vmem:[#allocation7 + $0x160] sm:$0xff]
    %v2295 = vld [vmem:[#allocation7 + $0x168] sm:$0xff]
    %v2296 = vld [vmem:[#allocation7 + $0x170] sm:$0xff]
    %v2297 = vld [vmem:[#allocation7 + $0x178] sm:$0xff]
    %v2298 = vld [vmem:[#allocation7 + $0x180] sm:$0xff]
    %v2299 = vld [vmem:[#allocation7 + $0x188] sm:$0xff]
    %v2300 = vld [vmem:[#allocation7 + $0x190] sm:$0xff]
    %v2301 = vld [vmem:[#allocation7 + $0x198] sm:$0xff]
    %v2302 = vld [vmem:[#allocation7 + $0x1a0] sm:$0xff]
    %v2303 = vld [vmem:[#allocation7 + $0x1a8] sm:$0xff]
    %v2304 = vld [vmem:[#allocation7 + $0x1b0] sm:$0xff]
    %v2305 = vld [vmem:[#allocation7 + $0x1b8] sm:$0xff]
    %v2306 = vld [vmem:[#allocation7 + $0x1c0] sm:$0xff]
    %v2307 = vld [vmem:[#allocation7 + $0x1c8] sm:$0xff]
    %v2308 = vld [vmem:[#allocation7 + $0x1d0] sm:$0xff]
    %v2309 = vld [vmem:[#allocation7 + $0x1d8] sm:$0xff]
    %v2310 = vld [vmem:[#allocation7 + $0x1e0] sm:$0xff]
    %v2311 = vld [vmem:[#allocation7 + $0x1e8] sm:$0xff]
    %v2312 = vld [vmem:[#allocation7 + $0x1f0] sm:$0xff]
    %v2313 = vld [vmem:[#allocation7 + $0x1f8] sm:$0xff]
    %v2314 = vld [vmem:[%s14] sm:$0x1]
    %v2316 = vlaneseq
    %v2317 = vshrl.u32 %v2316, 7
    %v2318 = vsub.s32 0, %v2317
    %v2319 = vrot.slane %v2314, %v2318
    %2321 = vmatprep.subr.mxu0 0.0
    %2322 = vmatpush1.msra.mxu0 %v2265
    %2323 = vmatprep.subr.mxu0 0.0
    %2324 = vmatpush1.msra.mxu0 %v2264
    %2325 = vmatprep.subr.mxu0 0.0
    %2326 = vmatpush1.msra.mxu0 %v2263
    %2327 = vmatprep.subr.mxu0 0.0
    %2328 = vmatpush1.msra.mxu0 %v2262
    %2329 = vmatprep.subr.mxu0 0.0
    %2330 = vmatpush1.msra.mxu0 %v2261
    %2331 = vmatprep.subr.mxu0 0.0
    %2332 = vmatpush1.msra.mxu0 %v2260
    %2333 = vmatprep.subr.mxu0 0.0
    %2334 = vmatpush1.msra.mxu0 %v2259
    %2335 = vmatprep.subr.mxu0 0.0
    %2336 = vmatpush1.msra.mxu0 %v2258
    %2337 = vmatprep.subr.mxu0 0.0
    %2338 = vmatpush1.msra.mxu0 %v2257
    %2339 = vmatprep.subr.mxu0 0.0
    %2340 = vmatpush1.msra.mxu0 %v2256
    %2341 = vmatprep.subr.mxu0 0.0
    %2342 = vmatpush1.msra.mxu0 %v2255
    %2343 = vmatprep.subr.mxu0 0.0
    %2344 = vmatpush1.msra.mxu0 %v2254
    %2345 = vmatprep.subr.mxu0 0.0
    %2346 = vmatpush1.msra.mxu0 %v2253
    %2347 = vmatprep.subr.mxu0 0.0
    %2348 = vmatpush1.msra.mxu0 %v2252
    %2349 = vmatprep.subr.mxu0 0.0
    %2350 = vmatpush1.msra.mxu0 %v2251
    %2351 = vmatprep.subr.mxu0 0.0
    %2352 = vmatpush1.msra.mxu0 %v2250
    %2353 = vmatprep.subr.mxu0 0.0
    %2354 = vmatpush2.msra.mxu0 %v2281
    %2355 = vmatprep.subr.mxu0 0.0
    %2356 = vmatpush2.msra.mxu0 %v2280
    %2357 = vmatprep.subr.mxu0 0.0
    %2358 = vmatpush2.msra.mxu0 %v2279
    %2359 = vmatprep.subr.mxu0 0.0
    %2360 = vmatpush2.msra.mxu0 %v2278
    %2361 = vmatprep.subr.mxu0 0.0
    %2362 = vmatpush2.msra.mxu0 %v2277
    %2363 = vmatprep.subr.mxu0 0.0
    %2364 = vmatpush2.msra.mxu0 %v2276
    %2365 = vmatprep.subr.mxu0 0.0
    %2366 = vmatpush2.msra.mxu0 %v2275
    %2367 = vmatprep.subr.mxu0 0.0
    %2368 = vmatpush2.msra.mxu0 %v2274
    %2369 = vmatprep.subr.mxu0 0.0
    %2370 = vmatpush2.msra.mxu0 %v2273
    %2371 = vmatprep.subr.mxu0 0.0
    %2372 = vmatpush2.msra.mxu0 %v2272
    %2373 = vmatprep.subr.mxu0 0.0
    %2374 = vmatpush2.msra.mxu0 %v2271
    %2375 = vmatprep.subr.mxu0 0.0
    %2376 = vmatpush2.msra.mxu0 %v2270
    %2377 = vmatprep.subr.mxu0 0.0
    %2378 = vmatpush2.msra.mxu0 %v2269
    %2379 = vmatprep.subr.mxu0 0.0
    %2380 = vmatpush2.msra.mxu0 %v2268
    %2381 = vmatprep.subr.mxu0 0.0
    %2382 = vmatpush2.msra.mxu0 %v2267
    %2383 = vmatprep.subr.mxu0 0.0
    %2384 = vmatpush2.msra.mxu0 %v2266
    %2385 = vmatprep.mubr.f32.mxu0 %v2247
    %2386 = vmatmul.mubr.f32.gmra.mxu0 %v2246
    %v2387 = vpop.f32.mrf.mxu0
    %v2388 = vadd.f32 %v2319, %v2387
    %v2389 = vpop.f32.mrf.mxu0
    %2390 = vdwg.mxu0
    %2391 = vmatprep.subr.mxu0 0.0
    %2392 = vmatpush1.msra.mxu0 %v2297
    %2393 = vmatprep.subr.mxu0 0.0
    %2394 = vmatpush1.msra.mxu0 %v2296
    %2395 = vmatprep.subr.mxu0 0.0
    %2396 = vmatpush1.msra.mxu0 %v2295
    %2397 = vmatprep.subr.mxu0 0.0
    %2398 = vmatpush1.msra.mxu0 %v2294
    %2399 = vmatprep.subr.mxu0 0.0
    %2400 = vmatpush1.msra.mxu0 %v2293
    %2401 = vmatprep.subr.mxu0 0.0
    %2402 = vmatpush1.msra.mxu0 %v2292
    %2403 = vmatprep.subr.mxu0 0.0
    %2404 = vmatpush1.msra.mxu0 %v2291
    %2405 = vmatprep.subr.mxu0 0.0
    %2406 = vmatpush1.msra.mxu0 %v2290
    %2407 = vmatprep.subr.mxu0 0.0
    %2408 = vmatpush1.msra.mxu0 %v2289
    %2409 = vmatprep.subr.mxu0 0.0
    %2410 = vmatpush1.msra.mxu0 %v2288
    %2411 = vmatprep.subr.mxu0 0.0
    %2412 = vmatpush1.msra.mxu0 %v2287
    %2413 = vmatprep.subr.mxu0 0.0
    %2414 = vmatpush1.msra.mxu0 %v2286
    %2415 = vmatprep.subr.mxu0 0.0
    %2416 = vmatpush1.msra.mxu0 %v2285
    %2417 = vmatprep.subr.mxu0 0.0
    %2418 = vmatpush1.msra.mxu0 %v2284
    %2419 = vmatprep.subr.mxu0 0.0
    %2420 = vmatpush1.msra.mxu0 %v2283
    %2421 = vmatprep.subr.mxu0 0.0
    %2422 = vmatpush1.msra.mxu0 %v2282
    %2423 = vmatprep.subr.mxu0 0.0
    %2424 = vmatpush2.msra.mxu0 %v2313
    %2425 = vmatprep.subr.mxu0 0.0
    %2426 = vmatpush2.msra.mxu0 %v2312
    %2427 = vmatprep.subr.mxu0 0.0
    %2428 = vmatpush2.msra.mxu0 %v2311
    %2429 = vmatprep.subr.mxu0 0.0
    %2430 = vmatpush2.msra.mxu0 %v2310
    %2431 = vmatprep.subr.mxu0 0.0
    %2432 = vmatpush2.msra.mxu0 %v2309
    %2433 = vmatprep.subr.mxu0 0.0
    %2434 = vmatpush2.msra.mxu0 %v2308
    %2435 = vmatprep.subr.mxu0 0.0
    %2436 = vmatpush2.msra.mxu0 %v2307
    %2437 = vmatprep.subr.mxu0 0.0
    %2438 = vmatpush2.msra.mxu0 %v2306
    %2439 = vmatprep.subr.mxu0 0.0
    %2440 = vmatpush2.msra.mxu0 %v2305
    %2441 = vmatprep.subr.mxu0 0.0
    %2442 = vmatpush2.msra.mxu0 %v2304
    %2443 = vmatprep.subr.mxu0 0.0
    %2444 = vmatpush2.msra.mxu0 %v2303
    %2445 = vmatprep.subr.mxu0 0.0
    %2446 = vmatpush2.msra.mxu0 %v2302
    %2447 = vmatprep.subr.mxu0 0.0
    %2448 = vmatpush2.msra.mxu0 %v2301
    %2449 = vmatprep.subr.mxu0 0.0
    %2450 = vmatpush2.msra.mxu0 %v2300
    %2451 = vmatprep.subr.mxu0 0.0
    %2452 = vmatpush2.msra.mxu0 %v2299
    %2453 = vmatprep.subr.mxu0 0.0
    %2454 = vmatpush2.msra.mxu0 %v2298
    %2455 = vmatprep.mubr.f32.mxu0 %v2249
    %2456 = vmatmul.mubr.f32.gmra.mxu0 %v2248
    %v2457 = vpop.f32.mrf.mxu0
    %v2458 = vadd.f32 %v2388, %v2457
    %v2459 = vpop.f32.mrf.mxu0
    %2460 = vdwg.mxu0
    %2461 = vmax.xlane.f32.xlu0 %v2458
    %v2462 = vpop.xlane.xlu0 %2461
    %v2463 = vsub.f32 %v2458, %v2462
    %v2464 = vmul.f32 %v2463, 1.442695
    %v2465 = vpow.pop %v2464
    %2466 = vadd.xlane.f32.xlu0 %v2465
    %v2467 = vpop.xlane.xlu0 %2466
    %v2468 = vrcp.pop %v2467
    %v2469 = vmul.f32 %v2465, %v2468
    %v2470 = vlaneseq
    %v2471 = vshrl.u32 %v2470, 7
    %v2472 = vsub.s32 0, %v2471
    %v2473 = vrot.slane %v2469, %v2472
    %2475 = vbcast.lane.b32.xlu0 %v2473, 256
    %v2476 = vpop.permute.xlu0 %2475
    %s2478 = sor.u32 256, 8
    %2479 = vbcast.lane.b32.xlu0 %v2473, %s2478
    %v2480 = vpop.permute.xlu0 %2479
    %v2481 = vlaneseq
    %v2482 = vshrl.u32 %v2481, 7
    %v2483 = vsub.s32 1, %v2482
    %v2484 = vrot.slane %v2469, %v2483
    %2486 = vbcast.lane.b32.xlu0 %v2484, 256
    %v2487 = vpop.permute.xlu0 %2486
    %s2489 = sor.u32 256, 8
    %2490 = vbcast.lane.b32.xlu0 %v2484, %s2489
    %v2491 = vpop.permute.xlu0 %2490
    %v2492 = vlaneseq
    %v2493 = vshrl.u32 %v2492, 7
    %v2494 = vsub.s32 2, %v2493
    %v2495 = vrot.slane %v2469, %v2494
    %2497 = vbcast.lane.b32.xlu0 %v2495, 256
    %v2498 = vpop.permute.xlu0 %2497
    %s2500 = sor.u32 256, 8
    %2501 = vbcast.lane.b32.xlu0 %v2495, %s2500
    %v2502 = vpop.permute.xlu0 %2501
    %v2503 = vlaneseq
    %v2504 = vshrl.u32 %v2503, 7
    %v2505 = vsub.s32 3, %v2504
    %v2506 = vrot.slane %v2469, %v2505
    %2508 = vbcast.lane.b32.xlu0 %v2506, 256
    %v2509 = vpop.permute.xlu0 %2508
    %s2511 = sor.u32 256, 8
    %2512 = vbcast.lane.b32.xlu0 %v2506, %s2511
    %v2513 = vpop.permute.xlu0 %2512
    %v2514 = vlaneseq
    %v2515 = vshrl.u32 %v2514, 7
    %v2516 = vsub.s32 4, %v2515
    %v2517 = vrot.slane %v2469, %v2516
    %2519 = vbcast.lane.b32.xlu0 %v2517, 256
    %v2520 = vpop.permute.xlu0 %2519
    %s2522 = sor.u32 256, 8
    %2523 = vbcast.lane.b32.xlu0 %v2517, %s2522
    %v2524 = vpop.permute.xlu0 %2523
    %v2525 = vlaneseq
    %v2526 = vshrl.u32 %v2525, 7
    %v2527 = vsub.s32 5, %v2526
    %v2528 = vrot.slane %v2469, %v2527
    %2530 = vbcast.lane.b32.xlu0 %v2528, 256
    %v2531 = vpop.permute.xlu0 %2530
    %s2533 = sor.u32 256, 8
    %2534 = vbcast.lane.b32.xlu0 %v2528, %s2533
    %v2535 = vpop.permute.xlu0 %2534
    %v2536 = vlaneseq
    %v2537 = vshrl.u32 %v2536, 7
    %v2538 = vsub.s32 6, %v2537
    %v2539 = vrot.slane %v2469, %v2538
    %2541 = vbcast.lane.b32.xlu0 %v2539, 256
    %v2542 = vpop.permute.xlu0 %2541
    %s2544 = sor.u32 256, 8
    %2545 = vbcast.lane.b32.xlu0 %v2539, %s2544
    %v2546 = vpop.permute.xlu0 %2545
    %v2547 = vlaneseq
    %v2548 = vshrl.u32 %v2547, 7
    %v2549 = vsub.s32 7, %v2548
    %v2550 = vrot.slane %v2469, %v2549
    %2552 = vbcast.lane.b32.xlu0 %v2550, 256
    %v2553 = vpop.permute.xlu0 %2552
    %s2555 = sor.u32 256, 8
    %2556 = vbcast.lane.b32.xlu0 %v2550, %s2555
    %v2557 = vpop.permute.xlu0 %2556
    %v2558 = vld [vmem:[%s4] sm:$0xff]
    %v2559 = vld [vmem:[%s4 + $0x8] sm:$0xff]
    %v2560 = vld [vmem:[%s4 + $0x10] sm:$0xff]
    %v2561 = vld [vmem:[%s4 + $0x18] sm:$0xff]
    %v2562 = vld [vmem:[%s4 + $0x20] sm:$0xff]
    %v2563 = vld [vmem:[%s4 + $0x28] sm:$0xff]
    %v2564 = vld [vmem:[%s4 + $0x30] sm:$0xff]
    %v2565 = vld [vmem:[%s4 + $0x38] sm:$0xff]
    %v2566 = vld [vmem:[%s4 + $0x40] sm:$0xff]
    %v2567 = vld [vmem:[%s4 + $0x48] sm:$0xff]
    %v2568 = vld [vmem:[%s4 + $0x50] sm:$0xff]
    %v2569 = vld [vmem:[%s4 + $0x58] sm:$0xff]
    %v2570 = vld [vmem:[%s4 + $0x60] sm:$0xff]
    %v2571 = vld [vmem:[%s4 + $0x68] sm:$0xff]
    %v2572 = vld [vmem:[%s4 + $0x70] sm:$0xff]
    %v2573 = vld [vmem:[%s4 + $0x78] sm:$0xff]
    %v2574 = vmul.f32 %v2476, %v2558
    %v2575 = vmul.f32 %v2480, %v2559
    %v2576 = vmul.f32 %v2487, %v2560
    %v2577 = vmul.f32 %v2491, %v2561
    %v2578 = vmul.f32 %v2498, %v2562
    %v2579 = vmul.f32 %v2502, %v2563
    %v2580 = vmul.f32 %v2509, %v2564
    %v2581 = vmul.f32 %v2513, %v2565
    %v2582 = vmul.f32 %v2520, %v2566
    %v2583 = vmul.f32 %v2524, %v2567
    %v2584 = vmul.f32 %v2531, %v2568
    %v2585 = vmul.f32 %v2535, %v2569
    %v2586 = vmul.f32 %v2542, %v2570
    %v2587 = vmul.f32 %v2546, %v2571
    %v2588 = vmul.f32 %v2553, %v2572
    %v2589 = vmul.f32 %v2557, %v2573
    %v2590 = vsel %vm102, %v2574, 0.0
    %v2591 = vsel %vm102, %v2575, 0.0
    %v2592 = vadd.f32 %v2590, %v2591
    %v2593 = vrot.slane %v2592, 4
    %v2594 = vadd.f32 %v2592, %v2593
    %v2595 = vrot.slane %v2594, 2
    %v2596 = vadd.f32 %v2594, %v2595
    %v2597 = vrot.slane %v2596, 1
    %v2598 = vadd.f32 %v2596, %v2597
    %v2599 = vsel %vm102, %v2576, 0.0
    %v2600 = vsel %vm102, %v2577, 0.0
    %v2601 = vadd.f32 %v2599, %v2600
    %v2602 = vrot.slane %v2601, 4
    %v2603 = vadd.f32 %v2601, %v2602
    %v2604 = vrot.slane %v2603, 2
    %v2605 = vadd.f32 %v2603, %v2604
    %v2606 = vrot.slane %v2605, 1
    %v2607 = vadd.f32 %v2605, %v2606
    %v2608 = vsel %vm102, %v2578, 0.0
    %v2609 = vsel %vm102, %v2579, 0.0
    %v2610 = vadd.f32 %v2608, %v2609
    %v2611 = vrot.slane %v2610, 4
    %v2612 = vadd.f32 %v2610, %v2611
    %v2613 = vrot.slane %v2612, 2
    %v2614 = vadd.f32 %v2612, %v2613
    %v2615 = vrot.slane %v2614, 1
    %v2616 = vadd.f32 %v2614, %v2615
    %v2617 = vsel %vm102, %v2580, 0.0
    %v2618 = vsel %vm102, %v2581, 0.0
    %v2619 = vadd.f32 %v2617, %v2618
    %v2620 = vrot.slane %v2619, 4
    %v2621 = vadd.f32 %v2619, %v2620
    %v2622 = vrot.slane %v2621, 2
    %v2623 = vadd.f32 %v2621, %v2622
    %v2624 = vrot.slane %v2623, 1
    %v2625 = vadd.f32 %v2623, %v2624
    %v2626 = vsel %vm102, %v2582, 0.0
    %v2627 = vsel %vm102, %v2583, 0.0
    %v2628 = vadd.f32 %v2626, %v2627
    %v2629 = vrot.slane %v2628, 4
    %v2630 = vadd.f32 %v2628, %v2629
    %v2631 = vrot.slane %v2630, 2
    %v2632 = vadd.f32 %v2630, %v2631
    %v2633 = vrot.slane %v2632, 1
    %v2634 = vadd.f32 %v2632, %v2633
    %v2635 = vsel %vm102, %v2584, 0.0
    %v2636 = vsel %vm102, %v2585, 0.0
    %v2637 = vadd.f32 %v2635, %v2636
    %v2638 = vrot.slane %v2637, 4
    %v2639 = vadd.f32 %v2637, %v2638
    %v2640 = vrot.slane %v2639, 2
    %v2641 = vadd.f32 %v2639, %v2640
    %v2642 = vrot.slane %v2641, 1
    %v2643 = vadd.f32 %v2641, %v2642
    %v2644 = vsel %vm102, %v2586, 0.0
    %v2645 = vsel %vm102, %v2587, 0.0
    %v2646 = vadd.f32 %v2644, %v2645
    %v2647 = vrot.slane %v2646, 4
    %v2648 = vadd.f32 %v2646, %v2647
    %v2649 = vrot.slane %v2648, 2
    %v2650 = vadd.f32 %v2648, %v2649
    %v2651 = vrot.slane %v2650, 1
    %v2652 = vadd.f32 %v2650, %v2651
    %v2653 = vsel %vm102, %v2588, 0.0
    %v2654 = vsel %vm102, %v2589, 0.0
    %v2655 = vadd.f32 %v2653, %v2654
    %v2656 = vrot.slane %v2655, 4
    %v2657 = vadd.f32 %v2655, %v2656
    %v2658 = vrot.slane %v2657, 2
    %v2659 = vadd.f32 %v2657, %v2658
    %v2660 = vrot.slane %v2659, 1
    %v2661 = vadd.f32 %v2659, %v2660
    %v2662 = vadd.f32 %v1973, %v2235
    %v2663 = vld [vmem:[%s15] sm:$0xff]
    %v2664 = vld [vmem:[%s15 + $0x8] sm:$0xff]
    %v2665 = vld [vmem:[%s15 + $0x10] sm:$0xff]
    %v2666 = vld [vmem:[%s15 + $0x18] sm:$0xff]
    %v2675 = vsel %vm1740, %v2607, %v2598
    %v2676 = vsel %vm1742, %v2616, %v2675
    %v2677 = vsel %vm1744, %v2625, %v2676
    %v2678 = vsel %vm1746, %v2634, %v2677
    %v2679 = vsel %vm1748, %v2643, %v2678
    %v2680 = vsel %vm1750, %v2652, %v2679
    %v2681 = vsel %vm1752, %v2661, %v2680
    %v2682 = vsel %vm102, %v2681, 0
    %2684 = vmatprep.subr.mxu0 0.0
    %2685 = vmatpush1.msra.mxu0 0.0
    %2686 = vmatprep.subr.mxu0 0.0
    %2687 = vmatpush1.msra.mxu0 0.0
    %2688 = vmatprep.subr.mxu0 0.0
    %2689 = vmatpush1.msra.mxu0 0.0
    %2690 = vmatprep.subr.mxu0 0.0
    %2691 = vmatpush1.msra.mxu0 0.0
    %2692 = vmatprep.subr.mxu0 0.0
    %2693 = vmatpush1.msra.mxu0 0.0
    %2694 = vmatprep.subr.mxu0 0.0
    %2695 = vmatpush1.msra.mxu0 0.0
    %2696 = vmatprep.subr.mxu0 0.0
    %2697 = vmatpush1.msra.mxu0 0.0
    %2698 = vmatprep.subr.mxu0 0.0
    %2699 = vmatpush1.msra.mxu0 0.0
    %2700 = vmatprep.subr.mxu0 0.0
    %2701 = vmatpush1.msra.mxu0 0.0
    %2702 = vmatprep.subr.mxu0 0.0
    %2703 = vmatpush1.msra.mxu0 0.0
    %2704 = vmatprep.subr.mxu0 0.0
    %2705 = vmatpush1.msra.mxu0 0.0
    %2706 = vmatprep.subr.mxu0 0.0
    %2707 = vmatpush1.msra.mxu0 0.0
    %2708 = vmatprep.subr.mxu0 0.0
    %2709 = vmatpush1.msra.mxu0 %v2666
    %2710 = vmatprep.subr.mxu0 0.0
    %2711 = vmatpush1.msra.mxu0 %v2665
    %2712 = vmatprep.subr.mxu0 0.0
    %2713 = vmatpush1.msra.mxu0 %v2664
    %2714 = vmatprep.subr.mxu0 0.0
    %2715 = vmatpush1.msra.mxu0 %v2663
    %2716 = vmatprep.subr.mxu0 0.0
    %2717 = vmatpush2.msra.mxu0 0.0
    %2718 = vmatprep.subr.mxu0 0.0
    %2719 = vmatpush2.msra.mxu0 0.0
    %2720 = vmatprep.subr.mxu0 0.0
    %2721 = vmatpush2.msra.mxu0 0.0
    %2722 = vmatprep.subr.mxu0 0.0
    %2723 = vmatpush2.msra.mxu0 0.0
    %2724 = vmatprep.subr.mxu0 0.0
    %2725 = vmatpush2.msra.mxu0 0.0
    %2726 = vmatprep.subr.mxu0 0.0
    %2727 = vmatpush2.msra.mxu0 0.0
    %2728 = vmatprep.subr.mxu0 0.0
    %2729 = vmatpush2.msra.mxu0 0.0
    %2730 = vmatprep.subr.mxu0 0.0
    %2731 = vmatpush2.msra.mxu0 0.0
    %2732 = vmatprep.subr.mxu0 0.0
    %2733 = vmatpush2.msra.mxu0 0.0
    %2734 = vmatprep.subr.mxu0 0.0
    %2735 = vmatpush2.msra.mxu0 0.0
    %2736 = vmatprep.subr.mxu0 0.0
    %2737 = vmatpush2.msra.mxu0 0.0
    %2738 = vmatprep.subr.mxu0 0.0
    %2739 = vmatpush2.msra.mxu0 0.0
    %2740 = vmatprep.subr.mxu0 0.0
    %2741 = vmatpush2.msra.mxu0 0.0
    %2742 = vmatprep.subr.mxu0 0.0
    %2743 = vmatpush2.msra.mxu0 0.0
    %2744 = vmatprep.subr.mxu0 0.0
    %2745 = vmatpush2.msra.mxu0 0.0
    %2746 = vmatprep.subr.mxu0 0.0
    %2747 = vmatpush2.msra.mxu0 0.0
    %2748 = vmatprep.mubr.f32.mxu0 0.0
    %2749 = vmatmul.mubr.f32.gmra.mxu0 %v2682
    %v2750 = vpop.f32.mrf.mxu0
    %v2751 = vadd.f32 0.0, %v2750
    %v2752 = vpop.f32.mrf.mxu0
    %2753 = vdwg.mxu0
    %v2754 = vadd.f32 %v2662, %v2751
    %v2755 = vxor.u32 %v2754, 2147483648
    %v2756 = vmul.f32 %v2755, 1.442695
    %v2757 = vpow.pop %v2756
    %v2758 = vadd.f32 %v2757, 1.0
    %v2759 = vrcp.pop %v2758
    %v2760 = vmul.f32 1.0, %v2759
    %v2761 = vtanh.pop %v2754
    %v2762 = vmul.f32 %v2760, %v1971
    %2764 = vrot.lane.b32.xlu0 %v2761, 32
    %v2765 = vpop.permute.xlu0 %2764
    %v2767 = vmul.f32 %v2760, %v2765
    %2769 = vrot.lane.b32.xlu0 %v2767, 32
    %v2770 = vpop.permute.xlu0 %2769
    %v2772 = vadd.f32 %v2762, %v2770
    %v2773 = vtanh.pop %v2772
    %2775 = vrot.lane.b32.xlu0 %v2773, 32
    %v2776 = vpop.permute.xlu0 %2775
    %v2778 = vmul.f32 %v2760, %v2776
    %v2779 = vld [vmem:[%s16] sm:$0xff]
    %v2780 = vld [vmem:[%s16 + $0x8] sm:$0xff]
    %v2781 = vld [vmem:[%s16 + $0x10] sm:$0xff]
    %v2782 = vld [vmem:[%s16 + $0x18] sm:$0xff]
    %v2783 = vld [vmem:[%s17] sm:$0x1]
    %v2785 = vlaneseq
    %v2786 = vshrl.u32 %v2785, 7
    %v2787 = vsub.s32 0, %v2786
    %v2788 = vrot.slane %v2783, %v2787
    %2791 = vrot.lane.b32.xlu0 %v2778, 64
    %v2792 = vpop.permute.xlu0 %2791
    %v2793 = vsel %vm102, %v2792, 0
    %2795 = vmatprep.subr.mxu0 0.0
    %2796 = vmatpush1.msra.mxu0 0.0
    %2797 = vmatprep.subr.mxu0 0.0
    %2798 = vmatpush1.msra.mxu0 0.0
    %2799 = vmatprep.subr.mxu0 0.0
    %2800 = vmatpush1.msra.mxu0 0.0
    %2801 = vmatprep.subr.mxu0 0.0
    %2802 = vmatpush1.msra.mxu0 0.0
    %2803 = vmatprep.subr.mxu0 0.0
    %2804 = vmatpush1.msra.mxu0 0.0
    %2805 = vmatprep.subr.mxu0 0.0
    %2806 = vmatpush1.msra.mxu0 0.0
    %2807 = vmatprep.subr.mxu0 0.0
    %2808 = vmatpush1.msra.mxu0 0.0
    %2809 = vmatprep.subr.mxu0 0.0
    %2810 = vmatpush1.msra.mxu0 0.0
    %2811 = vmatprep.subr.mxu0 0.0
    %2812 = vmatpush1.msra.mxu0 0.0
    %2813 = vmatprep.subr.mxu0 0.0
    %2814 = vmatpush1.msra.mxu0 0.0
    %2815 = vmatprep.subr.mxu0 0.0
    %2816 = vmatpush1.msra.mxu0 0.0
    %2817 = vmatprep.subr.mxu0 0.0
    %2818 = vmatpush1.msra.mxu0 0.0
    %2819 = vmatprep.subr.mxu0 0.0
    %2820 = vmatpush1.msra.mxu0 %v2782
    %2821 = vmatprep.subr.mxu0 0.0
    %2822 = vmatpush1.msra.mxu0 %v2781
    %2823 = vmatprep.subr.mxu0 0.0
    %2824 = vmatpush1.msra.mxu0 %v2780
    %2825 = vmatprep.subr.mxu0 0.0
    %2826 = vmatpush1.msra.mxu0 %v2779
    %2827 = vmatprep.subr.mxu0 0.0
    %2828 = vmatpush2.msra.mxu0 0.0
    %2829 = vmatprep.subr.mxu0 0.0
    %2830 = vmatpush2.msra.mxu0 0.0
    %2831 = vmatprep.subr.mxu0 0.0
    %2832 = vmatpush2.msra.mxu0 0.0
    %2833 = vmatprep.subr.mxu0 0.0
    %2834 = vmatpush2.msra.mxu0 0.0
    %2835 = vmatprep.subr.mxu0 0.0
    %2836 = vmatpush2.msra.mxu0 0.0
    %2837 = vmatprep.subr.mxu0 0.0
    %2838 = vmatpush2.msra.mxu0 0.0
    %2839 = vmatprep.subr.mxu0 0.0
    %2840 = vmatpush2.msra.mxu0 0.0
    %2841 = vmatprep.subr.mxu0 0.0
    %2842 = vmatpush2.msra.mxu0 0.0
    %2843 = vmatprep.subr.mxu0 0.0
    %2844 = vmatpush2.msra.mxu0 0.0
    %2845 = vmatprep.subr.mxu0 0.0
    %2846 = vmatpush2.msra.mxu0 0.0
    %2847 = vmatprep.subr.mxu0 0.0
    %2848 = vmatpush2.msra.mxu0 0.0
    %2849 = vmatprep.subr.mxu0 0.0
    %2850 = vmatpush2.msra.mxu0 0.0
    %2851 = vmatprep.subr.mxu0 0.0
    %2852 = vmatpush2.msra.mxu0 0.0
    %2853 = vmatprep.subr.mxu0 0.0
    %2854 = vmatpush2.msra.mxu0 0.0
    %2855 = vmatprep.subr.mxu0 0.0
    %2856 = vmatpush2.msra.mxu0 0.0
    %2857 = vmatprep.subr.mxu0 0.0
    %2858 = vmatpush2.msra.mxu0 0.0
    %2859 = vmatprep.mubr.f32.mxu0 0.0
    %2860 = vmatmul.mubr.f32.gmra.mxu0 %v2793
    %v2861 = vpop.f32.mrf.mxu0
    %v2862 = vadd.f32 %v2788, %v2861
    %v2863 = vpop.f32.mrf.mxu0
    %2864 = vdwg.mxu0
    %2865 = vmax.xlane.f32.xlu0 %v2862
    %v2866 = vpop.xlane.xlu0 %2865
    %v2867 = vsub.f32 %v2862, %v2866
    %v2868 = vmul.f32 %v2867, 1.442695
    %v2869 = vpow.pop %v2868
    %2870 = vadd.xlane.f32.xlu0 %v2869
    %v2871 = vpop.xlane.xlu0 %2870
    %v2872 = vlog2.pop %v2871
    %v2873 = vmul.f32 %v2872, 0.6931472
    %v2874 = vsub.f32 %v2867, %v2873
    %p2875 = scmp.gt.s32.totalorder %s1039, 1
    %s2876 = scalar_select %p2875, 1, 0
    %s2877 = scvt.s32.f32 %s2876
    %v2878 = vstv %s2877
    %v2879 = vmul.f32 %v2878, %v2469
    %s2880 = scalar_lea.vmem %s18, 8
    %2881 = vst [vmem:[%s2880] sm:$0xff] %v2879
    %v2882 = vmul.f32 %v2878, %v2874
    %s2883 = scalar_lea.vmem %s19, 8
    %2884 = vst [vmem:[%s2883] sm:$0xff] %v2882
    %v2885 = vmul.f32 %v2878, %v2778
    %s2886 = ssub.f32 1.0, %s2877
    %v2887 = vstv %s2886
    %v2888 = vmul.f32 %v2887, %v1966
    %v2889 = vadd.f32 %v2885, %v2888
    %v2890 = vmul.f32 %v2878, %v2772
    %v2891 = vmul.f32 %v2887, %v1971
    %v2892 = vadd.f32 %v2890, %v2891
    %s2893 = scalar_lea.vmem [#allocation2], 16
    %v2894 = vld [vmem:[%s2893] sm:$0xff]
    %v2895 = vld [vmem:[%s11] sm:$0xff]
    %v2896 = vld [vmem:[%s11 + $0x8] sm:$0xff]
    %v2897 = vld [vmem:[%s11 + $0x10] sm:$0xff]
    %v2898 = vld [vmem:[%s11 + $0x18] sm:$0xff]
    %v2899 = vld [vmem:[%s11 + $0x20] sm:$0xff]
    %v2900 = vld [vmem:[%s11 + $0x28] sm:$0xff]
    %v2901 = vld [vmem:[%s11 + $0x30] sm:$0xff]
    %v2902 = vld [vmem:[%s11 + $0x38] sm:$0xff]
    %v2903 = vld [vmem:[%s11 + $0x40] sm:$0xff]
    %v2904 = vld [vmem:[%s11 + $0x48] sm:$0xff]
    %v2905 = vld [vmem:[%s11 + $0x50] sm:$0xff]
    %v2906 = vld [vmem:[%s11 + $0x58] sm:$0xff]
    %v2907 = vld [vmem:[%s11 + $0x60] sm:$0xff]
    %v2908 = vld [vmem:[%s11 + $0x68] sm:$0xff]
    %v2909 = vld [vmem:[%s11 + $0x70] sm:$0xff]
    %v2910 = vld [vmem:[%s11 + $0x78] sm:$0xff]
    %v2911 = vld [vmem:[%s11 + $0x80] sm:$0xff]
    %v2912 = vld [vmem:[%s11 + $0x88] sm:$0xff]
    %v2913 = vld [vmem:[%s11 + $0x90] sm:$0xff]
    %v2914 = vld [vmem:[%s11 + $0x98] sm:$0xff]
    %v2915 = vld [vmem:[%s12] sm:$0x1f]
    %v2917 = vlaneseq
    %v2918 = vshrl.u32 %v2917, 7
    %v2919 = vsub.s32 0, %v2918
    %v2920 = vrot.slane %v2915, %v2919
    %v2921 = vlaneseq
    %v2922 = vshrl.u32 %v2921, 7
    %v2923 = vsub.s32 1, %v2922
    %v2924 = vrot.slane %v2915, %v2923
    %v2925 = vlaneseq
    %v2926 = vshrl.u32 %v2925, 7
    %v2927 = vsub.s32 2, %v2926
    %v2928 = vrot.slane %v2915, %v2927
    %v2929 = vlaneseq
    %v2930 = vshrl.u32 %v2929, 7
    %v2931 = vsub.s32 3, %v2930
    %v2932 = vrot.slane %v2915, %v2931
    %v2933 = vlaneseq
    %v2934 = vshrl.u32 %v2933, 7
    %v2935 = vsub.s32 4, %v2934
    %v2936 = vrot.slane %v2915, %v2935
    %2943 = vrot.lane.b32.xlu0 %v2889, 64
    %v2944 = vpop.permute.xlu0 %2943
    %v2945 = vsel %vm102, %v2944, 0
    %2947 = vmatprep.subr.mxu0 0.0
    %2948 = vmatpush1.msra.mxu0 0.0
    %2949 = vmatprep.subr.mxu0 0.0
    %2950 = vmatpush1.msra.mxu0 0.0
    %2951 = vmatprep.subr.mxu0 0.0
    %2952 = vmatpush1.msra.mxu0 0.0
    %2953 = vmatprep.subr.mxu0 0.0
    %2954 = vmatpush1.msra.mxu0 0.0
    %2955 = vmatprep.subr.mxu0 0.0
    %2956 = vmatpush1.msra.mxu0 0.0
    %2957 = vmatprep.subr.mxu0 0.0
    %2958 = vmatpush1.msra.mxu0 0.0
    %2959 = vmatprep.subr.mxu0 0.0
    %2960 = vmatpush1.msra.mxu0 0.0
    %2961 = vmatprep.subr.mxu0 0.0
    %2962 = vmatpush1.msra.mxu0 0.0
    %2963 = vmatprep.subr.mxu0 0.0
    %2964 = vmatpush1.msra.mxu0 0.0
    %2965 = vmatprep.subr.mxu0 0.0
    %2966 = vmatpush1.msra.mxu0 0.0
    %2967 = vmatprep.subr.mxu0 0.0
    %2968 = vmatpush1.msra.mxu0 0.0
    %2969 = vmatprep.subr.mxu0 0.0
    %2970 = vmatpush1.msra.mxu0 0.0
    %2971 = vmatprep.subr.mxu0 %v2911
    %2972 = vmatpush1.msra.mxu0 %v2910
    %2973 = vmatprep.subr.mxu0 %v2906
    %2974 = vmatpush1.msra.mxu0 %v2905
    %2975 = vmatprep.subr.mxu0 %v2901
    %2976 = vmatpush1.msra.mxu0 %v2900
    %2977 = vmatprep.subr.mxu0 %v2896
    %2978 = vmatpush1.msra.mxu0 %v2895
    %2979 = vmatprep.subr.mxu0 0.0
    %2980 = vmatpush2.msra.mxu0 0.0
    %2981 = vmatprep.subr.mxu0 0.0
    %2982 = vmatpush2.msra.mxu0 0.0
    %2983 = vmatprep.subr.mxu0 0.0
    %2984 = vmatpush2.msra.mxu0 0.0
    %2985 = vmatprep.subr.mxu0 0.0
    %2986 = vmatpush2.msra.mxu0 0.0
    %2987 = vmatprep.subr.mxu0 0.0
    %2988 = vmatpush2.msra.mxu0 0.0
    %2989 = vmatprep.subr.mxu0 0.0
    %2990 = vmatpush2.msra.mxu0 0.0
    %2991 = vmatprep.subr.mxu0 0.0
    %2992 = vmatpush2.msra.mxu0 0.0
    %2993 = vmatprep.subr.mxu0 0.0
    %2994 = vmatpush2.msra.mxu0 0.0
    %2995 = vmatprep.subr.mxu0 0.0
    %2996 = vmatpush2.msra.mxu0 0.0
    %2997 = vmatprep.subr.mxu0 0.0
    %2998 = vmatpush2.msra.mxu0 0.0
    %2999 = vmatprep.subr.mxu0 0.0
    %3000 = vmatpush2.msra.mxu0 0.0
    %3001 = vmatprep.subr.mxu0 0.0
    %3002 = vmatpush2.msra.mxu0 0.0
    %3003 = vmatprep.subr.mxu0 0.0
    %3004 = vmatpush2.msra.mxu0 0.0
    %3005 = vmatprep.subr.mxu0 0.0
    %3006 = vmatpush2.msra.mxu0 0.0
    %3007 = vmatprep.subr.mxu0 0.0
    %3008 = vmatpush2.msra.mxu0 0.0
    %3009 = vmatprep.subr.mxu0 0.0
    %3010 = vmatpush2.msra.mxu0 0.0
    %3011 = vmatprep.mubr.f32.mxu0 0.0
    %3012 = vmatmul.mubr.f32.gmra.mxu0 %v2945
    %v3013 = vpop.f32.mrf.mxu0
    %v3014 = vadd.f32 %v2920, %v3013
    %v3015 = vpop.f32.mrf.mxu0
    %v3016 = vadd.f32 %v2924, %v3015
    %3017 = vdwg.mxu0
    %3018 = vmatprep.subr.mxu0 0.0
    %3019 = vmatpush1.msra.mxu0 0.0
    %3020 = vmatprep.subr.mxu0 0.0
    %3021 = vmatpush1.msra.mxu0 0.0
    %3022 = vmatprep.subr.mxu0 0.0
    %3023 = vmatpush1.msra.mxu0 0.0
    %3024 = vmatprep.subr.mxu0 0.0
    %3025 = vmatpush1.msra.mxu0 0.0
    %3026 = vmatprep.subr.mxu0 0.0
    %3027 = vmatpush1.msra.mxu0 0.0
    %3028 = vmatprep.subr.mxu0 0.0
    %3029 = vmatpush1.msra.mxu0 0.0
    %3030 = vmatprep.subr.mxu0 0.0
    %3031 = vmatpush1.msra.mxu0 0.0
    %3032 = vmatprep.subr.mxu0 0.0
    %3033 = vmatpush1.msra.mxu0 0.0
    %3034 = vmatprep.subr.mxu0 0.0
    %3035 = vmatpush1.msra.mxu0 0.0
    %3036 = vmatprep.subr.mxu0 0.0
    %3037 = vmatpush1.msra.mxu0 0.0
    %3038 = vmatprep.subr.mxu0 0.0
    %3039 = vmatpush1.msra.mxu0 0.0
    %3040 = vmatprep.subr.mxu0 0.0
    %3041 = vmatpush1.msra.mxu0 0.0
    %3042 = vmatprep.subr.mxu0 %v2913
    %3043 = vmatpush1.msra.mxu0 %v2912
    %3044 = vmatprep.subr.mxu0 %v2908
    %3045 = vmatpush1.msra.mxu0 %v2907
    %3046 = vmatprep.subr.mxu0 %v2903
    %3047 = vmatpush1.msra.mxu0 %v2902
    %3048 = vmatprep.subr.mxu0 %v2898
    %3049 = vmatpush1.msra.mxu0 %v2897
    %3050 = vmatprep.subr.mxu0 0.0
    %3051 = vmatpush2.msra.mxu0 0.0
    %3052 = vmatprep.subr.mxu0 0.0
    %3053 = vmatpush2.msra.mxu0 0.0
    %3054 = vmatprep.subr.mxu0 0.0
    %3055 = vmatpush2.msra.mxu0 0.0
    %3056 = vmatprep.subr.mxu0 0.0
    %3057 = vmatpush2.msra.mxu0 0.0
    %3058 = vmatprep.subr.mxu0 0.0
    %3059 = vmatpush2.msra.mxu0 0.0
    %3060 = vmatprep.subr.mxu0 0.0
    %3061 = vmatpush2.msra.mxu0 0.0
    %3062 = vmatprep.subr.mxu0 0.0
    %3063 = vmatpush2.msra.mxu0 0.0
    %3064 = vmatprep.subr.mxu0 0.0
    %3065 = vmatpush2.msra.mxu0 0.0
    %3066 = vmatprep.subr.mxu0 0.0
    %3067 = vmatpush2.msra.mxu0 0.0
    %3068 = vmatprep.subr.mxu0 0.0
    %3069 = vmatpush2.msra.mxu0 0.0
    %3070 = vmatprep.subr.mxu0 0.0
    %3071 = vmatpush2.msra.mxu0 0.0
    %3072 = vmatprep.subr.mxu0 0.0
    %3073 = vmatpush2.msra.mxu0 0.0
    %3074 = vmatprep.subr.mxu0 0.0
    %3075 = vmatpush2.msra.mxu0 0.0
    %3076 = vmatprep.subr.mxu0 0.0
    %3077 = vmatpush2.msra.mxu0 0.0
    %3078 = vmatprep.subr.mxu0 0.0
    %3079 = vmatpush2.msra.mxu0 0.0
    %3080 = vmatprep.subr.mxu0 0.0
    %3081 = vmatpush2.msra.mxu0 0.0
    %3082 = vmatprep.mubr.f32.mxu0 0.0
    %3083 = vmatmul.mubr.f32.gmra.mxu0 %v2945
    %v3084 = vpop.f32.mrf.mxu0
    %v3085 = vadd.f32 %v2928, %v3084
    %v3086 = vpop.f32.mrf.mxu0
    %v3087 = vadd.f32 %v2932, %v3086
    %3088 = vdwg.mxu0
    %3089 = vmatprep.subr.mxu0 0.0
    %3090 = vmatpush1.msra.mxu0 0.0
    %3091 = vmatprep.subr.mxu0 0.0
    %3092 = vmatpush1.msra.mxu0 0.0
    %3093 = vmatprep.subr.mxu0 0.0
    %3094 = vmatpush1.msra.mxu0 0.0
    %3095 = vmatprep.subr.mxu0 0.0
    %3096 = vmatpush1.msra.mxu0 0.0
    %3097 = vmatprep.subr.mxu0 0.0
    %3098 = vmatpush1.msra.mxu0 0.0
    %3099 = vmatprep.subr.mxu0 0.0
    %3100 = vmatpush1.msra.mxu0 0.0
    %3101 = vmatprep.subr.mxu0 0.0
    %3102 = vmatpush1.msra.mxu0 0.0
    %3103 = vmatprep.subr.mxu0 0.0
    %3104 = vmatpush1.msra.mxu0 0.0
    %3105 = vmatprep.subr.mxu0 0.0
    %3106 = vmatpush1.msra.mxu0 0.0
    %3107 = vmatprep.subr.mxu0 0.0
    %3108 = vmatpush1.msra.mxu0 0.0
    %3109 = vmatprep.subr.mxu0 0.0
    %3110 = vmatpush1.msra.mxu0 0.0
    %3111 = vmatprep.subr.mxu0 0.0
    %3112 = vmatpush1.msra.mxu0 0.0
    %3113 = vmatprep.subr.mxu0 0.0
    %3114 = vmatpush1.msra.mxu0 %v2914
    %3115 = vmatprep.subr.mxu0 0.0
    %3116 = vmatpush1.msra.mxu0 %v2909
    %3117 = vmatprep.subr.mxu0 0.0
    %3118 = vmatpush1.msra.mxu0 %v2904
    %3119 = vmatprep.subr.mxu0 0.0
    %3120 = vmatpush1.msra.mxu0 %v2899
    %3121 = vmatprep.subr.mxu0 0.0
    %3122 = vmatpush2.msra.mxu0 0.0
    %3123 = vmatprep.subr.mxu0 0.0
    %3124 = vmatpush2.msra.mxu0 0.0
    %3125 = vmatprep.subr.mxu0 0.0
    %3126 = vmatpush2.msra.mxu0 0.0
    %3127 = vmatprep.subr.mxu0 0.0
    %3128 = vmatpush2.msra.mxu0 0.0
    %3129 = vmatprep.subr.mxu0 0.0
    %3130 = vmatpush2.msra.mxu0 0.0
    %3131 = vmatprep.subr.mxu0 0.0
    %3132 = vmatpush2.msra.mxu0 0.0
    %3133 = vmatprep.subr.mxu0 0.0
    %3134 = vmatpush2.msra.mxu0 0.0
    %3135 = vmatprep.subr.mxu0 0.0
    %3136 = vmatpush2.msra.mxu0 0.0
    %3137 = vmatprep.subr.mxu0 0.0
    %3138 = vmatpush2.msra.mxu0 0.0
    %3139 = vmatprep.subr.mxu0 0.0
    %3140 = vmatpush2.msra.mxu0 0.0
    %3141 = vmatprep.subr.mxu0 0.0
    %3142 = vmatpush2.msra.mxu0 0.0
    %3143 = vmatprep.subr.mxu0 0.0
    %3144 = vmatpush2.msra.mxu0 0.0
    %3145 = vmatprep.subr.mxu0 0.0
    %3146 = vmatpush2.msra.mxu0 0.0
    %3147 = vmatprep.subr.mxu0 0.0
    %3148 = vmatpush2.msra.mxu0 0.0
    %3149 = vmatprep.subr.mxu0 0.0
    %3150 = vmatpush2.msra.mxu0 0.0
    %3151 = vmatprep.subr.mxu0 0.0
    %3152 = vmatpush2.msra.mxu0 0.0
    %3153 = vmatprep.mubr.f32.mxu0 0.0
    %3154 = vmatmul.mubr.f32.gmra.mxu0 %v2945
    %v3155 = vpop.f32.mrf.mxu0
    %v3156 = vadd.f32 %v2936, %v3155
    %v3157 = vpop.f32.mrf.mxu0
    %3158 = vdwg.mxu0
    %v3159 = vld [vmem:[#allocation3] sm:$0xff]
    %v3160 = vld [vmem:[#allocation3 + $0x8] sm:$0xff]
    %v3161 = vld [vmem:[#allocation3 + $0x10] sm:$0xff]
    %v3162 = vld [vmem:[#allocation3 + $0x18] sm:$0xff]
    %v3163 = vadd.f32 %v3159, %v3014
    %v3164 = vadd.f32 %v3160, %v3016
    %v3165 = vadd.f32 %v3161, %v3085
    %v3166 = vadd.f32 %v3162, %v3087
    %v3167 = vtanh.pop %v3163
    %v3168 = vtanh.pop %v3164
    %v3169 = vtanh.pop %v3165
    %v3170 = vtanh.pop %v3166
    %v3171 = vld [vmem:[#allocation7] sm:$0xff]
    %v3172 = vld [vmem:[#allocation7 + $0x8] sm:$0xff]
    %v3173 = vld [vmem:[#allocation7 + $0x10] sm:$0xff]
    %v3174 = vld [vmem:[#allocation7 + $0x18] sm:$0xff]
    %v3175 = vld [vmem:[#allocation7 + $0x20] sm:$0xff]
    %v3176 = vld [vmem:[#allocation7 + $0x28] sm:$0xff]
    %v3177 = vld [vmem:[#allocation7 + $0x30] sm:$0xff]
    %v3178 = vld [vmem:[#allocation7 + $0x38] sm:$0xff]
    %v3179 = vld [vmem:[#allocation7 + $0x40] sm:$0xff]
    %v3180 = vld [vmem:[#allocation7 + $0x48] sm:$0xff]
    %v3181 = vld [vmem:[#allocation7 + $0x50] sm:$0xff]
    %v3182 = vld [vmem:[#allocation7 + $0x58] sm:$0xff]
    %v3183 = vld [vmem:[#allocation7 + $0x60] sm:$0xff]
    %v3184 = vld [vmem:[#allocation7 + $0x68] sm:$0xff]
    %v3185 = vld [vmem:[#allocation7 + $0x70] sm:$0xff]
    %v3186 = vld [vmem:[#allocation7 + $0x78] sm:$0xff]
    %v3187 = vld [vmem:[#allocation7 + $0x80] sm:$0xff]
    %v3188 = vld [vmem:[#allocation7 + $0x88] sm:$0xff]
    %v3189 = vld [vmem:[#allocation7 + $0x90] sm:$0xff]
    %v3190 = vld [vmem:[#allocation7 + $0x98] sm:$0xff]
    %v3191 = vld [vmem:[#allocation7 + $0xa0] sm:$0xff]
    %v3192 = vld [vmem:[#allocation7 + $0xa8] sm:$0xff]
    %v3193 = vld [vmem:[#allocation7 + $0xb0] sm:$0xff]
    %v3194 = vld [vmem:[#allocation7 + $0xb8] sm:$0xff]
    %v3195 = vld [vmem:[#allocation7 + $0xc0] sm:$0xff]
    %v3196 = vld [vmem:[#allocation7 + $0xc8] sm:$0xff]
    %v3197 = vld [vmem:[#allocation7 + $0xd0] sm:$0xff]
    %v3198 = vld [vmem:[#allocation7 + $0xd8] sm:$0xff]
    %v3199 = vld [vmem:[#allocation7 + $0xe0] sm:$0xff]
    %v3200 = vld [vmem:[#allocation7 + $0xe8] sm:$0xff]
    %v3201 = vld [vmem:[#allocation7 + $0xf0] sm:$0xff]
    %v3202 = vld [vmem:[#allocation7 + $0xf8] sm:$0xff]
    %v3203 = vld [vmem:[#allocation7 + $0x100] sm:$0xff]
    %v3204 = vld [vmem:[#allocation7 + $0x108] sm:$0xff]
    %v3205 = vld [vmem:[#allocation7 + $0x110] sm:$0xff]
    %v3206 = vld [vmem:[#allocation7 + $0x118] sm:$0xff]
    %v3207 = vld [vmem:[#allocation7 + $0x120] sm:$0xff]
    %v3208 = vld [vmem:[#allocation7 + $0x128] sm:$0xff]
    %v3209 = vld [vmem:[#allocation7 + $0x130] sm:$0xff]
    %v3210 = vld [vmem:[#allocation7 + $0x138] sm:$0xff]
    %v3211 = vld [vmem:[#allocation7 + $0x140] sm:$0xff]
    %v3212 = vld [vmem:[#allocation7 + $0x148] sm:$0xff]
    %v3213 = vld [vmem:[#allocation7 + $0x150] sm:$0xff]
    %v3214 = vld [vmem:[#allocation7 + $0x158] sm:$0xff]
    %v3215 = vld [vmem:[#allocation7 + $0x160] sm:$0xff]
    %v3216 = vld [vmem:[#allocation7 + $0x168] sm:$0xff]
    %v3217 = vld [vmem:[#allocation7 + $0x170] sm:$0xff]
    %v3218 = vld [vmem:[#allocation7 + $0x178] sm:$0xff]
    %v3219 = vld [vmem:[#allocation7 + $0x180] sm:$0xff]
    %v3220 = vld [vmem:[#allocation7 + $0x188] sm:$0xff]
    %v3221 = vld [vmem:[#allocation7 + $0x190] sm:$0xff]
    %v3222 = vld [vmem:[#allocation7 + $0x198] sm:$0xff]
    %v3223 = vld [vmem:[#allocation7 + $0x1a0] sm:$0xff]
    %v3224 = vld [vmem:[#allocation7 + $0x1a8] sm:$0xff]
    %v3225 = vld [vmem:[#allocation7 + $0x1b0] sm:$0xff]
    %v3226 = vld [vmem:[#allocation7 + $0x1b8] sm:$0xff]
    %v3227 = vld [vmem:[#allocation7 + $0x1c0] sm:$0xff]
    %v3228 = vld [vmem:[#allocation7 + $0x1c8] sm:$0xff]
    %v3229 = vld [vmem:[#allocation7 + $0x1d0] sm:$0xff]
    %v3230 = vld [vmem:[#allocation7 + $0x1d8] sm:$0xff]
    %v3231 = vld [vmem:[#allocation7 + $0x1e0] sm:$0xff]
    %v3232 = vld [vmem:[#allocation7 + $0x1e8] sm:$0xff]
    %v3233 = vld [vmem:[#allocation7 + $0x1f0] sm:$0xff]
    %v3234 = vld [vmem:[#allocation7 + $0x1f8] sm:$0xff]
    %v3235 = vld [vmem:[%s14] sm:$0x1]
    %v3237 = vlaneseq
    %v3238 = vshrl.u32 %v3237, 7
    %v3239 = vsub.s32 0, %v3238
    %v3240 = vrot.slane %v3235, %v3239
    %3242 = vmatprep.subr.mxu0 0.0
    %3243 = vmatpush1.msra.mxu0 %v3186
    %3244 = vmatprep.subr.mxu0 0.0
    %3245 = vmatpush1.msra.mxu0 %v3185
    %3246 = vmatprep.subr.mxu0 0.0
    %3247 = vmatpush1.msra.mxu0 %v3184
    %3248 = vmatprep.subr.mxu0 0.0
    %3249 = vmatpush1.msra.mxu0 %v3183
    %3250 = vmatprep.subr.mxu0 0.0
    %3251 = vmatpush1.msra.mxu0 %v3182
    %3252 = vmatprep.subr.mxu0 0.0
    %3253 = vmatpush1.msra.mxu0 %v3181
    %3254 = vmatprep.subr.mxu0 0.0
    %3255 = vmatpush1.msra.mxu0 %v3180
    %3256 = vmatprep.subr.mxu0 0.0
    %3257 = vmatpush1.msra.mxu0 %v3179
    %3258 = vmatprep.subr.mxu0 0.0
    %3259 = vmatpush1.msra.mxu0 %v3178
    %3260 = vmatprep.subr.mxu0 0.0
    %3261 = vmatpush1.msra.mxu0 %v3177
    %3262 = vmatprep.subr.mxu0 0.0
    %3263 = vmatpush1.msra.mxu0 %v3176
    %3264 = vmatprep.subr.mxu0 0.0
    %3265 = vmatpush1.msra.mxu0 %v3175
    %3266 = vmatprep.subr.mxu0 0.0
    %3267 = vmatpush1.msra.mxu0 %v3174
    %3268 = vmatprep.subr.mxu0 0.0
    %3269 = vmatpush1.msra.mxu0 %v3173
    %3270 = vmatprep.subr.mxu0 0.0
    %3271 = vmatpush1.msra.mxu0 %v3172
    %3272 = vmatprep.subr.mxu0 0.0
    %3273 = vmatpush1.msra.mxu0 %v3171
    %3274 = vmatprep.subr.mxu0 0.0
    %3275 = vmatpush2.msra.mxu0 %v3202
    %3276 = vmatprep.subr.mxu0 0.0
    %3277 = vmatpush2.msra.mxu0 %v3201
    %3278 = vmatprep.subr.mxu0 0.0
    %3279 = vmatpush2.msra.mxu0 %v3200
    %3280 = vmatprep.subr.mxu0 0.0
    %3281 = vmatpush2.msra.mxu0 %v3199
    %3282 = vmatprep.subr.mxu0 0.0
    %3283 = vmatpush2.msra.mxu0 %v3198
    %3284 = vmatprep.subr.mxu0 0.0
    %3285 = vmatpush2.msra.mxu0 %v3197
    %3286 = vmatprep.subr.mxu0 0.0
    %3287 = vmatpush2.msra.mxu0 %v3196
    %3288 = vmatprep.subr.mxu0 0.0
    %3289 = vmatpush2.msra.mxu0 %v3195
    %3290 = vmatprep.subr.mxu0 0.0
    %3291 = vmatpush2.msra.mxu0 %v3194
    %3292 = vmatprep.subr.mxu0 0.0
    %3293 = vmatpush2.msra.mxu0 %v3193
    %3294 = vmatprep.subr.mxu0 0.0
    %3295 = vmatpush2.msra.mxu0 %v3192
    %3296 = vmatprep.subr.mxu0 0.0
    %3297 = vmatpush2.msra.mxu0 %v3191
    %3298 = vmatprep.subr.mxu0 0.0
    %3299 = vmatpush2.msra.mxu0 %v3190
    %3300 = vmatprep.subr.mxu0 0.0
    %3301 = vmatpush2.msra.mxu0 %v3189
    %3302 = vmatprep.subr.mxu0 0.0
    %3303 = vmatpush2.msra.mxu0 %v3188
    %3304 = vmatprep.subr.mxu0 0.0
    %3305 = vmatpush2.msra.mxu0 %v3187
    %3306 = vmatprep.mubr.f32.mxu0 %v3168
    %3307 = vmatmul.mubr.f32.gmra.mxu0 %v3167
    %v3308 = vpop.f32.mrf.mxu0
    %v3309 = vadd.f32 %v3240, %v3308
    %v3310 = vpop.f32.mrf.mxu0
    %3311 = vdwg.mxu0
    %3312 = vmatprep.subr.mxu0 0.0
    %3313 = vmatpush1.msra.mxu0 %v3218
    %3314 = vmatprep.subr.mxu0 0.0
    %3315 = vmatpush1.msra.mxu0 %v3217
    %3316 = vmatprep.subr.mxu0 0.0
    %3317 = vmatpush1.msra.mxu0 %v3216
    %3318 = vmatprep.subr.mxu0 0.0
    %3319 = vmatpush1.msra.mxu0 %v3215
    %3320 = vmatprep.subr.mxu0 0.0
    %3321 = vmatpush1.msra.mxu0 %v3214
    %3322 = vmatprep.subr.mxu0 0.0
    %3323 = vmatpush1.msra.mxu0 %v3213
    %3324 = vmatprep.subr.mxu0 0.0
    %3325 = vmatpush1.msra.mxu0 %v3212
    %3326 = vmatprep.subr.mxu0 0.0
    %3327 = vmatpush1.msra.mxu0 %v3211
    %3328 = vmatprep.subr.mxu0 0.0
    %3329 = vmatpush1.msra.mxu0 %v3210
    %3330 = vmatprep.subr.mxu0 0.0
    %3331 = vmatpush1.msra.mxu0 %v3209
    %3332 = vmatprep.subr.mxu0 0.0
    %3333 = vmatpush1.msra.mxu0 %v3208
    %3334 = vmatprep.subr.mxu0 0.0
    %3335 = vmatpush1.msra.mxu0 %v3207
    %3336 = vmatprep.subr.mxu0 0.0
    %3337 = vmatpush1.msra.mxu0 %v3206
    %3338 = vmatprep.subr.mxu0 0.0
    %3339 = vmatpush1.msra.mxu0 %v3205
    %3340 = vmatprep.subr.mxu0 0.0
    %3341 = vmatpush1.msra.mxu0 %v3204
    %3342 = vmatprep.subr.mxu0 0.0
    %3343 = vmatpush1.msra.mxu0 %v3203
    %3344 = vmatprep.subr.mxu0 0.0
    %3345 = vmatpush2.msra.mxu0 %v3234
    %3346 = vmatprep.subr.mxu0 0.0
    %3347 = vmatpush2.msra.mxu0 %v3233
    %3348 = vmatprep.subr.mxu0 0.0
    %3349 = vmatpush2.msra.mxu0 %v3232
    %3350 = vmatprep.subr.mxu0 0.0
    %3351 = vmatpush2.msra.mxu0 %v3231
    %3352 = vmatprep.subr.mxu0 0.0
    %3353 = vmatpush2.msra.mxu0 %v3230
    %3354 = vmatprep.subr.mxu0 0.0
    %3355 = vmatpush2.msra.mxu0 %v3229
    %3356 = vmatprep.subr.mxu0 0.0
    %3357 = vmatpush2.msra.mxu0 %v3228
    %3358 = vmatprep.subr.mxu0 0.0
    %3359 = vmatpush2.msra.mxu0 %v3227
    %3360 = vmatprep.subr.mxu0 0.0
    %3361 = vmatpush2.msra.mxu0 %v3226
    %3362 = vmatprep.subr.mxu0 0.0
    %3363 = vmatpush2.msra.mxu0 %v3225
    %3364 = vmatprep.subr.mxu0 0.0
    %3365 = vmatpush2.msra.mxu0 %v3224
    %3366 = vmatprep.subr.mxu0 0.0
    %3367 = vmatpush2.msra.mxu0 %v3223
    %3368 = vmatprep.subr.mxu0 0.0
    %3369 = vmatpush2.msra.mxu0 %v3222
    %3370 = vmatprep.subr.mxu0 0.0
    %3371 = vmatpush2.msra.mxu0 %v3221
    %3372 = vmatprep.subr.mxu0 0.0
    %3373 = vmatpush2.msra.mxu0 %v3220
    %3374 = vmatprep.subr.mxu0 0.0
    %3375 = vmatpush2.msra.mxu0 %v3219
    %3376 = vmatprep.mubr.f32.mxu0 %v3170
    %3377 = vmatmul.mubr.f32.gmra.mxu0 %v3169
    %v3378 = vpop.f32.mrf.mxu0
    %v3379 = vadd.f32 %v3309, %v3378
    %v3380 = vpop.f32.mrf.mxu0
    %3381 = vdwg.mxu0
    %3382 = vmax.xlane.f32.xlu0 %v3379
    %v3383 = vpop.xlane.xlu0 %3382
    %v3384 = vsub.f32 %v3379, %v3383
    %v3385 = vmul.f32 %v3384, 1.442695
    %v3386 = vpow.pop %v3385
    %3387 = vadd.xlane.f32.xlu0 %v3386
    %v3388 = vpop.xlane.xlu0 %3387
    %v3389 = vrcp.pop %v3388
    %v3390 = vmul.f32 %v3386, %v3389
    %v3391 = vlaneseq
    %v3392 = vshrl.u32 %v3391, 7
    %v3393 = vsub.s32 0, %v3392
    %v3394 = vrot.slane %v3390, %v3393
    %3396 = vbcast.lane.b32.xlu0 %v3394, 256
    %v3397 = vpop.permute.xlu0 %3396
    %s3399 = sor.u32 256, 8
    %3400 = vbcast.lane.b32.xlu0 %v3394, %s3399
    %v3401 = vpop.permute.xlu0 %3400
    %v3402 = vlaneseq
    %v3403 = vshrl.u32 %v3402, 7
    %v3404 = vsub.s32 1, %v3403
    %v3405 = vrot.slane %v3390, %v3404
    %3407 = vbcast.lane.b32.xlu0 %v3405, 256
    %v3408 = vpop.permute.xlu0 %3407
    %s3410 = sor.u32 256, 8
    %3411 = vbcast.lane.b32.xlu0 %v3405, %s3410
    %v3412 = vpop.permute.xlu0 %3411
    %v3413 = vlaneseq
    %v3414 = vshrl.u32 %v3413, 7
    %v3415 = vsub.s32 2, %v3414
    %v3416 = vrot.slane %v3390, %v3415
    %3418 = vbcast.lane.b32.xlu0 %v3416, 256
    %v3419 = vpop.permute.xlu0 %3418
    %s3421 = sor.u32 256, 8
    %3422 = vbcast.lane.b32.xlu0 %v3416, %s3421
    %v3423 = vpop.permute.xlu0 %3422
    %v3424 = vlaneseq
    %v3425 = vshrl.u32 %v3424, 7
    %v3426 = vsub.s32 3, %v3425
    %v3427 = vrot.slane %v3390, %v3426
    %3429 = vbcast.lane.b32.xlu0 %v3427, 256
    %v3430 = vpop.permute.xlu0 %3429
    %s3432 = sor.u32 256, 8
    %3433 = vbcast.lane.b32.xlu0 %v3427, %s3432
    %v3434 = vpop.permute.xlu0 %3433
    %v3435 = vlaneseq
    %v3436 = vshrl.u32 %v3435, 7
    %v3437 = vsub.s32 4, %v3436
    %v3438 = vrot.slane %v3390, %v3437
    %3440 = vbcast.lane.b32.xlu0 %v3438, 256
    %v3441 = vpop.permute.xlu0 %3440
    %s3443 = sor.u32 256, 8
    %3444 = vbcast.lane.b32.xlu0 %v3438, %s3443
    %v3445 = vpop.permute.xlu0 %3444
    %v3446 = vlaneseq
    %v3447 = vshrl.u32 %v3446, 7
    %v3448 = vsub.s32 5, %v3447
    %v3449 = vrot.slane %v3390, %v3448
    %3451 = vbcast.lane.b32.xlu0 %v3449, 256
    %v3452 = vpop.permute.xlu0 %3451
    %s3454 = sor.u32 256, 8
    %3455 = vbcast.lane.b32.xlu0 %v3449, %s3454
    %v3456 = vpop.permute.xlu0 %3455
    %v3457 = vlaneseq
    %v3458 = vshrl.u32 %v3457, 7
    %v3459 = vsub.s32 6, %v3458
    %v3460 = vrot.slane %v3390, %v3459
    %3462 = vbcast.lane.b32.xlu0 %v3460, 256
    %v3463 = vpop.permute.xlu0 %3462
    %s3465 = sor.u32 256, 8
    %3466 = vbcast.lane.b32.xlu0 %v3460, %s3465
    %v3467 = vpop.permute.xlu0 %3466
    %v3468 = vlaneseq
    %v3469 = vshrl.u32 %v3468, 7
    %v3470 = vsub.s32 7, %v3469
    %v3471 = vrot.slane %v3390, %v3470
    %3473 = vbcast.lane.b32.xlu0 %v3471, 256
    %v3474 = vpop.permute.xlu0 %3473
    %s3476 = sor.u32 256, 8
    %3477 = vbcast.lane.b32.xlu0 %v3471, %s3476
    %v3478 = vpop.permute.xlu0 %3477
    %v3479 = vld [vmem:[%s4] sm:$0xff]
    %v3480 = vld [vmem:[%s4 + $0x8] sm:$0xff]
    %v3481 = vld [vmem:[%s4 + $0x10] sm:$0xff]
    %v3482 = vld [vmem:[%s4 + $0x18] sm:$0xff]
    %v3483 = vld [vmem:[%s4 + $0x20] sm:$0xff]
    %v3484 = vld [vmem:[%s4 + $0x28] sm:$0xff]
    %v3485 = vld [vmem:[%s4 + $0x30] sm:$0xff]
    %v3486 = vld [vmem:[%s4 + $0x38] sm:$0xff]
    %v3487 = vld [vmem:[%s4 + $0x40] sm:$0xff]
    %v3488 = vld [vmem:[%s4 + $0x48] sm:$0xff]
    %v3489 = vld [vmem:[%s4 + $0x50] sm:$0xff]
    %v3490 = vld [vmem:[%s4 + $0x58] sm:$0xff]
    %v3491 = vld [vmem:[%s4 + $0x60] sm:$0xff]
    %v3492 = vld [vmem:[%s4 + $0x68] sm:$0xff]
    %v3493 = vld [vmem:[%s4 + $0x70] sm:$0xff]
    %v3494 = vld [vmem:[%s4 + $0x78] sm:$0xff]
    %v3495 = vmul.f32 %v3397, %v3479
    %v3496 = vmul.f32 %v3401, %v3480
    %v3497 = vmul.f32 %v3408, %v3481
    %v3498 = vmul.f32 %v3412, %v3482
    %v3499 = vmul.f32 %v3419, %v3483
    %v3500 = vmul.f32 %v3423, %v3484
    %v3501 = vmul.f32 %v3430, %v3485
    %v3502 = vmul.f32 %v3434, %v3486
    %v3503 = vmul.f32 %v3441, %v3487
    %v3504 = vmul.f32 %v3445, %v3488
    %v3505 = vmul.f32 %v3452, %v3489
    %v3506 = vmul.f32 %v3456, %v3490
    %v3507 = vmul.f32 %v3463, %v3491
    %v3508 = vmul.f32 %v3467, %v3492
    %v3509 = vmul.f32 %v3474, %v3493
    %v3510 = vmul.f32 %v3478, %v3494
    %v3511 = vsel %vm102, %v3495, 0.0
    %v3512 = vsel %vm102, %v3496, 0.0
    %v3513 = vadd.f32 %v3511, %v3512
    %v3514 = vrot.slane %v3513, 4
    %v3515 = vadd.f32 %v3513, %v3514
    %v3516 = vrot.slane %v3515, 2
    %v3517 = vadd.f32 %v3515, %v3516
    %v3518 = vrot.slane %v3517, 1
    %v3519 = vadd.f32 %v3517, %v3518
    %v3520 = vsel %vm102, %v3497, 0.0
    %v3521 = vsel %vm102, %v3498, 0.0
    %v3522 = vadd.f32 %v3520, %v3521
    %v3523 = vrot.slane %v3522, 4
    %v3524 = vadd.f32 %v3522, %v3523
    %v3525 = vrot.slane %v3524, 2
    %v3526 = vadd.f32 %v3524, %v3525
    %v3527 = vrot.slane %v3526, 1
    %v3528 = vadd.f32 %v3526, %v3527
    %v3529 = vsel %vm102, %v3499, 0.0
    %v3530 = vsel %vm102, %v3500, 0.0
    %v3531 = vadd.f32 %v3529, %v3530
    %v3532 = vrot.slane %v3531, 4
    %v3533 = vadd.f32 %v3531, %v3532
    %v3534 = vrot.slane %v3533, 2
    %v3535 = vadd.f32 %v3533, %v3534
    %v3536 = vrot.slane %v3535, 1
    %v3537 = vadd.f32 %v3535, %v3536
    %v3538 = vsel %vm102, %v3501, 0.0
    %v3539 = vsel %vm102, %v3502, 0.0
    %v3540 = vadd.f32 %v3538, %v3539
    %v3541 = vrot.slane %v3540, 4
    %v3542 = vadd.f32 %v3540, %v3541
    %v3543 = vrot.slane %v3542, 2
    %v3544 = vadd.f32 %v3542, %v3543
    %v3545 = vrot.slane %v3544, 1
    %v3546 = vadd.f32 %v3544, %v3545
    %v3547 = vsel %vm102, %v3503, 0.0
    %v3548 = vsel %vm102, %v3504, 0.0
    %v3549 = vadd.f32 %v3547, %v3548
    %v3550 = vrot.slane %v3549, 4
    %v3551 = vadd.f32 %v3549, %v3550
    %v3552 = vrot.slane %v3551, 2
    %v3553 = vadd.f32 %v3551, %v3552
    %v3554 = vrot.slane %v3553, 1
    %v3555 = vadd.f32 %v3553, %v3554
    %v3556 = vsel %vm102, %v3505, 0.0
    %v3557 = vsel %vm102, %v3506, 0.0
    %v3558 = vadd.f32 %v3556, %v3557
    %v3559 = vrot.slane %v3558, 4
    %v3560 = vadd.f32 %v3558, %v3559
    %v3561 = vrot.slane %v3560, 2
    %v3562 = vadd.f32 %v3560, %v3561
    %v3563 = vrot.slane %v3562, 1
    %v3564 = vadd.f32 %v3562, %v3563
    %v3565 = vsel %vm102, %v3507, 0.0
    %v3566 = vsel %vm102, %v3508, 0.0
    %v3567 = vadd.f32 %v3565, %v3566
    %v3568 = vrot.slane %v3567, 4
    %v3569 = vadd.f32 %v3567, %v3568
    %v3570 = vrot.slane %v3569, 2
    %v3571 = vadd.f32 %v3569, %v3570
    %v3572 = vrot.slane %v3571, 1
    %v3573 = vadd.f32 %v3571, %v3572
    %v3574 = vsel %vm102, %v3509, 0.0
    %v3575 = vsel %vm102, %v3510, 0.0
    %v3576 = vadd.f32 %v3574, %v3575
    %v3577 = vrot.slane %v3576, 4
    %v3578 = vadd.f32 %v3576, %v3577
    %v3579 = vrot.slane %v3578, 2
    %v3580 = vadd.f32 %v3578, %v3579
    %v3581 = vrot.slane %v3580, 1
    %v3582 = vadd.f32 %v3580, %v3581
    %v3583 = vadd.f32 %v2894, %v3156
    %v3584 = vld [vmem:[%s15] sm:$0xff]
    %v3585 = vld [vmem:[%s15 + $0x8] sm:$0xff]
    %v3586 = vld [vmem:[%s15 + $0x10] sm:$0xff]
    %v3587 = vld [vmem:[%s15 + $0x18] sm:$0xff]
    %v3596 = vsel %vm1740, %v3528, %v3519
    %v3597 = vsel %vm1742, %v3537, %v3596
    %v3598 = vsel %vm1744, %v3546, %v3597
    %v3599 = vsel %vm1746, %v3555, %v3598
    %v3600 = vsel %vm1748, %v3564, %v3599
    %v3601 = vsel %vm1750, %v3573, %v3600
    %v3602 = vsel %vm1752, %v3582, %v3601
    %v3603 = vsel %vm102, %v3602, 0
    %3605 = vmatprep.subr.mxu0 0.0
    %3606 = vmatpush1.msra.mxu0 0.0
    %3607 = vmatprep.subr.mxu0 0.0
    %3608 = vmatpush1.msra.mxu0 0.0
    %3609 = vmatprep.subr.mxu0 0.0
    %3610 = vmatpush1.msra.mxu0 0.0
    %3611 = vmatprep.subr.mxu0 0.0
    %3612 = vmatpush1.msra.mxu0 0.0
    %3613 = vmatprep.subr.mxu0 0.0
    %3614 = vmatpush1.msra.mxu0 0.0
    %3615 = vmatprep.subr.mxu0 0.0
    %3616 = vmatpush1.msra.mxu0 0.0
    %3617 = vmatprep.subr.mxu0 0.0
    %3618 = vmatpush1.msra.mxu0 0.0
    %3619 = vmatprep.subr.mxu0 0.0
    %3620 = vmatpush1.msra.mxu0 0.0
    %3621 = vmatprep.subr.mxu0 0.0
    %3622 = vmatpush1.msra.mxu0 0.0
    %3623 = vmatprep.subr.mxu0 0.0
    %3624 = vmatpush1.msra.mxu0 0.0
    %3625 = vmatprep.subr.mxu0 0.0
    %3626 = vmatpush1.msra.mxu0 0.0
    %3627 = vmatprep.subr.mxu0 0.0
    %3628 = vmatpush1.msra.mxu0 0.0
    %3629 = vmatprep.subr.mxu0 0.0
    %3630 = vmatpush1.msra.mxu0 %v3587
    %3631 = vmatprep.subr.mxu0 0.0
    %3632 = vmatpush1.msra.mxu0 %v3586
    %3633 = vmatprep.subr.mxu0 0.0
    %3634 = vmatpush1.msra.mxu0 %v3585
    %3635 = vmatprep.subr.mxu0 0.0
    %3636 = vmatpush1.msra.mxu0 %v3584
    %3637 = vmatprep.subr.mxu0 0.0
    %3638 = vmatpush2.msra.mxu0 0.0
    %3639 = vmatprep.subr.mxu0 0.0
    %3640 = vmatpush2.msra.mxu0 0.0
    %3641 = vmatprep.subr.mxu0 0.0
    %3642 = vmatpush2.msra.mxu0 0.0
    %3643 = vmatprep.subr.mxu0 0.0
    %3644 = vmatpush2.msra.mxu0 0.0
    %3645 = vmatprep.subr.mxu0 0.0
    %3646 = vmatpush2.msra.mxu0 0.0
    %3647 = vmatprep.subr.mxu0 0.0
    %3648 = vmatpush2.msra.mxu0 0.0
    %3649 = vmatprep.subr.mxu0 0.0
    %3650 = vmatpush2.msra.mxu0 0.0
    %3651 = vmatprep.subr.mxu0 0.0
    %3652 = vmatpush2.msra.mxu0 0.0
    %3653 = vmatprep.subr.mxu0 0.0
    %3654 = vmatpush2.msra.mxu0 0.0
    %3655 = vmatprep.subr.mxu0 0.0
    %3656 = vmatpush2.msra.mxu0 0.0
    %3657 = vmatprep.subr.mxu0 0.0
    %3658 = vmatpush2.msra.mxu0 0.0
    %3659 = vmatprep.subr.mxu0 0.0
    %3660 = vmatpush2.msra.mxu0 0.0
    %3661 = vmatprep.subr.mxu0 0.0
    %3662 = vmatpush2.msra.mxu0 0.0
    %3663 = vmatprep.subr.mxu0 0.0
    %3664 = vmatpush2.msra.mxu0 0.0
    %3665 = vmatprep.subr.mxu0 0.0
    %3666 = vmatpush2.msra.mxu0 0.0
    %3667 = vmatprep.subr.mxu0 0.0
    %3668 = vmatpush2.msra.mxu0 0.0
    %3669 = vmatprep.mubr.f32.mxu0 0.0
    %3670 = vmatmul.mubr.f32.gmra.mxu0 %v3603
    %v3671 = vpop.f32.mrf.mxu0
    %v3672 = vadd.f32 0.0, %v3671
    %v3673 = vpop.f32.mrf.mxu0
    %3674 = vdwg.mxu0
    %v3675 = vadd.f32 %v3583, %v3672
    %v3676 = vxor.u32 %v3675, 2147483648
    %v3677 = vmul.f32 %v3676, 1.442695
    %v3678 = vpow.pop %v3677
    %v3679 = vadd.f32 %v3678, 1.0
    %v3680 = vrcp.pop %v3679
    %v3681 = vmul.f32 1.0, %v3680
    %v3682 = vtanh.pop %v3675
    %v3683 = vmul.f32 %v3681, %v2892
    %3685 = vrot.lane.b32.xlu0 %v3682, 32
    %v3686 = vpop.permute.xlu0 %3685
    %v3688 = vmul.f32 %v3681, %v3686
    %3690 = vrot.lane.b32.xlu0 %v3688, 32
    %v3691 = vpop.permute.xlu0 %3690
    %v3693 = vadd.f32 %v3683, %v3691
    %v3694 = vtanh.pop %v3693
    %3696 = vrot.lane.b32.xlu0 %v3694, 32
    %v3697 = vpop.permute.xlu0 %3696
    %v3699 = vmul.f32 %v3681, %v3697
    %v3700 = vld [vmem:[%s16] sm:$0xff]
    %v3701 = vld [vmem:[%s16 + $0x8] sm:$0xff]
    %v3702 = vld [vmem:[%s16 + $0x10] sm:$0xff]
    %v3703 = vld [vmem:[%s16 + $0x18] sm:$0xff]
    %v3704 = vld [vmem:[%s17] sm:$0x1]
    %v3706 = vlaneseq
    %v3707 = vshrl.u32 %v3706, 7
    %v3708 = vsub.s32 0, %v3707
    %v3709 = vrot.slane %v3704, %v3708
    %3712 = vrot.lane.b32.xlu0 %v3699, 64
    %v3713 = vpop.permute.xlu0 %3712
    %v3714 = vsel %vm102, %v3713, 0
    %3716 = vmatprep.subr.mxu0 0.0
    %3717 = vmatpush1.msra.mxu0 0.0
    %3718 = vmatprep.subr.mxu0 0.0
    %3719 = vmatpush1.msra.mxu0 0.0
    %3720 = vmatprep.subr.mxu0 0.0
    %3721 = vmatpush1.msra.mxu0 0.0
    %3722 = vmatprep.subr.mxu0 0.0
    %3723 = vmatpush1.msra.mxu0 0.0
    %3724 = vmatprep.subr.mxu0 0.0
    %3725 = vmatpush1.msra.mxu0 0.0
    %3726 = vmatprep.subr.mxu0 0.0
    %3727 = vmatpush1.msra.mxu0 0.0
    %3728 = vmatprep.subr.mxu0 0.0
    %3729 = vmatpush1.msra.mxu0 0.0
    %3730 = vmatprep.subr.mxu0 0.0
    %3731 = vmatpush1.msra.mxu0 0.0
    %3732 = vmatprep.subr.mxu0 0.0
    %3733 = vmatpush1.msra.mxu0 0.0
    %3734 = vmatprep.subr.mxu0 0.0
    %3735 = vmatpush1.msra.mxu0 0.0
    %3736 = vmatprep.subr.mxu0 0.0
    %3737 = vmatpush1.msra.mxu0 0.0
    %3738 = vmatprep.subr.mxu0 0.0
    %3739 = vmatpush1.msra.mxu0 0.0
    %3740 = vmatprep.subr.mxu0 0.0
    %3741 = vmatpush1.msra.mxu0 %v3703
    %3742 = vmatprep.subr.mxu0 0.0
    %3743 = vmatpush1.msra.mxu0 %v3702
    %3744 = vmatprep.subr.mxu0 0.0
    %3745 = vmatpush1.msra.mxu0 %v3701
    %3746 = vmatprep.subr.mxu0 0.0
    %3747 = vmatpush1.msra.mxu0 %v3700
    %3748 = vmatprep.subr.mxu0 0.0
    %3749 = vmatpush2.msra.mxu0 0.0
    %3750 = vmatprep.subr.mxu0 0.0
    %3751 = vmatpush2.msra.mxu0 0.0
    %3752 = vmatprep.subr.mxu0 0.0
    %3753 = vmatpush2.msra.mxu0 0.0
    %3754 = vmatprep.subr.mxu0 0.0
    %3755 = vmatpush2.msra.mxu0 0.0
    %3756 = vmatprep.subr.mxu0 0.0
    %3757 = vmatpush2.msra.mxu0 0.0
    %3758 = vmatprep.subr.mxu0 0.0
    %3759 = vmatpush2.msra.mxu0 0.0
    %3760 = vmatprep.subr.mxu0 0.0
    %3761 = vmatpush2.msra.mxu0 0.0
    %3762 = vmatprep.subr.mxu0 0.0
    %3763 = vmatpush2.msra.mxu0 0.0
    %3764 = vmatprep.subr.mxu0 0.0
    %3765 = vmatpush2.msra.mxu0 0.0
    %3766 = vmatprep.subr.mxu0 0.0
    %3767 = vmatpush2.msra.mxu0 0.0
    %3768 = vmatprep.subr.mxu0 0.0
    %3769 = vmatpush2.msra.mxu0 0.0
    %3770 = vmatprep.subr.mxu0 0.0
    %3771 = vmatpush2.msra.mxu0 0.0
    %3772 = vmatprep.subr.mxu0 0.0
    %3773 = vmatpush2.msra.mxu0 0.0
    %3774 = vmatprep.subr.mxu0 0.0
    %3775 = vmatpush2.msra.mxu0 0.0
    %3776 = vmatprep.subr.mxu0 0.0
    %3777 = vmatpush2.msra.mxu0 0.0
    %3778 = vmatprep.subr.mxu0 0.0
    %3779 = vmatpush2.msra.mxu0 0.0
    %3780 = vmatprep.mubr.f32.mxu0 0.0
    %3781 = vmatmul.mubr.f32.gmra.mxu0 %v3714
    %v3782 = vpop.f32.mrf.mxu0
    %v3783 = vadd.f32 %v3709, %v3782
    %v3784 = vpop.f32.mrf.mxu0
    %3785 = vdwg.mxu0
    %3786 = vmax.xlane.f32.xlu0 %v3783
    %v3787 = vpop.xlane.xlu0 %3786
    %v3788 = vsub.f32 %v3783, %v3787
    %v3789 = vmul.f32 %v3788, 1.442695
    %v3790 = vpow.pop %v3789
    %3791 = vadd.xlane.f32.xlu0 %v3790
    %v3792 = vpop.xlane.xlu0 %3791
    %v3793 = vlog2.pop %v3792
    %v3794 = vmul.f32 %v3793, 0.6931472
    %v3795 = vsub.f32 %v3788, %v3794
    %p3796 = scmp.gt.s32.totalorder %s1039, 2
    %s3797 = scalar_select %p3796, 1, 0
    %s3798 = scvt.s32.f32 %s3797
    %v3799 = vstv %s3798
    %v3800 = vmul.f32 %v3799, %v3390
    %s3801 = scalar_lea.vmem %s18, 16
    %3802 = vst [vmem:[%s3801] sm:$0xff] %v3800
    %v3803 = vmul.f32 %v3799, %v3795
    %s3804 = scalar_lea.vmem %s19, 16
    %3805 = vst [vmem:[%s3804] sm:$0xff] %v3803
    %v3806 = vmul.f32 %v3799, %v3699
    %s3807 = ssub.f32 1.0, %s3798
    %v3808 = vstv %s3807
    %v3809 = vmul.f32 %v3808, %v2889
    %v3810 = vadd.f32 %v3806, %v3809
    %v3811 = vmul.f32 %v3799, %v3693
    %v3812 = vmul.f32 %v3808, %v2892
    %v3813 = vadd.f32 %v3811, %v3812
    %s3814 = scalar_lea.vmem [#allocation2], 24
    %v3815 = vld [vmem:[%s3814] sm:$0xff]
    %v3816 = vld [vmem:[%s11] sm:$0xff]
    %v3817 = vld [vmem:[%s11 + $0x8] sm:$0xff]
    %v3818 = vld [vmem:[%s11 + $0x10] sm:$0xff]
    %v3819 = vld [vmem:[%s11 + $0x18] sm:$0xff]
    %v3820 = vld [vmem:[%s11 + $0x20] sm:$0xff]
    %v3821 = vld [vmem:[%s11 + $0x28] sm:$0xff]
    %v3822 = vld [vmem:[%s11 + $0x30] sm:$0xff]
    %v3823 = vld [vmem:[%s11 + $0x38] sm:$0xff]
    %v3824 = vld [vmem:[%s11 + $0x40] sm:$0xff]
    %v3825 = vld [vmem:[%s11 + $0x48] sm:$0xff]
    %v3826 = vld [vmem:[%s11 + $0x50] sm:$0xff]
    %v3827 = vld [vmem:[%s11 + $0x58] sm:$0xff]
    %v3828 = vld [vmem:[%s11 + $0x60] sm:$0xff]
    %v3829 = vld [vmem:[%s11 + $0x68] sm:$0xff]
    %v3830 = vld [vmem:[%s11 + $0x70] sm:$0xff]
    %v3831 = vld [vmem:[%s11 + $0x78] sm:$0xff]
    %v3832 = vld [vmem:[%s11 + $0x80] sm:$0xff]
    %v3833 = vld [vmem:[%s11 + $0x88] sm:$0xff]
    %v3834 = vld [vmem:[%s11 + $0x90] sm:$0xff]
    %v3835 = vld [vmem:[%s11 + $0x98] sm:$0xff]
    %v3836 = vld [vmem:[%s12] sm:$0x1f]
    %v3838 = vlaneseq
    %v3839 = vshrl.u32 %v3838, 7
    %v3840 = vsub.s32 0, %v3839
    %v3841 = vrot.slane %v3836, %v3840
    %v3842 = vlaneseq
    %v3843 = vshrl.u32 %v3842, 7
    %v3844 = vsub.s32 1, %v3843
    %v3845 = vrot.slane %v3836, %v3844
    %v3846 = vlaneseq
    %v3847 = vshrl.u32 %v3846, 7
    %v3848 = vsub.s32 2, %v3847
    %v3849 = vrot.slane %v3836, %v3848
    %v3850 = vlaneseq
    %v3851 = vshrl.u32 %v3850, 7
    %v3852 = vsub.s32 3, %v3851
    %v3853 = vrot.slane %v3836, %v3852
    %v3854 = vlaneseq
    %v3855 = vshrl.u32 %v3854, 7
    %v3856 = vsub.s32 4, %v3855
    %v3857 = vrot.slane %v3836, %v3856
    %3864 = vrot.lane.b32.xlu0 %v3810, 64
    %v3865 = vpop.permute.xlu0 %3864
    %v3866 = vsel %vm102, %v3865, 0
    %3868 = vmatprep.subr.mxu0 0.0
    %3869 = vmatpush1.msra.mxu0 0.0
    %3870 = vmatprep.subr.mxu0 0.0
    %3871 = vmatpush1.msra.mxu0 0.0
    %3872 = vmatprep.subr.mxu0 0.0
    %3873 = vmatpush1.msra.mxu0 0.0
    %3874 = vmatprep.subr.mxu0 0.0
    %3875 = vmatpush1.msra.mxu0 0.0
    %3876 = vmatprep.subr.mxu0 0.0
    %3877 = vmatpush1.msra.mxu0 0.0
    %3878 = vmatprep.subr.mxu0 0.0
    %3879 = vmatpush1.msra.mxu0 0.0
    %3880 = vmatprep.subr.mxu0 0.0
    %3881 = vmatpush1.msra.mxu0 0.0
    %3882 = vmatprep.subr.mxu0 0.0
    %3883 = vmatpush1.msra.mxu0 0.0
    %3884 = vmatprep.subr.mxu0 0.0
    %3885 = vmatpush1.msra.mxu0 0.0
    %3886 = vmatprep.subr.mxu0 0.0
    %3887 = vmatpush1.msra.mxu0 0.0
    %3888 = vmatprep.subr.mxu0 0.0
    %3889 = vmatpush1.msra.mxu0 0.0
    %3890 = vmatprep.subr.mxu0 0.0
    %3891 = vmatpush1.msra.mxu0 0.0
    %3892 = vmatprep.subr.mxu0 %v3832
    %3893 = vmatpush1.msra.mxu0 %v3831
    %3894 = vmatprep.subr.mxu0 %v3827
    %3895 = vmatpush1.msra.mxu0 %v3826
    %3896 = vmatprep.subr.mxu0 %v3822
    %3897 = vmatpush1.msra.mxu0 %v3821
    %3898 = vmatprep.subr.mxu0 %v3817
    %3899 = vmatpush1.msra.mxu0 %v3816
    %3900 = vmatprep.subr.mxu0 0.0
    %3901 = vmatpush2.msra.mxu0 0.0
    %3902 = vmatprep.subr.mxu0 0.0
    %3903 = vmatpush2.msra.mxu0 0.0
    %3904 = vmatprep.subr.mxu0 0.0
    %3905 = vmatpush2.msra.mxu0 0.0
    %3906 = vmatprep.subr.mxu0 0.0
    %3907 = vmatpush2.msra.mxu0 0.0
    %3908 = vmatprep.subr.mxu0 0.0
    %3909 = vmatpush2.msra.mxu0 0.0
    %3910 = vmatprep.subr.mxu0 0.0
    %3911 = vmatpush2.msra.mxu0 0.0
    %3912 = vmatprep.subr.mxu0 0.0
    %3913 = vmatpush2.msra.mxu0 0.0
    %3914 = vmatprep.subr.mxu0 0.0
    %3915 = vmatpush2.msra.mxu0 0.0
    %3916 = vmatprep.subr.mxu0 0.0
    %3917 = vmatpush2.msra.mxu0 0.0
    %3918 = vmatprep.subr.mxu0 0.0
    %3919 = vmatpush2.msra.mxu0 0.0
    %3920 = vmatprep.subr.mxu0 0.0
    %3921 = vmatpush2.msra.mxu0 0.0
    %3922 = vmatprep.subr.mxu0 0.0
    %3923 = vmatpush2.msra.mxu0 0.0
    %3924 = vmatprep.subr.mxu0 0.0
    %3925 = vmatpush2.msra.mxu0 0.0
    %3926 = vmatprep.subr.mxu0 0.0
    %3927 = vmatpush2.msra.mxu0 0.0
    %3928 = vmatprep.subr.mxu0 0.0
    %3929 = vmatpush2.msra.mxu0 0.0
    %3930 = vmatprep.subr.mxu0 0.0
    %3931 = vmatpush2.msra.mxu0 0.0
    %3932 = vmatprep.mubr.f32.mxu0 0.0
    %3933 = vmatmul.mubr.f32.gmra.mxu0 %v3866
    %v3934 = vpop.f32.mrf.mxu0
    %v3935 = vadd.f32 %v3841, %v3934
    %v3936 = vpop.f32.mrf.mxu0
    %v3937 = vadd.f32 %v3845, %v3936
    %3938 = vdwg.mxu0
    %3939 = vmatprep.subr.mxu0 0.0
    %3940 = vmatpush1.msra.mxu0 0.0
    %3941 = vmatprep.subr.mxu0 0.0
    %3942 = vmatpush1.msra.mxu0 0.0
    %3943 = vmatprep.subr.mxu0 0.0
    %3944 = vmatpush1.msra.mxu0 0.0
    %3945 = vmatprep.subr.mxu0 0.0
    %3946 = vmatpush1.msra.mxu0 0.0
    %3947 = vmatprep.subr.mxu0 0.0
    %3948 = vmatpush1.msra.mxu0 0.0
    %3949 = vmatprep.subr.mxu0 0.0
    %3950 = vmatpush1.msra.mxu0 0.0
    %3951 = vmatprep.subr.mxu0 0.0
    %3952 = vmatpush1.msra.mxu0 0.0
    %3953 = vmatprep.subr.mxu0 0.0
    %3954 = vmatpush1.msra.mxu0 0.0
    %3955 = vmatprep.subr.mxu0 0.0
    %3956 = vmatpush1.msra.mxu0 0.0
    %3957 = vmatprep.subr.mxu0 0.0
    %3958 = vmatpush1.msra.mxu0 0.0
    %3959 = vmatprep.subr.mxu0 0.0
    %3960 = vmatpush1.msra.mxu0 0.0
    %3961 = vmatprep.subr.mxu0 0.0
    %3962 = vmatpush1.msra.mxu0 0.0
    %3963 = vmatprep.subr.mxu0 %v3834
    %3964 = vmatpush1.msra.mxu0 %v3833
    %3965 = vmatprep.subr.mxu0 %v3829
    %3966 = vmatpush1.msra.mxu0 %v3828
    %3967 = vmatprep.subr.mxu0 %v3824
    %3968 = vmatpush1.msra.mxu0 %v3823
    %3969 = vmatprep.subr.mxu0 %v3819
    %3970 = vmatpush1.msra.mxu0 %v3818
    %3971 = vmatprep.subr.mxu0 0.0
    %3972 = vmatpush2.msra.mxu0 0.0
    %3973 = vmatprep.subr.mxu0 0.0
    %3974 = vmatpush2.msra.mxu0 0.0
    %3975 = vmatprep.subr.mxu0 0.0
    %3976 = vmatpush2.msra.mxu0 0.0
    %3977 = vmatprep.subr.mxu0 0.0
    %3978 = vmatpush2.msra.mxu0 0.0
    %3979 = vmatprep.subr.mxu0 0.0
    %3980 = vmatpush2.msra.mxu0 0.0
    %3981 = vmatprep.subr.mxu0 0.0
    %3982 = vmatpush2.msra.mxu0 0.0
    %3983 = vmatprep.subr.mxu0 0.0
    %3984 = vmatpush2.msra.mxu0 0.0
    %3985 = vmatprep.subr.mxu0 0.0
    %3986 = vmatpush2.msra.mxu0 0.0
    %3987 = vmatprep.subr.mxu0 0.0
    %3988 = vmatpush2.msra.mxu0 0.0
    %3989 = vmatprep.subr.mxu0 0.0
    %3990 = vmatpush2.msra.mxu0 0.0
    %3991 = vmatprep.subr.mxu0 0.0
    %3992 = vmatpush2.msra.mxu0 0.0
    %3993 = vmatprep.subr.mxu0 0.0
    %3994 = vmatpush2.msra.mxu0 0.0
    %3995 = vmatprep.subr.mxu0 0.0
    %3996 = vmatpush2.msra.mxu0 0.0
    %3997 = vmatprep.subr.mxu0 0.0
    %3998 = vmatpush2.msra.mxu0 0.0
    %3999 = vmatprep.subr.mxu0 0.0
    %4000 = vmatpush2.msra.mxu0 0.0
    %4001 = vmatprep.subr.mxu0 0.0
    %4002 = vmatpush2.msra.mxu0 0.0
    %4003 = vmatprep.mubr.f32.mxu0 0.0
    %4004 = vmatmul.mubr.f32.gmra.mxu0 %v3866
    %v4005 = vpop.f32.mrf.mxu0
    %v4006 = vadd.f32 %v3849, %v4005
    %v4007 = vpop.f32.mrf.mxu0
    %v4008 = vadd.f32 %v3853, %v4007
    %4009 = vdwg.mxu0
    %4010 = vmatprep.subr.mxu0 0.0
    %4011 = vmatpush1.msra.mxu0 0.0
    %4012 = vmatprep.subr.mxu0 0.0
    %4013 = vmatpush1.msra.mxu0 0.0
    %4014 = vmatprep.subr.mxu0 0.0
    %4015 = vmatpush1.msra.mxu0 0.0
    %4016 = vmatprep.subr.mxu0 0.0
    %4017 = vmatpush1.msra.mxu0 0.0
    %4018 = vmatprep.subr.mxu0 0.0
    %4019 = vmatpush1.msra.mxu0 0.0
    %4020 = vmatprep.subr.mxu0 0.0
    %4021 = vmatpush1.msra.mxu0 0.0
    %4022 = vmatprep.subr.mxu0 0.0
    %4023 = vmatpush1.msra.mxu0 0.0
    %4024 = vmatprep.subr.mxu0 0.0
    %4025 = vmatpush1.msra.mxu0 0.0
    %4026 = vmatprep.subr.mxu0 0.0
    %4027 = vmatpush1.msra.mxu0 0.0
    %4028 = vmatprep.subr.mxu0 0.0
    %4029 = vmatpush1.msra.mxu0 0.0
    %4030 = vmatprep.subr.mxu0 0.0
    %4031 = vmatpush1.msra.mxu0 0.0
    %4032 = vmatprep.subr.mxu0 0.0
    %4033 = vmatpush1.msra.mxu0 0.0
    %4034 = vmatprep.subr.mxu0 0.0
    %4035 = vmatpush1.msra.mxu0 %v3835
    %4036 = vmatprep.subr.mxu0 0.0
    %4037 = vmatpush1.msra.mxu0 %v3830
    %4038 = vmatprep.subr.mxu0 0.0
    %4039 = vmatpush1.msra.mxu0 %v3825
    %4040 = vmatprep.subr.mxu0 0.0
    %4041 = vmatpush1.msra.mxu0 %v3820
    %4042 = vmatprep.subr.mxu0 0.0
    %4043 = vmatpush2.msra.mxu0 0.0
    %4044 = vmatprep.subr.mxu0 0.0
    %4045 = vmatpush2.msra.mxu0 0.0
    %4046 = vmatprep.subr.mxu0 0.0
    %4047 = vmatpush2.msra.mxu0 0.0
    %4048 = vmatprep.subr.mxu0 0.0
    %4049 = vmatpush2.msra.mxu0 0.0
    %4050 = vmatprep.subr.mxu0 0.0
    %4051 = vmatpush2.msra.mxu0 0.0
    %4052 = vmatprep.subr.mxu0 0.0
    %4053 = vmatpush2.msra.mxu0 0.0
    %4054 = vmatprep.subr.mxu0 0.0
    %4055 = vmatpush2.msra.mxu0 0.0
    %4056 = vmatprep.subr.mxu0 0.0
    %4057 = vmatpush2.msra.mxu0 0.0
    %4058 = vmatprep.subr.mxu0 0.0
    %4059 = vmatpush2.msra.mxu0 0.0
    %4060 = vmatprep.subr.mxu0 0.0
    %4061 = vmatpush2.msra.mxu0 0.0
    %4062 = vmatprep.subr.mxu0 0.0
    %4063 = vmatpush2.msra.mxu0 0.0
    %4064 = vmatprep.subr.mxu0 0.0
    %4065 = vmatpush2.msra.mxu0 0.0
    %4066 = vmatprep.subr.mxu0 0.0
    %4067 = vmatpush2.msra.mxu0 0.0
    %4068 = vmatprep.subr.mxu0 0.0
    %4069 = vmatpush2.msra.mxu0 0.0
    %4070 = vmatprep.subr.mxu0 0.0
    %4071 = vmatpush2.msra.mxu0 0.0
    %4072 = vmatprep.subr.mxu0 0.0
    %4073 = vmatpush2.msra.mxu0 0.0
    %4074 = vmatprep.mubr.f32.mxu0 0.0
    %4075 = vmatmul.mubr.f32.gmra.mxu0 %v3866
    %v4076 = vpop.f32.mrf.mxu0
    %v4077 = vadd.f32 %v3857, %v4076
    %v4078 = vpop.f32.mrf.mxu0
    %4079 = vdwg.mxu0
    %v4080 = vld [vmem:[#allocation3] sm:$0xff]
    %v4081 = vld [vmem:[#allocation3 + $0x8] sm:$0xff]
    %v4082 = vld [vmem:[#allocation3 + $0x10] sm:$0xff]
    %v4083 = vld [vmem:[#allocation3 + $0x18] sm:$0xff]
    %v4084 = vadd.f32 %v4080, %v3935
    %v4085 = vadd.f32 %v4081, %v3937
    %v4086 = vadd.f32 %v4082, %v4006
    %v4087 = vadd.f32 %v4083, %v4008
    %v4088 = vtanh.pop %v4084
    %v4089 = vtanh.pop %v4085
    %v4090 = vtanh.pop %v4086
    %v4091 = vtanh.pop %v4087
    %v4092 = vld [vmem:[#allocation7] sm:$0xff]
    %v4093 = vld [vmem:[#allocation7 + $0x8] sm:$0xff]
    %v4094 = vld [vmem:[#allocation7 + $0x10] sm:$0xff]
    %v4095 = vld [vmem:[#allocation7 + $0x18] sm:$0xff]
    %v4096 = vld [vmem:[#allocation7 + $0x20] sm:$0xff]
    %v4097 = vld [vmem:[#allocation7 + $0x28] sm:$0xff]
    %v4098 = vld [vmem:[#allocation7 + $0x30] sm:$0xff]
    %v4099 = vld [vmem:[#allocation7 + $0x38] sm:$0xff]
    %v4100 = vld [vmem:[#allocation7 + $0x40] sm:$0xff]
    %v4101 = vld [vmem:[#allocation7 + $0x48] sm:$0xff]
    %v4102 = vld [vmem:[#allocation7 + $0x50] sm:$0xff]
    %v4103 = vld [vmem:[#allocation7 + $0x58] sm:$0xff]
    %v4104 = vld [vmem:[#allocation7 + $0x60] sm:$0xff]
    %v4105 = vld [vmem:[#allocation7 + $0x68] sm:$0xff]
    %v4106 = vld [vmem:[#allocation7 + $0x70] sm:$0xff]
    %v4107 = vld [vmem:[#allocation7 + $0x78] sm:$0xff]
    %v4108 = vld [vmem:[#allocation7 + $0x80] sm:$0xff]
    %v4109 = vld [vmem:[#allocation7 + $0x88] sm:$0xff]
    %v4110 = vld [vmem:[#allocation7 + $0x90] sm:$0xff]
    %v4111 = vld [vmem:[#allocation7 + $0x98] sm:$0xff]
    %v4112 = vld [vmem:[#allocation7 + $0xa0] sm:$0xff]
    %v4113 = vld [vmem:[#allocation7 + $0xa8] sm:$0xff]
    %v4114 = vld [vmem:[#allocation7 + $0xb0] sm:$0xff]
    %v4115 = vld [vmem:[#allocation7 + $0xb8] sm:$0xff]
    %v4116 = vld [vmem:[#allocation7 + $0xc0] sm:$0xff]
    %v4117 = vld [vmem:[#allocation7 + $0xc8] sm:$0xff]
    %v4118 = vld [vmem:[#allocation7 + $0xd0] sm:$0xff]
    %v4119 = vld [vmem:[#allocation7 + $0xd8] sm:$0xff]
    %v4120 = vld [vmem:[#allocation7 + $0xe0] sm:$0xff]
    %v4121 = vld [vmem:[#allocation7 + $0xe8] sm:$0xff]
    %v4122 = vld [vmem:[#allocation7 + $0xf0] sm:$0xff]
    %v4123 = vld [vmem:[#allocation7 + $0xf8] sm:$0xff]
    %v4124 = vld [vmem:[#allocation7 + $0x100] sm:$0xff]
    %v4125 = vld [vmem:[#allocation7 + $0x108] sm:$0xff]
    %v4126 = vld [vmem:[#allocation7 + $0x110] sm:$0xff]
    %v4127 = vld [vmem:[#allocation7 + $0x118] sm:$0xff]
    %v4128 = vld [vmem:[#allocation7 + $0x120] sm:$0xff]
    %v4129 = vld [vmem:[#allocation7 + $0x128] sm:$0xff]
    %v4130 = vld [vmem:[#allocation7 + $0x130] sm:$0xff]
    %v4131 = vld [vmem:[#allocation7 + $0x138] sm:$0xff]
    %v4132 = vld [vmem:[#allocation7 + $0x140] sm:$0xff]
    %v4133 = vld [vmem:[#allocation7 + $0x148] sm:$0xff]
    %v4134 = vld [vmem:[#allocation7 + $0x150] sm:$0xff]
    %v4135 = vld [vmem:[#allocation7 + $0x158] sm:$0xff]
    %v4136 = vld [vmem:[#allocation7 + $0x160] sm:$0xff]
    %v4137 = vld [vmem:[#allocation7 + $0x168] sm:$0xff]
    %v4138 = vld [vmem:[#allocation7 + $0x170] sm:$0xff]
    %v4139 = vld [vmem:[#allocation7 + $0x178] sm:$0xff]
    %v4140 = vld [vmem:[#allocation7 + $0x180] sm:$0xff]
    %v4141 = vld [vmem:[#allocation7 + $0x188] sm:$0xff]
    %v4142 = vld [vmem:[#allocation7 + $0x190] sm:$0xff]
    %v4143 = vld [vmem:[#allocation7 + $0x198] sm:$0xff]
    %v4144 = vld [vmem:[#allocation7 + $0x1a0] sm:$0xff]
    %v4145 = vld [vmem:[#allocation7 + $0x1a8] sm:$0xff]
    %v4146 = vld [vmem:[#allocation7 + $0x1b0] sm:$0xff]
    %v4147 = vld [vmem:[#allocation7 + $0x1b8] sm:$0xff]
    %v4148 = vld [vmem:[#allocation7 + $0x1c0] sm:$0xff]
    %v4149 = vld [vmem:[#allocation7 + $0x1c8] sm:$0xff]
    %v4150 = vld [vmem:[#allocation7 + $0x1d0] sm:$0xff]
    %v4151 = vld [vmem:[#allocation7 + $0x1d8] sm:$0xff]
    %v4152 = vld [vmem:[#allocation7 + $0x1e0] sm:$0xff]
    %v4153 = vld [vmem:[#allocation7 + $0x1e8] sm:$0xff]
    %v4154 = vld [vmem:[#allocation7 + $0x1f0] sm:$0xff]
    %v4155 = vld [vmem:[#allocation7 + $0x1f8] sm:$0xff]
    %v4156 = vld [vmem:[%s14] sm:$0x1]
    %v4158 = vlaneseq
    %v4159 = vshrl.u32 %v4158, 7
    %v4160 = vsub.s32 0, %v4159
    %v4161 = vrot.slane %v4156, %v4160
    %4163 = vmatprep.subr.mxu0 0.0
    %4164 = vmatpush1.msra.mxu0 %v4107
    %4165 = vmatprep.subr.mxu0 0.0
    %4166 = vmatpush1.msra.mxu0 %v4106
    %4167 = vmatprep.subr.mxu0 0.0
    %4168 = vmatpush1.msra.mxu0 %v4105
    %4169 = vmatprep.subr.mxu0 0.0
    %4170 = vmatpush1.msra.mxu0 %v4104
    %4171 = vmatprep.subr.mxu0 0.0
    %4172 = vmatpush1.msra.mxu0 %v4103
    %4173 = vmatprep.subr.mxu0 0.0
    %4174 = vmatpush1.msra.mxu0 %v4102
    %4175 = vmatprep.subr.mxu0 0.0
    %4176 = vmatpush1.msra.mxu0 %v4101
    %4177 = vmatprep.subr.mxu0 0.0
    %4178 = vmatpush1.msra.mxu0 %v4100
    %4179 = vmatprep.subr.mxu0 0.0
    %4180 = vmatpush1.msra.mxu0 %v4099
    %4181 = vmatprep.subr.mxu0 0.0
    %4182 = vmatpush1.msra.mxu0 %v4098
    %4183 = vmatprep.subr.mxu0 0.0
    %4184 = vmatpush1.msra.mxu0 %v4097
    %4185 = vmatprep.subr.mxu0 0.0
    %4186 = vmatpush1.msra.mxu0 %v4096
    %4187 = vmatprep.subr.mxu0 0.0
    %4188 = vmatpush1.msra.mxu0 %v4095
    %4189 = vmatprep.subr.mxu0 0.0
    %4190 = vmatpush1.msra.mxu0 %v4094
    %4191 = vmatprep.subr.mxu0 0.0
    %4192 = vmatpush1.msra.mxu0 %v4093
    %4193 = vmatprep.subr.mxu0 0.0
    %4194 = vmatpush1.msra.mxu0 %v4092
    %4195 = vmatprep.subr.mxu0 0.0
    %4196 = vmatpush2.msra.mxu0 %v4123
    %4197 = vmatprep.subr.mxu0 0.0
    %4198 = vmatpush2.msra.mxu0 %v4122
    %4199 = vmatprep.subr.mxu0 0.0
    %4200 = vmatpush2.msra.mxu0 %v4121
    %4201 = vmatprep.subr.mxu0 0.0
    %4202 = vmatpush2.msra.mxu0 %v4120
    %4203 = vmatprep.subr.mxu0 0.0
    %4204 = vmatpush2.msra.mxu0 %v4119
    %4205 = vmatprep.subr.mxu0 0.0
    %4206 = vmatpush2.msra.mxu0 %v4118
    %4207 = vmatprep.subr.mxu0 0.0
    %4208 = vmatpush2.msra.mxu0 %v4117
    %4209 = vmatprep.subr.mxu0 0.0
    %4210 = vmatpush2.msra.mxu0 %v4116
    %4211 = vmatprep.subr.mxu0 0.0
    %4212 = vmatpush2.msra.mxu0 %v4115
    %4213 = vmatprep.subr.mxu0 0.0
    %4214 = vmatpush2.msra.mxu0 %v4114
    %4215 = vmatprep.subr.mxu0 0.0
    %4216 = vmatpush2.msra.mxu0 %v4113
    %4217 = vmatprep.subr.mxu0 0.0
    %4218 = vmatpush2.msra.mxu0 %v4112
    %4219 = vmatprep.subr.mxu0 0.0
    %4220 = vmatpush2.msra.mxu0 %v4111
    %4221 = vmatprep.subr.mxu0 0.0
    %4222 = vmatpush2.msra.mxu0 %v4110
    %4223 = vmatprep.subr.mxu0 0.0
    %4224 = vmatpush2.msra.mxu0 %v4109
    %4225 = vmatprep.subr.mxu0 0.0
    %4226 = vmatpush2.msra.mxu0 %v4108
    %4227 = vmatprep.mubr.f32.mxu0 %v4089
    %4228 = vmatmul.mubr.f32.gmra.mxu0 %v4088
    %v4229 = vpop.f32.mrf.mxu0
    %v4230 = vadd.f32 %v4161, %v4229
    %v4231 = vpop.f32.mrf.mxu0
    %4232 = vdwg.mxu0
    %4233 = vmatprep.subr.mxu0 0.0
    %4234 = vmatpush1.msra.mxu0 %v4139
    %4235 = vmatprep.subr.mxu0 0.0
    %4236 = vmatpush1.msra.mxu0 %v4138
    %4237 = vmatprep.subr.mxu0 0.0
    %4238 = vmatpush1.msra.mxu0 %v4137
    %4239 = vmatprep.subr.mxu0 0.0
    %4240 = vmatpush1.msra.mxu0 %v4136
    %4241 = vmatprep.subr.mxu0 0.0
    %4242 = vmatpush1.msra.mxu0 %v4135
    %4243 = vmatprep.subr.mxu0 0.0
    %4244 = vmatpush1.msra.mxu0 %v4134
    %4245 = vmatprep.subr.mxu0 0.0
    %4246 = vmatpush1.msra.mxu0 %v4133
    %4247 = vmatprep.subr.mxu0 0.0
    %4248 = vmatpush1.msra.mxu0 %v4132
    %4249 = vmatprep.subr.mxu0 0.0
    %4250 = vmatpush1.msra.mxu0 %v4131
    %4251 = vmatprep.subr.mxu0 0.0
    %4252 = vmatpush1.msra.mxu0 %v4130
    %4253 = vmatprep.subr.mxu0 0.0
    %4254 = vmatpush1.msra.mxu0 %v4129
    %4255 = vmatprep.subr.mxu0 0.0
    %4256 = vmatpush1.msra.mxu0 %v4128
    %4257 = vmatprep.subr.mxu0 0.0
    %4258 = vmatpush1.msra.mxu0 %v4127
    %4259 = vmatprep.subr.mxu0 0.0
    %4260 = vmatpush1.msra.mxu0 %v4126
    %4261 = vmatprep.subr.mxu0 0.0
    %4262 = vmatpush1.msra.mxu0 %v4125
    %4263 = vmatprep.subr.mxu0 0.0
    %4264 = vmatpush1.msra.mxu0 %v4124
    %4265 = vmatprep.subr.mxu0 0.0
    %4266 = vmatpush2.msra.mxu0 %v4155
    %4267 = vmatprep.subr.mxu0 0.0
    %4268 = vmatpush2.msra.mxu0 %v4154
    %4269 = vmatprep.subr.mxu0 0.0
    %4270 = vmatpush2.msra.mxu0 %v4153
    %4271 = vmatprep.subr.mxu0 0.0
    %4272 = vmatpush2.msra.mxu0 %v4152
    %4273 = vmatprep.subr.mxu0 0.0
    %4274 = vmatpush2.msra.mxu0 %v4151
    %4275 = vmatprep.subr.mxu0 0.0
    %4276 = vmatpush2.msra.mxu0 %v4150
    %4277 = vmatprep.subr.mxu0 0.0
    %4278 = vmatpush2.msra.mxu0 %v4149
    %4279 = vmatprep.subr.mxu0 0.0
    %4280 = vmatpush2.msra.mxu0 %v4148
    %4281 = vmatprep.subr.mxu0 0.0
    %4282 = vmatpush2.msra.mxu0 %v4147
    %4283 = vmatprep.subr.mxu0 0.0
    %4284 = vmatpush2.msra.mxu0 %v4146
    %4285 = vmatprep.subr.mxu0 0.0
    %4286 = vmatpush2.msra.mxu0 %v4145
    %4287 = vmatprep.subr.mxu0 0.0
    %4288 = vmatpush2.msra.mxu0 %v4144
    %4289 = vmatprep.subr.mxu0 0.0
    %4290 = vmatpush2.msra.mxu0 %v4143
    %4291 = vmatprep.subr.mxu0 0.0
    %4292 = vmatpush2.msra.mxu0 %v4142
    %4293 = vmatprep.subr.mxu0 0.0
    %4294 = vmatpush2.msra.mxu0 %v4141
    %4295 = vmatprep.subr.mxu0 0.0
    %4296 = vmatpush2.msra.mxu0 %v4140
    %4297 = vmatprep.mubr.f32.mxu0 %v4091
    %4298 = vmatmul.mubr.f32.gmra.mxu0 %v4090
    %v4299 = vpop.f32.mrf.mxu0
    %v4300 = vadd.f32 %v4230, %v4299
    %v4301 = vpop.f32.mrf.mxu0
    %4302 = vdwg.mxu0
    %4303 = vmax.xlane.f32.xlu0 %v4300
    %v4304 = vpop.xlane.xlu0 %4303
    %v4305 = vsub.f32 %v4300, %v4304
    %v4306 = vmul.f32 %v4305, 1.442695
    %v4307 = vpow.pop %v4306
    %4308 = vadd.xlane.f32.xlu0 %v4307
    %v4309 = vpop.xlane.xlu0 %4308
    %v4310 = vrcp.pop %v4309
    %v4311 = vmul.f32 %v4307, %v4310
    %v4312 = vlaneseq
    %v4313 = vshrl.u32 %v4312, 7
    %v4314 = vsub.s32 0, %v4313
    %v4315 = vrot.slane %v4311, %v4314
    %4317 = vbcast.lane.b32.xlu0 %v4315, 256
    %v4318 = vpop.permute.xlu0 %4317
    %s4320 = sor.u32 256, 8
    %4321 = vbcast.lane.b32.xlu0 %v4315, %s4320
    %v4322 = vpop.permute.xlu0 %4321
    %v4323 = vlaneseq
    %v4324 = vshrl.u32 %v4323, 7
    %v4325 = vsub.s32 1, %v4324
    %v4326 = vrot.slane %v4311, %v4325
    %4328 = vbcast.lane.b32.xlu0 %v4326, 256
    %v4329 = vpop.permute.xlu0 %4328
    %s4331 = sor.u32 256, 8
    %4332 = vbcast.lane.b32.xlu0 %v4326, %s4331
    %v4333 = vpop.permute.xlu0 %4332
    %v4334 = vlaneseq
    %v4335 = vshrl.u32 %v4334, 7
    %v4336 = vsub.s32 2, %v4335
    %v4337 = vrot.slane %v4311, %v4336
    %4339 = vbcast.lane.b32.xlu0 %v4337, 256
    %v4340 = vpop.permute.xlu0 %4339
    %s4342 = sor.u32 256, 8
    %4343 = vbcast.lane.b32.xlu0 %v4337, %s4342
    %v4344 = vpop.permute.xlu0 %4343
    %v4345 = vlaneseq
    %v4346 = vshrl.u32 %v4345, 7
    %v4347 = vsub.s32 3, %v4346
    %v4348 = vrot.slane %v4311, %v4347
    %4350 = vbcast.lane.b32.xlu0 %v4348, 256
    %v4351 = vpop.permute.xlu0 %4350
    %s4353 = sor.u32 256, 8
    %4354 = vbcast.lane.b32.xlu0 %v4348, %s4353
    %v4355 = vpop.permute.xlu0 %4354
    %v4356 = vlaneseq
    %v4357 = vshrl.u32 %v4356, 7
    %v4358 = vsub.s32 4, %v4357
    %v4359 = vrot.slane %v4311, %v4358
    %4361 = vbcast.lane.b32.xlu0 %v4359, 256
    %v4362 = vpop.permute.xlu0 %4361
    %s4364 = sor.u32 256, 8
    %4365 = vbcast.lane.b32.xlu0 %v4359, %s4364
    %v4366 = vpop.permute.xlu0 %4365
    %v4367 = vlaneseq
    %v4368 = vshrl.u32 %v4367, 7
    %v4369 = vsub.s32 5, %v4368
    %v4370 = vrot.slane %v4311, %v4369
    %4372 = vbcast.lane.b32.xlu0 %v4370, 256
    %v4373 = vpop.permute.xlu0 %4372
    %s4375 = sor.u32 256, 8
    %4376 = vbcast.lane.b32.xlu0 %v4370, %s4375
    %v4377 = vpop.permute.xlu0 %4376
    %v4378 = vlaneseq
    %v4379 = vshrl.u32 %v4378, 7
    %v4380 = vsub.s32 6, %v4379
    %v4381 = vrot.slane %v4311, %v4380
    %4383 = vbcast.lane.b32.xlu0 %v4381, 256
    %v4384 = vpop.permute.xlu0 %4383
    %s4386 = sor.u32 256, 8
    %4387 = vbcast.lane.b32.xlu0 %v4381, %s4386
    %v4388 = vpop.permute.xlu0 %4387
    %v4389 = vlaneseq
    %v4390 = vshrl.u32 %v4389, 7
    %v4391 = vsub.s32 7, %v4390
    %v4392 = vrot.slane %v4311, %v4391
    %4394 = vbcast.lane.b32.xlu0 %v4392, 256
    %v4395 = vpop.permute.xlu0 %4394
    %s4397 = sor.u32 256, 8
    %4398 = vbcast.lane.b32.xlu0 %v4392, %s4397
    %v4399 = vpop.permute.xlu0 %4398
    %v4400 = vld [vmem:[%s4] sm:$0xff]
    %v4401 = vld [vmem:[%s4 + $0x8] sm:$0xff]
    %v4402 = vld [vmem:[%s4 + $0x10] sm:$0xff]
    %v4403 = vld [vmem:[%s4 + $0x18] sm:$0xff]
    %v4404 = vld [vmem:[%s4 + $0x20] sm:$0xff]
    %v4405 = vld [vmem:[%s4 + $0x28] sm:$0xff]
    %v4406 = vld [vmem:[%s4 + $0x30] sm:$0xff]
    %v4407 = vld [vmem:[%s4 + $0x38] sm:$0xff]
    %v4408 = vld [vmem:[%s4 + $0x40] sm:$0xff]
    %v4409 = vld [vmem:[%s4 + $0x48] sm:$0xff]
    %v4410 = vld [vmem:[%s4 + $0x50] sm:$0xff]
    %v4411 = vld [vmem:[%s4 + $0x58] sm:$0xff]
    %v4412 = vld [vmem:[%s4 + $0x60] sm:$0xff]
    %v4413 = vld [vmem:[%s4 + $0x68] sm:$0xff]
    %v4414 = vld [vmem:[%s4 + $0x70] sm:$0xff]
    %v4415 = vld [vmem:[%s4 + $0x78] sm:$0xff]
    %v4416 = vmul.f32 %v4318, %v4400
    %v4417 = vmul.f32 %v4322, %v4401
    %v4418 = vmul.f32 %v4329, %v4402
    %v4419 = vmul.f32 %v4333, %v4403
    %v4420 = vmul.f32 %v4340, %v4404
    %v4421 = vmul.f32 %v4344, %v4405
    %v4422 = vmul.f32 %v4351, %v4406
    %v4423 = vmul.f32 %v4355, %v4407
    %v4424 = vmul.f32 %v4362, %v4408
    %v4425 = vmul.f32 %v4366, %v4409
    %v4426 = vmul.f32 %v4373, %v4410
    %v4427 = vmul.f32 %v4377, %v4411
    %v4428 = vmul.f32 %v4384, %v4412
    %v4429 = vmul.f32 %v4388, %v4413
    %v4430 = vmul.f32 %v4395, %v4414
    %v4431 = vmul.f32 %v4399, %v4415
    %v4432 = vsel %vm102, %v4416, 0.0
    %v4433 = vsel %vm102, %v4417, 0.0
    %v4434 = vadd.f32 %v4432, %v4433
    %v4435 = vrot.slane %v4434, 4
    %v4436 = vadd.f32 %v4434, %v4435
    %v4437 = vrot.slane %v4436, 2
    %v4438 = vadd.f32 %v4436, %v4437
    %v4439 = vrot.slane %v4438, 1
    %v4440 = vadd.f32 %v4438, %v4439
    %v4441 = vsel %vm102, %v4418, 0.0
    %v4442 = vsel %vm102, %v4419, 0.0
    %v4443 = vadd.f32 %v4441, %v4442
    %v4444 = vrot.slane %v4443, 4
    %v4445 = vadd.f32 %v4443, %v4444
    %v4446 = vrot.slane %v4445, 2
    %v4447 = vadd.f32 %v4445, %v4446
    %v4448 = vrot.slane %v4447, 1
    %v4449 = vadd.f32 %v4447, %v4448
    %v4450 = vsel %vm102, %v4420, 0.0
    %v4451 = vsel %vm102, %v4421, 0.0
    %v4452 = vadd.f32 %v4450, %v4451
    %v4453 = vrot.slane %v4452, 4
    %v4454 = vadd.f32 %v4452, %v4453
    %v4455 = vrot.slane %v4454, 2
    %v4456 = vadd.f32 %v4454, %v4455
    %v4457 = vrot.slane %v4456, 1
    %v4458 = vadd.f32 %v4456, %v4457
    %v4459 = vsel %vm102, %v4422, 0.0
    %v4460 = vsel %vm102, %v4423, 0.0
    %v4461 = vadd.f32 %v4459, %v4460
    %v4462 = vrot.slane %v4461, 4
    %v4463 = vadd.f32 %v4461, %v4462
    %v4464 = vrot.slane %v4463, 2
    %v4465 = vadd.f32 %v4463, %v4464
    %v4466 = vrot.slane %v4465, 1
    %v4467 = vadd.f32 %v4465, %v4466
    %v4468 = vsel %vm102, %v4424, 0.0
    %v4469 = vsel %vm102, %v4425, 0.0
    %v4470 = vadd.f32 %v4468, %v4469
    %v4471 = vrot.slane %v4470, 4
    %v4472 = vadd.f32 %v4470, %v4471
    %v4473 = vrot.slane %v4472, 2
    %v4474 = vadd.f32 %v4472, %v4473
    %v4475 = vrot.slane %v4474, 1
    %v4476 = vadd.f32 %v4474, %v4475
    %v4477 = vsel %vm102, %v4426, 0.0
    %v4478 = vsel %vm102, %v4427, 0.0
    %v4479 = vadd.f32 %v4477, %v4478
    %v4480 = vrot.slane %v4479, 4
    %v4481 = vadd.f32 %v4479, %v4480
    %v4482 = vrot.slane %v4481, 2
    %v4483 = vadd.f32 %v4481, %v4482
    %v4484 = vrot.slane %v4483, 1
    %v4485 = vadd.f32 %v4483, %v4484
    %v4486 = vsel %vm102, %v4428, 0.0
    %v4487 = vsel %vm102, %v4429, 0.0
    %v4488 = vadd.f32 %v4486, %v4487
    %v4489 = vrot.slane %v4488, 4
    %v4490 = vadd.f32 %v4488, %v4489
    %v4491 = vrot.slane %v4490, 2
    %v4492 = vadd.f32 %v4490, %v4491
    %v4493 = vrot.slane %v4492, 1
    %v4494 = vadd.f32 %v4492, %v4493
    %v4495 = vsel %vm102, %v4430, 0.0
    %v4496 = vsel %vm102, %v4431, 0.0
    %v4497 = vadd.f32 %v4495, %v4496
    %v4498 = vrot.slane %v4497, 4
    %v4499 = vadd.f32 %v4497, %v4498
    %v4500 = vrot.slane %v4499, 2
    %v4501 = vadd.f32 %v4499, %v4500
    %v4502 = vrot.slane %v4501, 1
    %v4503 = vadd.f32 %v4501, %v4502
    %v4504 = vadd.f32 %v3815, %v4077
    %v4505 = vld [vmem:[%s15] sm:$0xff]
    %v4506 = vld [vmem:[%s15 + $0x8] sm:$0xff]
    %v4507 = vld [vmem:[%s15 + $0x10] sm:$0xff]
    %v4508 = vld [vmem:[%s15 + $0x18] sm:$0xff]
    %v4517 = vsel %vm1740, %v4449, %v4440
    %v4518 = vsel %vm1742, %v4458, %v4517
    %v4519 = vsel %vm1744, %v4467, %v4518
    %v4520 = vsel %vm1746, %v4476, %v4519
    %v4521 = vsel %vm1748, %v4485, %v4520
    %v4522 = vsel %vm1750, %v4494, %v4521
    %v4523 = vsel %vm1752, %v4503, %v4522
    %v4524 = vsel %vm102, %v4523, 0
    %4526 = vmatprep.subr.mxu0 0.0
    %4527 = vmatpush1.msra.mxu0 0.0
    %4528 = vmatprep.subr.mxu0 0.0
    %4529 = vmatpush1.msra.mxu0 0.0
    %4530 = vmatprep.subr.mxu0 0.0
    %4531 = vmatpush1.msra.mxu0 0.0
    %4532 = vmatprep.subr.mxu0 0.0
    %4533 = vmatpush1.msra.mxu0 0.0
    %4534 = vmatprep.subr.mxu0 0.0
    %4535 = vmatpush1.msra.mxu0 0.0
    %4536 = vmatprep.subr.mxu0 0.0
    %4537 = vmatpush1.msra.mxu0 0.0
    %4538 = vmatprep.subr.mxu0 0.0
    %4539 = vmatpush1.msra.mxu0 0.0
    %4540 = vmatprep.subr.mxu0 0.0
    %4541 = vmatpush1.msra.mxu0 0.0
    %4542 = vmatprep.subr.mxu0 0.0
    %4543 = vmatpush1.msra.mxu0 0.0
    %4544 = vmatprep.subr.mxu0 0.0
    %4545 = vmatpush1.msra.mxu0 0.0
    %4546 = vmatprep.subr.mxu0 0.0
    %4547 = vmatpush1.msra.mxu0 0.0
    %4548 = vmatprep.subr.mxu0 0.0
    %4549 = vmatpush1.msra.mxu0 0.0
    %4550 = vmatprep.subr.mxu0 0.0
    %4551 = vmatpush1.msra.mxu0 %v4508
    %4552 = vmatprep.subr.mxu0 0.0
    %4553 = vmatpush1.msra.mxu0 %v4507
    %4554 = vmatprep.subr.mxu0 0.0
    %4555 = vmatpush1.msra.mxu0 %v4506
    %4556 = vmatprep.subr.mxu0 0.0
    %4557 = vmatpush1.msra.mxu0 %v4505
    %4558 = vmatprep.subr.mxu0 0.0
    %4559 = vmatpush2.msra.mxu0 0.0
    %4560 = vmatprep.subr.mxu0 0.0
    %4561 = vmatpush2.msra.mxu0 0.0
    %4562 = vmatprep.subr.mxu0 0.0
    %4563 = vmatpush2.msra.mxu0 0.0
    %4564 = vmatprep.subr.mxu0 0.0
    %4565 = vmatpush2.msra.mxu0 0.0
    %4566 = vmatprep.subr.mxu0 0.0
    %4567 = vmatpush2.msra.mxu0 0.0
    %4568 = vmatprep.subr.mxu0 0.0
    %4569 = vmatpush2.msra.mxu0 0.0
    %4570 = vmatprep.subr.mxu0 0.0
    %4571 = vmatpush2.msra.mxu0 0.0
    %4572 = vmatprep.subr.mxu0 0.0
    %4573 = vmatpush2.msra.mxu0 0.0
    %4574 = vmatprep.subr.mxu0 0.0
    %4575 = vmatpush2.msra.mxu0 0.0
    %4576 = vmatprep.subr.mxu0 0.0
    %4577 = vmatpush2.msra.mxu0 0.0
    %4578 = vmatprep.subr.mxu0 0.0
    %4579 = vmatpush2.msra.mxu0 0.0
    %4580 = vmatprep.subr.mxu0 0.0
    %4581 = vmatpush2.msra.mxu0 0.0
    %4582 = vmatprep.subr.mxu0 0.0
    %4583 = vmatpush2.msra.mxu0 0.0
    %4584 = vmatprep.subr.mxu0 0.0
    %4585 = vmatpush2.msra.mxu0 0.0
    %4586 = vmatprep.subr.mxu0 0.0
    %4587 = vmatpush2.msra.mxu0 0.0
    %4588 = vmatprep.subr.mxu0 0.0
    %4589 = vmatpush2.msra.mxu0 0.0
    %4590 = vmatprep.mubr.f32.mxu0 0.0
    %4591 = vmatmul.mubr.f32.gmra.mxu0 %v4524
    %v4592 = vpop.f32.mrf.mxu0
    %v4593 = vadd.f32 0.0, %v4592
    %v4594 = vpop.f32.mrf.mxu0
    %4595 = vdwg.mxu0
    %v4596 = vadd.f32 %v4504, %v4593
    %v4597 = vxor.u32 %v4596, 2147483648
    %v4598 = vmul.f32 %v4597, 1.442695
    %v4599 = vpow.pop %v4598
    %v4600 = vadd.f32 %v4599, 1.0
    %v4601 = vrcp.pop %v4600
    %v4602 = vmul.f32 1.0, %v4601
    %v4603 = vtanh.pop %v4596
    %v4604 = vmul.f32 %v4602, %v3813
    %4606 = vrot.lane.b32.xlu0 %v4603, 32
    %v4607 = vpop.permute.xlu0 %4606
    %v4609 = vmul.f32 %v4602, %v4607
    %4611 = vrot.lane.b32.xlu0 %v4609, 32
    %v4612 = vpop.permute.xlu0 %4611
    %v4614 = vadd.f32 %v4604, %v4612
    %v4615 = vtanh.pop %v4614
    %4617 = vrot.lane.b32.xlu0 %v4615, 32
    %v4618 = vpop.permute.xlu0 %4617
    %v4620 = vmul.f32 %v4602, %v4618
    %v4621 = vld [vmem:[%s16] sm:$0xff]
    %v4622 = vld [vmem:[%s16 + $0x8] sm:$0xff]
    %v4623 = vld [vmem:[%s16 + $0x10] sm:$0xff]
    %v4624 = vld [vmem:[%s16 + $0x18] sm:$0xff]
    %v4625 = vld [vmem:[%s17] sm:$0x1]
    %v4627 = vlaneseq
    %v4628 = vshrl.u32 %v4627, 7
    %v4629 = vsub.s32 0, %v4628
    %v4630 = vrot.slane %v4625, %v4629
    %4633 = vrot.lane.b32.xlu0 %v4620, 64
    %v4634 = vpop.permute.xlu0 %4633
    %v4635 = vsel %vm102, %v4634, 0
    %4637 = vmatprep.subr.mxu0 0.0
    %4638 = vmatpush1.msra.mxu0 0.0
    %4639 = vmatprep.subr.mxu0 0.0
    %4640 = vmatpush1.msra.mxu0 0.0
    %4641 = vmatprep.subr.mxu0 0.0
    %4642 = vmatpush1.msra.mxu0 0.0
    %4643 = vmatprep.subr.mxu0 0.0
    %4644 = vmatpush1.msra.mxu0 0.0
    %4645 = vmatprep.subr.mxu0 0.0
    %4646 = vmatpush1.msra.mxu0 0.0
    %4647 = vmatprep.subr.mxu0 0.0
    %4648 = vmatpush1.msra.mxu0 0.0
    %4649 = vmatprep.subr.mxu0 0.0
    %4650 = vmatpush1.msra.mxu0 0.0
    %4651 = vmatprep.subr.mxu0 0.0
    %4652 = vmatpush1.msra.mxu0 0.0
    %4653 = vmatprep.subr.mxu0 0.0
    %4654 = vmatpush1.msra.mxu0 0.0
    %4655 = vmatprep.subr.mxu0 0.0
    %4656 = vmatpush1.msra.mxu0 0.0
    %4657 = vmatprep.subr.mxu0 0.0
    %4658 = vmatpush1.msra.mxu0 0.0
    %4659 = vmatprep.subr.mxu0 0.0
    %4660 = vmatpush1.msra.mxu0 0.0
    %4661 = vmatprep.subr.mxu0 0.0
    %4662 = vmatpush1.msra.mxu0 %v4624
    %4663 = vmatprep.subr.mxu0 0.0
    %4664 = vmatpush1.msra.mxu0 %v4623
    %4665 = vmatprep.subr.mxu0 0.0
    %4666 = vmatpush1.msra.mxu0 %v4622
    %4667 = vmatprep.subr.mxu0 0.0
    %4668 = vmatpush1.msra.mxu0 %v4621
    %4669 = vmatprep.subr.mxu0 0.0
    %4670 = vmatpush2.msra.mxu0 0.0
    %4671 = vmatprep.subr.mxu0 0.0
    %4672 = vmatpush2.msra.mxu0 0.0
    %4673 = vmatprep.subr.mxu0 0.0
    %4674 = vmatpush2.msra.mxu0 0.0
    %4675 = vmatprep.subr.mxu0 0.0
    %4676 = vmatpush2.msra.mxu0 0.0
    %4677 = vmatprep.subr.mxu0 0.0
    %4678 = vmatpush2.msra.mxu0 0.0
    %4679 = vmatprep.subr.mxu0 0.0
    %4680 = vmatpush2.msra.mxu0 0.0
    %4681 = vmatprep.subr.mxu0 0.0
    %4682 = vmatpush2.msra.mxu0 0.0
    %4683 = vmatprep.subr.mxu0 0.0
    %4684 = vmatpush2.msra.mxu0 0.0
    %4685 = vmatprep.subr.mxu0 0.0
    %4686 = vmatpush2.msra.mxu0 0.0
    %4687 = vmatprep.subr.mxu0 0.0
    %4688 = vmatpush2.msra.mxu0 0.0
    %4689 = vmatprep.subr.mxu0 0.0
    %4690 = vmatpush2.msra.mxu0 0.0
    %4691 = vmatprep.subr.mxu0 0.0
    %4692 = vmatpush2.msra.mxu0 0.0
    %4693 = vmatprep.subr.mxu0 0.0
    %4694 = vmatpush2.msra.mxu0 0.0
    %4695 = vmatprep.subr.mxu0 0.0
    %4696 = vmatpush2.msra.mxu0 0.0
    %4697 = vmatprep.subr.mxu0 0.0
    %4698 = vmatpush2.msra.mxu0 0.0
    %4699 = vmatprep.subr.mxu0 0.0
    %4700 = vmatpush2.msra.mxu0 0.0
    %4701 = vmatprep.mubr.f32.mxu0 0.0
    %4702 = vmatmul.mubr.f32.gmra.mxu0 %v4635
    %v4703 = vpop.f32.mrf.mxu0
    %v4704 = vadd.f32 %v4630, %v4703
    %v4705 = vpop.f32.mrf.mxu0
    %4706 = vdwg.mxu0
    %4707 = vmax.xlane.f32.xlu0 %v4704
    %v4708 = vpop.xlane.xlu0 %4707
    %v4709 = vsub.f32 %v4704, %v4708
    %v4710 = vmul.f32 %v4709, 1.442695
    %v4711 = vpow.pop %v4710
    %4712 = vadd.xlane.f32.xlu0 %v4711
    %v4713 = vpop.xlane.xlu0 %4712
    %v4714 = vlog2.pop %v4713
    %v4715 = vmul.f32 %v4714, 0.6931472
    %v4716 = vsub.f32 %v4709, %v4715
    %p4717 = scmp.gt.s32.totalorder %s1039, 3
    %s4718 = scalar_select %p4717, 1, 0
    %s4719 = scvt.s32.f32 %s4718
    %v4720 = vstv %s4719
    %v4721 = vmul.f32 %v4720, %v4311
    %s4722 = scalar_lea.vmem %s18, 24
    %4723 = vst [vmem:[%s4722] sm:$0xff] %v4721
    %v4724 = vmul.f32 %v4720, %v4716
    %s4725 = scalar_lea.vmem %s19, 24
    %4726 = vst [vmem:[%s4725] sm:$0xff] %v4724
    %v4727 = vmul.f32 %v4720, %v4620
    %s4728 = ssub.f32 1.0, %s4719
    %v4729 = vstv %s4728
    %v4730 = vmul.f32 %v4729, %v3810
    %v4731 = vadd.f32 %v4727, %v4730
    %v4732 = vmul.f32 %v4720, %v4614
    %v4733 = vmul.f32 %v4729, %v3813
    %v4734 = vadd.f32 %v4732, %v4733
    %s4735 = scalar_lea.vmem [#allocation2], 32
    %v4736 = vld [vmem:[%s4735] sm:$0xff]
    %v4737 = vld [vmem:[%s11] sm:$0xff]
    %v4738 = vld [vmem:[%s11 + $0x8] sm:$0xff]
    %v4739 = vld [vmem:[%s11 + $0x10] sm:$0xff]
    %v4740 = vld [vmem:[%s11 + $0x18] sm:$0xff]
    %v4741 = vld [vmem:[%s11 + $0x20] sm:$0xff]
    %v4742 = vld [vmem:[%s11 + $0x28] sm:$0xff]
    %v4743 = vld [vmem:[%s11 + $0x30] sm:$0xff]
    %v4744 = vld [vmem:[%s11 + $0x38] sm:$0xff]
    %v4745 = vld [vmem:[%s11 + $0x40] sm:$0xff]
    %v4746 = vld [vmem:[%s11 + $0x48] sm:$0xff]
    %v4747 = vld [vmem:[%s11 + $0x50] sm:$0xff]
    %v4748 = vld [vmem:[%s11 + $0x58] sm:$0xff]
    %v4749 = vld [vmem:[%s11 + $0x60] sm:$0xff]
    %v4750 = vld [vmem:[%s11 + $0x68] sm:$0xff]
    %v4751 = vld [vmem:[%s11 + $0x70] sm:$0xff]
    %v4752 = vld [vmem:[%s11 + $0x78] sm:$0xff]
    %v4753 = vld [vmem:[%s11 + $0x80] sm:$0xff]
    %v4754 = vld [vmem:[%s11 + $0x88] sm:$0xff]
    %v4755 = vld [vmem:[%s11 + $0x90] sm:$0xff]
    %v4756 = vld [vmem:[%s11 + $0x98] sm:$0xff]
    %v4757 = vld [vmem:[%s12] sm:$0x1f]
    %v4759 = vlaneseq
    %v4760 = vshrl.u32 %v4759, 7
    %v4761 = vsub.s32 0, %v4760
    %v4762 = vrot.slane %v4757, %v4761
    %v4763 = vlaneseq
    %v4764 = vshrl.u32 %v4763, 7
    %v4765 = vsub.s32 1, %v4764
    %v4766 = vrot.slane %v4757, %v4765
    %v4767 = vlaneseq
    %v4768 = vshrl.u32 %v4767, 7
    %v4769 = vsub.s32 2, %v4768
    %v4770 = vrot.slane %v4757, %v4769
    %v4771 = vlaneseq
    %v4772 = vshrl.u32 %v4771, 7
    %v4773 = vsub.s32 3, %v4772
    %v4774 = vrot.slane %v4757, %v4773
    %v4775 = vlaneseq
    %v4776 = vshrl.u32 %v4775, 7
    %v4777 = vsub.s32 4, %v4776
    %v4778 = vrot.slane %v4757, %v4777
    %4785 = vrot.lane.b32.xlu0 %v4731, 64
    %v4786 = vpop.permute.xlu0 %4785
    %v4787 = vsel %vm102, %v4786, 0
    %4789 = vmatprep.subr.mxu0 0.0
    %4790 = vmatpush1.msra.mxu0 0.0
    %4791 = vmatprep.subr.mxu0 0.0
    %4792 = vmatpush1.msra.mxu0 0.0
    %4793 = vmatprep.subr.mxu0 0.0
    %4794 = vmatpush1.msra.mxu0 0.0
    %4795 = vmatprep.subr.mxu0 0.0
    %4796 = vmatpush1.msra.mxu0 0.0
    %4797 = vmatprep.subr.mxu0 0.0
    %4798 = vmatpush1.msra.mxu0 0.0
    %4799 = vmatprep.subr.mxu0 0.0
    %4800 = vmatpush1.msra.mxu0 0.0
    %4801 = vmatprep.subr.mxu0 0.0
    %4802 = vmatpush1.msra.mxu0 0.0
    %4803 = vmatprep.subr.mxu0 0.0
    %4804 = vmatpush1.msra.mxu0 0.0
    %4805 = vmatprep.subr.mxu0 0.0
    %4806 = vmatpush1.msra.mxu0 0.0
    %4807 = vmatprep.subr.mxu0 0.0
    %4808 = vmatpush1.msra.mxu0 0.0
    %4809 = vmatprep.subr.mxu0 0.0
    %4810 = vmatpush1.msra.mxu0 0.0
    %4811 = vmatprep.subr.mxu0 0.0
    %4812 = vmatpush1.msra.mxu0 0.0
    %4813 = vmatprep.subr.mxu0 %v4753
    %4814 = vmatpush1.msra.mxu0 %v4752
    %4815 = vmatprep.subr.mxu0 %v4748
    %4816 = vmatpush1.msra.mxu0 %v4747
    %4817 = vmatprep.subr.mxu0 %v4743
    %4818 = vmatpush1.msra.mxu0 %v4742
    %4819 = vmatprep.subr.mxu0 %v4738
    %4820 = vmatpush1.msra.mxu0 %v4737
    %4821 = vmatprep.subr.mxu0 0.0
    %4822 = vmatpush2.msra.mxu0 0.0
    %4823 = vmatprep.subr.mxu0 0.0
    %4824 = vmatpush2.msra.mxu0 0.0
    %4825 = vmatprep.subr.mxu0 0.0
    %4826 = vmatpush2.msra.mxu0 0.0
    %4827 = vmatprep.subr.mxu0 0.0
    %4828 = vmatpush2.msra.mxu0 0.0
    %4829 = vmatprep.subr.mxu0 0.0
    %4830 = vmatpush2.msra.mxu0 0.0
    %4831 = vmatprep.subr.mxu0 0.0
    %4832 = vmatpush2.msra.mxu0 0.0
    %4833 = vmatprep.subr.mxu0 0.0
    %4834 = vmatpush2.msra.mxu0 0.0
    %4835 = vmatprep.subr.mxu0 0.0
    %4836 = vmatpush2.msra.mxu0 0.0
    %4837 = vmatprep.subr.mxu0 0.0
    %4838 = vmatpush2.msra.mxu0 0.0
    %4839 = vmatprep.subr.mxu0 0.0
    %4840 = vmatpush2.msra.mxu0 0.0
    %4841 = vmatprep.subr.mxu0 0.0
    %4842 = vmatpush2.msra.mxu0 0.0
    %4843 = vmatprep.subr.mxu0 0.0
    %4844 = vmatpush2.msra.mxu0 0.0
    %4845 = vmatprep.subr.mxu0 0.0
    %4846 = vmatpush2.msra.mxu0 0.0
    %4847 = vmatprep.subr.mxu0 0.0
    %4848 = vmatpush2.msra.mxu0 0.0
    %4849 = vmatprep.subr.mxu0 0.0
    %4850 = vmatpush2.msra.mxu0 0.0
    %4851 = vmatprep.subr.mxu0 0.0
    %4852 = vmatpush2.msra.mxu0 0.0
    %4853 = vmatprep.mubr.f32.mxu0 0.0
    %4854 = vmatmul.mubr.f32.gmra.mxu0 %v4787
    %v4855 = vpop.f32.mrf.mxu0
    %v4856 = vadd.f32 %v4762, %v4855
    %v4857 = vpop.f32.mrf.mxu0
    %v4858 = vadd.f32 %v4766, %v4857
    %4859 = vdwg.mxu0
    %4860 = vmatprep.subr.mxu0 0.0
    %4861 = vmatpush1.msra.mxu0 0.0
    %4862 = vmatprep.subr.mxu0 0.0
    %4863 = vmatpush1.msra.mxu0 0.0
    %4864 = vmatprep.subr.mxu0 0.0
    %4865 = vmatpush1.msra.mxu0 0.0
    %4866 = vmatprep.subr.mxu0 0.0
    %4867 = vmatpush1.msra.mxu0 0.0
    %4868 = vmatprep.subr.mxu0 0.0
    %4869 = vmatpush1.msra.mxu0 0.0
    %4870 = vmatprep.subr.mxu0 0.0
    %4871 = vmatpush1.msra.mxu0 0.0
    %4872 = vmatprep.subr.mxu0 0.0
    %4873 = vmatpush1.msra.mxu0 0.0
    %4874 = vmatprep.subr.mxu0 0.0
    %4875 = vmatpush1.msra.mxu0 0.0
    %4876 = vmatprep.subr.mxu0 0.0
    %4877 = vmatpush1.msra.mxu0 0.0
    %4878 = vmatprep.subr.mxu0 0.0
    %4879 = vmatpush1.msra.mxu0 0.0
    %4880 = vmatprep.subr.mxu0 0.0
    %4881 = vmatpush1.msra.mxu0 0.0
    %4882 = vmatprep.subr.mxu0 0.0
    %4883 = vmatpush1.msra.mxu0 0.0
    %4884 = vmatprep.subr.mxu0 %v4755
    %4885 = vmatpush1.msra.mxu0 %v4754
    %4886 = vmatprep.subr.mxu0 %v4750
    %4887 = vmatpush1.msra.mxu0 %v4749
    %4888 = vmatprep.subr.mxu0 %v4745
    %4889 = vmatpush1.msra.mxu0 %v4744
    %4890 = vmatprep.subr.mxu0 %v4740
    %4891 = vmatpush1.msra.mxu0 %v4739
    %4892 = vmatprep.subr.mxu0 0.0
    %4893 = vmatpush2.msra.mxu0 0.0
    %4894 = vmatprep.subr.mxu0 0.0
    %4895 = vmatpush2.msra.mxu0 0.0
    %4896 = vmatprep.subr.mxu0 0.0
    %4897 = vmatpush2.msra.mxu0 0.0
    %4898 = vmatprep.subr.mxu0 0.0
    %4899 = vmatpush2.msra.mxu0 0.0
    %4900 = vmatprep.subr.mxu0 0.0
    %4901 = vmatpush2.msra.mxu0 0.0
    %4902 = vmatprep.subr.mxu0 0.0
    %4903 = vmatpush2.msra.mxu0 0.0
    %4904 = vmatprep.subr.mxu0 0.0
    %4905 = vmatpush2.msra.mxu0 0.0
    %4906 = vmatprep.subr.mxu0 0.0
    %4907 = vmatpush2.msra.mxu0 0.0
    %4908 = vmatprep.subr.mxu0 0.0
    %4909 = vmatpush2.msra.mxu0 0.0
    %4910 = vmatprep.subr.mxu0 0.0
    %4911 = vmatpush2.msra.mxu0 0.0
    %4912 = vmatprep.subr.mxu0 0.0
    %4913 = vmatpush2.msra.mxu0 0.0
    %4914 = vmatprep.subr.mxu0 0.0
    %4915 = vmatpush2.msra.mxu0 0.0
    %4916 = vmatprep.subr.mxu0 0.0
    %4917 = vmatpush2.msra.mxu0 0.0
    %4918 = vmatprep.subr.mxu0 0.0
    %4919 = vmatpush2.msra.mxu0 0.0
    %4920 = vmatprep.subr.mxu0 0.0
    %4921 = vmatpush2.msra.mxu0 0.0
    %4922 = vmatprep.subr.mxu0 0.0
    %4923 = vmatpush2.msra.mxu0 0.0
    %4924 = vmatprep.mubr.f32.mxu0 0.0
    %4925 = vmatmul.mubr.f32.gmra.mxu0 %v4787
    %v4926 = vpop.f32.mrf.mxu0
    %v4927 = vadd.f32 %v4770, %v4926
    %v4928 = vpop.f32.mrf.mxu0
    %v4929 = vadd.f32 %v4774, %v4928
    %4930 = vdwg.mxu0
    %4931 = vmatprep.subr.mxu0 0.0
    %4932 = vmatpush1.msra.mxu0 0.0
    %4933 = vmatprep.subr.mxu0 0.0
    %4934 = vmatpush1.msra.mxu0 0.0
    %4935 = vmatprep.subr.mxu0 0.0
    %4936 = vmatpush1.msra.mxu0 0.0
    %4937 = vmatprep.subr.mxu0 0.0
    %4938 = vmatpush1.msra.mxu0 0.0
    %4939 = vmatprep.subr.mxu0 0.0
    %4940 = vmatpush1.msra.mxu0 0.0
    %4941 = vmatprep.subr.mxu0 0.0
    %4942 = vmatpush1.msra.mxu0 0.0
    %4943 = vmatprep.subr.mxu0 0.0
    %4944 = vmatpush1.msra.mxu0 0.0
    %4945 = vmatprep.subr.mxu0 0.0
    %4946 = vmatpush1.msra.mxu0 0.0
    %4947 = vmatprep.subr.mxu0 0.0
    %4948 = vmatpush1.msra.mxu0 0.0
    %4949 = vmatprep.subr.mxu0 0.0
    %4950 = vmatpush1.msra.mxu0 0.0
    %4951 = vmatprep.subr.mxu0 0.0
    %4952 = vmatpush1.msra.mxu0 0.0
    %4953 = vmatprep.subr.mxu0 0.0
    %4954 = vmatpush1.msra.mxu0 0.0
    %4955 = vmatprep.subr.mxu0 0.0
    %4956 = vmatpush1.msra.mxu0 %v4756
    %4957 = vmatprep.subr.mxu0 0.0
    %4958 = vmatpush1.msra.mxu0 %v4751
    %4959 = vmatprep.subr.mxu0 0.0
    %4960 = vmatpush1.msra.mxu0 %v4746
    %4961 = vmatprep.subr.mxu0 0.0
    %4962 = vmatpush1.msra.mxu0 %v4741
    %4963 = vmatprep.subr.mxu0 0.0
    %4964 = vmatpush2.msra.mxu0 0.0
    %4965 = vmatprep.subr.mxu0 0.0
    %4966 = vmatpush2.msra.mxu0 0.0
    %4967 = vmatprep.subr.mxu0 0.0
    %4968 = vmatpush2.msra.mxu0 0.0
    %4969 = vmatprep.subr.mxu0 0.0
    %4970 = vmatpush2.msra.mxu0 0.0
    %4971 = vmatprep.subr.mxu0 0.0
    %4972 = vmatpush2.msra.mxu0 0.0
    %4973 = vmatprep.subr.mxu0 0.0
    %4974 = vmatpush2.msra.mxu0 0.0
    %4975 = vmatprep.subr.mxu0 0.0
    %4976 = vmatpush2.msra.mxu0 0.0
    %4977 = vmatprep.subr.mxu0 0.0
    %4978 = vmatpush2.msra.mxu0 0.0
    %4979 = vmatprep.subr.mxu0 0.0
    %4980 = vmatpush2.msra.mxu0 0.0
    %4981 = vmatprep.subr.mxu0 0.0
    %4982 = vmatpush2.msra.mxu0 0.0
    %4983 = vmatprep.subr.mxu0 0.0
    %4984 = vmatpush2.msra.mxu0 0.0
    %4985 = vmatprep.subr.mxu0 0.0
    %4986 = vmatpush2.msra.mxu0 0.0
    %4987 = vmatprep.subr.mxu0 0.0
    %4988 = vmatpush2.msra.mxu0 0.0
    %4989 = vmatprep.subr.mxu0 0.0
    %4990 = vmatpush2.msra.mxu0 0.0
    %4991 = vmatprep.subr.mxu0 0.0
    %4992 = vmatpush2.msra.mxu0 0.0
    %4993 = vmatprep.subr.mxu0 0.0
    %4994 = vmatpush2.msra.mxu0 0.0
    %4995 = vmatprep.mubr.f32.mxu0 0.0
    %4996 = vmatmul.mubr.f32.gmra.mxu0 %v4787
    %v4997 = vpop.f32.mrf.mxu0
    %v4998 = vadd.f32 %v4778, %v4997
    %v4999 = vpop.f32.mrf.mxu0
    %5000 = vdwg.mxu0
    %v5001 = vld [vmem:[#allocation3] sm:$0xff]
    %v5002 = vld [vmem:[#allocation3 + $0x8] sm:$0xff]
    %v5003 = vld [vmem:[#allocation3 + $0x10] sm:$0xff]
    %v5004 = vld [vmem:[#allocation3 + $0x18] sm:$0xff]
    %v5005 = vadd.f32 %v5001, %v4856
    %v5006 = vadd.f32 %v5002, %v4858
    %v5007 = vadd.f32 %v5003, %v4927
    %v5008 = vadd.f32 %v5004, %v4929
    %v5009 = vtanh.pop %v5005
    %v5010 = vtanh.pop %v5006
    %v5011 = vtanh.pop %v5007
    %v5012 = vtanh.pop %v5008
    %v5013 = vld [vmem:[#allocation7] sm:$0xff]
    %v5014 = vld [vmem:[#allocation7 + $0x8] sm:$0xff]
    %v5015 = vld [vmem:[#allocation7 + $0x10] sm:$0xff]
    %v5016 = vld [vmem:[#allocation7 + $0x18] sm:$0xff]
    %v5017 = vld [vmem:[#allocation7 + $0x20] sm:$0xff]
    %v5018 = vld [vmem:[#allocation7 + $0x28] sm:$0xff]
    %v5019 = vld [vmem:[#allocation7 + $0x30] sm:$0xff]
    %v5020 = vld [vmem:[#allocation7 + $0x38] sm:$0xff]
    %v5021 = vld [vmem:[#allocation7 + $0x40] sm:$0xff]
    %v5022 = vld [vmem:[#allocation7 + $0x48] sm:$0xff]
    %v5023 = vld [vmem:[#allocation7 + $0x50] sm:$0xff]
    %v5024 = vld [vmem:[#allocation7 + $0x58] sm:$0xff]
    %v5025 = vld [vmem:[#allocation7 + $0x60] sm:$0xff]
    %v5026 = vld [vmem:[#allocation7 + $0x68] sm:$0xff]
    %v5027 = vld [vmem:[#allocation7 + $0x70] sm:$0xff]
    %v5028 = vld [vmem:[#allocation7 + $0x78] sm:$0xff]
    %v5029 = vld [vmem:[#allocation7 + $0x80] sm:$0xff]
    %v5030 = vld [vmem:[#allocation7 + $0x88] sm:$0xff]
    %v5031 = vld [vmem:[#allocation7 + $0x90] sm:$0xff]
    %v5032 = vld [vmem:[#allocation7 + $0x98] sm:$0xff]
    %v5033 = vld [vmem:[#allocation7 + $0xa0] sm:$0xff]
    %v5034 = vld [vmem:[#allocation7 + $0xa8] sm:$0xff]
    %v5035 = vld [vmem:[#allocation7 + $0xb0] sm:$0xff]
    %v5036 = vld [vmem:[#allocation7 + $0xb8] sm:$0xff]
    %v5037 = vld [vmem:[#allocation7 + $0xc0] sm:$0xff]
    %v5038 = vld [vmem:[#allocation7 + $0xc8] sm:$0xff]
    %v5039 = vld [vmem:[#allocation7 + $0xd0] sm:$0xff]
    %v5040 = vld [vmem:[#allocation7 + $0xd8] sm:$0xff]
    %v5041 = vld [vmem:[#allocation7 + $0xe0] sm:$0xff]
    %v5042 = vld [vmem:[#allocation7 + $0xe8] sm:$0xff]
    %v5043 = vld [vmem:[#allocation7 + $0xf0] sm:$0xff]
    %v5044 = vld [vmem:[#allocation7 + $0xf8] sm:$0xff]
    %v5045 = vld [vmem:[#allocation7 + $0x100] sm:$0xff]
    %v5046 = vld [vmem:[#allocation7 + $0x108] sm:$0xff]
    %v5047 = vld [vmem:[#allocation7 + $0x110] sm:$0xff]
    %v5048 = vld [vmem:[#allocation7 + $0x118] sm:$0xff]
    %v5049 = vld [vmem:[#allocation7 + $0x120] sm:$0xff]
    %v5050 = vld [vmem:[#allocation7 + $0x128] sm:$0xff]
    %v5051 = vld [vmem:[#allocation7 + $0x130] sm:$0xff]
    %v5052 = vld [vmem:[#allocation7 + $0x138] sm:$0xff]
    %v5053 = vld [vmem:[#allocation7 + $0x140] sm:$0xff]
    %v5054 = vld [vmem:[#allocation7 + $0x148] sm:$0xff]
    %v5055 = vld [vmem:[#allocation7 + $0x150] sm:$0xff]
    %v5056 = vld [vmem:[#allocation7 + $0x158] sm:$0xff]
    %v5057 = vld [vmem:[#allocation7 + $0x160] sm:$0xff]
    %v5058 = vld [vmem:[#allocation7 + $0x168] sm:$0xff]
    %v5059 = vld [vmem:[#allocation7 + $0x170] sm:$0xff]
    %v5060 = vld [vmem:[#allocation7 + $0x178] sm:$0xff]
    %v5061 = vld [vmem:[#allocation7 + $0x180] sm:$0xff]
    %v5062 = vld [vmem:[#allocation7 + $0x188] sm:$0xff]
    %v5063 = vld [vmem:[#allocation7 + $0x190] sm:$0xff]
    %v5064 = vld [vmem:[#allocation7 + $0x198] sm:$0xff]
    %v5065 = vld [vmem:[#allocation7 + $0x1a0] sm:$0xff]
    %v5066 = vld [vmem:[#allocation7 + $0x1a8] sm:$0xff]
    %v5067 = vld [vmem:[#allocation7 + $0x1b0] sm:$0xff]
    %v5068 = vld [vmem:[#allocation7 + $0x1b8] sm:$0xff]
    %v5069 = vld [vmem:[#allocation7 + $0x1c0] sm:$0xff]
    %v5070 = vld [vmem:[#allocation7 + $0x1c8] sm:$0xff]
    %v5071 = vld [vmem:[#allocation7 + $0x1d0] sm:$0xff]
    %v5072 = vld [vmem:[#allocation7 + $0x1d8] sm:$0xff]
    %v5073 = vld [vmem:[#allocation7 + $0x1e0] sm:$0xff]
    %v5074 = vld [vmem:[#allocation7 + $0x1e8] sm:$0xff]
    %v5075 = vld [vmem:[#allocation7 + $0x1f0] sm:$0xff]
    %v5076 = vld [vmem:[#allocation7 + $0x1f8] sm:$0xff]
    %v5077 = vld [vmem:[%s14] sm:$0x1]
    %v5079 = vlaneseq
    %v5080 = vshrl.u32 %v5079, 7
    %v5081 = vsub.s32 0, %v5080
    %v5082 = vrot.slane %v5077, %v5081
    %5084 = vmatprep.subr.mxu0 0.0
    %5085 = vmatpush1.msra.mxu0 %v5028
    %5086 = vmatprep.subr.mxu0 0.0
    %5087 = vmatpush1.msra.mxu0 %v5027
    %5088 = vmatprep.subr.mxu0 0.0
    %5089 = vmatpush1.msra.mxu0 %v5026
    %5090 = vmatprep.subr.mxu0 0.0
    %5091 = vmatpush1.msra.mxu0 %v5025
    %5092 = vmatprep.subr.mxu0 0.0
    %5093 = vmatpush1.msra.mxu0 %v5024
    %5094 = vmatprep.subr.mxu0 0.0
    %5095 = vmatpush1.msra.mxu0 %v5023
    %5096 = vmatprep.subr.mxu0 0.0
    %5097 = vmatpush1.msra.mxu0 %v5022
    %5098 = vmatprep.subr.mxu0 0.0
    %5099 = vmatpush1.msra.mxu0 %v5021
    %5100 = vmatprep.subr.mxu0 0.0
    %5101 = vmatpush1.msra.mxu0 %v5020
    %5102 = vmatprep.subr.mxu0 0.0
    %5103 = vmatpush1.msra.mxu0 %v5019
    %5104 = vmatprep.subr.mxu0 0.0
    %5105 = vmatpush1.msra.mxu0 %v5018
    %5106 = vmatprep.subr.mxu0 0.0
    %5107 = vmatpush1.msra.mxu0 %v5017
    %5108 = vmatprep.subr.mxu0 0.0
    %5109 = vmatpush1.msra.mxu0 %v5016
    %5110 = vmatprep.subr.mxu0 0.0
    %5111 = vmatpush1.msra.mxu0 %v5015
    %5112 = vmatprep.subr.mxu0 0.0
    %5113 = vmatpush1.msra.mxu0 %v5014
    %5114 = vmatprep.subr.mxu0 0.0
    %5115 = vmatpush1.msra.mxu0 %v5013
    %5116 = vmatprep.subr.mxu0 0.0
    %5117 = vmatpush2.msra.mxu0 %v5044
    %5118 = vmatprep.subr.mxu0 0.0
    %5119 = vmatpush2.msra.mxu0 %v5043
    %5120 = vmatprep.subr.mxu0 0.0
    %5121 = vmatpush2.msra.mxu0 %v5042
    %5122 = vmatprep.subr.mxu0 0.0
    %5123 = vmatpush2.msra.mxu0 %v5041
    %5124 = vmatprep.subr.mxu0 0.0
    %5125 = vmatpush2.msra.mxu0 %v5040
    %5126 = vmatprep.subr.mxu0 0.0
    %5127 = vmatpush2.msra.mxu0 %v5039
    %5128 = vmatprep.subr.mxu0 0.0
    %5129 = vmatpush2.msra.mxu0 %v5038
    %5130 = vmatprep.subr.mxu0 0.0
    %5131 = vmatpush2.msra.mxu0 %v5037
    %5132 = vmatprep.subr.mxu0 0.0
    %5133 = vmatpush2.msra.mxu0 %v5036
    %5134 = vmatprep.subr.mxu0 0.0
    %5135 = vmatpush2.msra.mxu0 %v5035
    %5136 = vmatprep.subr.mxu0 0.0
    %5137 = vmatpush2.msra.mxu0 %v5034
    %5138 = vmatprep.subr.mxu0 0.0
    %5139 = vmatpush2.msra.mxu0 %v5033
    %5140 = vmatprep.subr.mxu0 0.0
    %5141 = vmatpush2.msra.mxu0 %v5032
    %5142 = vmatprep.subr.mxu0 0.0
    %5143 = vmatpush2.msra.mxu0 %v5031
    %5144 = vmatprep.subr.mxu0 0.0
    %5145 = vmatpush2.msra.mxu0 %v5030
    %5146 = vmatprep.subr.mxu0 0.0
    %5147 = vmatpush2.msra.mxu0 %v5029
    %5148 = vmatprep.mubr.f32.mxu0 %v5010
    %5149 = vmatmul.mubr.f32.gmra.mxu0 %v5009
    %v5150 = vpop.f32.mrf.mxu0
    %v5151 = vadd.f32 %v5082, %v5150
    %v5152 = vpop.f32.mrf.mxu0
    %5153 = vdwg.mxu0
    %5154 = vmatprep.subr.mxu0 0.0
    %5155 = vmatpush1.msra.mxu0 %v5060
    %5156 = vmatprep.subr.mxu0 0.0
    %5157 = vmatpush1.msra.mxu0 %v5059
    %5158 = vmatprep.subr.mxu0 0.0
    %5159 = vmatpush1.msra.mxu0 %v5058
    %5160 = vmatprep.subr.mxu0 0.0
    %5161 = vmatpush1.msra.mxu0 %v5057
    %5162 = vmatprep.subr.mxu0 0.0
    %5163 = vmatpush1.msra.mxu0 %v5056
    %5164 = vmatprep.subr.mxu0 0.0
    %5165 = vmatpush1.msra.mxu0 %v5055
    %5166 = vmatprep.subr.mxu0 0.0
    %5167 = vmatpush1.msra.mxu0 %v5054
    %5168 = vmatprep.subr.mxu0 0.0
    %5169 = vmatpush1.msra.mxu0 %v5053
    %5170 = vmatprep.subr.mxu0 0.0
    %5171 = vmatpush1.msra.mxu0 %v5052
    %5172 = vmatprep.subr.mxu0 0.0
    %5173 = vmatpush1.msra.mxu0 %v5051
    %5174 = vmatprep.subr.mxu0 0.0
    %5175 = vmatpush1.msra.mxu0 %v5050
    %5176 = vmatprep.subr.mxu0 0.0
    %5177 = vmatpush1.msra.mxu0 %v5049
    %5178 = vmatprep.subr.mxu0 0.0
    %5179 = vmatpush1.msra.mxu0 %v5048
    %5180 = vmatprep.subr.mxu0 0.0
    %5181 = vmatpush1.msra.mxu0 %v5047
    %5182 = vmatprep.subr.mxu0 0.0
    %5183 = vmatpush1.msra.mxu0 %v5046
    %5184 = vmatprep.subr.mxu0 0.0
    %5185 = vmatpush1.msra.mxu0 %v5045
    %5186 = vmatprep.subr.mxu0 0.0
    %5187 = vmatpush2.msra.mxu0 %v5076
    %5188 = vmatprep.subr.mxu0 0.0
    %5189 = vmatpush2.msra.mxu0 %v5075
    %5190 = vmatprep.subr.mxu0 0.0
    %5191 = vmatpush2.msra.mxu0 %v5074
    %5192 = vmatprep.subr.mxu0 0.0
    %5193 = vmatpush2.msra.mxu0 %v5073
    %5194 = vmatprep.subr.mxu0 0.0
    %5195 = vmatpush2.msra.mxu0 %v5072
    %5196 = vmatprep.subr.mxu0 0.0
    %5197 = vmatpush2.msra.mxu0 %v5071
    %5198 = vmatprep.subr.mxu0 0.0
    %5199 = vmatpush2.msra.mxu0 %v5070
    %5200 = vmatprep.subr.mxu0 0.0
    %5201 = vmatpush2.msra.mxu0 %v5069
    %5202 = vmatprep.subr.mxu0 0.0
    %5203 = vmatpush2.msra.mxu0 %v5068
    %5204 = vmatprep.subr.mxu0 0.0
    %5205 = vmatpush2.msra.mxu0 %v5067
    %5206 = vmatprep.subr.mxu0 0.0
    %5207 = vmatpush2.msra.mxu0 %v5066
    %5208 = vmatprep.subr.mxu0 0.0
    %5209 = vmatpush2.msra.mxu0 %v5065
    %5210 = vmatprep.subr.mxu0 0.0
    %5211 = vmatpush2.msra.mxu0 %v5064
    %5212 = vmatprep.subr.mxu0 0.0
    %5213 = vmatpush2.msra.mxu0 %v5063
    %5214 = vmatprep.subr.mxu0 0.0
    %5215 = vmatpush2.msra.mxu0 %v5062
    %5216 = vmatprep.subr.mxu0 0.0
    %5217 = vmatpush2.msra.mxu0 %v5061
    %5218 = vmatprep.mubr.f32.mxu0 %v5012
    %5219 = vmatmul.mubr.f32.gmra.mxu0 %v5011
    %v5220 = vpop.f32.mrf.mxu0
    %v5221 = vadd.f32 %v5151, %v5220
    %v5222 = vpop.f32.mrf.mxu0
    %5223 = vdwg.mxu0
    %5224 = vmax.xlane.f32.xlu0 %v5221
    %v5225 = vpop.xlane.xlu0 %5224
    %v5226 = vsub.f32 %v5221, %v5225
    %v5227 = vmul.f32 %v5226, 1.442695
    %v5228 = vpow.pop %v5227
    %5229 = vadd.xlane.f32.xlu0 %v5228
    %v5230 = vpop.xlane.xlu0 %5229
    %v5231 = vrcp.pop %v5230
    %v5232 = vmul.f32 %v5228, %v5231
    %v5233 = vlaneseq
    %v5234 = vshrl.u32 %v5233, 7
    %v5235 = vsub.s32 0, %v5234
    %v5236 = vrot.slane %v5232, %v5235
    %5238 = vbcast.lane.b32.xlu0 %v5236, 256
    %v5239 = vpop.permute.xlu0 %5238
    %s5241 = sor.u32 256, 8
    %5242 = vbcast.lane.b32.xlu0 %v5236, %s5241
    %v5243 = vpop.permute.xlu0 %5242
    %v5244 = vlaneseq
    %v5245 = vshrl.u32 %v5244, 7
    %v5246 = vsub.s32 1, %v5245
    %v5247 = vrot.slane %v5232, %v5246
    %5249 = vbcast.lane.b32.xlu0 %v5247, 256
    %v5250 = vpop.permute.xlu0 %5249
    %s5252 = sor.u32 256, 8
    %5253 = vbcast.lane.b32.xlu0 %v5247, %s5252
    %v5254 = vpop.permute.xlu0 %5253
    %v5255 = vlaneseq
    %v5256 = vshrl.u32 %v5255, 7
    %v5257 = vsub.s32 2, %v5256
    %v5258 = vrot.slane %v5232, %v5257
    %5260 = vbcast.lane.b32.xlu0 %v5258, 256
    %v5261 = vpop.permute.xlu0 %5260
    %s5263 = sor.u32 256, 8
    %5264 = vbcast.lane.b32.xlu0 %v5258, %s5263
    %v5265 = vpop.permute.xlu0 %5264
    %v5266 = vlaneseq
    %v5267 = vshrl.u32 %v5266, 7
    %v5268 = vsub.s32 3, %v5267
    %v5269 = vrot.slane %v5232, %v5268
    %5271 = vbcast.lane.b32.xlu0 %v5269, 256
    %v5272 = vpop.permute.xlu0 %5271
    %s5274 = sor.u32 256, 8
    %5275 = vbcast.lane.b32.xlu0 %v5269, %s5274
    %v5276 = vpop.permute.xlu0 %5275
    %v5277 = vlaneseq
    %v5278 = vshrl.u32 %v5277, 7
    %v5279 = vsub.s32 4, %v5278
    %v5280 = vrot.slane %v5232, %v5279
    %5282 = vbcast.lane.b32.xlu0 %v5280, 256
    %v5283 = vpop.permute.xlu0 %5282
    %s5285 = sor.u32 256, 8
    %5286 = vbcast.lane.b32.xlu0 %v5280, %s5285
    %v5287 = vpop.permute.xlu0 %5286
    %v5288 = vlaneseq
    %v5289 = vshrl.u32 %v5288, 7
    %v5290 = vsub.s32 5, %v5289
    %v5291 = vrot.slane %v5232, %v5290
    %5293 = vbcast.lane.b32.xlu0 %v5291, 256
    %v5294 = vpop.permute.xlu0 %5293
    %s5296 = sor.u32 256, 8
    %5297 = vbcast.lane.b32.xlu0 %v5291, %s5296
    %v5298 = vpop.permute.xlu0 %5297
    %v5299 = vlaneseq
    %v5300 = vshrl.u32 %v5299, 7
    %v5301 = vsub.s32 6, %v5300
    %v5302 = vrot.slane %v5232, %v5301
    %5304 = vbcast.lane.b32.xlu0 %v5302, 256
    %v5305 = vpop.permute.xlu0 %5304
    %s5307 = sor.u32 256, 8
    %5308 = vbcast.lane.b32.xlu0 %v5302, %s5307
    %v5309 = vpop.permute.xlu0 %5308
    %v5310 = vlaneseq
    %v5311 = vshrl.u32 %v5310, 7
    %v5312 = vsub.s32 7, %v5311
    %v5313 = vrot.slane %v5232, %v5312
    %5315 = vbcast.lane.b32.xlu0 %v5313, 256
    %v5316 = vpop.permute.xlu0 %5315
    %s5318 = sor.u32 256, 8
    %5319 = vbcast.lane.b32.xlu0 %v5313, %s5318
    %v5320 = vpop.permute.xlu0 %5319
    %v5321 = vld [vmem:[%s4] sm:$0xff]
    %v5322 = vld [vmem:[%s4 + $0x8] sm:$0xff]
    %v5323 = vld [vmem:[%s4 + $0x10] sm:$0xff]
    %v5324 = vld [vmem:[%s4 + $0x18] sm:$0xff]
    %v5325 = vld [vmem:[%s4 + $0x20] sm:$0xff]
    %v5326 = vld [vmem:[%s4 + $0x28] sm:$0xff]
    %v5327 = vld [vmem:[%s4 + $0x30] sm:$0xff]
    %v5328 = vld [vmem:[%s4 + $0x38] sm:$0xff]
    %v5329 = vld [vmem:[%s4 + $0x40] sm:$0xff]
    %v5330 = vld [vmem:[%s4 + $0x48] sm:$0xff]
    %v5331 = vld [vmem:[%s4 + $0x50] sm:$0xff]
    %v5332 = vld [vmem:[%s4 + $0x58] sm:$0xff]
    %v5333 = vld [vmem:[%s4 + $0x60] sm:$0xff]
    %v5334 = vld [vmem:[%s4 + $0x68] sm:$0xff]
    %v5335 = vld [vmem:[%s4 + $0x70] sm:$0xff]
    %v5336 = vld [vmem:[%s4 + $0x78] sm:$0xff]
    %v5337 = vmul.f32 %v5239, %v5321
    %v5338 = vmul.f32 %v5243, %v5322
    %v5339 = vmul.f32 %v5250, %v5323
    %v5340 = vmul.f32 %v5254, %v5324
    %v5341 = vmul.f32 %v5261, %v5325
    %v5342 = vmul.f32 %v5265, %v5326
    %v5343 = vmul.f32 %v5272, %v5327
    %v5344 = vmul.f32 %v5276, %v5328
    %v5345 = vmul.f32 %v5283, %v5329
    %v5346 = vmul.f32 %v5287, %v5330
    %v5347 = vmul.f32 %v5294, %v5331
    %v5348 = vmul.f32 %v5298, %v5332
    %v5349 = vmul.f32 %v5305, %v5333
    %v5350 = vmul.f32 %v5309, %v5334
    %v5351 = vmul.f32 %v5316, %v5335
    %v5352 = vmul.f32 %v5320, %v5336
    %v5353 = vsel %vm102, %v5337, 0.0
    %v5354 = vsel %vm102, %v5338, 0.0
    %v5355 = vadd.f32 %v5353, %v5354
    %v5356 = vrot.slane %v5355, 4
    %v5357 = vadd.f32 %v5355, %v5356
    %v5358 = vrot.slane %v5357, 2
    %v5359 = vadd.f32 %v5357, %v5358
    %v5360 = vrot.slane %v5359, 1
    %v5361 = vadd.f32 %v5359, %v5360
    %v5362 = vsel %vm102, %v5339, 0.0
    %v5363 = vsel %vm102, %v5340, 0.0
    %v5364 = vadd.f32 %v5362, %v5363
    %v5365 = vrot.slane %v5364, 4
    %v5366 = vadd.f32 %v5364, %v5365
    %v5367 = vrot.slane %v5366, 2
    %v5368 = vadd.f32 %v5366, %v5367
    %v5369 = vrot.slane %v5368, 1
    %v5370 = vadd.f32 %v5368, %v5369
    %v5371 = vsel %vm102, %v5341, 0.0
    %v5372 = vsel %vm102, %v5342, 0.0
    %v5373 = vadd.f32 %v5371, %v5372
    %v5374 = vrot.slane %v5373, 4
    %v5375 = vadd.f32 %v5373, %v5374
    %v5376 = vrot.slane %v5375, 2
    %v5377 = vadd.f32 %v5375, %v5376
    %v5378 = vrot.slane %v5377, 1
    %v5379 = vadd.f32 %v5377, %v5378
    %v5380 = vsel %vm102, %v5343, 0.0
    %v5381 = vsel %vm102, %v5344, 0.0
    %v5382 = vadd.f32 %v5380, %v5381
    %v5383 = vrot.slane %v5382, 4
    %v5384 = vadd.f32 %v5382, %v5383
    %v5385 = vrot.slane %v5384, 2
    %v5386 = vadd.f32 %v5384, %v5385
    %v5387 = vrot.slane %v5386, 1
    %v5388 = vadd.f32 %v5386, %v5387
    %v5389 = vsel %vm102, %v5345, 0.0
    %v5390 = vsel %vm102, %v5346, 0.0
    %v5391 = vadd.f32 %v5389, %v5390
    %v5392 = vrot.slane %v5391, 4
    %v5393 = vadd.f32 %v5391, %v5392
    %v5394 = vrot.slane %v5393, 2
    %v5395 = vadd.f32 %v5393, %v5394
    %v5396 = vrot.slane %v5395, 1
    %v5397 = vadd.f32 %v5395, %v5396
    %v5398 = vsel %vm102, %v5347, 0.0
    %v5399 = vsel %vm102, %v5348, 0.0
    %v5400 = vadd.f32 %v5398, %v5399
    %v5401 = vrot.slane %v5400, 4
    %v5402 = vadd.f32 %v5400, %v5401
    %v5403 = vrot.slane %v5402, 2
    %v5404 = vadd.f32 %v5402, %v5403
    %v5405 = vrot.slane %v5404, 1
    %v5406 = vadd.f32 %v5404, %v5405
    %v5407 = vsel %vm102, %v5349, 0.0
    %v5408 = vsel %vm102, %v5350, 0.0
    %v5409 = vadd.f32 %v5407, %v5408
    %v5410 = vrot.slane %v5409, 4
    %v5411 = vadd.f32 %v5409, %v5410
    %v5412 = vrot.slane %v5411, 2
    %v5413 = vadd.f32 %v5411, %v5412
    %v5414 = vrot.slane %v5413, 1
    %v5415 = vadd.f32 %v5413, %v5414
    %v5416 = vsel %vm102, %v5351, 0.0
    %v5417 = vsel %vm102, %v5352, 0.0
    %v5418 = vadd.f32 %v5416, %v5417
    %v5419 = vrot.slane %v5418, 4
    %v5420 = vadd.f32 %v5418, %v5419
    %v5421 = vrot.slane %v5420, 2
    %v5422 = vadd.f32 %v5420, %v5421
    %v5423 = vrot.slane %v5422, 1
    %v5424 = vadd.f32 %v5422, %v5423
    %v5425 = vadd.f32 %v4736, %v4998
    %v5426 = vld [vmem:[%s15] sm:$0xff]
    %v5427 = vld [vmem:[%s15 + $0x8] sm:$0xff]
    %v5428 = vld [vmem:[%s15 + $0x10] sm:$0xff]
    %v5429 = vld [vmem:[%s15 + $0x18] sm:$0xff]
    %v5438 = vsel %vm1740, %v5370, %v5361
    %v5439 = vsel %vm1742, %v5379, %v5438
    %v5440 = vsel %vm1744, %v5388, %v5439
    %v5441 = vsel %vm1746, %v5397, %v5440
    %v5442 = vsel %vm1748, %v5406, %v5441
    %v5443 = vsel %vm1750, %v5415, %v5442
    %v5444 = vsel %vm1752, %v5424, %v5443
    %v5445 = vsel %vm102, %v5444, 0
    %5447 = vmatprep.subr.mxu0 0.0
    %5448 = vmatpush1.msra.mxu0 0.0
    %5449 = vmatprep.subr.mxu0 0.0
    %5450 = vmatpush1.msra.mxu0 0.0
    %5451 = vmatprep.subr.mxu0 0.0
    %5452 = vmatpush1.msra.mxu0 0.0
    %5453 = vmatprep.subr.mxu0 0.0
    %5454 = vmatpush1.msra.mxu0 0.0
    %5455 = vmatprep.subr.mxu0 0.0
    %5456 = vmatpush1.msra.mxu0 0.0
    %5457 = vmatprep.subr.mxu0 0.0
    %5458 = vmatpush1.msra.mxu0 0.0
    %5459 = vmatprep.subr.mxu0 0.0
    %5460 = vmatpush1.msra.mxu0 0.0
    %5461 = vmatprep.subr.mxu0 0.0
    %5462 = vmatpush1.msra.mxu0 0.0
    %5463 = vmatprep.subr.mxu0 0.0
    %5464 = vmatpush1.msra.mxu0 0.0
    %5465 = vmatprep.subr.mxu0 0.0
    %5466 = vmatpush1.msra.mxu0 0.0
    %5467 = vmatprep.subr.mxu0 0.0
    %5468 = vmatpush1.msra.mxu0 0.0
    %5469 = vmatprep.subr.mxu0 0.0
    %5470 = vmatpush1.msra.mxu0 0.0
    %5471 = vmatprep.subr.mxu0 0.0
    %5472 = vmatpush1.msra.mxu0 %v5429
    %5473 = vmatprep.subr.mxu0 0.0
    %5474 = vmatpush1.msra.mxu0 %v5428
    %5475 = vmatprep.subr.mxu0 0.0
    %5476 = vmatpush1.msra.mxu0 %v5427
    %5477 = vmatprep.subr.mxu0 0.0
    %5478 = vmatpush1.msra.mxu0 %v5426
    %5479 = vmatprep.subr.mxu0 0.0
    %5480 = vmatpush2.msra.mxu0 0.0
    %5481 = vmatprep.subr.mxu0 0.0
    %5482 = vmatpush2.msra.mxu0 0.0
    %5483 = vmatprep.subr.mxu0 0.0
    %5484 = vmatpush2.msra.mxu0 0.0
    %5485 = vmatprep.subr.mxu0 0.0
    %5486 = vmatpush2.msra.mxu0 0.0
    %5487 = vmatprep.subr.mxu0 0.0
    %5488 = vmatpush2.msra.mxu0 0.0
    %5489 = vmatprep.subr.mxu0 0.0
    %5490 = vmatpush2.msra.mxu0 0.0
    %5491 = vmatprep.subr.mxu0 0.0
    %5492 = vmatpush2.msra.mxu0 0.0
    %5493 = vmatprep.subr.mxu0 0.0
    %5494 = vmatpush2.msra.mxu0 0.0
    %5495 = vmatprep.subr.mxu0 0.0
    %5496 = vmatpush2.msra.mxu0 0.0
    %5497 = vmatprep.subr.mxu0 0.0
    %5498 = vmatpush2.msra.mxu0 0.0
    %5499 = vmatprep.subr.mxu0 0.0
    %5500 = vmatpush2.msra.mxu0 0.0
    %5501 = vmatprep.subr.mxu0 0.0
    %5502 = vmatpush2.msra.mxu0 0.0
    %5503 = vmatprep.subr.mxu0 0.0
    %5504 = vmatpush2.msra.mxu0 0.0
    %5505 = vmatprep.subr.mxu0 0.0
    %5506 = vmatpush2.msra.mxu0 0.0
    %5507 = vmatprep.subr.mxu0 0.0
    %5508 = vmatpush2.msra.mxu0 0.0
    %5509 = vmatprep.subr.mxu0 0.0
    %5510 = vmatpush2.msra.mxu0 0.0
    %5511 = vmatprep.mubr.f32.mxu0 0.0
    %5512 = vmatmul.mubr.f32.gmra.mxu0 %v5445
    %v5513 = vpop.f32.mrf.mxu0
    %v5514 = vadd.f32 0.0, %v5513
    %v5515 = vpop.f32.mrf.mxu0
    %5516 = vdwg.mxu0
    %v5517 = vadd.f32 %v5425, %v5514
    %v5518 = vxor.u32 %v5517, 2147483648
    %v5519 = vmul.f32 %v5518, 1.442695
    %v5520 = vpow.pop %v5519
    %v5521 = vadd.f32 %v5520, 1.0
    %v5522 = vrcp.pop %v5521
    %v5523 = vmul.f32 1.0, %v5522
    %v5524 = vtanh.pop %v5517
    %v5525 = vmul.f32 %v5523, %v4734
    %5527 = vrot.lane.b32.xlu0 %v5524, 32
    %v5528 = vpop.permute.xlu0 %5527
    %v5530 = vmul.f32 %v5523, %v5528
    %5532 = vrot.lane.b32.xlu0 %v5530, 32
    %v5533 = vpop.permute.xlu0 %5532
    %v5535 = vadd.f32 %v5525, %v5533
    %v5536 = vtanh.pop %v5535
    %5538 = vrot.lane.b32.xlu0 %v5536, 32
    %v5539 = vpop.permute.xlu0 %5538
    %v5541 = vmul.f32 %v5523, %v5539
    %v5542 = vld [vmem:[%s16] sm:$0xff]
    %v5543 = vld [vmem:[%s16 + $0x8] sm:$0xff]
    %v5544 = vld [vmem:[%s16 + $0x10] sm:$0xff]
    %v5545 = vld [vmem:[%s16 + $0x18] sm:$0xff]
    %v5546 = vld [vmem:[%s17] sm:$0x1]
    %v5548 = vlaneseq
    %v5549 = vshrl.u32 %v5548, 7
    %v5550 = vsub.s32 0, %v5549
    %v5551 = vrot.slane %v5546, %v5550
    %5554 = vrot.lane.b32.xlu0 %v5541, 64
    %v5555 = vpop.permute.xlu0 %5554
    %v5556 = vsel %vm102, %v5555, 0
    %5558 = vmatprep.subr.mxu0 0.0
    %5559 = vmatpush1.msra.mxu0 0.0
    %5560 = vmatprep.subr.mxu0 0.0
    %5561 = vmatpush1.msra.mxu0 0.0
    %5562 = vmatprep.subr.mxu0 0.0
    %5563 = vmatpush1.msra.mxu0 0.0
    %5564 = vmatprep.subr.mxu0 0.0
    %5565 = vmatpush1.msra.mxu0 0.0
    %5566 = vmatprep.subr.mxu0 0.0
    %5567 = vmatpush1.msra.mxu0 0.0
    %5568 = vmatprep.subr.mxu0 0.0
    %5569 = vmatpush1.msra.mxu0 0.0
    %5570 = vmatprep.subr.mxu0 0.0
    %5571 = vmatpush1.msra.mxu0 0.0
    %5572 = vmatprep.subr.mxu0 0.0
    %5573 = vmatpush1.msra.mxu0 0.0
    %5574 = vmatprep.subr.mxu0 0.0
    %5575 = vmatpush1.msra.mxu0 0.0
    %5576 = vmatprep.subr.mxu0 0.0
    %5577 = vmatpush1.msra.mxu0 0.0
    %5578 = vmatprep.subr.mxu0 0.0
    %5579 = vmatpush1.msra.mxu0 0.0
    %5580 = vmatprep.subr.mxu0 0.0
    %5581 = vmatpush1.msra.mxu0 0.0
    %5582 = vmatprep.subr.mxu0 0.0
    %5583 = vmatpush1.msra.mxu0 %v5545
    %5584 = vmatprep.subr.mxu0 0.0
    %5585 = vmatpush1.msra.mxu0 %v5544
    %5586 = vmatprep.subr.mxu0 0.0
    %5587 = vmatpush1.msra.mxu0 %v5543
    %5588 = vmatprep.subr.mxu0 0.0
    %5589 = vmatpush1.msra.mxu0 %v5542
    %5590 = vmatprep.subr.mxu0 0.0
    %5591 = vmatpush2.msra.mxu0 0.0
    %5592 = vmatprep.subr.mxu0 0.0
    %5593 = vmatpush2.msra.mxu0 0.0
    %5594 = vmatprep.subr.mxu0 0.0
    %5595 = vmatpush2.msra.mxu0 0.0
    %5596 = vmatprep.subr.mxu0 0.0
    %5597 = vmatpush2.msra.mxu0 0.0
    %5598 = vmatprep.subr.mxu0 0.0
    %5599 = vmatpush2.msra.mxu0 0.0
    %5600 = vmatprep.subr.mxu0 0.0
    %5601 = vmatpush2.msra.mxu0 0.0
    %5602 = vmatprep.subr.mxu0 0.0
    %5603 = vmatpush2.msra.mxu0 0.0
    %5604 = vmatprep.subr.mxu0 0.0
    %5605 = vmatpush2.msra.mxu0 0.0
    %5606 = vmatprep.subr.mxu0 0.0
    %5607 = vmatpush2.msra.mxu0 0.0
    %5608 = vmatprep.subr.mxu0 0.0
    %5609 = vmatpush2.msra.mxu0 0.0
    %5610 = vmatprep.subr.mxu0 0.0
    %5611 = vmatpush2.msra.mxu0 0.0
    %5612 = vmatprep.subr.mxu0 0.0
    %5613 = vmatpush2.msra.mxu0 0.0
    %5614 = vmatprep.subr.mxu0 0.0
    %5615 = vmatpush2.msra.mxu0 0.0
    %5616 = vmatprep.subr.mxu0 0.0
    %5617 = vmatpush2.msra.mxu0 0.0
    %5618 = vmatprep.subr.mxu0 0.0
    %5619 = vmatpush2.msra.mxu0 0.0
    %5620 = vmatprep.subr.mxu0 0.0
    %5621 = vmatpush2.msra.mxu0 0.0
    %5622 = vmatprep.mubr.f32.mxu0 0.0
    %5623 = vmatmul.mubr.f32.gmra.mxu0 %v5556
    %v5624 = vpop.f32.mrf.mxu0
    %v5625 = vadd.f32 %v5551, %v5624
    %v5626 = vpop.f32.mrf.mxu0
    %5627 = vdwg.mxu0
    %5628 = vmax.xlane.f32.xlu0 %v5625
    %v5629 = vpop.xlane.xlu0 %5628
    %v5630 = vsub.f32 %v5625, %v5629
    %v5631 = vmul.f32 %v5630, 1.442695
    %v5632 = vpow.pop %v5631
    %5633 = vadd.xlane.f32.xlu0 %v5632
    %v5634 = vpop.xlane.xlu0 %5633
    %v5635 = vlog2.pop %v5634
    %v5636 = vmul.f32 %v5635, 0.6931472
    %v5637 = vsub.f32 %v5630, %v5636
    %p5638 = scmp.gt.s32.totalorder %s1039, 4
    %s5639 = scalar_select %p5638, 1, 0
    %s5640 = scvt.s32.f32 %s5639
    %v5641 = vstv %s5640
    %v5642 = vmul.f32 %v5641, %v5232
    %s5643 = scalar_lea.vmem %s18, 32
    %5644 = vst [vmem:[%s5643] sm:$0xff] %v5642
    %v5645 = vmul.f32 %v5641, %v5637
    %s5646 = scalar_lea.vmem %s19, 32
    %5647 = vst [vmem:[%s5646] sm:$0xff] %v5645
    %v5648 = vmul.f32 %v5641, %v5541
    %s5649 = ssub.f32 1.0, %s5640
    %v5650 = vstv %s5649
    %v5651 = vmul.f32 %v5650, %v4731
    %v5652 = vadd.f32 %v5648, %v5651
    %v5653 = vmul.f32 %v5641, %v5535
    %v5654 = vmul.f32 %v5650, %v4734
    %v5655 = vadd.f32 %v5653, %v5654
    %s5656 = scalar_lea.vmem [#allocation2], 40
    %v5657 = vld [vmem:[%s5656] sm:$0xff]
    %v5658 = vld [vmem:[%s11] sm:$0xff]
    %v5659 = vld [vmem:[%s11 + $0x8] sm:$0xff]
    %v5660 = vld [vmem:[%s11 + $0x10] sm:$0xff]
    %v5661 = vld [vmem:[%s11 + $0x18] sm:$0xff]
    %v5662 = vld [vmem:[%s11 + $0x20] sm:$0xff]
    %v5663 = vld [vmem:[%s11 + $0x28] sm:$0xff]
    %v5664 = vld [vmem:[%s11 + $0x30] sm:$0xff]
    %v5665 = vld [vmem:[%s11 + $0x38] sm:$0xff]
    %v5666 = vld [vmem:[%s11 + $0x40] sm:$0xff]
    %v5667 = vld [vmem:[%s11 + $0x48] sm:$0xff]
    %v5668 = vld [vmem:[%s11 + $0x50] sm:$0xff]
    %v5669 = vld [vmem:[%s11 + $0x58] sm:$0xff]
    %v5670 = vld [vmem:[%s11 + $0x60] sm:$0xff]
    %v5671 = vld [vmem:[%s11 + $0x68] sm:$0xff]
    %v5672 = vld [vmem:[%s11 + $0x70] sm:$0xff]
    %v5673 = vld [vmem:[%s11 + $0x78] sm:$0xff]
    %v5674 = vld [vmem:[%s11 + $0x80] sm:$0xff]
    %v5675 = vld [vmem:[%s11 + $0x88] sm:$0xff]
    %v5676 = vld [vmem:[%s11 + $0x90] sm:$0xff]
    %v5677 = vld [vmem:[%s11 + $0x98] sm:$0xff]
    %v5678 = vld [vmem:[%s12] sm:$0x1f]
    %v5680 = vlaneseq
    %v5681 = vshrl.u32 %v5680, 7
    %v5682 = vsub.s32 0, %v5681
    %v5683 = vrot.slane %v5678, %v5682
    %v5684 = vlaneseq
    %v5685 = vshrl.u32 %v5684, 7
    %v5686 = vsub.s32 1, %v5685
    %v5687 = vrot.slane %v5678, %v5686
    %v5688 = vlaneseq
    %v5689 = vshrl.u32 %v5688, 7
    %v5690 = vsub.s32 2, %v5689
    %v5691 = vrot.slane %v5678, %v5690
    %v5692 = vlaneseq
    %v5693 = vshrl.u32 %v5692, 7
    %v5694 = vsub.s32 3, %v5693
    %v5695 = vrot.slane %v5678, %v5694
    %v5696 = vlaneseq
    %v5697 = vshrl.u32 %v5696, 7
    %v5698 = vsub.s32 4, %v5697
    %v5699 = vrot.slane %v5678, %v5698
    %5706 = vrot.lane.b32.xlu0 %v5652, 64
    %v5707 = vpop.permute.xlu0 %5706
    %v5708 = vsel %vm102, %v5707, 0
    %5710 = vmatprep.subr.mxu0 0.0
    %5711 = vmatpush1.msra.mxu0 0.0
    %5712 = vmatprep.subr.mxu0 0.0
    %5713 = vmatpush1.msra.mxu0 0.0
    %5714 = vmatprep.subr.mxu0 0.0
    %5715 = vmatpush1.msra.mxu0 0.0
    %5716 = vmatprep.subr.mxu0 0.0
    %5717 = vmatpush1.msra.mxu0 0.0
    %5718 = vmatprep.subr.mxu0 0.0
    %5719 = vmatpush1.msra.mxu0 0.0
    %5720 = vmatprep.subr.mxu0 0.0
    %5721 = vmatpush1.msra.mxu0 0.0
    %5722 = vmatprep.subr.mxu0 0.0
    %5723 = vmatpush1.msra.mxu0 0.0
    %5724 = vmatprep.subr.mxu0 0.0
    %5725 = vmatpush1.msra.mxu0 0.0
    %5726 = vmatprep.subr.mxu0 0.0
    %5727 = vmatpush1.msra.mxu0 0.0
    %5728 = vmatprep.subr.mxu0 0.0
    %5729 = vmatpush1.msra.mxu0 0.0
    %5730 = vmatprep.subr.mxu0 0.0
    %5731 = vmatpush1.msra.mxu0 0.0
    %5732 = vmatprep.subr.mxu0 0.0
    %5733 = vmatpush1.msra.mxu0 0.0
    %5734 = vmatprep.subr.mxu0 %v5674
    %5735 = vmatpush1.msra.mxu0 %v5673
    %5736 = vmatprep.subr.mxu0 %v5669
    %5737 = vmatpush1.msra.mxu0 %v5668
    %5738 = vmatprep.subr.mxu0 %v5664
    %5739 = vmatpush1.msra.mxu0 %v5663
    %5740 = vmatprep.subr.mxu0 %v5659
    %5741 = vmatpush1.msra.mxu0 %v5658
    %5742 = vmatprep.subr.mxu0 0.0
    %5743 = vmatpush2.msra.mxu0 0.0
    %5744 = vmatprep.subr.mxu0 0.0
    %5745 = vmatpush2.msra.mxu0 0.0
    %5746 = vmatprep.subr.mxu0 0.0
    %5747 = vmatpush2.msra.mxu0 0.0
    %5748 = vmatprep.subr.mxu0 0.0
    %5749 = vmatpush2.msra.mxu0 0.0
    %5750 = vmatprep.subr.mxu0 0.0
    %5751 = vmatpush2.msra.mxu0 0.0
    %5752 = vmatprep.subr.mxu0 0.0
    %5753 = vmatpush2.msra.mxu0 0.0
    %5754 = vmatprep.subr.mxu0 0.0
    %5755 = vmatpush2.msra.mxu0 0.0
    %5756 = vmatprep.subr.mxu0 0.0
    %5757 = vmatpush2.msra.mxu0 0.0
    %5758 = vmatprep.subr.mxu0 0.0
    %5759 = vmatpush2.msra.mxu0 0.0
    %5760 = vmatprep.subr.mxu0 0.0
    %5761 = vmatpush2.msra.mxu0 0.0
    %5762 = vmatprep.subr.mxu0 0.0
    %5763 = vmatpush2.msra.mxu0 0.0
    %5764 = vmatprep.subr.mxu0 0.0
    %5765 = vmatpush2.msra.mxu0 0.0
    %5766 = vmatprep.subr.mxu0 0.0
    %5767 = vmatpush2.msra.mxu0 0.0
    %5768 = vmatprep.subr.mxu0 0.0
    %5769 = vmatpush2.msra.mxu0 0.0
    %5770 = vmatprep.subr.mxu0 0.0
    %5771 = vmatpush2.msra.mxu0 0.0
    %5772 = vmatprep.subr.mxu0 0.0
    %5773 = vmatpush2.msra.mxu0 0.0
    %5774 = vmatprep.mubr.f32.mxu0 0.0
    %5775 = vmatmul.mubr.f32.gmra.mxu0 %v5708
    %v5776 = vpop.f32.mrf.mxu0
    %v5777 = vadd.f32 %v5683, %v5776
    %v5778 = vpop.f32.mrf.mxu0
    %v5779 = vadd.f32 %v5687, %v5778
    %5780 = vdwg.mxu0
    %5781 = vmatprep.subr.mxu0 0.0
    %5782 = vmatpush1.msra.mxu0 0.0
    %5783 = vmatprep.subr.mxu0 0.0
    %5784 = vmatpush1.msra.mxu0 0.0
    %5785 = vmatprep.subr.mxu0 0.0
    %5786 = vmatpush1.msra.mxu0 0.0
    %5787 = vmatprep.subr.mxu0 0.0
    %5788 = vmatpush1.msra.mxu0 0.0
    %5789 = vmatprep.subr.mxu0 0.0
    %5790 = vmatpush1.msra.mxu0 0.0
    %5791 = vmatprep.subr.mxu0 0.0
    %5792 = vmatpush1.msra.mxu0 0.0
    %5793 = vmatprep.subr.mxu0 0.0
    %5794 = vmatpush1.msra.mxu0 0.0
    %5795 = vmatprep.subr.mxu0 0.0
    %5796 = vmatpush1.msra.mxu0 0.0
    %5797 = vmatprep.subr.mxu0 0.0
    %5798 = vmatpush1.msra.mxu0 0.0
    %5799 = vmatprep.subr.mxu0 0.0
    %5800 = vmatpush1.msra.mxu0 0.0
    %5801 = vmatprep.subr.mxu0 0.0
    %5802 = vmatpush1.msra.mxu0 0.0
    %5803 = vmatprep.subr.mxu0 0.0
    %5804 = vmatpush1.msra.mxu0 0.0
    %5805 = vmatprep.subr.mxu0 %v5676
    %5806 = vmatpush1.msra.mxu0 %v5675
    %5807 = vmatprep.subr.mxu0 %v5671
    %5808 = vmatpush1.msra.mxu0 %v5670
    %5809 = vmatprep.subr.mxu0 %v5666
    %5810 = vmatpush1.msra.mxu0 %v5665
    %5811 = vmatprep.subr.mxu0 %v5661
    %5812 = vmatpush1.msra.mxu0 %v5660
    %5813 = vmatprep.subr.mxu0 0.0
    %5814 = vmatpush2.msra.mxu0 0.0
    %5815 = vmatprep.subr.mxu0 0.0
    %5816 = vmatpush2.msra.mxu0 0.0
    %5817 = vmatprep.subr.mxu0 0.0
    %5818 = vmatpush2.msra.mxu0 0.0
    %5819 = vmatprep.subr.mxu0 0.0
    %5820 = vmatpush2.msra.mxu0 0.0
    %5821 = vmatprep.subr.mxu0 0.0
    %5822 = vmatpush2.msra.mxu0 0.0
    %5823 = vmatprep.subr.mxu0 0.0
    %5824 = vmatpush2.msra.mxu0 0.0
    %5825 = vmatprep.subr.mxu0 0.0
    %5826 = vmatpush2.msra.mxu0 0.0
    %5827 = vmatprep.subr.mxu0 0.0
    %5828 = vmatpush2.msra.mxu0 0.0
    %5829 = vmatprep.subr.mxu0 0.0
    %5830 = vmatpush2.msra.mxu0 0.0
    %5831 = vmatprep.subr.mxu0 0.0
    %5832 = vmatpush2.msra.mxu0 0.0
    %5833 = vmatprep.subr.mxu0 0.0
    %5834 = vmatpush2.msra.mxu0 0.0
    %5835 = vmatprep.subr.mxu0 0.0
    %5836 = vmatpush2.msra.mxu0 0.0
    %5837 = vmatprep.subr.mxu0 0.0
    %5838 = vmatpush2.msra.mxu0 0.0
    %5839 = vmatprep.subr.mxu0 0.0
    %5840 = vmatpush2.msra.mxu0 0.0
    %5841 = vmatprep.subr.mxu0 0.0
    %5842 = vmatpush2.msra.mxu0 0.0
    %5843 = vmatprep.subr.mxu0 0.0
    %5844 = vmatpush2.msra.mxu0 0.0
    %5845 = vmatprep.mubr.f32.mxu0 0.0
    %5846 = vmatmul.mubr.f32.gmra.mxu0 %v5708
    %v5847 = vpop.f32.mrf.mxu0
    %v5848 = vadd.f32 %v5691, %v5847
    %v5849 = vpop.f32.mrf.mxu0
    %v5850 = vadd.f32 %v5695, %v5849
    %5851 = vdwg.mxu0
    %5852 = vmatprep.subr.mxu0 0.0
    %5853 = vmatpush1.msra.mxu0 0.0
    %5854 = vmatprep.subr.mxu0 0.0
    %5855 = vmatpush1.msra.mxu0 0.0
    %5856 = vmatprep.subr.mxu0 0.0
    %5857 = vmatpush1.msra.mxu0 0.0
    %5858 = vmatprep.subr.mxu0 0.0
    %5859 = vmatpush1.msra.mxu0 0.0
    %5860 = vmatprep.subr.mxu0 0.0
    %5861 = vmatpush1.msra.mxu0 0.0
    %5862 = vmatprep.subr.mxu0 0.0
    %5863 = vmatpush1.msra.mxu0 0.0
    %5864 = vmatprep.subr.mxu0 0.0
    %5865 = vmatpush1.msra.mxu0 0.0
    %5866 = vmatprep.subr.mxu0 0.0
    %5867 = vmatpush1.msra.mxu0 0.0
    %5868 = vmatprep.subr.mxu0 0.0
    %5869 = vmatpush1.msra.mxu0 0.0
    %5870 = vmatprep.subr.mxu0 0.0
    %5871 = vmatpush1.msra.mxu0 0.0
    %5872 = vmatprep.subr.mxu0 0.0
    %5873 = vmatpush1.msra.mxu0 0.0
    %5874 = vmatprep.subr.mxu0 0.0
    %5875 = vmatpush1.msra.mxu0 0.0
    %5876 = vmatprep.subr.mxu0 0.0
    %5877 = vmatpush1.msra.mxu0 %v5677
    %5878 = vmatprep.subr.mxu0 0.0
    %5879 = vmatpush1.msra.mxu0 %v5672
    %5880 = vmatprep.subr.mxu0 0.0
    %5881 = vmatpush1.msra.mxu0 %v5667
    %5882 = vmatprep.subr.mxu0 0.0
    %5883 = vmatpush1.msra.mxu0 %v5662
    %5884 = vmatprep.subr.mxu0 0.0
    %5885 = vmatpush2.msra.mxu0 0.0
    %5886 = vmatprep.subr.mxu0 0.0
    %5887 = vmatpush2.msra.mxu0 0.0
    %5888 = vmatprep.subr.mxu0 0.0
    %5889 = vmatpush2.msra.mxu0 0.0
    %5890 = vmatprep.subr.mxu0 0.0
    %5891 = vmatpush2.msra.mxu0 0.0
    %5892 = vmatprep.subr.mxu0 0.0
    %5893 = vmatpush2.msra.mxu0 0.0
    %5894 = vmatprep.subr.mxu0 0.0
    %5895 = vmatpush2.msra.mxu0 0.0
    %5896 = vmatprep.subr.mxu0 0.0
    %5897 = vmatpush2.msra.mxu0 0.0
    %5898 = vmatprep.subr.mxu0 0.0
    %5899 = vmatpush2.msra.mxu0 0.0
    %5900 = vmatprep.subr.mxu0 0.0
    %5901 = vmatpush2.msra.mxu0 0.0
    %5902 = vmatprep.subr.mxu0 0.0
    %5903 = vmatpush2.msra.mxu0 0.0
    %5904 = vmatprep.subr.mxu0 0.0
    %5905 = vmatpush2.msra.mxu0 0.0
    %5906 = vmatprep.subr.mxu0 0.0
    %5907 = vmatpush2.msra.mxu0 0.0
    %5908 = vmatprep.subr.mxu0 0.0
    %5909 = vmatpush2.msra.mxu0 0.0
    %5910 = vmatprep.subr.mxu0 0.0
    %5911 = vmatpush2.msra.mxu0 0.0
    %5912 = vmatprep.subr.mxu0 0.0
    %5913 = vmatpush2.msra.mxu0 0.0
    %5914 = vmatprep.subr.mxu0 0.0
    %5915 = vmatpush2.msra.mxu0 0.0
    %5916 = vmatprep.mubr.f32.mxu0 0.0
    %5917 = vmatmul.mubr.f32.gmra.mxu0 %v5708
    %v5918 = vpop.f32.mrf.mxu0
    %v5919 = vadd.f32 %v5699, %v5918
    %v5920 = vpop.f32.mrf.mxu0
    %5921 = vdwg.mxu0
    %v5922 = vld [vmem:[#allocation3] sm:$0xff]
    %v5923 = vld [vmem:[#allocation3 + $0x8] sm:$0xff]
    %v5924 = vld [vmem:[#allocation3 + $0x10] sm:$0xff]
    %v5925 = vld [vmem:[#allocation3 + $0x18] sm:$0xff]
    %v5926 = vadd.f32 %v5922, %v5777
    %v5927 = vadd.f32 %v5923, %v5779
    %v5928 = vadd.f32 %v5924, %v5848
    %v5929 = vadd.f32 %v5925, %v5850
    %v5930 = vtanh.pop %v5926
    %v5931 = vtanh.pop %v5927
    %v5932 = vtanh.pop %v5928
    %v5933 = vtanh.pop %v5929
    %v5934 = vld [vmem:[#allocation7] sm:$0xff]
    %v5935 = vld [vmem:[#allocation7 + $0x8] sm:$0xff]
    %v5936 = vld [vmem:[#allocation7 + $0x10] sm:$0xff]
    %v5937 = vld [vmem:[#allocation7 + $0x18] sm:$0xff]
    %v5938 = vld [vmem:[#allocation7 + $0x20] sm:$0xff]
    %v5939 = vld [vmem:[#allocation7 + $0x28] sm:$0xff]
    %v5940 = vld [vmem:[#allocation7 + $0x30] sm:$0xff]
    %v5941 = vld [vmem:[#allocation7 + $0x38] sm:$0xff]
    %v5942 = vld [vmem:[#allocation7 + $0x40] sm:$0xff]
    %v5943 = vld [vmem:[#allocation7 + $0x48] sm:$0xff]
    %v5944 = vld [vmem:[#allocation7 + $0x50] sm:$0xff]
    %v5945 = vld [vmem:[#allocation7 + $0x58] sm:$0xff]
    %v5946 = vld [vmem:[#allocation7 + $0x60] sm:$0xff]
    %v5947 = vld [vmem:[#allocation7 + $0x68] sm:$0xff]
    %v5948 = vld [vmem:[#allocation7 + $0x70] sm:$0xff]
    %v5949 = vld [vmem:[#allocation7 + $0x78] sm:$0xff]
    %v5950 = vld [vmem:[#allocation7 + $0x80] sm:$0xff]
    %v5951 = vld [vmem:[#allocation7 + $0x88] sm:$0xff]
    %v5952 = vld [vmem:[#allocation7 + $0x90] sm:$0xff]
    %v5953 = vld [vmem:[#allocation7 + $0x98] sm:$0xff]
    %v5954 = vld [vmem:[#allocation7 + $0xa0] sm:$0xff]
    %v5955 = vld [vmem:[#allocation7 + $0xa8] sm:$0xff]
    %v5956 = vld [vmem:[#allocation7 + $0xb0] sm:$0xff]
    %v5957 = vld [vmem:[#allocation7 + $0xb8] sm:$0xff]
    %v5958 = vld [vmem:[#allocation7 + $0xc0] sm:$0xff]
    %v5959 = vld [vmem:[#allocation7 + $0xc8] sm:$0xff]
    %v5960 = vld [vmem:[#allocation7 + $0xd0] sm:$0xff]
    %v5961 = vld [vmem:[#allocation7 + $0xd8] sm:$0xff]
    %v5962 = vld [vmem:[#allocation7 + $0xe0] sm:$0xff]
    %v5963 = vld [vmem:[#allocation7 + $0xe8] sm:$0xff]
    %v5964 = vld [vmem:[#allocation7 + $0xf0] sm:$0xff]
    %v5965 = vld [vmem:[#allocation7 + $0xf8] sm:$0xff]
    %v5966 = vld [vmem:[#allocation7 + $0x100] sm:$0xff]
    %v5967 = vld [vmem:[#allocation7 + $0x108] sm:$0xff]
    %v5968 = vld [vmem:[#allocation7 + $0x110] sm:$0xff]
    %v5969 = vld [vmem:[#allocation7 + $0x118] sm:$0xff]
    %v5970 = vld [vmem:[#allocation7 + $0x120] sm:$0xff]
    %v5971 = vld [vmem:[#allocation7 + $0x128] sm:$0xff]
    %v5972 = vld [vmem:[#allocation7 + $0x130] sm:$0xff]
    %v5973 = vld [vmem:[#allocation7 + $0x138] sm:$0xff]
    %v5974 = vld [vmem:[#allocation7 + $0x140] sm:$0xff]
    %v5975 = vld [vmem:[#allocation7 + $0x148] sm:$0xff]
    %v5976 = vld [vmem:[#allocation7 + $0x150] sm:$0xff]
    %v5977 = vld [vmem:[#allocation7 + $0x158] sm:$0xff]
    %v5978 = vld [vmem:[#allocation7 + $0x160] sm:$0xff]
    %v5979 = vld [vmem:[#allocation7 + $0x168] sm:$0xff]
    %v5980 = vld [vmem:[#allocation7 + $0x170] sm:$0xff]
    %v5981 = vld [vmem:[#allocation7 + $0x178] sm:$0xff]
    %v5982 = vld [vmem:[#allocation7 + $0x180] sm:$0xff]
    %v5983 = vld [vmem:[#allocation7 + $0x188] sm:$0xff]
    %v5984 = vld [vmem:[#allocation7 + $0x190] sm:$0xff]
    %v5985 = vld [vmem:[#allocation7 + $0x198] sm:$0xff]
    %v5986 = vld [vmem:[#allocation7 + $0x1a0] sm:$0xff]
    %v5987 = vld [vmem:[#allocation7 + $0x1a8] sm:$0xff]
    %v5988 = vld [vmem:[#allocation7 + $0x1b0] sm:$0xff]
    %v5989 = vld [vmem:[#allocation7 + $0x1b8] sm:$0xff]
    %v5990 = vld [vmem:[#allocation7 + $0x1c0] sm:$0xff]
    %v5991 = vld [vmem:[#allocation7 + $0x1c8] sm:$0xff]
    %v5992 = vld [vmem:[#allocation7 + $0x1d0] sm:$0xff]
    %v5993 = vld [vmem:[#allocation7 + $0x1d8] sm:$0xff]
    %v5994 = vld [vmem:[#allocation7 + $0x1e0] sm:$0xff]
    %v5995 = vld [vmem:[#allocation7 + $0x1e8] sm:$0xff]
    %v5996 = vld [vmem:[#allocation7 + $0x1f0] sm:$0xff]
    %v5997 = vld [vmem:[#allocation7 + $0x1f8] sm:$0xff]
    %v5998 = vld [vmem:[%s14] sm:$0x1]
    %v6000 = vlaneseq
    %v6001 = vshrl.u32 %v6000, 7
    %v6002 = vsub.s32 0, %v6001
    %v6003 = vrot.slane %v5998, %v6002
    %6005 = vmatprep.subr.mxu0 0.0
    %6006 = vmatpush1.msra.mxu0 %v5949
    %6007 = vmatprep.subr.mxu0 0.0
    %6008 = vmatpush1.msra.mxu0 %v5948
    %6009 = vmatprep.subr.mxu0 0.0
    %6010 = vmatpush1.msra.mxu0 %v5947
    %6011 = vmatprep.subr.mxu0 0.0
    %6012 = vmatpush1.msra.mxu0 %v5946
    %6013 = vmatprep.subr.mxu0 0.0
    %6014 = vmatpush1.msra.mxu0 %v5945
    %6015 = vmatprep.subr.mxu0 0.0
    %6016 = vmatpush1.msra.mxu0 %v5944
    %6017 = vmatprep.subr.mxu0 0.0
    %6018 = vmatpush1.msra.mxu0 %v5943
    %6019 = vmatprep.subr.mxu0 0.0
    %6020 = vmatpush1.msra.mxu0 %v5942
    %6021 = vmatprep.subr.mxu0 0.0
    %6022 = vmatpush1.msra.mxu0 %v5941
    %6023 = vmatprep.subr.mxu0 0.0
    %6024 = vmatpush1.msra.mxu0 %v5940
    %6025 = vmatprep.subr.mxu0 0.0
    %6026 = vmatpush1.msra.mxu0 %v5939
    %6027 = vmatprep.subr.mxu0 0.0
    %6028 = vmatpush1.msra.mxu0 %v5938
    %6029 = vmatprep.subr.mxu0 0.0
    %6030 = vmatpush1.msra.mxu0 %v5937
    %6031 = vmatprep.subr.mxu0 0.0
    %6032 = vmatpush1.msra.mxu0 %v5936
    %6033 = vmatprep.subr.mxu0 0.0
    %6034 = vmatpush1.msra.mxu0 %v5935
    %6035 = vmatprep.subr.mxu0 0.0
    %6036 = vmatpush1.msra.mxu0 %v5934
    %6037 = vmatprep.subr.mxu0 0.0
    %6038 = vmatpush2.msra.mxu0 %v5965
    %6039 = vmatprep.subr.mxu0 0.0
    %6040 = vmatpush2.msra.mxu0 %v5964
    %6041 = vmatprep.subr.mxu0 0.0
    %6042 = vmatpush2.msra.mxu0 %v5963
    %6043 = vmatprep.subr.mxu0 0.0
    %6044 = vmatpush2.msra.mxu0 %v5962
    %6045 = vmatprep.subr.mxu0 0.0
    %6046 = vmatpush2.msra.mxu0 %v5961
    %6047 = vmatprep.subr.mxu0 0.0
    %6048 = vmatpush2.msra.mxu0 %v5960
    %6049 = vmatprep.subr.mxu0 0.0
    %6050 = vmatpush2.msra.mxu0 %v5959
    %6051 = vmatprep.subr.mxu0 0.0
    %6052 = vmatpush2.msra.mxu0 %v5958
    %6053 = vmatprep.subr.mxu0 0.0
    %6054 = vmatpush2.msra.mxu0 %v5957
    %6055 = vmatprep.subr.mxu0 0.0
    %6056 = vmatpush2.msra.mxu0 %v5956
    %6057 = vmatprep.subr.mxu0 0.0
    %6058 = vmatpush2.msra.mxu0 %v5955
    %6059 = vmatprep.subr.mxu0 0.0
    %6060 = vmatpush2.msra.mxu0 %v5954
    %6061 = vmatprep.subr.mxu0 0.0
    %6062 = vmatpush2.msra.mxu0 %v5953
    %6063 = vmatprep.subr.mxu0 0.0
    %6064 = vmatpush2.msra.mxu0 %v5952
    %6065 = vmatprep.subr.mxu0 0.0
    %6066 = vmatpush2.msra.mxu0 %v5951
    %6067 = vmatprep.subr.mxu0 0.0
    %6068 = vmatpush2.msra.mxu0 %v5950
    %6069 = vmatprep.mubr.f32.mxu0 %v5931
    %6070 = vmatmul.mubr.f32.gmra.mxu0 %v5930
    %v6071 = vpop.f32.mrf.mxu0
    %v6072 = vadd.f32 %v6003, %v6071
    %v6073 = vpop.f32.mrf.mxu0
    %6074 = vdwg.mxu0
    %6075 = vmatprep.subr.mxu0 0.0
    %6076 = vmatpush1.msra.mxu0 %v5981
    %6077 = vmatprep.subr.mxu0 0.0
    %6078 = vmatpush1.msra.mxu0 %v5980
    %6079 = vmatprep.subr.mxu0 0.0
    %6080 = vmatpush1.msra.mxu0 %v5979
    %6081 = vmatprep.subr.mxu0 0.0
    %6082 = vmatpush1.msra.mxu0 %v5978
    %6083 = vmatprep.subr.mxu0 0.0
    %6084 = vmatpush1.msra.mxu0 %v5977
    %6085 = vmatprep.subr.mxu0 0.0
    %6086 = vmatpush1.msra.mxu0 %v5976
    %6087 = vmatprep.subr.mxu0 0.0
    %6088 = vmatpush1.msra.mxu0 %v5975
    %6089 = vmatprep.subr.mxu0 0.0
    %6090 = vmatpush1.msra.mxu0 %v5974
    %6091 = vmatprep.subr.mxu0 0.0
    %6092 = vmatpush1.msra.mxu0 %v5973
    %6093 = vmatprep.subr.mxu0 0.0
    %6094 = vmatpush1.msra.mxu0 %v5972
    %6095 = vmatprep.subr.mxu0 0.0
    %6096 = vmatpush1.msra.mxu0 %v5971
    %6097 = vmatprep.subr.mxu0 0.0
    %6098 = vmatpush1.msra.mxu0 %v5970
    %6099 = vmatprep.subr.mxu0 0.0
    %6100 = vmatpush1.msra.mxu0 %v5969
    %6101 = vmatprep.subr.mxu0 0.0
    %6102 = vmatpush1.msra.mxu0 %v5968
    %6103 = vmatprep.subr.mxu0 0.0
    %6104 = vmatpush1.msra.mxu0 %v5967
    %6105 = vmatprep.subr.mxu0 0.0
    %6106 = vmatpush1.msra.mxu0 %v5966
    %6107 = vmatprep.subr.mxu0 0.0
    %6108 = vmatpush2.msra.mxu0 %v5997
    %6109 = vmatprep.subr.mxu0 0.0
    %6110 = vmatpush2.msra.mxu0 %v5996
    %6111 = vmatprep.subr.mxu0 0.0
    %6112 = vmatpush2.msra.mxu0 %v5995
    %6113 = vmatprep.subr.mxu0 0.0
    %6114 = vmatpush2.msra.mxu0 %v5994
    %6115 = vmatprep.subr.mxu0 0.0
    %6116 = vmatpush2.msra.mxu0 %v5993
    %6117 = vmatprep.subr.mxu0 0.0
    %6118 = vmatpush2.msra.mxu0 %v5992
    %6119 = vmatprep.subr.mxu0 0.0
    %6120 = vmatpush2.msra.mxu0 %v5991
    %6121 = vmatprep.subr.mxu0 0.0
    %6122 = vmatpush2.msra.mxu0 %v5990
    %6123 = vmatprep.subr.mxu0 0.0
    %6124 = vmatpush2.msra.mxu0 %v5989
    %6125 = vmatprep.subr.mxu0 0.0
    %6126 = vmatpush2.msra.mxu0 %v5988
    %6127 = vmatprep.subr.mxu0 0.0
    %6128 = vmatpush2.msra.mxu0 %v5987
    %6129 = vmatprep.subr.mxu0 0.0
    %6130 = vmatpush2.msra.mxu0 %v5986
    %6131 = vmatprep.subr.mxu0 0.0
    %6132 = vmatpush2.msra.mxu0 %v5985
    %6133 = vmatprep.subr.mxu0 0.0
    %6134 = vmatpush2.msra.mxu0 %v5984
    %6135 = vmatprep.subr.mxu0 0.0
    %6136 = vmatpush2.msra.mxu0 %v5983
    %6137 = vmatprep.subr.mxu0 0.0
    %6138 = vmatpush2.msra.mxu0 %v5982
    %6139 = vmatprep.mubr.f32.mxu0 %v5933
    %6140 = vmatmul.mubr.f32.gmra.mxu0 %v5932
    %v6141 = vpop.f32.mrf.mxu0
    %v6142 = vadd.f32 %v6072, %v6141
    %v6143 = vpop.f32.mrf.mxu0
    %6144 = vdwg.mxu0
    %6145 = vmax.xlane.f32.xlu0 %v6142
    %v6146 = vpop.xlane.xlu0 %6145
    %v6147 = vsub.f32 %v6142, %v6146
    %v6148 = vmul.f32 %v6147, 1.442695
    %v6149 = vpow.pop %v6148
    %6150 = vadd.xlane.f32.xlu0 %v6149
    %v6151 = vpop.xlane.xlu0 %6150
    %v6152 = vrcp.pop %v6151
    %v6153 = vmul.f32 %v6149, %v6152
    %v6154 = vlaneseq
    %v6155 = vshrl.u32 %v6154, 7
    %v6156 = vsub.s32 0, %v6155
    %v6157 = vrot.slane %v6153, %v6156
    %6159 = vbcast.lane.b32.xlu0 %v6157, 256
    %v6160 = vpop.permute.xlu0 %6159
    %s6162 = sor.u32 256, 8
    %6163 = vbcast.lane.b32.xlu0 %v6157, %s6162
    %v6164 = vpop.permute.xlu0 %6163
    %v6165 = vlaneseq
    %v6166 = vshrl.u32 %v6165, 7
    %v6167 = vsub.s32 1, %v6166
    %v6168 = vrot.slane %v6153, %v6167
    %6170 = vbcast.lane.b32.xlu0 %v6168, 256
    %v6171 = vpop.permute.xlu0 %6170
    %s6173 = sor.u32 256, 8
    %6174 = vbcast.lane.b32.xlu0 %v6168, %s6173
    %v6175 = vpop.permute.xlu0 %6174
    %v6176 = vlaneseq
    %v6177 = vshrl.u32 %v6176, 7
    %v6178 = vsub.s32 2, %v6177
    %v6179 = vrot.slane %v6153, %v6178
    %6181 = vbcast.lane.b32.xlu0 %v6179, 256
    %v6182 = vpop.permute.xlu0 %6181
    %s6184 = sor.u32 256, 8
    %6185 = vbcast.lane.b32.xlu0 %v6179, %s6184
    %v6186 = vpop.permute.xlu0 %6185
    %v6187 = vlaneseq
    %v6188 = vshrl.u32 %v6187, 7
    %v6189 = vsub.s32 3, %v6188
    %v6190 = vrot.slane %v6153, %v6189
    %6192 = vbcast.lane.b32.xlu0 %v6190, 256
    %v6193 = vpop.permute.xlu0 %6192
    %s6195 = sor.u32 256, 8
    %6196 = vbcast.lane.b32.xlu0 %v6190, %s6195
    %v6197 = vpop.permute.xlu0 %6196
    %v6198 = vlaneseq
    %v6199 = vshrl.u32 %v6198, 7
    %v6200 = vsub.s32 4, %v6199
    %v6201 = vrot.slane %v6153, %v6200
    %6203 = vbcast.lane.b32.xlu0 %v6201, 256
    %v6204 = vpop.permute.xlu0 %6203
    %s6206 = sor.u32 256, 8
    %6207 = vbcast.lane.b32.xlu0 %v6201, %s6206
    %v6208 = vpop.permute.xlu0 %6207
    %v6209 = vlaneseq
    %v6210 = vshrl.u32 %v6209, 7
    %v6211 = vsub.s32 5, %v6210
    %v6212 = vrot.slane %v6153, %v6211
    %6214 = vbcast.lane.b32.xlu0 %v6212, 256
    %v6215 = vpop.permute.xlu0 %6214
    %s6217 = sor.u32 256, 8
    %6218 = vbcast.lane.b32.xlu0 %v6212, %s6217
    %v6219 = vpop.permute.xlu0 %6218
    %v6220 = vlaneseq
    %v6221 = vshrl.u32 %v6220, 7
    %v6222 = vsub.s32 6, %v6221
    %v6223 = vrot.slane %v6153, %v6222
    %6225 = vbcast.lane.b32.xlu0 %v6223, 256
    %v6226 = vpop.permute.xlu0 %6225
    %s6228 = sor.u32 256, 8
    %6229 = vbcast.lane.b32.xlu0 %v6223, %s6228
    %v6230 = vpop.permute.xlu0 %6229
    %v6231 = vlaneseq
    %v6232 = vshrl.u32 %v6231, 7
    %v6233 = vsub.s32 7, %v6232
    %v6234 = vrot.slane %v6153, %v6233
    %6236 = vbcast.lane.b32.xlu0 %v6234, 256
    %v6237 = vpop.permute.xlu0 %6236
    %s6239 = sor.u32 256, 8
    %6240 = vbcast.lane.b32.xlu0 %v6234, %s6239
    %v6241 = vpop.permute.xlu0 %6240
    %v6242 = vld [vmem:[%s4] sm:$0xff]
    %v6243 = vld [vmem:[%s4 + $0x8] sm:$0xff]
    %v6244 = vld [vmem:[%s4 + $0x10] sm:$0xff]
    %v6245 = vld [vmem:[%s4 + $0x18] sm:$0xff]
    %v6246 = vld [vmem:[%s4 + $0x20] sm:$0xff]
    %v6247 = vld [vmem:[%s4 + $0x28] sm:$0xff]
    %v6248 = vld [vmem:[%s4 + $0x30] sm:$0xff]
    %v6249 = vld [vmem:[%s4 + $0x38] sm:$0xff]
    %v6250 = vld [vmem:[%s4 + $0x40] sm:$0xff]
    %v6251 = vld [vmem:[%s4 + $0x48] sm:$0xff]
    %v6252 = vld [vmem:[%s4 + $0x50] sm:$0xff]
    %v6253 = vld [vmem:[%s4 + $0x58] sm:$0xff]
    %v6254 = vld [vmem:[%s4 + $0x60] sm:$0xff]
    %v6255 = vld [vmem:[%s4 + $0x68] sm:$0xff]
    %v6256 = vld [vmem:[%s4 + $0x70] sm:$0xff]
    %v6257 = vld [vmem:[%s4 + $0x78] sm:$0xff]
    %v6258 = vmul.f32 %v6160, %v6242
    %v6259 = vmul.f32 %v6164, %v6243
    %v6260 = vmul.f32 %v6171, %v6244
    %v6261 = vmul.f32 %v6175, %v6245
    %v6262 = vmul.f32 %v6182, %v6246
    %v6263 = vmul.f32 %v6186, %v6247
    %v6264 = vmul.f32 %v6193, %v6248
    %v6265 = vmul.f32 %v6197, %v6249
    %v6266 = vmul.f32 %v6204, %v6250
    %v6267 = vmul.f32 %v6208, %v6251
    %v6268 = vmul.f32 %v6215, %v6252
    %v6269 = vmul.f32 %v6219, %v6253
    %v6270 = vmul.f32 %v6226, %v6254
    %v6271 = vmul.f32 %v6230, %v6255
    %v6272 = vmul.f32 %v6237, %v6256
    %v6273 = vmul.f32 %v6241, %v6257
    %v6274 = vsel %vm102, %v6258, 0.0
    %v6275 = vsel %vm102, %v6259, 0.0
    %v6276 = vadd.f32 %v6274, %v6275
    %v6277 = vrot.slane %v6276, 4
    %v6278 = vadd.f32 %v6276, %v6277
    %v6279 = vrot.slane %v6278, 2
    %v6280 = vadd.f32 %v6278, %v6279
    %v6281 = vrot.slane %v6280, 1
    %v6282 = vadd.f32 %v6280, %v6281
    %v6283 = vsel %vm102, %v6260, 0.0
    %v6284 = vsel %vm102, %v6261, 0.0
    %v6285 = vadd.f32 %v6283, %v6284
    %v6286 = vrot.slane %v6285, 4
    %v6287 = vadd.f32 %v6285, %v6286
    %v6288 = vrot.slane %v6287, 2
    %v6289 = vadd.f32 %v6287, %v6288
    %v6290 = vrot.slane %v6289, 1
    %v6291 = vadd.f32 %v6289, %v6290
    %v6292 = vsel %vm102, %v6262, 0.0
    %v6293 = vsel %vm102, %v6263, 0.0
    %v6294 = vadd.f32 %v6292, %v6293
    %v6295 = vrot.slane %v6294, 4
    %v6296 = vadd.f32 %v6294, %v6295
    %v6297 = vrot.slane %v6296, 2
    %v6298 = vadd.f32 %v6296, %v6297
    %v6299 = vrot.slane %v6298, 1
    %v6300 = vadd.f32 %v6298, %v6299
    %v6301 = vsel %vm102, %v6264, 0.0
    %v6302 = vsel %vm102, %v6265, 0.0
    %v6303 = vadd.f32 %v6301, %v6302
    %v6304 = vrot.slane %v6303, 4
    %v6305 = vadd.f32 %v6303, %v6304
    %v6306 = vrot.slane %v6305, 2
    %v6307 = vadd.f32 %v6305, %v6306
    %v6308 = vrot.slane %v6307, 1
    %v6309 = vadd.f32 %v6307, %v6308
    %v6310 = vsel %vm102, %v6266, 0.0
    %v6311 = vsel %vm102, %v6267, 0.0
    %v6312 = vadd.f32 %v6310, %v6311
    %v6313 = vrot.slane %v6312, 4
    %v6314 = vadd.f32 %v6312, %v6313
    %v6315 = vrot.slane %v6314, 2
    %v6316 = vadd.f32 %v6314, %v6315
    %v6317 = vrot.slane %v6316, 1
    %v6318 = vadd.f32 %v6316, %v6317
    %v6319 = vsel %vm102, %v6268, 0.0
    %v6320 = vsel %vm102, %v6269, 0.0
    %v6321 = vadd.f32 %v6319, %v6320
    %v6322 = vrot.slane %v6321, 4
    %v6323 = vadd.f32 %v6321, %v6322
    %v6324 = vrot.slane %v6323, 2
    %v6325 = vadd.f32 %v6323, %v6324
    %v6326 = vrot.slane %v6325, 1
    %v6327 = vadd.f32 %v6325, %v6326
    %v6328 = vsel %vm102, %v6270, 0.0
    %v6329 = vsel %vm102, %v6271, 0.0
    %v6330 = vadd.f32 %v6328, %v6329
    %v6331 = vrot.slane %v6330, 4
    %v6332 = vadd.f32 %v6330, %v6331
    %v6333 = vrot.slane %v6332, 2
    %v6334 = vadd.f32 %v6332, %v6333
    %v6335 = vrot.slane %v6334, 1
    %v6336 = vadd.f32 %v6334, %v6335
    %v6337 = vsel %vm102, %v6272, 0.0
    %v6338 = vsel %vm102, %v6273, 0.0
    %v6339 = vadd.f32 %v6337, %v6338
    %v6340 = vrot.slane %v6339, 4
    %v6341 = vadd.f32 %v6339, %v6340
    %v6342 = vrot.slane %v6341, 2
    %v6343 = vadd.f32 %v6341, %v6342
    %v6344 = vrot.slane %v6343, 1
    %v6345 = vadd.f32 %v6343, %v6344
    %v6346 = vadd.f32 %v5657, %v5919
    %v6347 = vld [vmem:[%s15] sm:$0xff]
    %v6348 = vld [vmem:[%s15 + $0x8] sm:$0xff]
    %v6349 = vld [vmem:[%s15 + $0x10] sm:$0xff]
    %v6350 = vld [vmem:[%s15 + $0x18] sm:$0xff]
    %v6359 = vsel %vm1740, %v6291, %v6282
    %v6360 = vsel %vm1742, %v6300, %v6359
    %v6361 = vsel %vm1744, %v6309, %v6360
    %v6362 = vsel %vm1746, %v6318, %v6361
    %v6363 = vsel %vm1748, %v6327, %v6362
    %v6364 = vsel %vm1750, %v6336, %v6363
    %v6365 = vsel %vm1752, %v6345, %v6364
    %v6366 = vsel %vm102, %v6365, 0
    %6368 = vmatprep.subr.mxu0 0.0
    %6369 = vmatpush1.msra.mxu0 0.0
    %6370 = vmatprep.subr.mxu0 0.0
    %6371 = vmatpush1.msra.mxu0 0.0
    %6372 = vmatprep.subr.mxu0 0.0
    %6373 = vmatpush1.msra.mxu0 0.0
    %6374 = vmatprep.subr.mxu0 0.0
    %6375 = vmatpush1.msra.mxu0 0.0
    %6376 = vmatprep.subr.mxu0 0.0
    %6377 = vmatpush1.msra.mxu0 0.0
    %6378 = vmatprep.subr.mxu0 0.0
    %6379 = vmatpush1.msra.mxu0 0.0
    %6380 = vmatprep.subr.mxu0 0.0
    %6381 = vmatpush1.msra.mxu0 0.0
    %6382 = vmatprep.subr.mxu0 0.0
    %6383 = vmatpush1.msra.mxu0 0.0
    %6384 = vmatprep.subr.mxu0 0.0
    %6385 = vmatpush1.msra.mxu0 0.0
    %6386 = vmatprep.subr.mxu0 0.0
    %6387 = vmatpush1.msra.mxu0 0.0
    %6388 = vmatprep.subr.mxu0 0.0
    %6389 = vmatpush1.msra.mxu0 0.0
    %6390 = vmatprep.subr.mxu0 0.0
    %6391 = vmatpush1.msra.mxu0 0.0
    %6392 = vmatprep.subr.mxu0 0.0
    %6393 = vmatpush1.msra.mxu0 %v6350
    %6394 = vmatprep.subr.mxu0 0.0
    %6395 = vmatpush1.msra.mxu0 %v6349
    %6396 = vmatprep.subr.mxu0 0.0
    %6397 = vmatpush1.msra.mxu0 %v6348
    %6398 = vmatprep.subr.mxu0 0.0
    %6399 = vmatpush1.msra.mxu0 %v6347
    %6400 = vmatprep.subr.mxu0 0.0
    %6401 = vmatpush2.msra.mxu0 0.0
    %6402 = vmatprep.subr.mxu0 0.0
    %6403 = vmatpush2.msra.mxu0 0.0
    %6404 = vmatprep.subr.mxu0 0.0
    %6405 = vmatpush2.msra.mxu0 0.0
    %6406 = vmatprep.subr.mxu0 0.0
    %6407 = vmatpush2.msra.mxu0 0.0
    %6408 = vmatprep.subr.mxu0 0.0
    %6409 = vmatpush2.msra.mxu0 0.0
    %6410 = vmatprep.subr.mxu0 0.0
    %6411 = vmatpush2.msra.mxu0 0.0
    %6412 = vmatprep.subr.mxu0 0.0
    %6413 = vmatpush2.msra.mxu0 0.0
    %6414 = vmatprep.subr.mxu0 0.0
    %6415 = vmatpush2.msra.mxu0 0.0
    %6416 = vmatprep.subr.mxu0 0.0
    %6417 = vmatpush2.msra.mxu0 0.0
    %6418 = vmatprep.subr.mxu0 0.0
    %6419 = vmatpush2.msra.mxu0 0.0
    %6420 = vmatprep.subr.mxu0 0.0
    %6421 = vmatpush2.msra.mxu0 0.0
    %6422 = vmatprep.subr.mxu0 0.0
    %6423 = vmatpush2.msra.mxu0 0.0
    %6424 = vmatprep.subr.mxu0 0.0
    %6425 = vmatpush2.msra.mxu0 0.0
    %6426 = vmatprep.subr.mxu0 0.0
    %6427 = vmatpush2.msra.mxu0 0.0
    %6428 = vmatprep.subr.mxu0 0.0
    %6429 = vmatpush2.msra.mxu0 0.0
    %6430 = vmatprep.subr.mxu0 0.0
    %6431 = vmatpush2.msra.mxu0 0.0
    %6432 = vmatprep.mubr.f32.mxu0 0.0
    %6433 = vmatmul.mubr.f32.gmra.mxu0 %v6366
    %v6434 = vpop.f32.mrf.mxu0
    %v6435 = vadd.f32 0.0, %v6434
    %v6436 = vpop.f32.mrf.mxu0
    %6437 = vdwg.mxu0
    %v6438 = vadd.f32 %v6346, %v6435
    %v6439 = vxor.u32 %v6438, 2147483648
    %v6440 = vmul.f32 %v6439, 1.442695
    %v6441 = vpow.pop %v6440
    %v6442 = vadd.f32 %v6441, 1.0
    %v6443 = vrcp.pop %v6442
    %v6444 = vmul.f32 1.0, %v6443
    %v6445 = vtanh.pop %v6438
    %v6446 = vmul.f32 %v6444, %v5655
    %6448 = vrot.lane.b32.xlu0 %v6445, 32
    %v6449 = vpop.permute.xlu0 %6448
    %v6451 = vmul.f32 %v6444, %v6449
    %6453 = vrot.lane.b32.xlu0 %v6451, 32
    %v6454 = vpop.permute.xlu0 %6453
    %v6456 = vadd.f32 %v6446, %v6454
    %v6457 = vtanh.pop %v6456
    %6459 = vrot.lane.b32.xlu0 %v6457, 32
    %v6460 = vpop.permute.xlu0 %6459
    %v6462 = vmul.f32 %v6444, %v6460
    %v6463 = vld [vmem:[%s16] sm:$0xff]
    %v6464 = vld [vmem:[%s16 + $0x8] sm:$0xff]
    %v6465 = vld [vmem:[%s16 + $0x10] sm:$0xff]
    %v6466 = vld [vmem:[%s16 + $0x18] sm:$0xff]
    %v6467 = vld [vmem:[%s17] sm:$0x1]
    %v6469 = vlaneseq
    %v6470 = vshrl.u32 %v6469, 7
    %v6471 = vsub.s32 0, %v6470
    %v6472 = vrot.slane %v6467, %v6471
    %6475 = vrot.lane.b32.xlu0 %v6462, 64
    %v6476 = vpop.permute.xlu0 %6475
    %v6477 = vsel %vm102, %v6476, 0
    %6479 = vmatprep.subr.mxu0 0.0
    %6480 = vmatpush1.msra.mxu0 0.0
    %6481 = vmatprep.subr.mxu0 0.0
    %6482 = vmatpush1.msra.mxu0 0.0
    %6483 = vmatprep.subr.mxu0 0.0
    %6484 = vmatpush1.msra.mxu0 0.0
    %6485 = vmatprep.subr.mxu0 0.0
    %6486 = vmatpush1.msra.mxu0 0.0
    %6487 = vmatprep.subr.mxu0 0.0
    %6488 = vmatpush1.msra.mxu0 0.0
    %6489 = vmatprep.subr.mxu0 0.0
    %6490 = vmatpush1.msra.mxu0 0.0
    %6491 = vmatprep.subr.mxu0 0.0
    %6492 = vmatpush1.msra.mxu0 0.0
    %6493 = vmatprep.subr.mxu0 0.0
    %6494 = vmatpush1.msra.mxu0 0.0
    %6495 = vmatprep.subr.mxu0 0.0
    %6496 = vmatpush1.msra.mxu0 0.0
    %6497 = vmatprep.subr.mxu0 0.0
    %6498 = vmatpush1.msra.mxu0 0.0
    %6499 = vmatprep.subr.mxu0 0.0
    %6500 = vmatpush1.msra.mxu0 0.0
    %6501 = vmatprep.subr.mxu0 0.0
    %6502 = vmatpush1.msra.mxu0 0.0
    %6503 = vmatprep.subr.mxu0 0.0
    %6504 = vmatpush1.msra.mxu0 %v6466
    %6505 = vmatprep.subr.mxu0 0.0
    %6506 = vmatpush1.msra.mxu0 %v6465
    %6507 = vmatprep.subr.mxu0 0.0
    %6508 = vmatpush1.msra.mxu0 %v6464
    %6509 = vmatprep.subr.mxu0 0.0
    %6510 = vmatpush1.msra.mxu0 %v6463
    %6511 = vmatprep.subr.mxu0 0.0
    %6512 = vmatpush2.msra.mxu0 0.0
    %6513 = vmatprep.subr.mxu0 0.0
    %6514 = vmatpush2.msra.mxu0 0.0
    %6515 = vmatprep.subr.mxu0 0.0
    %6516 = vmatpush2.msra.mxu0 0.0
    %6517 = vmatprep.subr.mxu0 0.0
    %6518 = vmatpush2.msra.mxu0 0.0
    %6519 = vmatprep.subr.mxu0 0.0
    %6520 = vmatpush2.msra.mxu0 0.0
    %6521 = vmatprep.subr.mxu0 0.0
    %6522 = vmatpush2.msra.mxu0 0.0
    %6523 = vmatprep.subr.mxu0 0.0
    %6524 = vmatpush2.msra.mxu0 0.0
    %6525 = vmatprep.subr.mxu0 0.0
    %6526 = vmatpush2.msra.mxu0 0.0
    %6527 = vmatprep.subr.mxu0 0.0
    %6528 = vmatpush2.msra.mxu0 0.0
    %6529 = vmatprep.subr.mxu0 0.0
    %6530 = vmatpush2.msra.mxu0 0.0
    %6531 = vmatprep.subr.mxu0 0.0
    %6532 = vmatpush2.msra.mxu0 0.0
    %6533 = vmatprep.subr.mxu0 0.0
    %6534 = vmatpush2.msra.mxu0 0.0
    %6535 = vmatprep.subr.mxu0 0.0
    %6536 = vmatpush2.msra.mxu0 0.0
    %6537 = vmatprep.subr.mxu0 0.0
    %6538 = vmatpush2.msra.mxu0 0.0
    %6539 = vmatprep.subr.mxu0 0.0
    %6540 = vmatpush2.msra.mxu0 0.0
    %6541 = vmatprep.subr.mxu0 0.0
    %6542 = vmatpush2.msra.mxu0 0.0
    %6543 = vmatprep.mubr.f32.mxu0 0.0
    %6544 = vmatmul.mubr.f32.gmra.mxu0 %v6477
    %v6545 = vpop.f32.mrf.mxu0
    %v6546 = vadd.f32 %v6472, %v6545
    %v6547 = vpop.f32.mrf.mxu0
    %6548 = vdwg.mxu0
    %6549 = vmax.xlane.f32.xlu0 %v6546
    %v6550 = vpop.xlane.xlu0 %6549
    %v6551 = vsub.f32 %v6546, %v6550
    %v6552 = vmul.f32 %v6551, 1.442695
    %v6553 = vpow.pop %v6552
    %6554 = vadd.xlane.f32.xlu0 %v6553
    %v6555 = vpop.xlane.xlu0 %6554
    %v6556 = vlog2.pop %v6555
    %v6557 = vmul.f32 %v6556, 0.6931472
    %v6558 = vsub.f32 %v6551, %v6557
    %p6559 = scmp.gt.s32.totalorder %s1039, 5
    %s6560 = scalar_select %p6559, 1, 0
    %s6561 = scvt.s32.f32 %s6560
    %v6562 = vstv %s6561
    %v6563 = vmul.f32 %v6562, %v6153
    %s6564 = scalar_lea.vmem %s18, 40
    %6565 = vst [vmem:[%s6564] sm:$0xff] %v6563
    %v6566 = vmul.f32 %v6562, %v6558
    %s6567 = scalar_lea.vmem %s19, 40
    %6568 = vst [vmem:[%s6567] sm:$0xff] %v6566
    %v6569 = vmul.f32 %v6562, %v6462
    %s6570 = ssub.f32 1.0, %s6561
    %v6571 = vstv %s6570
    %v6572 = vmul.f32 %v6571, %v5652
    %v6573 = vadd.f32 %v6569, %v6572
    %v6574 = vmul.f32 %v6562, %v6456
    %v6575 = vmul.f32 %v6571, %v5655
    %v6576 = vadd.f32 %v6574, %v6575
    %s6577 = scalar_lea.vmem [#allocation2], 48
    %v6578 = vld [vmem:[%s6577] sm:$0xff]
    %v6579 = vld [vmem:[%s11] sm:$0xff]
    %v6580 = vld [vmem:[%s11 + $0x8] sm:$0xff]
    %v6581 = vld [vmem:[%s11 + $0x10] sm:$0xff]
    %v6582 = vld [vmem:[%s11 + $0x18] sm:$0xff]
    %v6583 = vld [vmem:[%s11 + $0x20] sm:$0xff]
    %v6584 = vld [vmem:[%s11 + $0x28] sm:$0xff]
    %v6585 = vld [vmem:[%s11 + $0x30] sm:$0xff]
    %v6586 = vld [vmem:[%s11 + $0x38] sm:$0xff]
    %v6587 = vld [vmem:[%s11 + $0x40] sm:$0xff]
    %v6588 = vld [vmem:[%s11 + $0x48] sm:$0xff]
    %v6589 = vld [vmem:[%s11 + $0x50] sm:$0xff]
    %v6590 = vld [vmem:[%s11 + $0x58] sm:$0xff]
    %v6591 = vld [vmem:[%s11 + $0x60] sm:$0xff]
    %v6592 = vld [vmem:[%s11 + $0x68] sm:$0xff]
    %v6593 = vld [vmem:[%s11 + $0x70] sm:$0xff]
    %v6594 = vld [vmem:[%s11 + $0x78] sm:$0xff]
    %v6595 = vld [vmem:[%s11 + $0x80] sm:$0xff]
    %v6596 = vld [vmem:[%s11 + $0x88] sm:$0xff]
    %v6597 = vld [vmem:[%s11 + $0x90] sm:$0xff]
    %v6598 = vld [vmem:[%s11 + $0x98] sm:$0xff]
    %v6599 = vld [vmem:[%s12] sm:$0x1f]
    %v6601 = vlaneseq
    %v6602 = vshrl.u32 %v6601, 7
    %v6603 = vsub.s32 0, %v6602
    %v6604 = vrot.slane %v6599, %v6603
    %v6605 = vlaneseq
    %v6606 = vshrl.u32 %v6605, 7
    %v6607 = vsub.s32 1, %v6606
    %v6608 = vrot.slane %v6599, %v6607
    %v6609 = vlaneseq
    %v6610 = vshrl.u32 %v6609, 7
    %v6611 = vsub.s32 2, %v6610
    %v6612 = vrot.slane %v6599, %v6611
    %v6613 = vlaneseq
    %v6614 = vshrl.u32 %v6613, 7
    %v6615 = vsub.s32 3, %v6614
    %v6616 = vrot.slane %v6599, %v6615
    %v6617 = vlaneseq
    %v6618 = vshrl.u32 %v6617, 7
    %v6619 = vsub.s32 4, %v6618
    %v6620 = vrot.slane %v6599, %v6619
    %6627 = vrot.lane.b32.xlu0 %v6573, 64
    %v6628 = vpop.permute.xlu0 %6627
    %v6629 = vsel %vm102, %v6628, 0
    %6631 = vmatprep.subr.mxu0 0.0
    %6632 = vmatpush1.msra.mxu0 0.0
    %6633 = vmatprep.subr.mxu0 0.0
    %6634 = vmatpush1.msra.mxu0 0.0
    %6635 = vmatprep.subr.mxu0 0.0
    %6636 = vmatpush1.msra.mxu0 0.0
    %6637 = vmatprep.subr.mxu0 0.0
    %6638 = vmatpush1.msra.mxu0 0.0
    %6639 = vmatprep.subr.mxu0 0.0
    %6640 = vmatpush1.msra.mxu0 0.0
    %6641 = vmatprep.subr.mxu0 0.0
    %6642 = vmatpush1.msra.mxu0 0.0
    %6643 = vmatprep.subr.mxu0 0.0
    %6644 = vmatpush1.msra.mxu0 0.0
    %6645 = vmatprep.subr.mxu0 0.0
    %6646 = vmatpush1.msra.mxu0 0.0
    %6647 = vmatprep.subr.mxu0 0.0
    %6648 = vmatpush1.msra.mxu0 0.0
    %6649 = vmatprep.subr.mxu0 0.0
    %6650 = vmatpush1.msra.mxu0 0.0
    %6651 = vmatprep.subr.mxu0 0.0
    %6652 = vmatpush1.msra.mxu0 0.0
    %6653 = vmatprep.subr.mxu0 0.0
    %6654 = vmatpush1.msra.mxu0 0.0
    %6655 = vmatprep.subr.mxu0 %v6595
    %6656 = vmatpush1.msra.mxu0 %v6594
    %6657 = vmatprep.subr.mxu0 %v6590
    %6658 = vmatpush1.msra.mxu0 %v6589
    %6659 = vmatprep.subr.mxu0 %v6585
    %6660 = vmatpush1.msra.mxu0 %v6584
    %6661 = vmatprep.subr.mxu0 %v6580
    %6662 = vmatpush1.msra.mxu0 %v6579
    %6663 = vmatprep.subr.mxu0 0.0
    %6664 = vmatpush2.msra.mxu0 0.0
    %6665 = vmatprep.subr.mxu0 0.0
    %6666 = vmatpush2.msra.mxu0 0.0
    %6667 = vmatprep.subr.mxu0 0.0
    %6668 = vmatpush2.msra.mxu0 0.0
    %6669 = vmatprep.subr.mxu0 0.0
    %6670 = vmatpush2.msra.mxu0 0.0
    %6671 = vmatprep.subr.mxu0 0.0
    %6672 = vmatpush2.msra.mxu0 0.0
    %6673 = vmatprep.subr.mxu0 0.0
    %6674 = vmatpush2.msra.mxu0 0.0
    %6675 = vmatprep.subr.mxu0 0.0
    %6676 = vmatpush2.msra.mxu0 0.0
    %6677 = vmatprep.subr.mxu0 0.0
    %6678 = vmatpush2.msra.mxu0 0.0
    %6679 = vmatprep.subr.mxu0 0.0
    %6680 = vmatpush2.msra.mxu0 0.0
    %6681 = vmatprep.subr.mxu0 0.0
    %6682 = vmatpush2.msra.mxu0 0.0
    %6683 = vmatprep.subr.mxu0 0.0
    %6684 = vmatpush2.msra.mxu0 0.0
    %6685 = vmatprep.subr.mxu0 0.0
    %6686 = vmatpush2.msra.mxu0 0.0
    %6687 = vmatprep.subr.mxu0 0.0
    %6688 = vmatpush2.msra.mxu0 0.0
    %6689 = vmatprep.subr.mxu0 0.0
    %6690 = vmatpush2.msra.mxu0 0.0
    %6691 = vmatprep.subr.mxu0 0.0
    %6692 = vmatpush2.msra.mxu0 0.0
    %6693 = vmatprep.subr.mxu0 0.0
    %6694 = vmatpush2.msra.mxu0 0.0
    %6695 = vmatprep.mubr.f32.mxu0 0.0
    %6696 = vmatmul.mubr.f32.gmra.mxu0 %v6629
    %v6697 = vpop.f32.mrf.mxu0
    %v6698 = vadd.f32 %v6604, %v6697
    %v6699 = vpop.f32.mrf.mxu0
    %v6700 = vadd.f32 %v6608, %v6699
    %6701 = vdwg.mxu0
    %6702 = vmatprep.subr.mxu0 0.0
    %6703 = vmatpush1.msra.mxu0 0.0
    %6704 = vmatprep.subr.mxu0 0.0
    %6705 = vmatpush1.msra.mxu0 0.0
    %6706 = vmatprep.subr.mxu0 0.0
    %6707 = vmatpush1.msra.mxu0 0.0
    %6708 = vmatprep.subr.mxu0 0.0
    %6709 = vmatpush1.msra.mxu0 0.0
    %6710 = vmatprep.subr.mxu0 0.0
    %6711 = vmatpush1.msra.mxu0 0.0
    %6712 = vmatprep.subr.mxu0 0.0
    %6713 = vmatpush1.msra.mxu0 0.0
    %6714 = vmatprep.subr.mxu0 0.0
    %6715 = vmatpush1.msra.mxu0 0.0
    %6716 = vmatprep.subr.mxu0 0.0
    %6717 = vmatpush1.msra.mxu0 0.0
    %6718 = vmatprep.subr.mxu0 0.0
    %6719 = vmatpush1.msra.mxu0 0.0
    %6720 = vmatprep.subr.mxu0 0.0
    %6721 = vmatpush1.msra.mxu0 0.0
    %6722 = vmatprep.subr.mxu0 0.0
    %6723 = vmatpush1.msra.mxu0 0.0
    %6724 = vmatprep.subr.mxu0 0.0
    %6725 = vmatpush1.msra.mxu0 0.0
    %6726 = vmatprep.subr.mxu0 %v6597
    %6727 = vmatpush1.msra.mxu0 %v6596
    %6728 = vmatprep.subr.mxu0 %v6592
    %6729 = vmatpush1.msra.mxu0 %v6591
    %6730 = vmatprep.subr.mxu0 %v6587
    %6731 = vmatpush1.msra.mxu0 %v6586
    %6732 = vmatprep.subr.mxu0 %v6582
    %6733 = vmatpush1.msra.mxu0 %v6581
    %6734 = vmatprep.subr.mxu0 0.0
    %6735 = vmatpush2.msra.mxu0 0.0
    %6736 = vmatprep.subr.mxu0 0.0
    %6737 = vmatpush2.msra.mxu0 0.0
    %6738 = vmatprep.subr.mxu0 0.0
    %6739 = vmatpush2.msra.mxu0 0.0
    %6740 = vmatprep.subr.mxu0 0.0
    %6741 = vmatpush2.msra.mxu0 0.0
    %6742 = vmatprep.subr.mxu0 0.0
    %6743 = vmatpush2.msra.mxu0 0.0
    %6744 = vmatprep.subr.mxu0 0.0
    %6745 = vmatpush2.msra.mxu0 0.0
    %6746 = vmatprep.subr.mxu0 0.0
    %6747 = vmatpush2.msra.mxu0 0.0
    %6748 = vmatprep.subr.mxu0 0.0
    %6749 = vmatpush2.msra.mxu0 0.0
    %6750 = vmatprep.subr.mxu0 0.0
    %6751 = vmatpush2.msra.mxu0 0.0
    %6752 = vmatprep.subr.mxu0 0.0
    %6753 = vmatpush2.msra.mxu0 0.0
    %6754 = vmatprep.subr.mxu0 0.0
    %6755 = vmatpush2.msra.mxu0 0.0
    %6756 = vmatprep.subr.mxu0 0.0
    %6757 = vmatpush2.msra.mxu0 0.0
    %6758 = vmatprep.subr.mxu0 0.0
    %6759 = vmatpush2.msra.mxu0 0.0
    %6760 = vmatprep.subr.mxu0 0.0
    %6761 = vmatpush2.msra.mxu0 0.0
    %6762 = vmatprep.subr.mxu0 0.0
    %6763 = vmatpush2.msra.mxu0 0.0
    %6764 = vmatprep.subr.mxu0 0.0
    %6765 = vmatpush2.msra.mxu0 0.0
    %6766 = vmatprep.mubr.f32.mxu0 0.0
    %6767 = vmatmul.mubr.f32.gmra.mxu0 %v6629
    %v6768 = vpop.f32.mrf.mxu0
    %v6769 = vadd.f32 %v6612, %v6768
    %v6770 = vpop.f32.mrf.mxu0
    %v6771 = vadd.f32 %v6616, %v6770
    %6772 = vdwg.mxu0
    %6773 = vmatprep.subr.mxu0 0.0
    %6774 = vmatpush1.msra.mxu0 0.0
    %6775 = vmatprep.subr.mxu0 0.0
    %6776 = vmatpush1.msra.mxu0 0.0
    %6777 = vmatprep.subr.mxu0 0.0
    %6778 = vmatpush1.msra.mxu0 0.0
    %6779 = vmatprep.subr.mxu0 0.0
    %6780 = vmatpush1.msra.mxu0 0.0
    %6781 = vmatprep.subr.mxu0 0.0
    %6782 = vmatpush1.msra.mxu0 0.0
    %6783 = vmatprep.subr.mxu0 0.0
    %6784 = vmatpush1.msra.mxu0 0.0
    %6785 = vmatprep.subr.mxu0 0.0
    %6786 = vmatpush1.msra.mxu0 0.0
    %6787 = vmatprep.subr.mxu0 0.0
    %6788 = vmatpush1.msra.mxu0 0.0
    %6789 = vmatprep.subr.mxu0 0.0
    %6790 = vmatpush1.msra.mxu0 0.0
    %6791 = vmatprep.subr.mxu0 0.0
    %6792 = vmatpush1.msra.mxu0 0.0
    %6793 = vmatprep.subr.mxu0 0.0
    %6794 = vmatpush1.msra.mxu0 0.0
    %6795 = vmatprep.subr.mxu0 0.0
    %6796 = vmatpush1.msra.mxu0 0.0
    %6797 = vmatprep.subr.mxu0 0.0
    %6798 = vmatpush1.msra.mxu0 %v6598
    %6799 = vmatprep.subr.mxu0 0.0
    %6800 = vmatpush1.msra.mxu0 %v6593
    %6801 = vmatprep.subr.mxu0 0.0
    %6802 = vmatpush1.msra.mxu0 %v6588
    %6803 = vmatprep.subr.mxu0 0.0
    %6804 = vmatpush1.msra.mxu0 %v6583
    %6805 = vmatprep.subr.mxu0 0.0
    %6806 = vmatpush2.msra.mxu0 0.0
    %6807 = vmatprep.subr.mxu0 0.0
    %6808 = vmatpush2.msra.mxu0 0.0
    %6809 = vmatprep.subr.mxu0 0.0
    %6810 = vmatpush2.msra.mxu0 0.0
    %6811 = vmatprep.subr.mxu0 0.0
    %6812 = vmatpush2.msra.mxu0 0.0
    %6813 = vmatprep.subr.mxu0 0.0
    %6814 = vmatpush2.msra.mxu0 0.0
    %6815 = vmatprep.subr.mxu0 0.0
    %6816 = vmatpush2.msra.mxu0 0.0
    %6817 = vmatprep.subr.mxu0 0.0
    %6818 = vmatpush2.msra.mxu0 0.0
    %6819 = vmatprep.subr.mxu0 0.0
    %6820 = vmatpush2.msra.mxu0 0.0
    %6821 = vmatprep.subr.mxu0 0.0
    %6822 = vmatpush2.msra.mxu0 0.0
    %6823 = vmatprep.subr.mxu0 0.0
    %6824 = vmatpush2.msra.mxu0 0.0
    %6825 = vmatprep.subr.mxu0 0.0
    %6826 = vmatpush2.msra.mxu0 0.0
    %6827 = vmatprep.subr.mxu0 0.0
    %6828 = vmatpush2.msra.mxu0 0.0
    %6829 = vmatprep.subr.mxu0 0.0
    %6830 = vmatpush2.msra.mxu0 0.0
    %6831 = vmatprep.subr.mxu0 0.0
    %6832 = vmatpush2.msra.mxu0 0.0
    %6833 = vmatprep.subr.mxu0 0.0
    %6834 = vmatpush2.msra.mxu0 0.0
    %6835 = vmatprep.subr.mxu0 0.0
    %6836 = vmatpush2.msra.mxu0 0.0
    %6837 = vmatprep.mubr.f32.mxu0 0.0
    %6838 = vmatmul.mubr.f32.gmra.mxu0 %v6629
    %v6839 = vpop.f32.mrf.mxu0
    %v6840 = vadd.f32 %v6620, %v6839
    %v6841 = vpop.f32.mrf.mxu0
    %6842 = vdwg.mxu0
    %v6843 = vld [vmem:[#allocation3] sm:$0xff]
    %v6844 = vld [vmem:[#allocation3 + $0x8] sm:$0xff]
    %v6845 = vld [vmem:[#allocation3 + $0x10] sm:$0xff]
    %v6846 = vld [vmem:[#allocation3 + $0x18] sm:$0xff]
    %v6847 = vadd.f32 %v6843, %v6698
    %v6848 = vadd.f32 %v6844, %v6700
    %v6849 = vadd.f32 %v6845, %v6769
    %v6850 = vadd.f32 %v6846, %v6771
    %v6851 = vtanh.pop %v6847
    %v6852 = vtanh.pop %v6848
    %v6853 = vtanh.pop %v6849
    %v6854 = vtanh.pop %v6850
    %v6855 = vld [vmem:[#allocation7] sm:$0xff]
    %v6856 = vld [vmem:[#allocation7 + $0x8] sm:$0xff]
    %v6857 = vld [vmem:[#allocation7 + $0x10] sm:$0xff]
    %v6858 = vld [vmem:[#allocation7 + $0x18] sm:$0xff]
    %v6859 = vld [vmem:[#allocation7 + $0x20] sm:$0xff]
    %v6860 = vld [vmem:[#allocation7 + $0x28] sm:$0xff]
    %v6861 = vld [vmem:[#allocation7 + $0x30] sm:$0xff]
    %v6862 = vld [vmem:[#allocation7 + $0x38] sm:$0xff]
    %v6863 = vld [vmem:[#allocation7 + $0x40] sm:$0xff]
    %v6864 = vld [vmem:[#allocation7 + $0x48] sm:$0xff]
    %v6865 = vld [vmem:[#allocation7 + $0x50] sm:$0xff]
    %v6866 = vld [vmem:[#allocation7 + $0x58] sm:$0xff]
    %v6867 = vld [vmem:[#allocation7 + $0x60] sm:$0xff]
    %v6868 = vld [vmem:[#allocation7 + $0x68] sm:$0xff]
    %v6869 = vld [vmem:[#allocation7 + $0x70] sm:$0xff]
    %v6870 = vld [vmem:[#allocation7 + $0x78] sm:$0xff]
    %v6871 = vld [vmem:[#allocation7 + $0x80] sm:$0xff]
    %v6872 = vld [vmem:[#allocation7 + $0x88] sm:$0xff]
    %v6873 = vld [vmem:[#allocation7 + $0x90] sm:$0xff]
    %v6874 = vld [vmem:[#allocation7 + $0x98] sm:$0xff]
    %v6875 = vld [vmem:[#allocation7 + $0xa0] sm:$0xff]
    %v6876 = vld [vmem:[#allocation7 + $0xa8] sm:$0xff]
    %v6877 = vld [vmem:[#allocation7 + $0xb0] sm:$0xff]
    %v6878 = vld [vmem:[#allocation7 + $0xb8] sm:$0xff]
    %v6879 = vld [vmem:[#allocation7 + $0xc0] sm:$0xff]
    %v6880 = vld [vmem:[#allocation7 + $0xc8] sm:$0xff]
    %v6881 = vld [vmem:[#allocation7 + $0xd0] sm:$0xff]
    %v6882 = vld [vmem:[#allocation7 + $0xd8] sm:$0xff]
    %v6883 = vld [vmem:[#allocation7 + $0xe0] sm:$0xff]
    %v6884 = vld [vmem:[#allocation7 + $0xe8] sm:$0xff]
    %v6885 = vld [vmem:[#allocation7 + $0xf0] sm:$0xff]
    %v6886 = vld [vmem:[#allocation7 + $0xf8] sm:$0xff]
    %v6887 = vld [vmem:[#allocation7 + $0x100] sm:$0xff]
    %v6888 = vld [vmem:[#allocation7 + $0x108] sm:$0xff]
    %v6889 = vld [vmem:[#allocation7 + $0x110] sm:$0xff]
    %v6890 = vld [vmem:[#allocation7 + $0x118] sm:$0xff]
    %v6891 = vld [vmem:[#allocation7 + $0x120] sm:$0xff]
    %v6892 = vld [vmem:[#allocation7 + $0x128] sm:$0xff]
    %v6893 = vld [vmem:[#allocation7 + $0x130] sm:$0xff]
    %v6894 = vld [vmem:[#allocation7 + $0x138] sm:$0xff]
    %v6895 = vld [vmem:[#allocation7 + $0x140] sm:$0xff]
    %v6896 = vld [vmem:[#allocation7 + $0x148] sm:$0xff]
    %v6897 = vld [vmem:[#allocation7 + $0x150] sm:$0xff]
    %v6898 = vld [vmem:[#allocation7 + $0x158] sm:$0xff]
    %v6899 = vld [vmem:[#allocation7 + $0x160] sm:$0xff]
    %v6900 = vld [vmem:[#allocation7 + $0x168] sm:$0xff]
    %v6901 = vld [vmem:[#allocation7 + $0x170] sm:$0xff]
    %v6902 = vld [vmem:[#allocation7 + $0x178] sm:$0xff]
    %v6903 = vld [vmem:[#allocation7 + $0x180] sm:$0xff]
    %v6904 = vld [vmem:[#allocation7 + $0x188] sm:$0xff]
    %v6905 = vld [vmem:[#allocation7 + $0x190] sm:$0xff]
    %v6906 = vld [vmem:[#allocation7 + $0x198] sm:$0xff]
    %v6907 = vld [vmem:[#allocation7 + $0x1a0] sm:$0xff]
    %v6908 = vld [vmem:[#allocation7 + $0x1a8] sm:$0xff]
    %v6909 = vld [vmem:[#allocation7 + $0x1b0] sm:$0xff]
    %v6910 = vld [vmem:[#allocation7 + $0x1b8] sm:$0xff]
    %v6911 = vld [vmem:[#allocation7 + $0x1c0] sm:$0xff]
    %v6912 = vld [vmem:[#allocation7 + $0x1c8] sm:$0xff]
    %v6913 = vld [vmem:[#allocation7 + $0x1d0] sm:$0xff]
    %v6914 = vld [vmem:[#allocation7 + $0x1d8] sm:$0xff]
    %v6915 = vld [vmem:[#allocation7 + $0x1e0] sm:$0xff]
    %v6916 = vld [vmem:[#allocation7 + $0x1e8] sm:$0xff]
    %v6917 = vld [vmem:[#allocation7 + $0x1f0] sm:$0xff]
    %v6918 = vld [vmem:[#allocation7 + $0x1f8] sm:$0xff]
    %v6919 = vld [vmem:[%s14] sm:$0x1]
    %v6921 = vlaneseq
    %v6922 = vshrl.u32 %v6921, 7
    %v6923 = vsub.s32 0, %v6922
    %v6924 = vrot.slane %v6919, %v6923
    %6926 = vmatprep.subr.mxu0 0.0
    %6927 = vmatpush1.msra.mxu0 %v6870
    %6928 = vmatprep.subr.mxu0 0.0
    %6929 = vmatpush1.msra.mxu0 %v6869
    %6930 = vmatprep.subr.mxu0 0.0
    %6931 = vmatpush1.msra.mxu0 %v6868
    %6932 = vmatprep.subr.mxu0 0.0
    %6933 = vmatpush1.msra.mxu0 %v6867
    %6934 = vmatprep.subr.mxu0 0.0
    %6935 = vmatpush1.msra.mxu0 %v6866
    %6936 = vmatprep.subr.mxu0 0.0
    %6937 = vmatpush1.msra.mxu0 %v6865
    %6938 = vmatprep.subr.mxu0 0.0
    %6939 = vmatpush1.msra.mxu0 %v6864
    %6940 = vmatprep.subr.mxu0 0.0
    %6941 = vmatpush1.msra.mxu0 %v6863
    %6942 = vmatprep.subr.mxu0 0.0
    %6943 = vmatpush1.msra.mxu0 %v6862
    %6944 = vmatprep.subr.mxu0 0.0
    %6945 = vmatpush1.msra.mxu0 %v6861
    %6946 = vmatprep.subr.mxu0 0.0
    %6947 = vmatpush1.msra.mxu0 %v6860
    %6948 = vmatprep.subr.mxu0 0.0
    %6949 = vmatpush1.msra.mxu0 %v6859
    %6950 = vmatprep.subr.mxu0 0.0
    %6951 = vmatpush1.msra.mxu0 %v6858
    %6952 = vmatprep.subr.mxu0 0.0
    %6953 = vmatpush1.msra.mxu0 %v6857
    %6954 = vmatprep.subr.mxu0 0.0
    %6955 = vmatpush1.msra.mxu0 %v6856
    %6956 = vmatprep.subr.mxu0 0.0
    %6957 = vmatpush1.msra.mxu0 %v6855
    %6958 = vmatprep.subr.mxu0 0.0
    %6959 = vmatpush2.msra.mxu0 %v6886
    %6960 = vmatprep.subr.mxu0 0.0
    %6961 = vmatpush2.msra.mxu0 %v6885
    %6962 = vmatprep.subr.mxu0 0.0
    %6963 = vmatpush2.msra.mxu0 %v6884
    %6964 = vmatprep.subr.mxu0 0.0
    %6965 = vmatpush2.msra.mxu0 %v6883
    %6966 = vmatprep.subr.mxu0 0.0
    %6967 = vmatpush2.msra.mxu0 %v6882
    %6968 = vmatprep.subr.mxu0 0.0
    %6969 = vmatpush2.msra.mxu0 %v6881
    %6970 = vmatprep.subr.mxu0 0.0
    %6971 = vmatpush2.msra.mxu0 %v6880
    %6972 = vmatprep.subr.mxu0 0.0
    %6973 = vmatpush2.msra.mxu0 %v6879
    %6974 = vmatprep.subr.mxu0 0.0
    %6975 = vmatpush2.msra.mxu0 %v6878
    %6976 = vmatprep.subr.mxu0 0.0
    %6977 = vmatpush2.msra.mxu0 %v6877
    %6978 = vmatprep.subr.mxu0 0.0
    %6979 = vmatpush2.msra.mxu0 %v6876
    %6980 = vmatprep.subr.mxu0 0.0
    %6981 = vmatpush2.msra.mxu0 %v6875
    %6982 = vmatprep.subr.mxu0 0.0
    %6983 = vmatpush2.msra.mxu0 %v6874
    %6984 = vmatprep.subr.mxu0 0.0
    %6985 = vmatpush2.msra.mxu0 %v6873
    %6986 = vmatprep.subr.mxu0 0.0
    %6987 = vmatpush2.msra.mxu0 %v6872
    %6988 = vmatprep.subr.mxu0 0.0
    %6989 = vmatpush2.msra.mxu0 %v6871
    %6990 = vmatprep.mubr.f32.mxu0 %v6852
    %6991 = vmatmul.mubr.f32.gmra.mxu0 %v6851
    %v6992 = vpop.f32.mrf.mxu0
    %v6993 = vadd.f32 %v6924, %v6992
    %v6994 = vpop.f32.mrf.mxu0
    %6995 = vdwg.mxu0
    %6996 = vmatprep.subr.mxu0 0.0
    %6997 = vmatpush1.msra.mxu0 %v6902
    %6998 = vmatprep.subr.mxu0 0.0
    %6999 = vmatpush1.msra.mxu0 %v6901
    %7000 = vmatprep.subr.mxu0 0.0
    %7001 = vmatpush1.msra.mxu0 %v6900
    %7002 = vmatprep.subr.mxu0 0.0
    %7003 = vmatpush1.msra.mxu0 %v6899
    %7004 = vmatprep.subr.mxu0 0.0
    %7005 = vmatpush1.msra.mxu0 %v6898
    %7006 = vmatprep.subr.mxu0 0.0
    %7007 = vmatpush1.msra.mxu0 %v6897
    %7008 = vmatprep.subr.mxu0 0.0
    %7009 = vmatpush1.msra.mxu0 %v6896
    %7010 = vmatprep.subr.mxu0 0.0
    %7011 = vmatpush1.msra.mxu0 %v6895
    %7012 = vmatprep.subr.mxu0 0.0
    %7013 = vmatpush1.msra.mxu0 %v6894
    %7014 = vmatprep.subr.mxu0 0.0
    %7015 = vmatpush1.msra.mxu0 %v6893
    %7016 = vmatprep.subr.mxu0 0.0
    %7017 = vmatpush1.msra.mxu0 %v6892
    %7018 = vmatprep.subr.mxu0 0.0
    %7019 = vmatpush1.msra.mxu0 %v6891
    %7020 = vmatprep.subr.mxu0 0.0
    %7021 = vmatpush1.msra.mxu0 %v6890
    %7022 = vmatprep.subr.mxu0 0.0
    %7023 = vmatpush1.msra.mxu0 %v6889
    %7024 = vmatprep.subr.mxu0 0.0
    %7025 = vmatpush1.msra.mxu0 %v6888
    %7026 = vmatprep.subr.mxu0 0.0
    %7027 = vmatpush1.msra.mxu0 %v6887
    %7028 = vmatprep.subr.mxu0 0.0
    %7029 = vmatpush2.msra.mxu0 %v6918
    %7030 = vmatprep.subr.mxu0 0.0
    %7031 = vmatpush2.msra.mxu0 %v6917
    %7032 = vmatprep.subr.mxu0 0.0
    %7033 = vmatpush2.msra.mxu0 %v6916
    %7034 = vmatprep.subr.mxu0 0.0
    %7035 = vmatpush2.msra.mxu0 %v6915
    %7036 = vmatprep.subr.mxu0 0.0
    %7037 = vmatpush2.msra.mxu0 %v6914
    %7038 = vmatprep.subr.mxu0 0.0
    %7039 = vmatpush2.msra.mxu0 %v6913
    %7040 = vmatprep.subr.mxu0 0.0
    %7041 = vmatpush2.msra.mxu0 %v6912
    %7042 = vmatprep.subr.mxu0 0.0
    %7043 = vmatpush2.msra.mxu0 %v6911
    %7044 = vmatprep.subr.mxu0 0.0
    %7045 = vmatpush2.msra.mxu0 %v6910
    %7046 = vmatprep.subr.mxu0 0.0
    %7047 = vmatpush2.msra.mxu0 %v6909
    %7048 = vmatprep.subr.mxu0 0.0
    %7049 = vmatpush2.msra.mxu0 %v6908
    %7050 = vmatprep.subr.mxu0 0.0
    %7051 = vmatpush2.msra.mxu0 %v6907
    %7052 = vmatprep.subr.mxu0 0.0
    %7053 = vmatpush2.msra.mxu0 %v6906
    %7054 = vmatprep.subr.mxu0 0.0
    %7055 = vmatpush2.msra.mxu0 %v6905
    %7056 = vmatprep.subr.mxu0 0.0
    %7057 = vmatpush2.msra.mxu0 %v6904
    %7058 = vmatprep.subr.mxu0 0.0
    %7059 = vmatpush2.msra.mxu0 %v6903
    %7060 = vmatprep.mubr.f32.mxu0 %v6854
    %7061 = vmatmul.mubr.f32.gmra.mxu0 %v6853
    %v7062 = vpop.f32.mrf.mxu0
    %v7063 = vadd.f32 %v6993, %v7062
    %v7064 = vpop.f32.mrf.mxu0
    %7065 = vdwg.mxu0
    %7066 = vmax.xlane.f32.xlu0 %v7063
    %v7067 = vpop.xlane.xlu0 %7066
    %v7068 = vsub.f32 %v7063, %v7067
    %v7069 = vmul.f32 %v7068, 1.442695
    %v7070 = vpow.pop %v7069
    %7071 = vadd.xlane.f32.xlu0 %v7070
    %v7072 = vpop.xlane.xlu0 %7071
    %v7073 = vrcp.pop %v7072
    %v7074 = vmul.f32 %v7070, %v7073
    %v7075 = vlaneseq
    %v7076 = vshrl.u32 %v7075, 7
    %v7077 = vsub.s32 0, %v7076
    %v7078 = vrot.slane %v7074, %v7077
    %7080 = vbcast.lane.b32.xlu0 %v7078, 256
    %v7081 = vpop.permute.xlu0 %7080
    %s7083 = sor.u32 256, 8
    %7084 = vbcast.lane.b32.xlu0 %v7078, %s7083
    %v7085 = vpop.permute.xlu0 %7084
    %v7086 = vlaneseq
    %v7087 = vshrl.u32 %v7086, 7
    %v7088 = vsub.s32 1, %v7087
    %v7089 = vrot.slane %v7074, %v7088
    %7091 = vbcast.lane.b32.xlu0 %v7089, 256
    %v7092 = vpop.permute.xlu0 %7091
    %s7094 = sor.u32 256, 8
    %7095 = vbcast.lane.b32.xlu0 %v7089, %s7094
    %v7096 = vpop.permute.xlu0 %7095
    %v7097 = vlaneseq
    %v7098 = vshrl.u32 %v7097, 7
    %v7099 = vsub.s32 2, %v7098
    %v7100 = vrot.slane %v7074, %v7099
    %7102 = vbcast.lane.b32.xlu0 %v7100, 256
    %v7103 = vpop.permute.xlu0 %7102
    %s7105 = sor.u32 256, 8
    %7106 = vbcast.lane.b32.xlu0 %v7100, %s7105
    %v7107 = vpop.permute.xlu0 %7106
    %v7108 = vlaneseq
    %v7109 = vshrl.u32 %v7108, 7
    %v7110 = vsub.s32 3, %v7109
    %v7111 = vrot.slane %v7074, %v7110
    %7113 = vbcast.lane.b32.xlu0 %v7111, 256
    %v7114 = vpop.permute.xlu0 %7113
    %s7116 = sor.u32 256, 8
    %7117 = vbcast.lane.b32.xlu0 %v7111, %s7116
    %v7118 = vpop.permute.xlu0 %7117
    %v7119 = vlaneseq
    %v7120 = vshrl.u32 %v7119, 7
    %v7121 = vsub.s32 4, %v7120
    %v7122 = vrot.slane %v7074, %v7121
    %7124 = vbcast.lane.b32.xlu0 %v7122, 256
    %v7125 = vpop.permute.xlu0 %7124
    %s7127 = sor.u32 256, 8
    %7128 = vbcast.lane.b32.xlu0 %v7122, %s7127
    %v7129 = vpop.permute.xlu0 %7128
    %v7130 = vlaneseq
    %v7131 = vshrl.u32 %v7130, 7
    %v7132 = vsub.s32 5, %v7131
    %v7133 = vrot.slane %v7074, %v7132
    %7135 = vbcast.lane.b32.xlu0 %v7133, 256
    %v7136 = vpop.permute.xlu0 %7135
    %s7138 = sor.u32 256, 8
    %7139 = vbcast.lane.b32.xlu0 %v7133, %s7138
    %v7140 = vpop.permute.xlu0 %7139
    %v7141 = vlaneseq
    %v7142 = vshrl.u32 %v7141, 7
    %v7143 = vsub.s32 6, %v7142
    %v7144 = vrot.slane %v7074, %v7143
    %7146 = vbcast.lane.b32.xlu0 %v7144, 256
    %v7147 = vpop.permute.xlu0 %7146
    %s7149 = sor.u32 256, 8
    %7150 = vbcast.lane.b32.xlu0 %v7144, %s7149
    %v7151 = vpop.permute.xlu0 %7150
    %v7152 = vlaneseq
    %v7153 = vshrl.u32 %v7152, 7
    %v7154 = vsub.s32 7, %v7153
    %v7155 = vrot.slane %v7074, %v7154
    %7157 = vbcast.lane.b32.xlu0 %v7155, 256
    %v7158 = vpop.permute.xlu0 %7157
    %s7160 = sor.u32 256, 8
    %7161 = vbcast.lane.b32.xlu0 %v7155, %s7160
    %v7162 = vpop.permute.xlu0 %7161
    %v7163 = vld [vmem:[%s4] sm:$0xff]
    %v7164 = vld [vmem:[%s4 + $0x8] sm:$0xff]
    %v7165 = vld [vmem:[%s4 + $0x10] sm:$0xff]
    %v7166 = vld [vmem:[%s4 + $0x18] sm:$0xff]
    %v7167 = vld [vmem:[%s4 + $0x20] sm:$0xff]
    %v7168 = vld [vmem:[%s4 + $0x28] sm:$0xff]
    %v7169 = vld [vmem:[%s4 + $0x30] sm:$0xff]
    %v7170 = vld [vmem:[%s4 + $0x38] sm:$0xff]
    %v7171 = vld [vmem:[%s4 + $0x40] sm:$0xff]
    %v7172 = vld [vmem:[%s4 + $0x48] sm:$0xff]
    %v7173 = vld [vmem:[%s4 + $0x50] sm:$0xff]
    %v7174 = vld [vmem:[%s4 + $0x58] sm:$0xff]
    %v7175 = vld [vmem:[%s4 + $0x60] sm:$0xff]
    %v7176 = vld [vmem:[%s4 + $0x68] sm:$0xff]
    %v7177 = vld [vmem:[%s4 + $0x70] sm:$0xff]
    %v7178 = vld [vmem:[%s4 + $0x78] sm:$0xff]
    %v7179 = vmul.f32 %v7081, %v7163
    %v7180 = vmul.f32 %v7085, %v7164
    %v7181 = vmul.f32 %v7092, %v7165
    %v7182 = vmul.f32 %v7096, %v7166
    %v7183 = vmul.f32 %v7103, %v7167
    %v7184 = vmul.f32 %v7107, %v7168
    %v7185 = vmul.f32 %v7114, %v7169
    %v7186 = vmul.f32 %v7118, %v7170
    %v7187 = vmul.f32 %v7125, %v7171
    %v7188 = vmul.f32 %v7129, %v7172
    %v7189 = vmul.f32 %v7136, %v7173
    %v7190 = vmul.f32 %v7140, %v7174
    %v7191 = vmul.f32 %v7147, %v7175
    %v7192 = vmul.f32 %v7151, %v7176
    %v7193 = vmul.f32 %v7158, %v7177
    %v7194 = vmul.f32 %v7162, %v7178
    %v7195 = vsel %vm102, %v7179, 0.0
    %v7196 = vsel %vm102, %v7180, 0.0
    %v7197 = vadd.f32 %v7195, %v7196
    %v7198 = vrot.slane %v7197, 4
    %v7199 = vadd.f32 %v7197, %v7198
    %v7200 = vrot.slane %v7199, 2
    %v7201 = vadd.f32 %v7199, %v7200
    %v7202 = vrot.slane %v7201, 1
    %v7203 = vadd.f32 %v7201, %v7202
    %v7204 = vsel %vm102, %v7181, 0.0
    %v7205 = vsel %vm102, %v7182, 0.0
    %v7206 = vadd.f32 %v7204, %v7205
    %v7207 = vrot.slane %v7206, 4
    %v7208 = vadd.f32 %v7206, %v7207
    %v7209 = vrot.slane %v7208, 2
    %v7210 = vadd.f32 %v7208, %v7209
    %v7211 = vrot.slane %v7210, 1
    %v7212 = vadd.f32 %v7210, %v7211
    %v7213 = vsel %vm102, %v7183, 0.0
    %v7214 = vsel %vm102, %v7184, 0.0
    %v7215 = vadd.f32 %v7213, %v7214
    %v7216 = vrot.slane %v7215, 4
    %v7217 = vadd.f32 %v7215, %v7216
    %v7218 = vrot.slane %v7217, 2
    %v7219 = vadd.f32 %v7217, %v7218
    %v7220 = vrot.slane %v7219, 1
    %v7221 = vadd.f32 %v7219, %v7220
    %v7222 = vsel %vm102, %v7185, 0.0
    %v7223 = vsel %vm102, %v7186, 0.0
    %v7224 = vadd.f32 %v7222, %v7223
    %v7225 = vrot.slane %v7224, 4
    %v7226 = vadd.f32 %v7224, %v7225
    %v7227 = vrot.slane %v7226, 2
    %v7228 = vadd.f32 %v7226, %v7227
    %v7229 = vrot.slane %v7228, 1
    %v7230 = vadd.f32 %v7228, %v7229
    %v7231 = vsel %vm102, %v7187, 0.0
    %v7232 = vsel %vm102, %v7188, 0.0
    %v7233 = vadd.f32 %v7231, %v7232
    %v7234 = vrot.slane %v7233, 4
    %v7235 = vadd.f32 %v7233, %v7234
    %v7236 = vrot.slane %v7235, 2
    %v7237 = vadd.f32 %v7235, %v7236
    %v7238 = vrot.slane %v7237, 1
    %v7239 = vadd.f32 %v7237, %v7238
    %v7240 = vsel %vm102, %v7189, 0.0
    %v7241 = vsel %vm102, %v7190, 0.0
    %v7242 = vadd.f32 %v7240, %v7241
    %v7243 = vrot.slane %v7242, 4
    %v7244 = vadd.f32 %v7242, %v7243
    %v7245 = vrot.slane %v7244, 2
    %v7246 = vadd.f32 %v7244, %v7245
    %v7247 = vrot.slane %v7246, 1
    %v7248 = vadd.f32 %v7246, %v7247
    %v7249 = vsel %vm102, %v7191, 0.0
    %v7250 = vsel %vm102, %v7192, 0.0
    %v7251 = vadd.f32 %v7249, %v7250
    %v7252 = vrot.slane %v7251, 4
    %v7253 = vadd.f32 %v7251, %v7252
    %v7254 = vrot.slane %v7253, 2
    %v7255 = vadd.f32 %v7253, %v7254
    %v7256 = vrot.slane %v7255, 1
    %v7257 = vadd.f32 %v7255, %v7256
    %v7258 = vsel %vm102, %v7193, 0.0
    %v7259 = vsel %vm102, %v7194, 0.0
    %v7260 = vadd.f32 %v7258, %v7259
    %v7261 = vrot.slane %v7260, 4
    %v7262 = vadd.f32 %v7260, %v7261
    %v7263 = vrot.slane %v7262, 2
    %v7264 = vadd.f32 %v7262, %v7263
    %v7265 = vrot.slane %v7264, 1
    %v7266 = vadd.f32 %v7264, %v7265
    %v7267 = vadd.f32 %v6578, %v6840
    %v7268 = vld [vmem:[%s15] sm:$0xff]
    %v7269 = vld [vmem:[%s15 + $0x8] sm:$0xff]
    %v7270 = vld [vmem:[%s15 + $0x10] sm:$0xff]
    %v7271 = vld [vmem:[%s15 + $0x18] sm:$0xff]
    %v7280 = vsel %vm1740, %v7212, %v7203
    %v7281 = vsel %vm1742, %v7221, %v7280
    %v7282 = vsel %vm1744, %v7230, %v7281
    %v7283 = vsel %vm1746, %v7239, %v7282
    %v7284 = vsel %vm1748, %v7248, %v7283
    %v7285 = vsel %vm1750, %v7257, %v7284
    %v7286 = vsel %vm1752, %v7266, %v7285
    %v7287 = vsel %vm102, %v7286, 0
    %7289 = vmatprep.subr.mxu0 0.0
    %7290 = vmatpush1.msra.mxu0 0.0
    %7291 = vmatprep.subr.mxu0 0.0
    %7292 = vmatpush1.msra.mxu0 0.0
    %7293 = vmatprep.subr.mxu0 0.0
    %7294 = vmatpush1.msra.mxu0 0.0
    %7295 = vmatprep.subr.mxu0 0.0
    %7296 = vmatpush1.msra.mxu0 0.0
    %7297 = vmatprep.subr.mxu0 0.0
    %7298 = vmatpush1.msra.mxu0 0.0
    %7299 = vmatprep.subr.mxu0 0.0
    %7300 = vmatpush1.msra.mxu0 0.0
    %7301 = vmatprep.subr.mxu0 0.0
    %7302 = vmatpush1.msra.mxu0 0.0
    %7303 = vmatprep.subr.mxu0 0.0
    %7304 = vmatpush1.msra.mxu0 0.0
    %7305 = vmatprep.subr.mxu0 0.0
    %7306 = vmatpush1.msra.mxu0 0.0
    %7307 = vmatprep.subr.mxu0 0.0
    %7308 = vmatpush1.msra.mxu0 0.0
    %7309 = vmatprep.subr.mxu0 0.0
    %7310 = vmatpush1.msra.mxu0 0.0
    %7311 = vmatprep.subr.mxu0 0.0
    %7312 = vmatpush1.msra.mxu0 0.0
    %7313 = vmatprep.subr.mxu0 0.0
    %7314 = vmatpush1.msra.mxu0 %v7271
    %7315 = vmatprep.subr.mxu0 0.0
    %7316 = vmatpush1.msra.mxu0 %v7270
    %7317 = vmatprep.subr.mxu0 0.0
    %7318 = vmatpush1.msra.mxu0 %v7269
    %7319 = vmatprep.subr.mxu0 0.0
    %7320 = vmatpush1.msra.mxu0 %v7268
    %7321 = vmatprep.subr.mxu0 0.0
    %7322 = vmatpush2.msra.mxu0 0.0
    %7323 = vmatprep.subr.mxu0 0.0
    %7324 = vmatpush2.msra.mxu0 0.0
    %7325 = vmatprep.subr.mxu0 0.0
    %7326 = vmatpush2.msra.mxu0 0.0
    %7327 = vmatprep.subr.mxu0 0.0
    %7328 = vmatpush2.msra.mxu0 0.0
    %7329 = vmatprep.subr.mxu0 0.0
    %7330 = vmatpush2.msra.mxu0 0.0
    %7331 = vmatprep.subr.mxu0 0.0
    %7332 = vmatpush2.msra.mxu0 0.0
    %7333 = vmatprep.subr.mxu0 0.0
    %7334 = vmatpush2.msra.mxu0 0.0
    %7335 = vmatprep.subr.mxu0 0.0
    %7336 = vmatpush2.msra.mxu0 0.0
    %7337 = vmatprep.subr.mxu0 0.0
    %7338 = vmatpush2.msra.mxu0 0.0
    %7339 = vmatprep.subr.mxu0 0.0
    %7340 = vmatpush2.msra.mxu0 0.0
    %7341 = vmatprep.subr.mxu0 0.0
    %7342 = vmatpush2.msra.mxu0 0.0
    %7343 = vmatprep.subr.mxu0 0.0
    %7344 = vmatpush2.msra.mxu0 0.0
    %7345 = vmatprep.subr.mxu0 0.0
    %7346 = vmatpush2.msra.mxu0 0.0
    %7347 = vmatprep.subr.mxu0 0.0
    %7348 = vmatpush2.msra.mxu0 0.0
    %7349 = vmatprep.subr.mxu0 0.0
    %7350 = vmatpush2.msra.mxu0 0.0
    %7351 = vmatprep.subr.mxu0 0.0
    %7352 = vmatpush2.msra.mxu0 0.0
    %7353 = vmatprep.mubr.f32.mxu0 0.0
    %7354 = vmatmul.mubr.f32.gmra.mxu0 %v7287
    %v7355 = vpop.f32.mrf.mxu0
    %v7356 = vadd.f32 0.0, %v7355
    %v7357 = vpop.f32.mrf.mxu0
    %7358 = vdwg.mxu0
    %v7359 = vadd.f32 %v7267, %v7356
    %v7360 = vxor.u32 %v7359, 2147483648
    %v7361 = vmul.f32 %v7360, 1.442695
    %v7362 = vpow.pop %v7361
    %v7363 = vadd.f32 %v7362, 1.0
    %v7364 = vrcp.pop %v7363
    %v7365 = vmul.f32 1.0, %v7364
    %v7366 = vtanh.pop %v7359
    %v7367 = vmul.f32 %v7365, %v6576
    %7369 = vrot.lane.b32.xlu0 %v7366, 32
    %v7370 = vpop.permute.xlu0 %7369
    %v7372 = vmul.f32 %v7365, %v7370
    %7374 = vrot.lane.b32.xlu0 %v7372, 32
    %v7375 = vpop.permute.xlu0 %7374
    %v7377 = vadd.f32 %v7367, %v7375
    %v7378 = vtanh.pop %v7377
    %7380 = vrot.lane.b32.xlu0 %v7378, 32
    %v7381 = vpop.permute.xlu0 %7380
    %v7383 = vmul.f32 %v7365, %v7381
    %v7384 = vld [vmem:[%s16] sm:$0xff]
    %v7385 = vld [vmem:[%s16 + $0x8] sm:$0xff]
    %v7386 = vld [vmem:[%s16 + $0x10] sm:$0xff]
    %v7387 = vld [vmem:[%s16 + $0x18] sm:$0xff]
    %v7388 = vld [vmem:[%s17] sm:$0x1]
    %v7390 = vlaneseq
    %v7391 = vshrl.u32 %v7390, 7
    %v7392 = vsub.s32 0, %v7391
    %v7393 = vrot.slane %v7388, %v7392
    %7396 = vrot.lane.b32.xlu0 %v7383, 64
    %v7397 = vpop.permute.xlu0 %7396
    %v7398 = vsel %vm102, %v7397, 0
    %7400 = vmatprep.subr.mxu0 0.0
    %7401 = vmatpush1.msra.mxu0 0.0
    %7402 = vmatprep.subr.mxu0 0.0
    %7403 = vmatpush1.msra.mxu0 0.0
    %7404 = vmatprep.subr.mxu0 0.0
    %7405 = vmatpush1.msra.mxu0 0.0
    %7406 = vmatprep.subr.mxu0 0.0
    %7407 = vmatpush1.msra.mxu0 0.0
    %7408 = vmatprep.subr.mxu0 0.0
    %7409 = vmatpush1.msra.mxu0 0.0
    %7410 = vmatprep.subr.mxu0 0.0
    %7411 = vmatpush1.msra.mxu0 0.0
    %7412 = vmatprep.subr.mxu0 0.0
    %7413 = vmatpush1.msra.mxu0 0.0
    %7414 = vmatprep.subr.mxu0 0.0
    %7415 = vmatpush1.msra.mxu0 0.0
    %7416 = vmatprep.subr.mxu0 0.0
    %7417 = vmatpush1.msra.mxu0 0.0
    %7418 = vmatprep.subr.mxu0 0.0
    %7419 = vmatpush1.msra.mxu0 0.0
    %7420 = vmatprep.subr.mxu0 0.0
    %7421 = vmatpush1.msra.mxu0 0.0
    %7422 = vmatprep.subr.mxu0 0.0
    %7423 = vmatpush1.msra.mxu0 0.0
    %7424 = vmatprep.subr.mxu0 0.0
    %7425 = vmatpush1.msra.mxu0 %v7387
    %7426 = vmatprep.subr.mxu0 0.0
    %7427 = vmatpush1.msra.mxu0 %v7386
    %7428 = vmatprep.subr.mxu0 0.0
    %7429 = vmatpush1.msra.mxu0 %v7385
    %7430 = vmatprep.subr.mxu0 0.0
    %7431 = vmatpush1.msra.mxu0 %v7384
    %7432 = vmatprep.subr.mxu0 0.0
    %7433 = vmatpush2.msra.mxu0 0.0
    %7434 = vmatprep.subr.mxu0 0.0
    %7435 = vmatpush2.msra.mxu0 0.0
    %7436 = vmatprep.subr.mxu0 0.0
    %7437 = vmatpush2.msra.mxu0 0.0
    %7438 = vmatprep.subr.mxu0 0.0
    %7439 = vmatpush2.msra.mxu0 0.0
    %7440 = vmatprep.subr.mxu0 0.0
    %7441 = vmatpush2.msra.mxu0 0.0
    %7442 = vmatprep.subr.mxu0 0.0
    %7443 = vmatpush2.msra.mxu0 0.0
    %7444 = vmatprep.subr.mxu0 0.0
    %7445 = vmatpush2.msra.mxu0 0.0
    %7446 = vmatprep.subr.mxu0 0.0
    %7447 = vmatpush2.msra.mxu0 0.0
    %7448 = vmatprep.subr.mxu0 0.0
    %7449 = vmatpush2.msra.mxu0 0.0
    %7450 = vmatprep.subr.mxu0 0.0
    %7451 = vmatpush2.msra.mxu0 0.0
    %7452 = vmatprep.subr.mxu0 0.0
    %7453 = vmatpush2.msra.mxu0 0.0
    %7454 = vmatprep.subr.mxu0 0.0
    %7455 = vmatpush2.msra.mxu0 0.0
    %7456 = vmatprep.subr.mxu0 0.0
    %7457 = vmatpush2.msra.mxu0 0.0
    %7458 = vmatprep.subr.mxu0 0.0
    %7459 = vmatpush2.msra.mxu0 0.0
    %7460 = vmatprep.subr.mxu0 0.0
    %7461 = vmatpush2.msra.mxu0 0.0
    %7462 = vmatprep.subr.mxu0 0.0
    %7463 = vmatpush2.msra.mxu0 0.0
    %7464 = vmatprep.mubr.f32.mxu0 0.0
    %7465 = vmatmul.mubr.f32.gmra.mxu0 %v7398
    %v7466 = vpop.f32.mrf.mxu0
    %v7467 = vadd.f32 %v7393, %v7466
    %v7468 = vpop.f32.mrf.mxu0
    %7469 = vdwg.mxu0
    %7470 = vmax.xlane.f32.xlu0 %v7467
    %v7471 = vpop.xlane.xlu0 %7470
    %v7472 = vsub.f32 %v7467, %v7471
    %v7473 = vmul.f32 %v7472, 1.442695
    %v7474 = vpow.pop %v7473
    %7475 = vadd.xlane.f32.xlu0 %v7474
    %v7476 = vpop.xlane.xlu0 %7475
    %v7477 = vlog2.pop %v7476
    %v7478 = vmul.f32 %v7477, 0.6931472
    %v7479 = vsub.f32 %v7472, %v7478
    %p7480 = scmp.gt.s32.totalorder %s1039, 6
    %s7481 = scalar_select %p7480, 1, 0
    %s7482 = scvt.s32.f32 %s7481
    %v7483 = vstv %s7482
    %v7484 = vmul.f32 %v7483, %v7074
    %s7485 = scalar_lea.vmem %s18, 48
    %7486 = vst [vmem:[%s7485] sm:$0xff] %v7484
    %v7487 = vmul.f32 %v7483, %v7479
    %s7488 = scalar_lea.vmem %s19, 48
    %7489 = vst [vmem:[%s7488] sm:$0xff] %v7487
    // Predicated region
    $region82: #{caption_model_forward.1} parent=1 // pred_check
      _
    $region83: #{caption_model_forward.1} parent=1 // pred_check_branch
      %7491 = sbr.rel (0) target = $region85
    $region84: #{caption_model_forward.1} parent=1 // pred_region
      _
    $region85: #{caption_model_forward.1} parent=1 // pred_fallthru
      _
    // Predicated region
    $region86: #{caption_model_forward.1} parent=1 // pred_check
      _
    $region87: #{caption_model_forward.1} parent=1 // pred_check_branch
      %7493 = sbr.rel (0) target = $region89
    $region88: #{caption_model_forward.1} parent=1 // pred_region
      _
    $region89: #{caption_model_forward.1} parent=1 // pred_fallthru
      _
    // Predicated region
    $region90: #{caption_model_forward.1} parent=1 // pred_check
      _
    $region91: #{caption_model_forward.1} parent=1 // pred_check_branch
      %7495 = sbr.rel (0) target = $region93
    $region92: #{caption_model_forward.1} parent=1 // pred_region
      _
    $region93: #{caption_model_forward.1} parent=1 // pred_fallthru
      _
    // Predicated region
    $region94: #{caption_model_forward.1} parent=1 // pred_check
      _
    $region95: #{caption_model_forward.1} parent=1 // pred_check_branch
      %7497 = sbr.rel (0) target = $region97
    $region96: #{caption_model_forward.1} parent=1 // pred_region
      _
    $region97: #{caption_model_forward.1} parent=1 // pred_fallthru
      _
    %7498 = vsyncpa [#allocation6], 1
    %7499 = vsyncpa [#allocation8], 1

</llo_original>
